<compile_context>
chip_gen: v6e
topology: v6e:2x2x1
jax: 0.10.0
libtpu: 0.0.40
codegen_flags: <defaults>
</compile_context>

<pallas_src>
import functools

import jax
import jax.numpy as jnp
from jax.experimental import pallas as pl
from jax.experimental.pallas import tpu as pltpu


# ---------------------------------------------------------------------------
# Fused kernel: saliency double max-pool + SAPModule + attribute/score head
# ---------------------------------------------------------------------------
def _samp_fused_kernel(fmap_ref, sal_ref, selw_ref,
                       wsx_ref, wss_ref, watt_ref, wcom_ref, wattp_ref,
                       wala_ref, walc_ref, w1a_ref, w1c_ref, w2_ref, w3_ref,
                       out_ref, sal_flat_ref, *, sal_h, pooled_h, num_attr):
    f32 = jnp.float32
    bf16 = jnp.bfloat16
    # bf16 x bf16 MXU matmul with f32 accumulation (weights already bf16 in HBM).
    bdot = lambda a, w: jnp.dot(a.astype(bf16), w, preferred_element_type=f32)

    # ---- saliency branch: MaxPool2d(3,2,1) twice == one max pool k=7, s=4, p=3 ----
    # saliency block is [TB*Hs, Ws] (batch folded into rows), DMA'd as bf16,
    # pool math in f32 (v5e has no bf16 VPU/EUP).
    sal = sal_ref[...].astype(f32)                                  # [R, Ws]
    rows, ws = sal.shape
    wp = ws // 4
    tb = fmap_ref.shape[0]

    # kernel-7 / stride-1 max along lanes (W): three kernel-3 maxes; edge masks hoisted.
    col = jax.lax.broadcasted_iota(jnp.int32, (rows, ws), 1)
    at_first_col = col == 0
    at_last_col = col == ws - 1
    for _ in range(3):
        nxt = jnp.where(at_last_col, -jnp.inf, pltpu.roll(sal, shift=ws - 1, axis=1))
        prv = jnp.where(at_first_col, -jnp.inf, pltpu.roll(sal, shift=1, axis=1))
        sal = jnp.maximum(jnp.maximum(nxt, sal), prv)

    # stride-4 downsample along lanes via a 0/1 selection matmul.  bf16 x bf16 is
    # exact here (pooled values are maxes of bf16 inputs -> bf16-representable).
    sal = jnp.dot(sal.astype(bf16), selw_ref[...], preferred_element_type=f32)  # [R, Wp]

    # kernel-7 / stride-1 max along sublanes (H).  The block always starts on an
    # image boundary, so the per-row H index is just an in-kernel iota mod Hs.
    h = jax.lax.broadcasted_iota(jnp.int32, (rows, wp), 0) % sal_h
    at_first_row = h == 0
    at_last_row = h == sal_h - 1
    for _ in range(3):
        nxt = jnp.where(at_last_row, -jnp.inf, pltpu.roll(sal, shift=rows - 1, axis=0))
        prv = jnp.where(at_first_row, -jnp.inf, pltpu.roll(sal, shift=1, axis=0))
        sal = jnp.maximum(jnp.maximum(nxt, sal), prv)

    # H stride-4 downsample + flatten: Hp cheap slice->store ops into a lane-dense
    # [TB, Hp*Wp] bf16 scratch (PyTorch flatten order hp*Wp + wp), feeding a single
    # streaming K = Hp*Wp matmul below instead of Hp tiny matmuls.
    sal3 = sal.reshape(tb, sal_h, wp)            # leading-dim split only: layout-free
    for hp in range(pooled_h):
        sal_flat_ref[:, hp * wp:(hp + 1) * wp] = sal3[:, 4 * hp, :].astype(bf16)

    # ---- SAPModule: GAP(fmap) ++ pooled saliency -> Linear (split matmul) ----
    gap = jnp.mean(fmap_ref[...].astype(f32), axis=1)               # [TB, C], f32 accum
    pat = bdot(gap, wsx_ref[...])                                   # [TB, OC]
    pat = pat + jnp.dot(sal_flat_ref[...], wss_ref[...], preferred_element_type=f32)

    # ---- attribute / composition feature branches (Linear -> ReLU, Dropout = id) ----
    att = jnp.maximum(bdot(pat, watt_ref[...]), 0.0)                # [TB, AD]
    com = jnp.maximum(bdot(pat, wcom_ref[...]), 0.0)                # [TB, CD]
    attribute = bdot(att, wattp_ref[...])                           # [TB, NA]

    # channel attention: alpha = sigmoid(Linear(cat([att, com])))  (split matmul)
    z = bdot(att, wala_ref[...]) + bdot(com, walc_ref[...])         # [TB, 2]
    alpha = 1.0 / (1.0 + jnp.exp(-z))
    att_w = alpha[:, 0:1] * att
    com_w = alpha[:, 1:2] * com

    # com_pred_layer: Linear -> ReLU -> Linear -> ReLU -> Linear -> Softmax(dim=1)
    hid = jnp.maximum(bdot(att_w, w1a_ref[...]) + bdot(com_w, w1c_ref[...]), 0.0)
    hid = jnp.maximum(bdot(hid, w2_ref[...]), 0.0)
    logits = bdot(hid, w3_ref[...])                                 # [TB, SL]
    m = jnp.max(logits, axis=1, keepdims=True)
    e = jnp.exp(logits - m)
    scores = e / jnp.sum(e, axis=1, keepdims=True)                  # exact normalization

    # merged output block: [:, :NA] attribute, [:, NA:] scores
    out_ref[:, :num_attr] = attribute
    out_ref[:, num_attr:] = scores


# ---------------------------------------------------------------------------
# Wrapper helpers
# ---------------------------------------------------------------------------
def _pick_batch_tile(B):
    # Large tiles amortize per-step overhead and fill MXU rows; prefer an even
    # number of tiles so the ("parallel",) axis splits across v7x's 2 TensorCores.
    # (Production tuning should sweep this against the per-generation VMEM limit.)
    for tb in (64, 32, 16, 8):
        if B % tb == 0 and (B // tb) >= 2 and (B // tb) % 2 == 0:
            return tb
    for tb in (64, 32, 16, 8):
        if B % tb == 0:
            return tb
    return B


def _vmem_limit_bytes():
    cap = 128 * 1024 * 1024
    try:
        cap = int(pltpu.get_tpu_info().vmem_capacity_bytes)
    except Exception:
        pass
    # ~60% of physical VMEM: ~77 MiB on v5e/v6e (128 MiB), ~38 MiB on v7x (64 MiB),
    # leaving headroom for Mosaic internal scratch and the pool transients.
    return max(32 * 1024 * 1024, min(int(cap * 0.6), 100 * 1024 * 1024))


# ---------------------------------------------------------------------------
# Wrapper: layout prep + weight quantization + pallas_call
# ---------------------------------------------------------------------------
def samp_net_forward(x, s, params, batch_tile=None):
    """Returns (weight, attribute, scores) like SAMPNet.forward."""
    B, C, H, W = x.shape
    Hs, Ws = s.shape[2], s.shape[3]
    assert Hs % 8 == 0 and Ws % 4 == 0
    Hp, Wp = Hs // 4, Ws // 4
    assert params["w_sap"].shape[0] == C + Hp * Wp
    OC = params["w_sap"].shape[1]
    AD = params["w_att"].shape[1]
    NA = params["w_attp"].shape[1]
    SL = params["w3"].shape[1]

    TB = batch_tile if batch_tile is not None else _pick_batch_tile(B)
    assert B % TB == 0
    nb = B // TB

    bf = lambda a: a.astype(jnp.bfloat16)

    # --- activations to bf16: halves the dominant per-step HBM DMA + double buffers ---
    fmap = bf(jnp.transpose(x.reshape(B, C, H * W), (0, 2, 1)))     # [B, HW, C], C on lanes
    sal2d = bf(s.reshape(B * Hs, Ws))                               # batch folded into rows

    # stride-4 lane-downsample 0/1 selector (bf16 selection matmul is exact)
    iw = jax.lax.broadcasted_iota(jnp.int32, (Ws, Wp), 0)
    iv = jax.lax.broadcasted_iota(jnp.int32, (Ws, Wp), 1)
    selw = (iw == 4 * iv).astype(jnp.bfloat16)

    # --- weights: bf16 in HBM, split/reshaped for the kernel ---
    w_sap = params["w_sap"]
    wsx = bf(w_sap[:C])                       # [C, OC]      (GAP branch)
    wss = bf(w_sap[C:])                       # [Hp*Wp, OC]  (pooled-saliency branch)
    watt, wcom, wattp = bf(params["w_att"]), bf(params["w_com"]), bf(params["w_attp"])
    wala, walc = bf(params["w_alpha"][:AD]), bf(params["w_alpha"][AD:])
    w1a, w1c = bf(params["w1"][:AD]), bf(params["w1"][AD:])
    w2, w3 = bf(params["w2"]), bf(params["w3"])

    weight_arrays = (selw, wsx, wss, watt, wcom, wattp, wala, walc, w1a, w1c, w2, w3)
    kernel = functools.partial(_samp_fused_kernel, sal_h=Hs, pooled_h=Hp, num_attr=NA)

    def make_call(resident_kwargs):
        def resident(a):   # constant block index -> DMA'd once, VMEM-resident for the grid
            nd = a.ndim
            return pl.BlockSpec(a.shape, lambda b, nd=nd: (0,) * nd, **resident_kwargs)

        in_specs = [
            pl.BlockSpec((TB, H * W, C), lambda b: (b, 0, 0)),      # fmap batch tile
            pl.BlockSpec((TB * Hs, Ws), lambda b: (b, 0)),          # saliency rows tile
        ] + [resident(a) for a in weight_arrays]
        out_spec = pl.BlockSpec((TB, NA + SL), lambda b: (b, 0))    # merged attr+scores

        return pl.pallas_call(
            kernel,
            out_shape=jax.ShapeDtypeStruct((B, NA + SL), jnp.float32),
            grid=(nb,),
            in_specs=in_specs,
            out_specs=out_spec,
            scratch_shapes=[pltpu.VMEM((TB, Hp * Wp), jnp.bfloat16)],
            compiler_params=pltpu.CompilerParams(
                dimension_semantics=("parallel",),     # v7x: shard batch tiles over 2 TCs
                vmem_limit_bytes=_vmem_limit_bytes(),
            ),
        )

    args = (fmap, sal2d) + weight_arrays
    try:
        # Single-buffer the never-changing resident weights: halves their VMEM
        # footprint (the default pipeline double-buffers every input).
        out = make_call(dict(pipeline_mode=pl.Buffered(1)))(*args)
    except Exception:
        # Fallback for Pallas versions without pipeline_mode on pallas_call specs.
        out = make_call({})(*args)

    attribute = out[:, :NA]
    scores = out[:, NA:]
    weight = None                                     # use_multipattern=False
    return weight, attribute, scores


# ---------------------------------------------------------------------------
# Pure-JAX reference (same bf16 input/weight quantization, f32 accumulation)
# ---------------------------------------------------------------------------
def reference_forward(x, s, p):
    bf16, f32 = jnp.bfloat16, jnp.float32
    q = lambda a: a.astype(bf16).astype(f32)          # same input quantization as the kernel
    bdot = lambda a, w: jnp.dot(a.astype(bf16), w.astype(bf16), preferred_element_type=f32)
    pool = lambda a: jax.lax.reduce_window(a, -jnp.inf, jax.lax.max,
                                           (1, 3, 3), (1, 2, 2),
                                           ((0, 0), (1, 1), (1, 1)))
    B = x.shape[0]
    sal = pool(pool(q(s[:, 0]))).reshape(B, -1)
    gap = q(x).mean(axis=(2, 3))
    pat = bdot(jnp.concatenate([gap, sal], axis=1), p["w_sap"])
    att = jnp.maximum(bdot(pat, p["w_att"]), 0.0)
    com = jnp.maximum(bdot(pat, p["w_com"]), 0.0)
    attribute = bdot(att, p["w_attp"])
    fused = jnp.concatenate([att, com], axis=1)
    alpha = 1.0 / (1.0 + jnp.exp(-bdot(fused, p["w_alpha"])))
    fused2 = jnp.concatenate([alpha[:, 0:1] * att, alpha[:, 1:2] * com], axis=1)
    h = jnp.maximum(bdot(fused2, p["w1"]), 0.0)
    h = jnp.maximum(bdot(h, p["w2"]), 0.0)
    logits = bdot(h, p["w3"])
    m = logits.max(axis=1, keepdims=True)
    e = jnp.exp(logits - m)
    return None, attribute, e / e.sum(axis=1, keepdims=True)


if __name__ == "__main__":
    # Small, module-consistent stand-in shapes (real config: input_channel=512,
    # sal_dim=512, OC=1024, saliency input 224 -> pooled 56x56).  B=16 exercises
    # a 2-step grid with TB=8 (auto-picked so the tile count is even).
    B, C, H, W = 16, 32, 8, 8       # backbone feature map [B, input_channel, h, w]
    SAL_IN = 32                     # saliency input spatial -> 8x8 after the two max pools
    SAL_DIM = 16                    # stand-in for sal_dim=512
    OC = C + SAL_DIM                # SAPModule output_channel
    AD = OC // 2                    # att_dim  (concat_dim < 1024 -> concat_dim // 2)
    CD = OC - AD                    # com_dim
    NA = 4                          # num_attributes
    SL = 5                          # score_level
    S2 = (SAL_IN // 4) ** 2         # flattened pooled-saliency length

    key = jax.random.PRNGKey(0)
    ks = jax.random.split(key, 10)
    x = jax.random.normal(ks[0], (B, C, H, W), jnp.float32)
    s = jax.random.normal(ks[1], (B, 1, SAL_IN, SAL_IN), jnp.float32)

    def wmat(k, fan_in, fan_out):
        return jax.random.normal(k, (fan_in, fan_out), jnp.float32) * 0.05

    params = {
        "w_sap":   wmat(ks[2], C + S2, OC),   # SAPModule.feature_layer
        "w_att":   wmat(ks[3], OC, AD),       # att_feature_layer
        "w_attp":  wmat(ks[4], AD, NA),       # att_pred_layer
        "w_com":   wmat(ks[5], OC, CD),       # com_feature_layer
        "w_alpha": wmat(ks[6], OC, 2),        # alpha_predict_layer
        "w1":      wmat(ks[7], OC, OC),       # com_pred_layer linear 1
        "w2":      wmat(ks[8], OC, C),        # com_pred_layer linear 2
        "w3":      wmat(ks[9], C, SL),        # com_pred_layer linear 3
    }

    weight, attribute, scores = samp_net_forward(x, s, params)
    jax.block_until_ready((attribute, scores))

    _, attr_ref, scores_ref = reference_forward(x, s, params)
    assert weight is None
    assert attribute.shape == (B, NA) and scores.shape == (B, SL)
    assert bool(jnp.allclose(attribute, attr_ref, rtol=1e-2, atol=1e-3)), "attribute mismatch"
    assert bool(jnp.allclose(scores, scores_ref, rtol=2e-2, atol=2e-3)), "scores mismatch"
    assert bool(jnp.allclose(scores.sum(axis=1), 1.0, atol=1e-4)), "softmax not normalized"

    print("KERNEL_OK")
</pallas_src>

<mosaic_0001>
module attributes {stable_mosaic.version = 11 : i64} {
  func.func @_samp_fused_kernel(%arg0: i32, %arg1: memref<8x64x32xbf16, #tpu.memory_space<vmem>>, %arg2: memref<256x32xbf16, #tpu.memory_space<vmem>>, %arg3: memref<32x8xbf16, #tpu.memory_space<vmem>>, %arg4: memref<32x48xbf16, #tpu.memory_space<vmem>>, %arg5: memref<64x48xbf16, #tpu.memory_space<vmem>>, %arg6: memref<48x24xbf16, #tpu.memory_space<vmem>>, %arg7: memref<48x24xbf16, #tpu.memory_space<vmem>>, %arg8: memref<24x4xbf16, #tpu.memory_space<vmem>>, %arg9: memref<24x2xbf16, #tpu.memory_space<vmem>>, %arg10: memref<24x2xbf16, #tpu.memory_space<vmem>>, %arg11: memref<24x48xbf16, #tpu.memory_space<vmem>>, %arg12: memref<24x48xbf16, #tpu.memory_space<vmem>>, %arg13: memref<48x32xbf16, #tpu.memory_space<vmem>>, %arg14: memref<32x5xbf16, #tpu.memory_space<vmem>>, %arg15: memref<8x9xf32, #tpu.memory_space<vmem>>, %arg16: memref<8x64xbf16, #tpu.memory_space<vmem>>) attributes {dimension_semantics = [#tpu.dimension_semantics<parallel>], iteration_bounds = array<i64: 2>, scalar_prefetch = 0 : i64, scratch_operands = 1 : i64, tpu.core_type = #tpu.core_type<tc>, window_params = [{transform_indices = @transform_0, window_bounds = array<i64: 8, 64, 32>}, {transform_indices = @transform_1, window_bounds = array<i64: 256, 32>}, {pipeline_mode = #tpu.pipeline_mode<synchronous>, transform_indices = @transform_2, window_bounds = array<i64: 32, 8>}, {pipeline_mode = #tpu.pipeline_mode<synchronous>, transform_indices = @transform_3, window_bounds = array<i64: 32, 48>}, {pipeline_mode = #tpu.pipeline_mode<synchronous>, transform_indices = @transform_4, window_bounds = array<i64: 64, 48>}, {pipeline_mode = #tpu.pipeline_mode<synchronous>, transform_indices = @transform_5, window_bounds = array<i64: 48, 24>}, {pipeline_mode = #tpu.pipeline_mode<synchronous>, transform_indices = @transform_6, window_bounds = array<i64: 48, 24>}, {pipeline_mode = #tpu.pipeline_mode<synchronous>, transform_indices = @transform_7, window_bounds = array<i64: 24, 4>}, {pipeline_mode = #tpu.pipeline_mode<synchronous>, transform_indices = @transform_8, window_bounds = array<i64: 24, 2>}, {pipeline_mode = #tpu.pipeline_mode<synchronous>, transform_indices = @transform_9, window_bounds = array<i64: 24, 2>}, {pipeline_mode = #tpu.pipeline_mode<synchronous>, transform_indices = @transform_10, window_bounds = array<i64: 24, 48>}, {pipeline_mode = #tpu.pipeline_mode<synchronous>, transform_indices = @transform_11, window_bounds = array<i64: 24, 48>}, {pipeline_mode = #tpu.pipeline_mode<synchronous>, transform_indices = @transform_12, window_bounds = array<i64: 48, 32>}, {pipeline_mode = #tpu.pipeline_mode<synchronous>, transform_indices = @transform_13, window_bounds = array<i64: 32, 5>}, {transform_indices = @transform_14, window_bounds = array<i64: 8, 9>}]} {
    %c0 = arith.constant 0 : index
    %c0_0 = arith.constant 0 : index
    %0 = vector.load %arg2[%c0, %c0_0] : memref<256x32xbf16, #tpu.memory_space<vmem>>, vector<256x32xbf16>
    %1 = arith.extf %0 : vector<256x32xbf16> to vector<256x32xf32>
    %2 = tpu.iota {dimensions = array<i32: 1>} : vector<256x32xi32>
    %c0_i32 = arith.constant 0 : i32
    %3 = vector.broadcast %c0_i32 : i32 to vector<256x32xi32>
    %4 = arith.cmpi eq, %2, %3 : vector<256x32xi32>
    %c31_i32 = arith.constant 31 : i32
    %5 = vector.broadcast %c31_i32 : i32 to vector<256x32xi32>
    %6 = arith.cmpi eq, %2, %5 : vector<256x32xi32>
    %c31_i32_1 = arith.constant 31 : i32
    %7 = tpu.dynamic_rotate %1 by %c31_i32_1 dim 1 : vector<256x32xf32>, i32 -> vector<256x32xf32>
    %cst = arith.constant 0xFF800000 : f32
    %8 = vector.broadcast %cst : f32 to vector<256x32xf32>
    %9 = arith.select %6, %8, %7 : vector<256x32xi1>, vector<256x32xf32>
    %c1_i32 = arith.constant 1 : i32
    %10 = tpu.dynamic_rotate %1 by %c1_i32 dim 1 : vector<256x32xf32>, i32 -> vector<256x32xf32>
    %cst_2 = arith.constant 0xFF800000 : f32
    %11 = vector.broadcast %cst_2 : f32 to vector<256x32xf32>
    %12 = arith.select %4, %11, %10 : vector<256x32xi1>, vector<256x32xf32>
    %13 = arith.maximumf %9, %1 : vector<256x32xf32>
    %14 = arith.maximumf %13, %12 : vector<256x32xf32>
    %c31_i32_3 = arith.constant 31 : i32
    %15 = tpu.dynamic_rotate %14 by %c31_i32_3 dim 1 : vector<256x32xf32>, i32 -> vector<256x32xf32>
    %cst_4 = arith.constant 0xFF800000 : f32
    %16 = vector.broadcast %cst_4 : f32 to vector<256x32xf32>
    %17 = arith.select %6, %16, %15 : vector<256x32xi1>, vector<256x32xf32>
    %c1_i32_5 = arith.constant 1 : i32
    %18 = tpu.dynamic_rotate %14 by %c1_i32_5 dim 1 : vector<256x32xf32>, i32 -> vector<256x32xf32>
    %cst_6 = arith.constant 0xFF800000 : f32
    %19 = vector.broadcast %cst_6 : f32 to vector<256x32xf32>
    %20 = arith.select %4, %19, %18 : vector<256x32xi1>, vector<256x32xf32>
    %21 = arith.maximumf %17, %14 : vector<256x32xf32>
    %22 = arith.maximumf %21, %20 : vector<256x32xf32>
    %c31_i32_7 = arith.constant 31 : i32
    %23 = tpu.dynamic_rotate %22 by %c31_i32_7 dim 1 : vector<256x32xf32>, i32 -> vector<256x32xf32>
    %cst_8 = arith.constant 0xFF800000 : f32
    %24 = vector.broadcast %cst_8 : f32 to vector<256x32xf32>
    %25 = arith.select %6, %24, %23 : vector<256x32xi1>, vector<256x32xf32>
    %c1_i32_9 = arith.constant 1 : i32
    %26 = tpu.dynamic_rotate %22 by %c1_i32_9 dim 1 : vector<256x32xf32>, i32 -> vector<256x32xf32>
    %cst_10 = arith.constant 0xFF800000 : f32
    %27 = vector.broadcast %cst_10 : f32 to vector<256x32xf32>
    %28 = arith.select %4, %27, %26 : vector<256x32xi1>, vector<256x32xf32>
    %29 = arith.maximumf %25, %22 : vector<256x32xf32>
    %30 = arith.maximumf %29, %28 : vector<256x32xf32>
    %31 = arith.truncf %30 : vector<256x32xf32> to vector<256x32xbf16>
    %c0_11 = arith.constant 0 : index
    %c0_12 = arith.constant 0 : index
    %32 = vector.load %arg3[%c0_11, %c0_12] : memref<32x8xbf16, #tpu.memory_space<vmem>>, vector<32x8xbf16>
    %cst_13 = arith.constant dense<0.000000e+00> : vector<256x8xf32>
    %33 = tpu.matmul %31, %32, %cst_13 {dimension_numbers = #tpu.dot_dimension_numbers<[1], [0], [0], [1], [0, 0, 1, 1], [], []>} : vector<256x32xbf16>, vector<32x8xbf16>, vector<256x8xf32> -> vector<256x8xf32>
    %34 = tpu.iota {dimensions = array<i32: 0>} : vector<256x8xi32>
    %c32_i32 = arith.constant 32 : i32
    %c0_i32_14 = arith.constant 0 : i32
    %35 = arith.cmpi eq, %c32_i32, %c0_i32_14 : i32
    %c1_i32_15 = arith.constant 1 : i32
    %36 = arith.select %35, %c1_i32_15, %c32_i32 : i32
    %37 = vector.broadcast %36 : i32 to vector<256x8xi32>
    %38 = arith.remsi %34, %37 : vector<256x8xi32>
    %c0_i32_16 = arith.constant 0 : i32
    %39 = vector.broadcast %c0_i32_16 : i32 to vector<256x8xi32>
    %40 = arith.cmpi ne, %38, %39 : vector<256x8xi32>
    %c0_i32_17 = arith.constant 0 : i32
    %41 = vector.broadcast %c0_i32_17 : i32 to vector<256x8xi32>
    %42 = arith.cmpi slt, %38, %41 : vector<256x8xi32>
    %c0_i32_18 = arith.constant 0 : i32
    %43 = arith.cmpi slt, %36, %c0_i32_18 : i32
    %44 = vector.broadcast %43 : i1 to vector<256x8xi1>
    %45 = vector.broadcast %44 : vector<256x8xi1> to vector<256x8xi1>
    %46 = arith.xori %42, %45 : vector<256x8xi1>
    %47 = arith.andi %46, %40 : vector<256x8xi1>
    %48 = vector.broadcast %36 : i32 to vector<256x8xi32>
    %49 = arith.addi %38, %48 : vector<256x8xi32>
    %50 = arith.select %47, %49, %38 : vector<256x8xi1>, vector<256x8xi32>
    %c0_i32_19 = arith.constant 0 : i32
    %51 = vector.broadcast %c0_i32_19 : i32 to vector<256x8xi32>
    %52 = arith.cmpi eq, %50, %51 : vector<256x8xi32>
    %c31_i32_20 = arith.constant 31 : i32
    %53 = vector.broadcast %c31_i32_20 : i32 to vector<256x8xi32>
    %54 = arith.cmpi eq, %50, %53 : vector<256x8xi32>
    %c255_i32 = arith.constant 255 : i32
    %55 = tpu.dynamic_rotate %33 by %c255_i32 dim 0 : vector<256x8xf32>, i32 -> vector<256x8xf32>
    %cst_21 = arith.constant 0xFF800000 : f32
    %56 = vector.broadcast %cst_21 : f32 to vector<256x8xf32>
    %57 = arith.select %54, %56, %55 : vector<256x8xi1>, vector<256x8xf32>
    %c1_i32_22 = arith.constant 1 : i32
    %58 = tpu.dynamic_rotate %33 by %c1_i32_22 dim 0 : vector<256x8xf32>, i32 -> vector<256x8xf32>
    %cst_23 = arith.constant 0xFF800000 : f32
    %59 = vector.broadcast %cst_23 : f32 to vector<256x8xf32>
    %60 = arith.select %52, %59, %58 : vector<256x8xi1>, vector<256x8xf32>
    %61 = arith.maximumf %57, %33 : vector<256x8xf32>
    %62 = arith.maximumf %61, %60 : vector<256x8xf32>
    %c255_i32_24 = arith.constant 255 : i32
    %63 = tpu.dynamic_rotate %62 by %c255_i32_24 dim 0 : vector<256x8xf32>, i32 -> vector<256x8xf32>
    %cst_25 = arith.constant 0xFF800000 : f32
    %64 = vector.broadcast %cst_25 : f32 to vector<256x8xf32>
    %65 = arith.select %54, %64, %63 : vector<256x8xi1>, vector<256x8xf32>
    %c1_i32_26 = arith.constant 1 : i32
    %66 = tpu.dynamic_rotate %62 by %c1_i32_26 dim 0 : vector<256x8xf32>, i32 -> vector<256x8xf32>
    %cst_27 = arith.constant 0xFF800000 : f32
    %67 = vector.broadcast %cst_27 : f32 to vector<256x8xf32>
    %68 = arith.select %52, %67, %66 : vector<256x8xi1>, vector<256x8xf32>
    %69 = arith.maximumf %65, %62 : vector<256x8xf32>
    %70 = arith.maximumf %69, %68 : vector<256x8xf32>
    %c255_i32_28 = arith.constant 255 : i32
    %71 = tpu.dynamic_rotate %70 by %c255_i32_28 dim 0 : vector<256x8xf32>, i32 -> vector<256x8xf32>
    %cst_29 = arith.constant 0xFF800000 : f32
    %72 = vector.broadcast %cst_29 : f32 to vector<256x8xf32>
    %73 = arith.select %54, %72, %71 : vector<256x8xi1>, vector<256x8xf32>
    %c1_i32_30 = arith.constant 1 : i32
    %74 = tpu.dynamic_rotate %70 by %c1_i32_30 dim 0 : vector<256x8xf32>, i32 -> vector<256x8xf32>
    %cst_31 = arith.constant 0xFF800000 : f32
    %75 = vector.broadcast %cst_31 : f32 to vector<256x8xf32>
    %76 = arith.select %52, %75, %74 : vector<256x8xi1>, vector<256x8xf32>
    %77 = arith.maximumf %73, %70 : vector<256x8xf32>
    %78 = arith.maximumf %77, %76 : vector<256x8xf32>
    %79 = vector.shape_cast %78 : vector<256x8xf32> to vector<8x32x8xf32>
    %80 = vector.extract_strided_slice %79 {offsets = [0, 0, 0], sizes = [8, 1, 8], strides = [1, 1, 1]} : vector<8x32x8xf32> to vector<8x1x8xf32>
    %81 = vector.shape_cast %80 : vector<8x1x8xf32> to vector<8x8xf32>
    %82 = arith.truncf %81 : vector<8x8xf32> to vector<8x8xbf16>
    %c0_32 = arith.constant 0 : index
    %c0_33 = arith.constant 0 : index
    %83 = vector.load %arg16[%c0_32, %c0_33] : memref<8x64xbf16, #tpu.memory_space<vmem>>, vector<8x8xbf16>
    tpu.vector_store %arg16[%c0_32, %c0_33], %82 {strides = array<i32>} : memref<8x64xbf16, #tpu.memory_space<vmem>>, vector<8x8xbf16>,
    %84 = vector.extract_strided_slice %79 {offsets = [0, 4, 0], sizes = [8, 1, 8], strides = [1, 1, 1]} : vector<8x32x8xf32> to vector<8x1x8xf32>
    %85 = vector.shape_cast %84 : vector<8x1x8xf32> to vector<8x8xf32>
    %86 = arith.truncf %85 : vector<8x8xf32> to vector<8x8xbf16>
    %c0_34 = arith.constant 0 : index
    %c8 = arith.constant 8 : index
    %87 = vector.load %arg16[%c0_34, %c8] : memref<8x64xbf16, #tpu.memory_space<vmem>>, vector<8x8xbf16>
    tpu.vector_store %arg16[%c0_34, %c8], %86 {strides = array<i32>} : memref<8x64xbf16, #tpu.memory_space<vmem>>, vector<8x8xbf16>,
    %88 = vector.extract_strided_slice %79 {offsets = [0, 8, 0], sizes = [8, 1, 8], strides = [1, 1, 1]} : vector<8x32x8xf32> to vector<8x1x8xf32>
    %89 = vector.shape_cast %88 : vector<8x1x8xf32> to vector<8x8xf32>
    %90 = arith.truncf %89 : vector<8x8xf32> to vector<8x8xbf16>
    %c0_35 = arith.constant 0 : index
    %c16 = arith.constant 16 : index
    %91 = vector.load %arg16[%c0_35, %c16] : memref<8x64xbf16, #tpu.memory_space<vmem>>, vector<8x8xbf16>
    tpu.vector_store %arg16[%c0_35, %c16], %90 {strides = array<i32>} : memref<8x64xbf16, #tpu.memory_space<vmem>>, vector<8x8xbf16>,
    %92 = vector.extract_strided_slice %79 {offsets = [0, 12, 0], sizes = [8, 1, 8], strides = [1, 1, 1]} : vector<8x32x8xf32> to vector<8x1x8xf32>
    %93 = vector.shape_cast %92 : vector<8x1x8xf32> to vector<8x8xf32>
    %94 = arith.truncf %93 : vector<8x8xf32> to vector<8x8xbf16>
    %c0_36 = arith.constant 0 : index
    %c24 = arith.constant 24 : index
    %95 = vector.load %arg16[%c0_36, %c24] : memref<8x64xbf16, #tpu.memory_space<vmem>>, vector<8x8xbf16>
    tpu.vector_store %arg16[%c0_36, %c24], %94 {strides = array<i32>} : memref<8x64xbf16, #tpu.memory_space<vmem>>, vector<8x8xbf16>,
    %96 = vector.extract_strided_slice %79 {offsets = [0, 16, 0], sizes = [8, 1, 8], strides = [1, 1, 1]} : vector<8x32x8xf32> to vector<8x1x8xf32>
    %97 = vector.shape_cast %96 : vector<8x1x8xf32> to vector<8x8xf32>
    %98 = arith.truncf %97 : vector<8x8xf32> to vector<8x8xbf16>
    %c0_37 = arith.constant 0 : index
    %c32 = arith.constant 32 : index
    %99 = vector.load %arg16[%c0_37, %c32] : memref<8x64xbf16, #tpu.memory_space<vmem>>, vector<8x8xbf16>
    tpu.vector_store %arg16[%c0_37, %c32], %98 {strides = array<i32>} : memref<8x64xbf16, #tpu.memory_space<vmem>>, vector<8x8xbf16>,
    %100 = vector.extract_strided_slice %79 {offsets = [0, 20, 0], sizes = [8, 1, 8], strides = [1, 1, 1]} : vector<8x32x8xf32> to vector<8x1x8xf32>
    %101 = vector.shape_cast %100 : vector<8x1x8xf32> to vector<8x8xf32>
    %102 = arith.truncf %101 : vector<8x8xf32> to vector<8x8xbf16>
    %c0_38 = arith.constant 0 : index
    %c40 = arith.constant 40 : index
    %103 = vector.load %arg16[%c0_38, %c40] : memref<8x64xbf16, #tpu.memory_space<vmem>>, vector<8x8xbf16>
    tpu.vector_store %arg16[%c0_38, %c40], %102 {strides = array<i32>} : memref<8x64xbf16, #tpu.memory_space<vmem>>, vector<8x8xbf16>,
    %104 = vector.extract_strided_slice %79 {offsets = [0, 24, 0], sizes = [8, 1, 8], strides = [1, 1, 1]} : vector<8x32x8xf32> to vector<8x1x8xf32>
    %105 = vector.shape_cast %104 : vector<8x1x8xf32> to vector<8x8xf32>
    %106 = arith.truncf %105 : vector<8x8xf32> to vector<8x8xbf16>
    %c0_39 = arith.constant 0 : index
    %c48 = arith.constant 48 : index
    %107 = vector.load %arg16[%c0_39, %c48] : memref<8x64xbf16, #tpu.memory_space<vmem>>, vector<8x8xbf16>
    tpu.vector_store %arg16[%c0_39, %c48], %106 {strides = array<i32>} : memref<8x64xbf16, #tpu.memory_space<vmem>>, vector<8x8xbf16>,
    %108 = vector.extract_strided_slice %79 {offsets = [0, 28, 0], sizes = [8, 1, 8], strides = [1, 1, 1]} : vector<8x32x8xf32> to vector<8x1x8xf32>
    %109 = vector.shape_cast %108 : vector<8x1x8xf32> to vector<8x8xf32>
    %110 = arith.truncf %109 : vector<8x8xf32> to vector<8x8xbf16>
    %c0_40 = arith.constant 0 : index
    %c56 = arith.constant 56 : index
    %111 = vector.load %arg16[%c0_40, %c56] : memref<8x64xbf16, #tpu.memory_space<vmem>>, vector<8x8xbf16>
    tpu.vector_store %arg16[%c0_40, %c56], %110 {strides = array<i32>} : memref<8x64xbf16, #tpu.memory_space<vmem>>, vector<8x8xbf16>,
    %c0_41 = arith.constant 0 : index
    %c0_42 = arith.constant 0 : index
    %c0_43 = arith.constant 0 : index
    %112 = vector.load %arg1[%c0_41, %c0_42, %c0_43] : memref<8x64x32xbf16, #tpu.memory_space<vmem>>, vector<8x64x32xbf16>
    %113 = arith.extf %112 : vector<8x64x32xbf16> to vector<8x64x32xf32>
    %cst_44 = arith.constant dense<0.000000e+00> : vector<8x32xf32>
    %114 = vector.multi_reduction <add>, %113, %cst_44 [1] : vector<8x64x32xf32> to vector<8x32xf32>
    %cst_45 = arith.constant 6.400000e+01 : f32
    %115 = vector.broadcast %cst_45 : f32 to vector<8x32xf32>
    %116 = arith.divf %114, %115 : vector<8x32xf32>
    %c0_46 = arith.constant 0 : index
    %c0_47 = arith.constant 0 : index
    %117 = vector.load %arg4[%c0_46, %c0_47] : memref<32x48xbf16, #tpu.memory_space<vmem>>, vector<32x48xbf16>
    %118 = arith.truncf %116 : vector<8x32xf32> to vector<8x32xbf16>
    %cst_48 = arith.constant dense<0.000000e+00> : vector<8x48xf32>
    %119 = tpu.matmul %118, %117, %cst_48 {dimension_numbers = #tpu.dot_dimension_numbers<[1], [0], [0], [1], [0, 0, 1, 1], [], []>} : vector<8x32xbf16>, vector<32x48xbf16>, vector<8x48xf32> -> vector<8x48xf32>
    %c0_49 = arith.constant 0 : index
    %c0_50 = arith.constant 0 : index
    %120 = vector.load %arg16[%c0_49, %c0_50] : memref<8x64xbf16, #tpu.memory_space<vmem>>, vector<8x64xbf16>
    %c0_51 = arith.constant 0 : index
    %c0_52 = arith.constant 0 : index
    %121 = vector.load %arg5[%c0_51, %c0_52] : memref<64x48xbf16, #tpu.memory_space<vmem>>, vector<64x48xbf16>
    %cst_53 = arith.constant dense<0.000000e+00> : vector<8x48xf32>
    %122 = tpu.matmul %120, %121, %cst_53 {dimension_numbers = #tpu.dot_dimension_numbers<[1], [0], [0], [1], [0, 0, 1, 1], [], []>} : vector<8x64xbf16>, vector<64x48xbf16>, vector<8x48xf32> -> vector<8x48xf32>
    %123 = arith.addf %119, %122 : vector<8x48xf32>
    %c0_54 = arith.constant 0 : index
    %c0_55 = arith.constant 0 : index
    %124 = vector.load %arg6[%c0_54, %c0_55] : memref<48x24xbf16, #tpu.memory_space<vmem>>, vector<48x24xbf16>
    %125 = arith.truncf %123 : vector<8x48xf32> to vector<8x48xbf16>
    %cst_56 = arith.constant dense<0.000000e+00> : vector<8x24xf32>
    %126 = tpu.matmul %125, %124, %cst_56 {dimension_numbers = #tpu.dot_dimension_numbers<[1], [0], [0], [1], [0, 0, 1, 1], [], []>} : vector<8x48xbf16>, vector<48x24xbf16>, vector<8x24xf32> -> vector<8x24xf32>
    %cst_57 = arith.constant 0.000000e+00 : f32
    %127 = vector.broadcast %cst_57 : f32 to vector<8x24xf32>
    %128 = arith.maximumf %126, %127 : vector<8x24xf32>
    %c0_58 = arith.constant 0 : index
    %c0_59 = arith.constant 0 : index
    %129 = vector.load %arg7[%c0_58, %c0_59] : memref<48x24xbf16, #tpu.memory_space<vmem>>, vector<48x24xbf16>
    %130 = arith.truncf %123 : vector<8x48xf32> to vector<8x48xbf16>
    %cst_60 = arith.constant dense<0.000000e+00> : vector<8x24xf32>
    %131 = tpu.matmul %130, %129, %cst_60 {dimension_numbers = #tpu.dot_dimension_numbers<[1], [0], [0], [1], [0, 0, 1, 1], [], []>} : vector<8x48xbf16>, vector<48x24xbf16>, vector<8x24xf32> -> vector<8x24xf32>
    %cst_61 = arith.constant 0.000000e+00 : f32
    %132 = vector.broadcast %cst_61 : f32 to vector<8x24xf32>
    %133 = arith.maximumf %131, %132 : vector<8x24xf32>
    %c0_62 = arith.constant 0 : index
    %c0_63 = arith.constant 0 : index
    %134 = vector.load %arg8[%c0_62, %c0_63] : memref<24x4xbf16, #tpu.memory_space<vmem>>, vector<24x4xbf16>
    %135 = arith.truncf %128 : vector<8x24xf32> to vector<8x24xbf16>
    %cst_64 = arith.constant dense<0.000000e+00> : vector<8x4xf32>
    %136 = tpu.matmul %135, %134, %cst_64 {dimension_numbers = #tpu.dot_dimension_numbers<[1], [0], [0], [1], [0, 0, 1, 1], [], []>} : vector<8x24xbf16>, vector<24x4xbf16>, vector<8x4xf32> -> vector<8x4xf32>
    %c0_65 = arith.constant 0 : index
    %c0_66 = arith.constant 0 : index
    %137 = vector.load %arg9[%c0_65, %c0_66] : memref<24x2xbf16, #tpu.memory_space<vmem>>, vector<24x2xbf16>
    %138 = arith.truncf %128 : vector<8x24xf32> to vector<8x24xbf16>
    %cst_67 = arith.constant dense<0.000000e+00> : vector<8x2xf32>
    %139 = tpu.matmul %138, %137, %cst_67 {dimension_numbers = #tpu.dot_dimension_numbers<[1], [0], [0], [1], [0, 0, 1, 1], [], []>} : vector<8x24xbf16>, vector<24x2xbf16>, vector<8x2xf32> -> vector<8x2xf32>
    %c0_68 = arith.constant 0 : index
    %c0_69 = arith.constant 0 : index
    %140 = vector.load %arg10[%c0_68, %c0_69] : memref<24x2xbf16, #tpu.memory_space<vmem>>, vector<24x2xbf16>
    %141 = arith.truncf %133 : vector<8x24xf32> to vector<8x24xbf16>
    %cst_70 = arith.constant dense<0.000000e+00> : vector<8x2xf32>
    %142 = tpu.matmul %141, %140, %cst_70 {dimension_numbers = #tpu.dot_dimension_numbers<[1], [0], [0], [1], [0, 0, 1, 1], [], []>} : vector<8x24xbf16>, vector<24x2xbf16>, vector<8x2xf32> -> vector<8x2xf32>
    %143 = arith.addf %139, %142 : vector<8x2xf32>
    %cst_71 = arith.constant 0.000000e+00 : f32
    %144 = vector.broadcast %cst_71 : f32 to vector<8x2xf32>
    %145 = arith.subf %144, %143 : vector<8x2xf32>
    %146 = math.exp %145 : vector<8x2xf32>
    %cst_72 = arith.constant 1.000000e+00 : f32
    %147 = vector.broadcast %cst_72 : f32 to vector<8x2xf32>
    %148 = arith.addf %147, %146 : vector<8x2xf32>
    %cst_73 = arith.constant 1.000000e+00 : f32
    %149 = vector.broadcast %cst_73 : f32 to vector<8x2xf32>
    %150 = arith.divf %149, %148 : vector<8x2xf32>
    %151 = vector.extract_strided_slice %150 {offsets = [0, 0], sizes = [8, 1], strides = [1, 1]} : vector<8x2xf32> to vector<8x1xf32>
    %152 = vector.broadcast %151 : vector<8x1xf32> to vector<8x24xf32>
    %153 = arith.mulf %152, %128 : vector<8x24xf32>
    %154 = vector.extract_strided_slice %150 {offsets = [0, 1], sizes = [8, 1], strides = [1, 1]} : vector<8x2xf32> to vector<8x1xf32>
    %155 = vector.broadcast %154 : vector<8x1xf32> to vector<8x24xf32>
    %156 = arith.mulf %155, %133 : vector<8x24xf32>
    %c0_74 = arith.constant 0 : index
    %c0_75 = arith.constant 0 : index
    %157 = vector.load %arg11[%c0_74, %c0_75] : memref<24x48xbf16, #tpu.memory_space<vmem>>, vector<24x48xbf16>
    %158 = arith.truncf %153 : vector<8x24xf32> to vector<8x24xbf16>
    %cst_76 = arith.constant dense<0.000000e+00> : vector<8x48xf32>
    %159 = tpu.matmul %158, %157, %cst_76 {dimension_numbers = #tpu.dot_dimension_numbers<[1], [0], [0], [1], [0, 0, 1, 1], [], []>} : vector<8x24xbf16>, vector<24x48xbf16>, vector<8x48xf32> -> vector<8x48xf32>
    %c0_77 = arith.constant 0 : index
    %c0_78 = arith.constant 0 : index
    %160 = vector.load %arg12[%c0_77, %c0_78] : memref<24x48xbf16, #tpu.memory_space<vmem>>, vector<24x48xbf16>
    %161 = arith.truncf %156 : vector<8x24xf32> to vector<8x24xbf16>
    %cst_79 = arith.constant dense<0.000000e+00> : vector<8x48xf32>
    %162 = tpu.matmul %161, %160, %cst_79 {dimension_numbers = #tpu.dot_dimension_numbers<[1], [0], [0], [1], [0, 0, 1, 1], [], []>} : vector<8x24xbf16>, vector<24x48xbf16>, vector<8x48xf32> -> vector<8x48xf32>
    %163 = arith.addf %159, %162 : vector<8x48xf32>
    %cst_80 = arith.constant 0.000000e+00 : f32
    %164 = vector.broadcast %cst_80 : f32 to vector<8x48xf32>
    %165 = arith.maximumf %163, %164 : vector<8x48xf32>
    %c0_81 = arith.constant 0 : index
    %c0_82 = arith.constant 0 : index
    %166 = vector.load %arg13[%c0_81, %c0_82] : memref<48x32xbf16, #tpu.memory_space<vmem>>, vector<48x32xbf16>
    %167 = arith.truncf %165 : vector<8x48xf32> to vector<8x48xbf16>
    %cst_83 = arith.constant dense<0.000000e+00> : vector<8x32xf32>
    %168 = tpu.matmul %167, %166, %cst_83 {dimension_numbers = #tpu.dot_dimension_numbers<[1], [0], [0], [1], [0, 0, 1, 1], [], []>} : vector<8x48xbf16>, vector<48x32xbf16>, vector<8x32xf32> -> vector<8x32xf32>
    %cst_84 = arith.constant 0.000000e+00 : f32
    %169 = vector.broadcast %cst_84 : f32 to vector<8x32xf32>
    %170 = arith.maximumf %168, %169 : vector<8x32xf32>
    %c0_85 = arith.constant 0 : index
    %c0_86 = arith.constant 0 : index
    %171 = vector.load %arg14[%c0_85, %c0_86] : memref<32x5xbf16, #tpu.memory_space<vmem>>, vector<32x5xbf16>
    %172 = arith.truncf %170 : vector<8x32xf32> to vector<8x32xbf16>
    %cst_87 = arith.constant dense<0.000000e+00> : vector<8x5xf32>
    %173 = tpu.matmul %172, %171, %cst_87 {dimension_numbers = #tpu.dot_dimension_numbers<[1], [0], [0], [1], [0, 0, 1, 1], [], []>} : vector<8x32xbf16>, vector<32x5xbf16>, vector<8x5xf32> -> vector<8x5xf32>
    %cst_88 = arith.constant dense<0xFF800000> : vector<8xf32>
    %174 = vector.multi_reduction <maximumf>, %173, %cst_88 [1] : vector<8x5xf32> to vector<8xf32>
    %175 = vector.shape_cast %174 : vector<8xf32> to vector<8x1xf32>
    %176 = vector.broadcast %175 : vector<8x1xf32> to vector<8x5xf32>
    %177 = arith.subf %173, %176 : vector<8x5xf32>
    %178 = math.exp %177 : vector<8x5xf32>
    %cst_89 = arith.constant dense<0.000000e+00> : vector<8xf32>
    %179 = vector.multi_reduction <add>, %178, %cst_89 [1] : vector<8x5xf32> to vector<8xf32>
    %180 = vector.shape_cast %179 : vector<8xf32> to vector<8x1xf32>
    %181 = vector.broadcast %180 : vector<8x1xf32> to vector<8x5xf32>
    %182 = arith.divf %178, %181 : vector<8x5xf32>
    %c0_90 = arith.constant 0 : index
    %c0_91 = arith.constant 0 : index
    %183 = vector.load %arg15[%c0_90, %c0_91] : memref<8x9xf32, #tpu.memory_space<vmem>>, vector<8x4xf32>
    tpu.vector_store %arg15[%c0_90, %c0_91], %136 {strides = array<i32>} : memref<8x9xf32, #tpu.memory_space<vmem>>, vector<8x4xf32>,
    %c0_92 = arith.constant 0 : index
    %c4 = arith.constant 4 : index
    %184 = vector.load %arg15[%c0_92, %c4] : memref<8x9xf32, #tpu.memory_space<vmem>>, vector<8x5xf32>
    tpu.vector_store %arg15[%c0_92, %c4], %182 {strides = array<i32>} : memref<8x9xf32, #tpu.memory_space<vmem>>, vector<8x5xf32>,
    return
  }
  func.func @transform_0(%arg0: i32) -> (i32, i32, i32) {
    %c0_i32 = arith.constant 0 : i32
    %c0_i32_0 = arith.constant 0 : i32
    %c0_i32_1 = arith.constant 0 : i32
    return %arg0, %c0_i32, %c0_i32_0 : i32, i32, i32
  }
  func.func @transform_1(%arg0: i32) -> (i32, i32) {
    %c0_i32 = arith.constant 0 : i32
    %c0_i32_0 = arith.constant 0 : i32
    return %arg0, %c0_i32 : i32, i32
  }
  func.func @transform_2(%arg0: i32) -> (i32, i32) {
    %c0_i32 = arith.constant 0 : i32
    %c0_i32_0 = arith.constant 0 : i32
    %c0_i32_1 = arith.constant 0 : i32
    return %c0_i32, %c0_i32_0 : i32, i32
  }
  func.func @transform_3(%arg0: i32) -> (i32, i32) {
    %c0_i32 = arith.constant 0 : i32
    %c0_i32_0 = arith.constant 0 : i32
    %c0_i32_1 = arith.constant 0 : i32
    return %c0_i32, %c0_i32_0 : i32, i32
  }
  func.func @transform_4(%arg0: i32) -> (i32, i32) {
    %c0_i32 = arith.constant 0 : i32
    %c0_i32_0 = arith.constant 0 : i32
    %c0_i32_1 = arith.constant 0 : i32
    return %c0_i32, %c0_i32_0 : i32, i32
  }
  func.func @transform_5(%arg0: i32) -> (i32, i32) {
    %c0_i32 = arith.constant 0 : i32
    %c0_i32_0 = arith.constant 0 : i32
    %c0_i32_1 = arith.constant 0 : i32
    return %c0_i32, %c0_i32_0 : i32, i32
  }
  func.func @transform_6(%arg0: i32) -> (i32, i32) {
    %c0_i32 = arith.constant 0 : i32
    %c0_i32_0 = arith.constant 0 : i32
    %c0_i32_1 = arith.constant 0 : i32
    return %c0_i32, %c0_i32_0 : i32, i32
  }
  func.func @transform_7(%arg0: i32) -> (i32, i32) {
    %c0_i32 = arith.constant 0 : i32
    %c0_i32_0 = arith.constant 0 : i32
    %c0_i32_1 = arith.constant 0 : i32
    return %c0_i32, %c0_i32_0 : i32, i32
  }
  func.func @transform_8(%arg0: i32) -> (i32, i32) {
    %c0_i32 = arith.constant 0 : i32
    %c0_i32_0 = arith.constant 0 : i32
    %c0_i32_1 = arith.constant 0 : i32
    return %c0_i32, %c0_i32_0 : i32, i32
  }
  func.func @transform_9(%arg0: i32) -> (i32, i32) {
    %c0_i32 = arith.constant 0 : i32
    %c0_i32_0 = arith.constant 0 : i32
    %c0_i32_1 = arith.constant 0 : i32
    return %c0_i32, %c0_i32_0 : i32, i32
  }
  func.func @transform_10(%arg0: i32) -> (i32, i32) {
    %c0_i32 = arith.constant 0 : i32
    %c0_i32_0 = arith.constant 0 : i32
    %c0_i32_1 = arith.constant 0 : i32
    return %c0_i32, %c0_i32_0 : i32, i32
  }
  func.func @transform_11(%arg0: i32) -> (i32, i32) {
    %c0_i32 = arith.constant 0 : i32
    %c0_i32_0 = arith.constant 0 : i32
    %c0_i32_1 = arith.constant 0 : i32
    return %c0_i32, %c0_i32_0 : i32, i32
  }
  func.func @transform_12(%arg0: i32) -> (i32, i32) {
    %c0_i32 = arith.constant 0 : i32
    %c0_i32_0 = arith.constant 0 : i32
    %c0_i32_1 = arith.constant 0 : i32
    return %c0_i32, %c0_i32_0 : i32, i32
  }
  func.func @transform_13(%arg0: i32) -> (i32, i32) {
    %c0_i32 = arith.constant 0 : i32
    %c0_i32_0 = arith.constant 0 : i32
    %c0_i32_1 = arith.constant 0 : i32
    return %c0_i32, %c0_i32_0 : i32, i32
  }
  func.func @transform_14(%arg0: i32) -> (i32, i32) {
    %c0_i32 = arith.constant 0 : i32
    %c0_i32_0 = arith.constant 0 : i32
    return %arg0, %c0_i32 : i32, i32
  }
}

module attributes {stable_mosaic.version = 11 : i64} {
  func.func @_samp_fused_kernel(%arg0: i32, %arg1: memref<8x64x32xbf16, #tpu.memory_space<vmem>>, %arg2: memref<256x32xbf16, #tpu.memory_space<vmem>>, %arg3: memref<32x8xbf16, #tpu.memory_space<vmem>>, %arg4: memref<32x48xbf16, #tpu.memory_space<vmem>>, %arg5: memref<64x48xbf16, #tpu.memory_space<vmem>>, %arg6: memref<48x24xbf16, #tpu.memory_space<vmem>>, %arg7: memref<48x24xbf16, #tpu.memory_space<vmem>>, %arg8: memref<24x4xbf16, #tpu.memory_space<vmem>>, %arg9: memref<24x2xbf16, #tpu.memory_space<vmem>>, %arg10: memref<24x2xbf16, #tpu.memory_space<vmem>>, %arg11: memref<24x48xbf16, #tpu.memory_space<vmem>>, %arg12: memref<24x48xbf16, #tpu.memory_space<vmem>>, %arg13: memref<48x32xbf16, #tpu.memory_space<vmem>>, %arg14: memref<32x5xbf16, #tpu.memory_space<vmem>>, %arg15: memref<8x9xf32, #tpu.memory_space<vmem>>, %arg16: memref<8x64xbf16, #tpu.memory_space<vmem>>) attributes {dimension_semantics = [#tpu.dimension_semantics<parallel>], iteration_bounds = array<i64: 2>, scalar_prefetch = 0 : i64, scratch_operands = 1 : i64, tpu.core_type = #tpu.core_type<tc>, window_params = [{transform_indices = @transform_0, window_bounds = array<i64: 8, 64, 32>}, {transform_indices = @transform_1, window_bounds = array<i64: 256, 32>}, {pipeline_mode = #tpu.pipeline_mode<synchronous>, transform_indices = @transform_2, window_bounds = array<i64: 32, 8>}, {pipeline_mode = #tpu.pipeline_mode<synchronous>, transform_indices = @transform_3, window_bounds = array<i64: 32, 48>}, {pipeline_mode = #tpu.pipeline_mode<synchronous>, transform_indices = @transform_4, window_bounds = array<i64: 64, 48>}, {pipeline_mode = #tpu.pipeline_mode<synchronous>, transform_indices = @transform_5, window_bounds = array<i64: 48, 24>}, {pipeline_mode = #tpu.pipeline_mode<synchronous>, transform_indices = @transform_6, window_bounds = array<i64: 48, 24>}, {pipeline_mode = #tpu.pipeline_mode<synchronous>, transform_indices = @transform_7, window_bounds = array<i64: 24, 4>}, {pipeline_mode = #tpu.pipeline_mode<synchronous>, transform_indices = @transform_8, window_bounds = array<i64: 24, 2>}, {pipeline_mode = #tpu.pipeline_mode<synchronous>, transform_indices = @transform_9, window_bounds = array<i64: 24, 2>}, {pipeline_mode = #tpu.pipeline_mode<synchronous>, transform_indices = @transform_10, window_bounds = array<i64: 24, 48>}, {pipeline_mode = #tpu.pipeline_mode<synchronous>, transform_indices = @transform_11, window_bounds = array<i64: 24, 48>}, {pipeline_mode = #tpu.pipeline_mode<synchronous>, transform_indices = @transform_12, window_bounds = array<i64: 48, 32>}, {pipeline_mode = #tpu.pipeline_mode<synchronous>, transform_indices = @transform_13, window_bounds = array<i64: 32, 5>}, {transform_indices = @transform_14, window_bounds = array<i64: 8, 9>}]} {
    %c0 = arith.constant 0 : index
    %c0_0 = arith.constant 0 : index
    %0 = vector.load %arg2[%c0, %c0_0] : memref<256x32xbf16, #tpu.memory_space<vmem>>, vector<256x32xbf16>
    %1 = arith.extf %0 : vector<256x32xbf16> to vector<256x32xf32>
    %2 = tpu.iota {dimensions = array<i32: 1>} : vector<256x32xi32>
    %c0_i32 = arith.constant 0 : i32
    %3 = vector.broadcast %c0_i32 : i32 to vector<256x32xi32>
    %4 = arith.cmpi eq, %2, %3 : vector<256x32xi32>
    %c31_i32 = arith.constant 31 : i32
    %5 = vector.broadcast %c31_i32 : i32 to vector<256x32xi32>
    %6 = arith.cmpi eq, %2, %5 : vector<256x32xi32>
    %c31_i32_1 = arith.constant 31 : i32
    %7 = tpu.dynamic_rotate %1 by %c31_i32_1 dim 1 : vector<256x32xf32>, i32 -> vector<256x32xf32>
    %cst = arith.constant 0xFF800000 : f32
    %8 = vector.broadcast %cst : f32 to vector<256x32xf32>
    %9 = arith.select %6, %8, %7 : vector<256x32xi1>, vector<256x32xf32>
    %c1_i32 = arith.constant 1 : i32
    %10 = tpu.dynamic_rotate %1 by %c1_i32 dim 1 : vector<256x32xf32>, i32 -> vector<256x32xf32>
    %cst_2 = arith.constant 0xFF800000 : f32
    %11 = vector.broadcast %cst_2 : f32 to vector<256x32xf32>
    %12 = arith.select %4, %11, %10 : vector<256x32xi1>, vector<256x32xf32>
    %13 = arith.maximumf %9, %1 : vector<256x32xf32>
    %14 = arith.maximumf %13, %12 : vector<256x32xf32>
    %c31_i32_3 = arith.constant 31 : i32
    %15 = tpu.dynamic_rotate %14 by %c31_i32_3 dim 1 : vector<256x32xf32>, i32 -> vector<256x32xf32>
    %cst_4 = arith.constant 0xFF800000 : f32
    %16 = vector.broadcast %cst_4 : f32 to vector<256x32xf32>
    %17 = arith.select %6, %16, %15 : vector<256x32xi1>, vector<256x32xf32>
    %c1_i32_5 = arith.constant 1 : i32
    %18 = tpu.dynamic_rotate %14 by %c1_i32_5 dim 1 : vector<256x32xf32>, i32 -> vector<256x32xf32>
    %cst_6 = arith.constant 0xFF800000 : f32
    %19 = vector.broadcast %cst_6 : f32 to vector<256x32xf32>
    %20 = arith.select %4, %19, %18 : vector<256x32xi1>, vector<256x32xf32>
    %21 = arith.maximumf %17, %14 : vector<256x32xf32>
    %22 = arith.maximumf %21, %20 : vector<256x32xf32>
    %c31_i32_7 = arith.constant 31 : i32
    %23 = tpu.dynamic_rotate %22 by %c31_i32_7 dim 1 : vector<256x32xf32>, i32 -> vector<256x32xf32>
    %cst_8 = arith.constant 0xFF800000 : f32
    %24 = vector.broadcast %cst_8 : f32 to vector<256x32xf32>
    %25 = arith.select %6, %24, %23 : vector<256x32xi1>, vector<256x32xf32>
    %c1_i32_9 = arith.constant 1 : i32
    %26 = tpu.dynamic_rotate %22 by %c1_i32_9 dim 1 : vector<256x32xf32>, i32 -> vector<256x32xf32>
    %cst_10 = arith.constant 0xFF800000 : f32
    %27 = vector.broadcast %cst_10 : f32 to vector<256x32xf32>
    %28 = arith.select %4, %27, %26 : vector<256x32xi1>, vector<256x32xf32>
    %29 = arith.maximumf %25, %22 : vector<256x32xf32>
    %30 = arith.maximumf %29, %28 : vector<256x32xf32>
    %31 = arith.truncf %30 : vector<256x32xf32> to vector<256x32xbf16>
    %c0_11 = arith.constant 0 : index
    %c0_12 = arith.constant 0 : index
    %32 = vector.load %arg3[%c0_11, %c0_12] : memref<32x8xbf16, #tpu.memory_space<vmem>>, vector<32x8xbf16>
    %cst_13 = arith.constant dense<0.000000e+00> : vector<256x8xf32>
    %33 = tpu.matmul %31, %32, %cst_13 {dimension_numbers = #tpu.dot_dimension_numbers<[1], [0], [0], [1], [0, 0, 1, 1], [], []>} : vector<256x32xbf16>, vector<32x8xbf16>, vector<256x8xf32> -> vector<256x8xf32>
    %34 = tpu.iota {dimensions = array<i32: 0>} : vector<256x8xi32>
    %c32_i32 = arith.constant 32 : i32
    %c0_i32_14 = arith.constant 0 : i32
    %35 = arith.cmpi eq, %c32_i32, %c0_i32_14 : i32
    %c1_i32_15 = arith.constant 1 : i32
    %36 = arith.select %35, %c1_i32_15, %c32_i32 : i32
    %37 = vector.broadcast %36 : i32 to vector<256x8xi32>
    %38 = arith.remsi %34, %37 : vector<256x8xi32>
    %c0_i32_16 = arith.constant 0 : i32
    %39 = vector.broadcast %c0_i32_16 : i32 to vector<256x8xi32>
    %40 = arith.cmpi ne, %38, %39 : vector<256x8xi32>
    %c0_i32_17 = arith.constant 0 : i32
    %41 = vector.broadcast %c0_i32_17 : i32 to vector<256x8xi32>
    %42 = arith.cmpi slt, %38, %41 : vector<256x8xi32>
    %c0_i32_18 = arith.constant 0 : i32
    %43 = arith.cmpi slt, %36, %c0_i32_18 : i32
    %44 = vector.broadcast %43 : i1 to vector<256x8xi1>
    %45 = vector.broadcast %44 : vector<256x8xi1> to vector<256x8xi1>
    %46 = arith.xori %42, %45 : vector<256x8xi1>
    %47 = arith.andi %46, %40 : vector<256x8xi1>
    %48 = vector.broadcast %36 : i32 to vector<256x8xi32>
    %49 = arith.addi %38, %48 : vector<256x8xi32>
    %50 = arith.select %47, %49, %38 : vector<256x8xi1>, vector<256x8xi32>
    %c0_i32_19 = arith.constant 0 : i32
    %51 = vector.broadcast %c0_i32_19 : i32 to vector<256x8xi32>
    %52 = arith.cmpi eq, %50, %51 : vector<256x8xi32>
    %c31_i32_20 = arith.constant 31 : i32
    %53 = vector.broadcast %c31_i32_20 : i32 to vector<256x8xi32>
    %54 = arith.cmpi eq, %50, %53 : vector<256x8xi32>
    %c255_i32 = arith.constant 255 : i32
    %55 = tpu.dynamic_rotate %33 by %c255_i32 dim 0 : vector<256x8xf32>, i32 -> vector<256x8xf32>
    %cst_21 = arith.constant 0xFF800000 : f32
    %56 = vector.broadcast %cst_21 : f32 to vector<256x8xf32>
    %57 = arith.select %54, %56, %55 : vector<256x8xi1>, vector<256x8xf32>
    %c1_i32_22 = arith.constant 1 : i32
    %58 = tpu.dynamic_rotate %33 by %c1_i32_22 dim 0 : vector<256x8xf32>, i32 -> vector<256x8xf32>
    %cst_23 = arith.constant 0xFF800000 : f32
    %59 = vector.broadcast %cst_23 : f32 to vector<256x8xf32>
    %60 = arith.select %52, %59, %58 : vector<256x8xi1>, vector<256x8xf32>
    %61 = arith.maximumf %57, %33 : vector<256x8xf32>
    %62 = arith.maximumf %61, %60 : vector<256x8xf32>
    %c255_i32_24 = arith.constant 255 : i32
    %63 = tpu.dynamic_rotate %62 by %c255_i32_24 dim 0 : vector<256x8xf32>, i32 -> vector<256x8xf32>
    %cst_25 = arith.constant 0xFF800000 : f32
    %64 = vector.broadcast %cst_25 : f32 to vector<256x8xf32>
    %65 = arith.select %54, %64, %63 : vector<256x8xi1>, vector<256x8xf32>
    %c1_i32_26 = arith.constant 1 : i32
    %66 = tpu.dynamic_rotate %62 by %c1_i32_26 dim 0 : vector<256x8xf32>, i32 -> vector<256x8xf32>
    %cst_27 = arith.constant 0xFF800000 : f32
    %67 = vector.broadcast %cst_27 : f32 to vector<256x8xf32>
    %68 = arith.select %52, %67, %66 : vector<256x8xi1>, vector<256x8xf32>
    %69 = arith.maximumf %65, %62 : vector<256x8xf32>
    %70 = arith.maximumf %69, %68 : vector<256x8xf32>
    %c255_i32_28 = arith.constant 255 : i32
    %71 = tpu.dynamic_rotate %70 by %c255_i32_28 dim 0 : vector<256x8xf32>, i32 -> vector<256x8xf32>
    %cst_29 = arith.constant 0xFF800000 : f32
    %72 = vector.broadcast %cst_29 : f32 to vector<256x8xf32>
    %73 = arith.select %54, %72, %71 : vector<256x8xi1>, vector<256x8xf32>
    %c1_i32_30 = arith.constant 1 : i32
    %74 = tpu.dynamic_rotate %70 by %c1_i32_30 dim 0 : vector<256x8xf32>, i32 -> vector<256x8xf32>
    %cst_31 = arith.constant 0xFF800000 : f32
    %75 = vector.broadcast %cst_31 : f32 to vector<256x8xf32>
    %76 = arith.select %52, %75, %74 : vector<256x8xi1>, vector<256x8xf32>
    %77 = arith.maximumf %73, %70 : vector<256x8xf32>
    %78 = arith.maximumf %77, %76 : vector<256x8xf32>
    %79 = vector.shape_cast %78 : vector<256x8xf32> to vector<8x32x8xf32>
    %80 = vector.extract_strided_slice %79 {offsets = [0, 0, 0], sizes = [8, 1, 8], strides = [1, 1, 1]} : vector<8x32x8xf32> to vector<8x1x8xf32>
    %81 = vector.shape_cast %80 : vector<8x1x8xf32> to vector<8x8xf32>
    %82 = arith.truncf %81 : vector<8x8xf32> to vector<8x8xbf16>
    %c0_32 = arith.constant 0 : index
    %c0_33 = arith.constant 0 : index
    %83 = vector.load %arg16[%c0_32, %c0_33] : memref<8x64xbf16, #tpu.memory_space<vmem>>, vector<8x8xbf16>
    tpu.vector_store %arg16[%c0_32, %c0_33], %82 {strides = array<i32>} : memref<8x64xbf16, #tpu.memory_space<vmem>>, vector<8x8xbf16>,
    %84 = vector.extract_strided_slice %79 {offsets = [0, 4, 0], sizes = [8, 1, 8], strides = [1, 1, 1]} : vector<8x32x8xf32> to vector<8x1x8xf32>
    %85 = vector.shape_cast %84 : vector<8x1x8xf32> to vector<8x8xf32>
    %86 = arith.truncf %85 : vector<8x8xf32> to vector<8x8xbf16>
    %c0_34 = arith.constant 0 : index
    %c8 = arith.constant 8 : index
    %87 = vector.load %arg16[%c0_34, %c8] : memref<8x64xbf16, #tpu.memory_space<vmem>>, vector<8x8xbf16>
    tpu.vector_store %arg16[%c0_34, %c8], %86 {strides = array<i32>} : memref<8x64xbf16, #tpu.memory_space<vmem>>, vector<8x8xbf16>,
    %88 = vector.extract_strided_slice %79 {offsets = [0, 8, 0], sizes = [8, 1, 8], strides = [1, 1, 1]} : vector<8x32x8xf32> to vector<8x1x8xf32>
    %89 = vector.shape_cast %88 : vector<8x1x8xf32> to vector<8x8xf32>
    %90 = arith.truncf %89 : vector<8x8xf32> to vector<8x8xbf16>
    %c0_35 = arith.constant 0 : index
    %c16 = arith.constant 16 : index
    %91 = vector.load %arg16[%c0_35, %c16] : memref<8x64xbf16, #tpu.memory_space<vmem>>, vector<8x8xbf16>
    tpu.vector_store %arg16[%c0_35, %c16], %90 {strides = array<i32>} : memref<8x64xbf16, #tpu.memory_space<vmem>>, vector<8x8xbf16>,
    %92 = vector.extract_strided_slice %79 {offsets = [0, 12, 0], sizes = [8, 1, 8], strides = [1, 1, 1]} : vector<8x32x8xf32> to vector<8x1x8xf32>
    %93 = vector.shape_cast %92 : vector<8x1x8xf32> to vector<8x8xf32>
    %94 = arith.truncf %93 : vector<8x8xf32> to vector<8x8xbf16>
    %c0_36 = arith.constant 0 : index
    %c24 = arith.constant 24 : index
    %95 = vector.load %arg16[%c0_36, %c24] : memref<8x64xbf16, #tpu.memory_space<vmem>>, vector<8x8xbf16>
    tpu.vector_store %arg16[%c0_36, %c24], %94 {strides = array<i32>} : memref<8x64xbf16, #tpu.memory_space<vmem>>, vector<8x8xbf16>,
    %96 = vector.extract_strided_slice %79 {offsets = [0, 16, 0], sizes = [8, 1, 8], strides = [1, 1, 1]} : vector<8x32x8xf32> to vector<8x1x8xf32>
    %97 = vector.shape_cast %96 : vector<8x1x8xf32> to vector<8x8xf32>
    %98 = arith.truncf %97 : vector<8x8xf32> to vector<8x8xbf16>
    %c0_37 = arith.constant 0 : index
    %c32 = arith.constant 32 : index
    %99 = vector.load %arg16[%c0_37, %c32] : memref<8x64xbf16, #tpu.memory_space<vmem>>, vector<8x8xbf16>
    tpu.vector_store %arg16[%c0_37, %c32], %98 {strides = array<i32>} : memref<8x64xbf16, #tpu.memory_space<vmem>>, vector<8x8xbf16>,
    %100 = vector.extract_strided_slice %79 {offsets = [0, 20, 0], sizes = [8, 1, 8], strides = [1, 1, 1]} : vector<8x32x8xf32> to vector<8x1x8xf32>
    %101 = vector.shape_cast %100 : vector<8x1x8xf32> to vector<8x8xf32>
    %102 = arith.truncf %101 : vector<8x8xf32> to vector<8x8xbf16>
    %c0_38 = arith.constant 0 : index
    %c40 = arith.constant 40 : index
    %103 = vector.load %arg16[%c0_38, %c40] : memref<8x64xbf16, #tpu.memory_space<vmem>>, vector<8x8xbf16>
    tpu.vector_store %arg16[%c0_38, %c40], %102 {strides = array<i32>} : memref<8x64xbf16, #tpu.memory_space<vmem>>, vector<8x8xbf16>,
    %104 = vector.extract_strided_slice %79 {offsets = [0, 24, 0], sizes = [8, 1, 8], strides = [1, 1, 1]} : vector<8x32x8xf32> to vector<8x1x8xf32>
    %105 = vector.shape_cast %104 : vector<8x1x8xf32> to vector<8x8xf32>
    %106 = arith.truncf %105 : vector<8x8xf32> to vector<8x8xbf16>
    %c0_39 = arith.constant 0 : index
    %c48 = arith.constant 48 : index
    %107 = vector.load %arg16[%c0_39, %c48] : memref<8x64xbf16, #tpu.memory_space<vmem>>, vector<8x8xbf16>
    tpu.vector_store %arg16[%c0_39, %c48], %106 {strides = array<i32>} : memref<8x64xbf16, #tpu.memory_space<vmem>>, vector<8x8xbf16>,
    %108 = vector.extract_strided_slice %79 {offsets = [0, 28, 0], sizes = [8, 1, 8], strides = [1, 1, 1]} : vector<8x32x8xf32> to vector<8x1x8xf32>
    %109 = vector.shape_cast %108 : vector<8x1x8xf32> to vector<8x8xf32>
    %110 = arith.truncf %109 : vector<8x8xf32> to vector<8x8xbf16>
    %c0_40 = arith.constant 0 : index
    %c56 = arith.constant 56 : index
    %111 = vector.load %arg16[%c0_40, %c56] : memref<8x64xbf16, #tpu.memory_space<vmem>>, vector<8x8xbf16>
    tpu.vector_store %arg16[%c0_40, %c56], %110 {strides = array<i32>} : memref<8x64xbf16, #tpu.memory_space<vmem>>, vector<8x8xbf16>,
    %c0_41 = arith.constant 0 : index
    %c0_42 = arith.constant 0 : index
    %c0_43 = arith.constant 0 : index
    %112 = vector.load %arg1[%c0_41, %c0_42, %c0_43] : memref<8x64x32xbf16, #tpu.memory_space<vmem>>, vector<8x64x32xbf16>
    %113 = arith.extf %112 : vector<8x64x32xbf16> to vector<8x64x32xf32>
    %cst_44 = arith.constant dense<0.000000e+00> : vector<8x32xf32>
    %114 = vector.multi_reduction <add>, %113, %cst_44 [1] : vector<8x64x32xf32> to vector<8x32xf32>
    %cst_45 = arith.constant 6.400000e+01 : f32
    %115 = vector.broadcast %cst_45 : f32 to vector<8x32xf32>
    %116 = arith.divf %114, %115 : vector<8x32xf32>
    %c0_46 = arith.constant 0 : index
    %c0_47 = arith.constant 0 : index
    %117 = vector.load %arg4[%c0_46, %c0_47] : memref<32x48xbf16, #tpu.memory_space<vmem>>, vector<32x48xbf16>
    %118 = arith.truncf %116 : vector<8x32xf32> to vector<8x32xbf16>
    %cst_48 = arith.constant dense<0.000000e+00> : vector<8x48xf32>
    %119 = tpu.matmul %118, %117, %cst_48 {dimension_numbers = #tpu.dot_dimension_numbers<[1], [0], [0], [1], [0, 0, 1, 1], [], []>} : vector<8x32xbf16>, vector<32x48xbf16>, vector<8x48xf32> -> vector<8x48xf32>
    %c0_49 = arith.constant 0 : index
    %c0_50 = arith.constant 0 : index
    %120 = vector.load %arg16[%c0_49, %c0_50] : memref<8x64xbf16, #tpu.memory_space<vmem>>, vector<8x64xbf16>
    %c0_51 = arith.constant 0 : index
    %c0_52 = arith.constant 0 : index
    %121 = vector.load %arg5[%c0_51, %c0_52] : memref<64x48xbf16, #tpu.memory_space<vmem>>, vector<64x48xbf16>
    %cst_53 = arith.constant dense<0.000000e+00> : vector<8x48xf32>
    %122 = tpu.matmul %120, %121, %cst_53 {dimension_numbers = #tpu.dot_dimension_numbers<[1], [0], [0], [1], [0, 0, 1, 1], [], []>} : vector<8x64xbf16>, vector<64x48xbf16>, vector<8x48xf32> -> vector<8x48xf32>
    %123 = arith.addf %119, %122 : vector<8x48xf32>
    %c0_54 = arith.constant 0 : index
    %c0_55 = arith.constant 0 : index
    %124 = vector.load %arg6[%c0_54, %c0_55] : memref<48x24xbf16, #tpu.memory_space<vmem>>, vector<48x24xbf16>
    %125 = arith.truncf %123 : vector<8x48xf32> to vector<8x48xbf16>
    %cst_56 = arith.constant dense<0.000000e+00> : vector<8x24xf32>
    %126 = tpu.matmul %125, %124, %cst_56 {dimension_numbers = #tpu.dot_dimension_numbers<[1], [0], [0], [1], [0, 0, 1, 1], [], []>} : vector<8x48xbf16>, vector<48x24xbf16>, vector<8x24xf32> -> vector<8x24xf32>
    %cst_57 = arith.constant 0.000000e+00 : f32
    %127 = vector.broadcast %cst_57 : f32 to vector<8x24xf32>
    %128 = arith.maximumf %126, %127 : vector<8x24xf32>
    %c0_58 = arith.constant 0 : index
    %c0_59 = arith.constant 0 : index
    %129 = vector.load %arg7[%c0_58, %c0_59] : memref<48x24xbf16, #tpu.memory_space<vmem>>, vector<48x24xbf16>
    %130 = arith.truncf %123 : vector<8x48xf32> to vector<8x48xbf16>
    %cst_60 = arith.constant dense<0.000000e+00> : vector<8x24xf32>
    %131 = tpu.matmul %130, %129, %cst_60 {dimension_numbers = #tpu.dot_dimension_numbers<[1], [0], [0], [1], [0, 0, 1, 1], [], []>} : vector<8x48xbf16>, vector<48x24xbf16>, vector<8x24xf32> -> vector<8x24xf32>
    %cst_61 = arith.constant 0.000000e+00 : f32
    %132 = vector.broadcast %cst_61 : f32 to vector<8x24xf32>
    %133 = arith.maximumf %131, %132 : vector<8x24xf32>
    %c0_62 = arith.constant 0 : index
    %c0_63 = arith.constant 0 : index
    %134 = vector.load %arg8[%c0_62, %c0_63] : memref<24x4xbf16, #tpu.memory_space<vmem>>, vector<24x4xbf16>
    %135 = arith.truncf %128 : vector<8x24xf32> to vector<8x24xbf16>
    %cst_64 = arith.constant dense<0.000000e+00> : vector<8x4xf32>
    %136 = tpu.matmul %135, %134, %cst_64 {dimension_numbers = #tpu.dot_dimension_numbers<[1], [0], [0], [1], [0, 0, 1, 1], [], []>} : vector<8x24xbf16>, vector<24x4xbf16>, vector<8x4xf32> -> vector<8x4xf32>
    %c0_65 = arith.constant 0 : index
    %c0_66 = arith.constant 0 : index
    %137 = vector.load %arg9[%c0_65, %c0_66] : memref<24x2xbf16, #tpu.memory_space<vmem>>, vector<24x2xbf16>
    %138 = arith.truncf %128 : vector<8x24xf32> to vector<8x24xbf16>
    %cst_67 = arith.constant dense<0.000000e+00> : vector<8x2xf32>
    %139 = tpu.matmul %138, %137, %cst_67 {dimension_numbers = #tpu.dot_dimension_numbers<[1], [0], [0], [1], [0, 0, 1, 1], [], []>} : vector<8x24xbf16>, vector<24x2xbf16>, vector<8x2xf32> -> vector<8x2xf32>
    %c0_68 = arith.constant 0 : index
    %c0_69 = arith.constant 0 : index
    %140 = vector.load %arg10[%c0_68, %c0_69] : memref<24x2xbf16, #tpu.memory_space<vmem>>, vector<24x2xbf16>
    %141 = arith.truncf %133 : vector<8x24xf32> to vector<8x24xbf16>
    %cst_70 = arith.constant dense<0.000000e+00> : vector<8x2xf32>
    %142 = tpu.matmul %141, %140, %cst_70 {dimension_numbers = #tpu.dot_dimension_numbers<[1], [0], [0], [1], [0, 0, 1, 1], [], []>} : vector<8x24xbf16>, vector<24x2xbf16>, vector<8x2xf32> -> vector<8x2xf32>
    %143 = arith.addf %139, %142 : vector<8x2xf32>
    %cst_71 = arith.constant 0.000000e+00 : f32
    %144 = vector.broadcast %cst_71 : f32 to vector<8x2xf32>
    %145 = arith.subf %144, %143 : vector<8x2xf32>
    %146 = math.exp %145 : vector<8x2xf32>
    %cst_72 = arith.constant 1.000000e+00 : f32
    %147 = vector.broadcast %cst_72 : f32 to vector<8x2xf32>
    %148 = arith.addf %147, %146 : vector<8x2xf32>
    %cst_73 = arith.constant 1.000000e+00 : f32
    %149 = vector.broadcast %cst_73 : f32 to vector<8x2xf32>
    %150 = arith.divf %149, %148 : vector<8x2xf32>
    %151 = vector.extract_strided_slice %150 {offsets = [0, 0], sizes = [8, 1], strides = [1, 1]} : vector<8x2xf32> to vector<8x1xf32>
    %152 = vector.broadcast %151 : vector<8x1xf32> to vector<8x24xf32>
    %153 = arith.mulf %152, %128 : vector<8x24xf32>
    %154 = vector.extract_strided_slice %150 {offsets = [0, 1], sizes = [8, 1], strides = [1, 1]} : vector<8x2xf32> to vector<8x1xf32>
    %155 = vector.broadcast %154 : vector<8x1xf32> to vector<8x24xf32>
    %156 = arith.mulf %155, %133 : vector<8x24xf32>
    %c0_74 = arith.constant 0 : index
    %c0_75 = arith.constant 0 : index
    %157 = vector.load %arg11[%c0_74, %c0_75] : memref<24x48xbf16, #tpu.memory_space<vmem>>, vector<24x48xbf16>
    %158 = arith.truncf %153 : vector<8x24xf32> to vector<8x24xbf16>
    %cst_76 = arith.constant dense<0.000000e+00> : vector<8x48xf32>
    %159 = tpu.matmul %158, %157, %cst_76 {dimension_numbers = #tpu.dot_dimension_numbers<[1], [0], [0], [1], [0, 0, 1, 1], [], []>} : vector<8x24xbf16>, vector<24x48xbf16>, vector<8x48xf32> -> vector<8x48xf32>
    %c0_77 = arith.constant 0 : index
    %c0_78 = arith.constant 0 : index
    %160 = vector.load %arg12[%c0_77, %c0_78] : memref<24x48xbf16, #tpu.memory_space<vmem>>, vector<24x48xbf16>
    %161 = arith.truncf %156 : vector<8x24xf32> to vector<8x24xbf16>
    %cst_79 = arith.constant dense<0.000000e+00> : vector<8x48xf32>
    %162 = tpu.matmul %161, %160, %cst_79 {dimension_numbers = #tpu.dot_dimension_numbers<[1], [0], [0], [1], [0, 0, 1, 1], [], []>} : vector<8x24xbf16>, vector<24x48xbf16>, vector<8x48xf32> -> vector<8x48xf32>
    %163 = arith.addf %159, %162 : vector<8x48xf32>
    %cst_80 = arith.constant 0.000000e+00 : f32
    %164 = vector.broadcast %cst_80 : f32 to vector<8x48xf32>
    %165 = arith.maximumf %163, %164 : vector<8x48xf32>
    %c0_81 = arith.constant 0 : index
    %c0_82 = arith.constant 0 : index
    %166 = vector.load %arg13[%c0_81, %c0_82] : memref<48x32xbf16, #tpu.memory_space<vmem>>, vector<48x32xbf16>
    %167 = arith.truncf %165 : vector<8x48xf32> to vector<8x48xbf16>
    %cst_83 = arith.constant dense<0.000000e+00> : vector<8x32xf32>
    %168 = tpu.matmul %167, %166, %cst_83 {dimension_numbers = #tpu.dot_dimension_numbers<[1], [0], [0], [1], [0, 0, 1, 1], [], []>} : vector<8x48xbf16>, vector<48x32xbf16>, vector<8x32xf32> -> vector<8x32xf32>
    %cst_84 = arith.constant 0.000000e+00 : f32
    %169 = vector.broadcast %cst_84 : f32 to vector<8x32xf32>
    %170 = arith.maximumf %168, %169 : vector<8x32xf32>
    %c0_85 = arith.constant 0 : index
    %c0_86 = arith.constant 0 : index
    %171 = vector.load %arg14[%c0_85, %c0_86] : memref<32x5xbf16, #tpu.memory_space<vmem>>, vector<32x5xbf16>
    %172 = arith.truncf %170 : vector<8x32xf32> to vector<8x32xbf16>
    %cst_87 = arith.constant dense<0.000000e+00> : vector<8x5xf32>
    %173 = tpu.matmul %172, %171, %cst_87 {dimension_numbers = #tpu.dot_dimension_numbers<[1], [0], [0], [1], [0, 0, 1, 1], [], []>} : vector<8x32xbf16>, vector<32x5xbf16>, vector<8x5xf32> -> vector<8x5xf32>
    %cst_88 = arith.constant dense<0xFF800000> : vector<8xf32>
    %174 = vector.multi_reduction <maximumf>, %173, %cst_88 [1] : vector<8x5xf32> to vector<8xf32>
    %175 = vector.shape_cast %174 : vector<8xf32> to vector<8x1xf32>
    %176 = vector.broadcast %175 : vector<8x1xf32> to vector<8x5xf32>
    %177 = arith.subf %173, %176 : vector<8x5xf32>
    %178 = math.exp %177 : vector<8x5xf32>
    %cst_89 = arith.constant dense<0.000000e+00> : vector<8xf32>
    %179 = vector.multi_reduction <add>, %178, %cst_89 [1] : vector<8x5xf32> to vector<8xf32>
    %180 = vector.shape_cast %179 : vector<8xf32> to vector<8x1xf32>
    %181 = vector.broadcast %180 : vector<8x1xf32> to vector<8x5xf32>
    %182 = arith.divf %178, %181 : vector<8x5xf32>
    %c0_90 = arith.constant 0 : index
    %c0_91 = arith.constant 0 : index
    %183 = vector.load %arg15[%c0_90, %c0_91] : memref<8x9xf32, #tpu.memory_space<vmem>>, vector<8x4xf32>
    tpu.vector_store %arg15[%c0_90, %c0_91], %136 {strides = array<i32>} : memref<8x9xf32, #tpu.memory_space<vmem>>, vector<8x4xf32>,
    %c0_92 = arith.constant 0 : index
    %c4 = arith.constant 4 : index
    %184 = vector.load %arg15[%c0_92, %c4] : memref<8x9xf32, #tpu.memory_space<vmem>>, vector<8x5xf32>
    tpu.vector_store %arg15[%c0_92, %c4], %182 {strides = array<i32>} : memref<8x9xf32, #tpu.memory_space<vmem>>, vector<8x5xf32>,
    return
  }
  func.func @transform_0(%arg0: i32) -> (i32, i32, i32) {
    %c0_i32 = arith.constant 0 : i32
    %c0_i32_0 = arith.constant 0 : i32
    %c0_i32_1 = arith.constant 0 : i32
    return %arg0, %c0_i32, %c0_i32_0 : i32, i32, i32
  }
  func.func @transform_1(%arg0: i32) -> (i32, i32) {
    %c0_i32 = arith.constant 0 : i32
    %c0_i32_0 = arith.constant 0 : i32
    return %arg0, %c0_i32 : i32, i32
  }
  func.func @transform_2(%arg0: i32) -> (i32, i32) {
    %c0_i32 = arith.constant 0 : i32
    %c0_i32_0 = arith.constant 0 : i32
    %c0_i32_1 = arith.constant 0 : i32
    return %c0_i32, %c0_i32_0 : i32, i32
  }
  func.func @transform_3(%arg0: i32) -> (i32, i32) {
    %c0_i32 = arith.constant 0 : i32
    %c0_i32_0 = arith.constant 0 : i32
    %c0_i32_1 = arith.constant 0 : i32
    return %c0_i32, %c0_i32_0 : i32, i32
  }
  func.func @transform_4(%arg0: i32) -> (i32, i32) {
    %c0_i32 = arith.constant 0 : i32
    %c0_i32_0 = arith.constant 0 : i32
    %c0_i32_1 = arith.constant 0 : i32
    return %c0_i32, %c0_i32_0 : i32, i32
  }
  func.func @transform_5(%arg0: i32) -> (i32, i32) {
    %c0_i32 = arith.constant 0 : i32
    %c0_i32_0 = arith.constant 0 : i32
    %c0_i32_1 = arith.constant 0 : i32
    return %c0_i32, %c0_i32_0 : i32, i32
  }
  func.func @transform_6(%arg0: i32) -> (i32, i32) {
    %c0_i32 = arith.constant 0 : i32
    %c0_i32_0 = arith.constant 0 : i32
    %c0_i32_1 = arith.constant 0 : i32
    return %c0_i32, %c0_i32_0 : i32, i32
  }
  func.func @transform_7(%arg0: i32) -> (i32, i32) {
    %c0_i32 = arith.constant 0 : i32
    %c0_i32_0 = arith.constant 0 : i32
    %c0_i32_1 = arith.constant 0 : i32
    return %c0_i32, %c0_i32_0 : i32, i32
  }
  func.func @transform_8(%arg0: i32) -> (i32, i32) {
    %c0_i32 = arith.constant 0 : i32
    %c0_i32_0 = arith.constant 0 : i32
    %c0_i32_1 = arith.constant 0 : i32
    return %c0_i32, %c0_i32_0 : i32, i32
  }
  func.func @transform_9(%arg0: i32) -> (i32, i32) {
    %c0_i32 = arith.constant 0 : i32
    %c0_i32_0 = arith.constant 0 : i32
    %c0_i32_1 = arith.constant 0 : i32
    return %c0_i32, %c0_i32_0 : i32, i32
  }
  func.func @transform_10(%arg0: i32) -> (i32, i32) {
    %c0_i32 = arith.constant 0 : i32
    %c0_i32_0 = arith.constant 0 : i32
    %c0_i32_1 = arith.constant 0 : i32
    return %c0_i32, %c0_i32_0 : i32, i32
  }
  func.func @transform_11(%arg0: i32) -> (i32, i32) {
    %c0_i32 = arith.constant 0 : i32
    %c0_i32_0 = arith.constant 0 : i32
    %c0_i32_1 = arith.constant 0 : i32
    return %c0_i32, %c0_i32_0 : i32, i32
  }
  func.func @transform_12(%arg0: i32) -> (i32, i32) {
    %c0_i32 = arith.constant 0 : i32
    %c0_i32_0 = arith.constant 0 : i32
    %c0_i32_1 = arith.constant 0 : i32
    return %c0_i32, %c0_i32_0 : i32, i32
  }
  func.func @transform_13(%arg0: i32) -> (i32, i32) {
    %c0_i32 = arith.constant 0 : i32
    %c0_i32_0 = arith.constant 0 : i32
    %c0_i32_1 = arith.constant 0 : i32
    return %c0_i32, %c0_i32_0 : i32, i32
  }
  func.func @transform_14(%arg0: i32) -> (i32, i32) {
    %c0_i32 = arith.constant 0 : i32
    %c0_i32_0 = arith.constant 0 : i32
    return %arg0, %c0_i32 : i32, i32
  }
}

</mosaic_0001>

<llo_original>
// kernel: tpu_custom_call.1
$region0: #{tpu_custom_call.1}
  #allocation0 [shape = 'u32[]', space=smem, size = 0x4, offset = 0x4, fixed_abs, tag = 'smem constant byte address 0x4 - core index']
  #allocation1 [shape = 'u32[144,128]{1,0:T(1,128)}', space=vmem, size = 0x12000, scoped, tag = 'internal scratch']
  #allocation2 [shape = 'bf16[8,64]{1,0:T(8,128)(2,1)}', space=vmem, size = 0x800, scoped, tag = 'scratch operand']
  %s0 = inlined_call_operand.vmem [shape: bf16[16,64,32], index: 0, kind: input, shape index: {}]
  %s1 = inlined_call_operand.vmem [shape: bf16[512,32], index: 1, kind: input, shape index: {}]
  %s2 = inlined_call_operand.vmem [shape: bf16[32,8], index: 2, kind: input, shape index: {}]
  %s3 = inlined_call_operand.vmem [shape: bf16[32,48], index: 3, kind: input, shape index: {}]
  %s4 = inlined_call_operand.vmem [shape: bf16[64,48], index: 4, kind: input, shape index: {}]
  %s5 = inlined_call_operand.vmem [shape: bf16[48,24], index: 5, kind: input, shape index: {}]
  %s6 = inlined_call_operand.vmem [shape: bf16[48,24], index: 6, kind: input, shape index: {}]
  %s7 = inlined_call_operand.vmem [shape: bf16[24,4], index: 7, kind: input, shape index: {}]
  %s8 = inlined_call_operand.vmem [shape: bf16[24,2], index: 8, kind: input, shape index: {}]
  %s9 = inlined_call_operand.vmem [shape: bf16[24,2], index: 9, kind: input, shape index: {}]
  %s10 = inlined_call_operand.vmem [shape: bf16[24,48], index: 10, kind: input, shape index: {}]
  %s11 = inlined_call_operand.vmem [shape: bf16[24,48], index: 11, kind: input, shape index: {}]
  %s12 = inlined_call_operand.vmem [shape: bf16[48,32], index: 12, kind: input, shape index: {}]
  %s13 = inlined_call_operand.vmem [shape: bf16[32,5], index: 13, kind: input, shape index: {}]
  %s14 = inlined_call_operand.hbm [shape: f32[16,9], index: 14, kind: output, shape index: {}]
  %s15 = sld [smem:[#allocation0]]
  $region89: #{tpu_custom_call.1} parent=0
    _
  %s17 = ssub.s32 1, %s15
  %s18 = scalar_select 0, %s17, %s15
  $region1: #{tpu_custom_call.1} parent=0
    #allocation3 [shape = 'u8[8192]{0}', space=vmem, size = 0x2000, scoped, tag = 'output window, operand 0']
    #allocation4 [shape = 's32[2]{0}', space=sflag, size = 0x8, scoped, tag = 'scoped memory for tpu_custom_call.1']
    %19 = vsyncpa [#allocation4], 0
    %s20 = scalar_lea.sflag [#allocation4], 1
    %21 = vsyncpa %s20, 0
    loop: start=0, step=1, limit=4
    $region2: #{tpu_custom_call.1} parent=1 // loop_pre_header
      _
    $region3: #{tpu_custom_call.1} parent=1 // loop_header
      %s23 = sphi 0, %s27
      %p24 = scmp.ge.s32.totalorder %s23, 4
      %s33 = sphi 0, %s35
      %s36 = sphi 0, %s33
      %s37 = sphi 0, %s36
      %s53 = sphi 0, %s37
      %s59 = sphi 0, %s61
      %s62 = sphi 0, %s59
      %s63 = sphi 0, %s62
      %s79 = sphi 0, %s63
      %s83 = sphi 0, %s83
      %s85 = sphi 0, %s83
      %s86 = sphi 0, %s85
      %s100 = sphi 0, %s86
      %s104 = sphi 0, %s104
      %s106 = sphi 0, %s104
      %s107 = sphi 0, %s106
      %s121 = sphi 0, %s107
      %s125 = sphi 0, %s125
      %s127 = sphi 0, %s125
      %s128 = sphi 0, %s127
      %s142 = sphi 0, %s128
      %s146 = sphi 0, %s146
      %s148 = sphi 0, %s146
      %s149 = sphi 0, %s148
      %s163 = sphi 0, %s149
      %s167 = sphi 0, %s167
      %s169 = sphi 0, %s167
      %s170 = sphi 0, %s169
      %s184 = sphi 0, %s170
      %s188 = sphi 0, %s188
      %s190 = sphi 0, %s188
      %s191 = sphi 0, %s190
      %s205 = sphi 0, %s191
      %s209 = sphi 0, %s209
      %s211 = sphi 0, %s209
      %s212 = sphi 0, %s211
      %s226 = sphi 0, %s212
      %s230 = sphi 0, %s230
      %s232 = sphi 0, %s230
      %s233 = sphi 0, %s232
      %s247 = sphi 0, %s233
      %s251 = sphi 0, %s251
      %s253 = sphi 0, %s251
      %s254 = sphi 0, %s253
      %s268 = sphi 0, %s254
      %s272 = sphi 0, %s272
      %s274 = sphi 0, %s272
      %s275 = sphi 0, %s274
      %s289 = sphi 0, %s275
      %s293 = sphi 0, %s293
      %s295 = sphi 0, %s293
      %s296 = sphi 0, %s295
      %s310 = sphi 0, %s296
      %s314 = sphi 0, %s314
      %s316 = sphi 0, %s314
      %s317 = sphi 0, %s316
      %s331 = sphi 0, %s317
      %s337 = sphi 0, %s339
      %s340 = sphi 0, %s337
      %s341 = sphi 0, %s340
      %s357 = sphi 0, %s341
    $region4: #{tpu_custom_call.1} parent=1 // loop_header_branch
      %26 = sbr.rel (%p24) target = $region8
    $region5: #{tpu_custom_call.1} parent=1 // loop_body
      %s28 = ssub.s32 %s23, 1
      %s29 = ssub.s32 %s23, 2
      %s30 = sadd.s32 %s23, 1
      %s31 = ssub.s32 %s23, %s30
      %p32 = scmp.eq.s32.totalorder %s31, 0
      %s34 = sadd.s32 %s33, 1
      %s35 = scalar_select %p32, %s33, %s34
      %p38 = pneg %p32
      %p39 = scmp.eq.s32.totalorder %s23, 1
      %p40 = por %p38, %p39
      %p41 = scmp.ne.s32.totalorder %s33, %s36
      %p42 = scmp.eq.s32.totalorder %s23, 0
      %p43 = por %p41, %p42
      %p44 = scmp.ne.s32.totalorder %s33, %s36
      %p45 = scmp.eq.s32.totalorder %s28, 1
      %p46 = por %p44, %p45
      %p47 = scmp.ne.s32.totalorder %s36, %s37
      %p48 = scmp.eq.s32.totalorder %s28, 0
      %p49 = por %p47, %p48
      %p50 = scmp.ne.s32.totalorder %s36, %s37
      %p51 = scmp.eq.s32.totalorder %s29, 1
      %p52 = por %p50, %p51
      %p54 = scmp.ne.s32.totalorder %s37, %s53
      %p55 = scmp.eq.s32.totalorder %s29, 0
      %p56 = por %p54, %p55
      %s57 = ssub.s32 %s23, %s30
      %p58 = scmp.eq.s32.totalorder %s57, 0
      %s60 = sadd.s32 %s59, 1
      %s61 = scalar_select %p58, %s59, %s60
      %p64 = pneg %p58
      %p65 = scmp.eq.s32.totalorder %s23, 1
      %p66 = por %p64, %p65
      %p67 = scmp.ne.s32.totalorder %s59, %s62
      %p68 = scmp.eq.s32.totalorder %s23, 0
      %p69 = por %p67, %p68
      %p70 = scmp.ne.s32.totalorder %s59, %s62
      %p71 = scmp.eq.s32.totalorder %s28, 1
      %p72 = por %p70, %p71
      %p73 = scmp.ne.s32.totalorder %s62, %s63
      %p74 = scmp.eq.s32.totalorder %s28, 0
      %p75 = por %p73, %p74
      %p76 = scmp.ne.s32.totalorder %s62, %s63
      %p77 = scmp.eq.s32.totalorder %s29, 1
      %p78 = por %p76, %p77
      %p80 = scmp.ne.s32.totalorder %s63, %s79
      %p81 = scmp.eq.s32.totalorder %s29, 0
      %p82 = por %p80, %p81
      %s84 = sadd.s32 %s83, 1
      %p87 = scmp.eq.s32.totalorder %s23, 1
      %p88 = scmp.ne.s32.totalorder %s83, %s85
      %p89 = scmp.eq.s32.totalorder %s23, 0
      %p90 = por %p88, %p89
      %p91 = scmp.ne.s32.totalorder %s83, %s85
      %p92 = scmp.eq.s32.totalorder %s28, 1
      %p93 = por %p91, %p92
      %p94 = scmp.ne.s32.totalorder %s85, %s86
      %p95 = scmp.eq.s32.totalorder %s28, 0
      %p96 = por %p94, %p95
      %p97 = scmp.ne.s32.totalorder %s85, %s86
      %p98 = scmp.eq.s32.totalorder %s29, 1
      %p99 = por %p97, %p98
      %p101 = scmp.ne.s32.totalorder %s86, %s100
      %p102 = scmp.eq.s32.totalorder %s29, 0
      %p103 = por %p101, %p102
      %s105 = sadd.s32 %s104, 1
      %p108 = scmp.eq.s32.totalorder %s23, 1
      %p109 = scmp.ne.s32.totalorder %s104, %s106
      %p110 = scmp.eq.s32.totalorder %s23, 0
      %p111 = por %p109, %p110
      %p112 = scmp.ne.s32.totalorder %s104, %s106
      %p113 = scmp.eq.s32.totalorder %s28, 1
      %p114 = por %p112, %p113
      %p115 = scmp.ne.s32.totalorder %s106, %s107
      %p116 = scmp.eq.s32.totalorder %s28, 0
      %p117 = por %p115, %p116
      %p118 = scmp.ne.s32.totalorder %s106, %s107
      %p119 = scmp.eq.s32.totalorder %s29, 1
      %p120 = por %p118, %p119
      %p122 = scmp.ne.s32.totalorder %s107, %s121
      %p123 = scmp.eq.s32.totalorder %s29, 0
      %p124 = por %p122, %p123
      %s126 = sadd.s32 %s125, 1
      %p129 = scmp.eq.s32.totalorder %s23, 1
      %p130 = scmp.ne.s32.totalorder %s125, %s127
      %p131 = scmp.eq.s32.totalorder %s23, 0
      %p132 = por %p130, %p131
      %p133 = scmp.ne.s32.totalorder %s125, %s127
      %p134 = scmp.eq.s32.totalorder %s28, 1
      %p135 = por %p133, %p134
      %p136 = scmp.ne.s32.totalorder %s127, %s128
      %p137 = scmp.eq.s32.totalorder %s28, 0
      %p138 = por %p136, %p137
      %p139 = scmp.ne.s32.totalorder %s127, %s128
      %p140 = scmp.eq.s32.totalorder %s29, 1
      %p141 = por %p139, %p140
      %p143 = scmp.ne.s32.totalorder %s128, %s142
      %p144 = scmp.eq.s32.totalorder %s29, 0
      %p145 = por %p143, %p144
      %s147 = sadd.s32 %s146, 1
      %p150 = scmp.eq.s32.totalorder %s23, 1
      %p151 = scmp.ne.s32.totalorder %s146, %s148
      %p152 = scmp.eq.s32.totalorder %s23, 0
      %p153 = por %p151, %p152
      %p154 = scmp.ne.s32.totalorder %s146, %s148
      %p155 = scmp.eq.s32.totalorder %s28, 1
      %p156 = por %p154, %p155
      %p157 = scmp.ne.s32.totalorder %s148, %s149
      %p158 = scmp.eq.s32.totalorder %s28, 0
      %p159 = por %p157, %p158
      %p160 = scmp.ne.s32.totalorder %s148, %s149
      %p161 = scmp.eq.s32.totalorder %s29, 1
      %p162 = por %p160, %p161
      %p164 = scmp.ne.s32.totalorder %s149, %s163
      %p165 = scmp.eq.s32.totalorder %s29, 0
      %p166 = por %p164, %p165
      %s168 = sadd.s32 %s167, 1
      %p171 = scmp.eq.s32.totalorder %s23, 1
      %p172 = scmp.ne.s32.totalorder %s167, %s169
      %p173 = scmp.eq.s32.totalorder %s23, 0
      %p174 = por %p172, %p173
      %p175 = scmp.ne.s32.totalorder %s167, %s169
      %p176 = scmp.eq.s32.totalorder %s28, 1
      %p177 = por %p175, %p176
      %p178 = scmp.ne.s32.totalorder %s169, %s170
      %p179 = scmp.eq.s32.totalorder %s28, 0
      %p180 = por %p178, %p179
      %p181 = scmp.ne.s32.totalorder %s169, %s170
      %p182 = scmp.eq.s32.totalorder %s29, 1
      %p183 = por %p181, %p182
      %p185 = scmp.ne.s32.totalorder %s170, %s184
      %p186 = scmp.eq.s32.totalorder %s29, 0
      %p187 = por %p185, %p186
      %s189 = sadd.s32 %s188, 1
      %p192 = scmp.eq.s32.totalorder %s23, 1
      %p193 = scmp.ne.s32.totalorder %s188, %s190
      %p194 = scmp.eq.s32.totalorder %s23, 0
      %p195 = por %p193, %p194
      %p196 = scmp.ne.s32.totalorder %s188, %s190
      %p197 = scmp.eq.s32.totalorder %s28, 1
      %p198 = por %p196, %p197
      %p199 = scmp.ne.s32.totalorder %s190, %s191
      %p200 = scmp.eq.s32.totalorder %s28, 0
      %p201 = por %p199, %p200
      %p202 = scmp.ne.s32.totalorder %s190, %s191
      %p203 = scmp.eq.s32.totalorder %s29, 1
      %p204 = por %p202, %p203
      %p206 = scmp.ne.s32.totalorder %s191, %s205
      %p207 = scmp.eq.s32.totalorder %s29, 0
      %p208 = por %p206, %p207
      %s210 = sadd.s32 %s209, 1
      %p213 = scmp.eq.s32.totalorder %s23, 1
      %p214 = scmp.ne.s32.totalorder %s209, %s211
      %p215 = scmp.eq.s32.totalorder %s23, 0
      %p216 = por %p214, %p215
      %p217 = scmp.ne.s32.totalorder %s209, %s211
      %p218 = scmp.eq.s32.totalorder %s28, 1
      %p219 = por %p217, %p218
      %p220 = scmp.ne.s32.totalorder %s211, %s212
      %p221 = scmp.eq.s32.totalorder %s28, 0
      %p222 = por %p220, %p221
      %p223 = scmp.ne.s32.totalorder %s211, %s212
      %p224 = scmp.eq.s32.totalorder %s29, 1
      %p225 = por %p223, %p224
      %p227 = scmp.ne.s32.totalorder %s212, %s226
      %p228 = scmp.eq.s32.totalorder %s29, 0
      %p229 = por %p227, %p228
      %s231 = sadd.s32 %s230, 1
      %p234 = scmp.eq.s32.totalorder %s23, 1
      %p235 = scmp.ne.s32.totalorder %s230, %s232
      %p236 = scmp.eq.s32.totalorder %s23, 0
      %p237 = por %p235, %p236
      %p238 = scmp.ne.s32.totalorder %s230, %s232
      %p239 = scmp.eq.s32.totalorder %s28, 1
      %p240 = por %p238, %p239
      %p241 = scmp.ne.s32.totalorder %s232, %s233
      %p242 = scmp.eq.s32.totalorder %s28, 0
      %p243 = por %p241, %p242
      %p244 = scmp.ne.s32.totalorder %s232, %s233
      %p245 = scmp.eq.s32.totalorder %s29, 1
      %p246 = por %p244, %p245
      %p248 = scmp.ne.s32.totalorder %s233, %s247
      %p249 = scmp.eq.s32.totalorder %s29, 0
      %p250 = por %p248, %p249
      %s252 = sadd.s32 %s251, 1
      %p255 = scmp.eq.s32.totalorder %s23, 1
      %p256 = scmp.ne.s32.totalorder %s251, %s253
      %p257 = scmp.eq.s32.totalorder %s23, 0
      %p258 = por %p256, %p257
      %p259 = scmp.ne.s32.totalorder %s251, %s253
      %p260 = scmp.eq.s32.totalorder %s28, 1
      %p261 = por %p259, %p260
      %p262 = scmp.ne.s32.totalorder %s253, %s254
      %p263 = scmp.eq.s32.totalorder %s28, 0
      %p264 = por %p262, %p263
      %p265 = scmp.ne.s32.totalorder %s253, %s254
      %p266 = scmp.eq.s32.totalorder %s29, 1
      %p267 = por %p265, %p266
      %p269 = scmp.ne.s32.totalorder %s254, %s268
      %p270 = scmp.eq.s32.totalorder %s29, 0
      %p271 = por %p269, %p270
      %s273 = sadd.s32 %s272, 1
      %p276 = scmp.eq.s32.totalorder %s23, 1
      %p277 = scmp.ne.s32.totalorder %s272, %s274
      %p278 = scmp.eq.s32.totalorder %s23, 0
      %p279 = por %p277, %p278
      %p280 = scmp.ne.s32.totalorder %s272, %s274
      %p281 = scmp.eq.s32.totalorder %s28, 1
      %p282 = por %p280, %p281
      %p283 = scmp.ne.s32.totalorder %s274, %s275
      %p284 = scmp.eq.s32.totalorder %s28, 0
      %p285 = por %p283, %p284
      %p286 = scmp.ne.s32.totalorder %s274, %s275
      %p287 = scmp.eq.s32.totalorder %s29, 1
      %p288 = por %p286, %p287
      %p290 = scmp.ne.s32.totalorder %s275, %s289
      %p291 = scmp.eq.s32.totalorder %s29, 0
      %p292 = por %p290, %p291
      %s294 = sadd.s32 %s293, 1
      %p297 = scmp.eq.s32.totalorder %s23, 1
      %p298 = scmp.ne.s32.totalorder %s293, %s295
      %p299 = scmp.eq.s32.totalorder %s23, 0
      %p300 = por %p298, %p299
      %p301 = scmp.ne.s32.totalorder %s293, %s295
      %p302 = scmp.eq.s32.totalorder %s28, 1
      %p303 = por %p301, %p302
      %p304 = scmp.ne.s32.totalorder %s295, %s296
      %p305 = scmp.eq.s32.totalorder %s28, 0
      %p306 = por %p304, %p305
      %p307 = scmp.ne.s32.totalorder %s295, %s296
      %p308 = scmp.eq.s32.totalorder %s29, 1
      %p309 = por %p307, %p308
      %p311 = scmp.ne.s32.totalorder %s296, %s310
      %p312 = scmp.eq.s32.totalorder %s29, 0
      %p313 = por %p311, %p312
      %s315 = sadd.s32 %s314, 1
      %p318 = scmp.eq.s32.totalorder %s23, 1
      %p319 = scmp.ne.s32.totalorder %s314, %s316
      %p320 = scmp.eq.s32.totalorder %s23, 0
      %p321 = por %p319, %p320
      %p322 = scmp.ne.s32.totalorder %s314, %s316
      %p323 = scmp.eq.s32.totalorder %s28, 1
      %p324 = por %p322, %p323
      %p325 = scmp.ne.s32.totalorder %s316, %s317
      %p326 = scmp.eq.s32.totalorder %s28, 0
      %p327 = por %p325, %p326
      %p328 = scmp.ne.s32.totalorder %s316, %s317
      %p329 = scmp.eq.s32.totalorder %s29, 1
      %p330 = por %p328, %p329
      %p332 = scmp.ne.s32.totalorder %s317, %s331
      %p333 = scmp.eq.s32.totalorder %s29, 0
      %p334 = por %p332, %p333
      %s335 = ssub.s32 %s23, %s30
      %p336 = scmp.eq.s32.totalorder %s335, 0
      %s338 = sadd.s32 %s337, 1
      %s339 = scalar_select %p336, %s337, %s338
      %p342 = pneg %p336
      %p343 = scmp.eq.s32.totalorder %s23, 1
      %p344 = por %p342, %p343
      %p345 = scmp.ne.s32.totalorder %s337, %s340
      %p346 = scmp.eq.s32.totalorder %s23, 0
      %p347 = por %p345, %p346
      %p348 = scmp.ne.s32.totalorder %s337, %s340
      %p349 = scmp.eq.s32.totalorder %s28, 1
      %p350 = por %p348, %p349
      %p351 = scmp.ne.s32.totalorder %s340, %s341
      %p352 = scmp.eq.s32.totalorder %s28, 0
      %p353 = por %p351, %p352
      %p354 = scmp.ne.s32.totalorder %s340, %s341
      %p355 = scmp.eq.s32.totalorder %s29, 1
      %p356 = por %p354, %p355
      %p358 = scmp.ne.s32.totalorder %s341, %s357
      %p359 = scmp.eq.s32.totalorder %s29, 0
      %p360 = por %p358, %p359
      %p361 = scmp.le.s32.totalorder 1, %s23
      %p362 = scmp.lt.s32.totalorder %s23, 3
      %p363 = pnand %p361, %p362
      %p364 = pneg %p363
      // Predicated region
      $region9: #{tpu_custom_call.1} parent=5 // pred_check
        _
      $region10: #{tpu_custom_call.1} parent=5 // pred_check_branch
        %366 = sbr.rel (%p363) target = $region12
      $region11: #{tpu_custom_call.1} parent=5 // pred_region
        %s367 = ssub.s32 %s23, 1
        // Predicated region
        $region13: #{tpu_custom_call.1} parent=11 // pred_check
          %p368 = pneg %p96
        $region14: #{tpu_custom_call.1} parent=11 // pred_check_branch
          %370 = sbr.rel (%p368) target = $region16
        $region15: #{tpu_custom_call.1} parent=11 // pred_region
          _
        $region16: #{tpu_custom_call.1} parent=11 // pred_fallthru
          _
        // Predicated region
        $region17: #{tpu_custom_call.1} parent=11 // pred_check
          %p371 = pneg %p117
        $region18: #{tpu_custom_call.1} parent=11 // pred_check_branch
          %373 = sbr.rel (%p371) target = $region20
        $region19: #{tpu_custom_call.1} parent=11 // pred_region
          _
        $region20: #{tpu_custom_call.1} parent=11 // pred_fallthru
          _
        // Predicated region
        $region21: #{tpu_custom_call.1} parent=11 // pred_check
          %p374 = pneg %p138
        $region22: #{tpu_custom_call.1} parent=11 // pred_check_branch
          %376 = sbr.rel (%p374) target = $region24
        $region23: #{tpu_custom_call.1} parent=11 // pred_region
          _
        $region24: #{tpu_custom_call.1} parent=11 // pred_fallthru
          _
        // Predicated region
        $region25: #{tpu_custom_call.1} parent=11 // pred_check
          %p377 = pneg %p159
        $region26: #{tpu_custom_call.1} parent=11 // pred_check_branch
          %379 = sbr.rel (%p377) target = $region28
        $region27: #{tpu_custom_call.1} parent=11 // pred_region
          _
        $region28: #{tpu_custom_call.1} parent=11 // pred_fallthru
          _
        // Predicated region
        $region29: #{tpu_custom_call.1} parent=11 // pred_check
          %p380 = pneg %p180
        $region30: #{tpu_custom_call.1} parent=11 // pred_check_branch
          %382 = sbr.rel (%p380) target = $region32
        $region31: #{tpu_custom_call.1} parent=11 // pred_region
          _
        $region32: #{tpu_custom_call.1} parent=11 // pred_fallthru
          _
        // Predicated region
        $region33: #{tpu_custom_call.1} parent=11 // pred_check
          %p383 = pneg %p201
        $region34: #{tpu_custom_call.1} parent=11 // pred_check_branch
          %385 = sbr.rel (%p383) target = $region36
        $region35: #{tpu_custom_call.1} parent=11 // pred_region
          _
        $region36: #{tpu_custom_call.1} parent=11 // pred_fallthru
          _
        // Predicated region
        $region37: #{tpu_custom_call.1} parent=11 // pred_check
          %p386 = pneg %p222
        $region38: #{tpu_custom_call.1} parent=11 // pred_check_branch
          %388 = sbr.rel (%p386) target = $region40
        $region39: #{tpu_custom_call.1} parent=11 // pred_region
          _
        $region40: #{tpu_custom_call.1} parent=11 // pred_fallthru
          _
        // Predicated region
        $region41: #{tpu_custom_call.1} parent=11 // pred_check
          %p389 = pneg %p243
        $region42: #{tpu_custom_call.1} parent=11 // pred_check_branch
          %391 = sbr.rel (%p389) target = $region44
        $region43: #{tpu_custom_call.1} parent=11 // pred_region
          _
        $region44: #{tpu_custom_call.1} parent=11 // pred_fallthru
          _
        // Predicated region
        $region45: #{tpu_custom_call.1} parent=11 // pred_check
          %p392 = pneg %p264
        $region46: #{tpu_custom_call.1} parent=11 // pred_check_branch
          %394 = sbr.rel (%p392) target = $region48
        $region47: #{tpu_custom_call.1} parent=11 // pred_region
          _
        $region48: #{tpu_custom_call.1} parent=11 // pred_fallthru
          _
        // Predicated region
        $region49: #{tpu_custom_call.1} parent=11 // pred_check
          %p395 = pneg %p285
        $region50: #{tpu_custom_call.1} parent=11 // pred_check_branch
          %397 = sbr.rel (%p395) target = $region52
        $region51: #{tpu_custom_call.1} parent=11 // pred_region
          _
        $region52: #{tpu_custom_call.1} parent=11 // pred_fallthru
          _
        // Predicated region
        $region53: #{tpu_custom_call.1} parent=11 // pred_check
          %p398 = pneg %p306
        $region54: #{tpu_custom_call.1} parent=11 // pred_check_branch
          %400 = sbr.rel (%p398) target = $region56
        $region55: #{tpu_custom_call.1} parent=11 // pred_region
          _
        $region56: #{tpu_custom_call.1} parent=11 // pred_fallthru
          _
        // Predicated region
        $region57: #{tpu_custom_call.1} parent=11 // pred_check
          %p401 = pneg %p327
        $region58: #{tpu_custom_call.1} parent=11 // pred_check_branch
          %403 = sbr.rel (%p401) target = $region60
        $region59: #{tpu_custom_call.1} parent=11 // pred_region
          _
        $region60: #{tpu_custom_call.1} parent=11 // pred_fallthru
          _
      $region12: #{tpu_custom_call.1} parent=5 // pred_fallthru
        _
      %p404 = scmp.lt.s32.totalorder %s23, 2
      // Predicated region
      $region61: #{tpu_custom_call.1} parent=5 // pred_check
        %p405 = pneg %p404
      $region62: #{tpu_custom_call.1} parent=5 // pred_check_branch
        %407 = sbr.rel (%p405) target = $region64
      $region63: #{tpu_custom_call.1} parent=5 // pred_region
        // Predicated region
        $region65: #{tpu_custom_call.1} parent=63 // pred_check
          %p408 = pneg %p43
        $region66: #{tpu_custom_call.1} parent=63 // pred_check_branch
          %410 = sbr.rel (%p408) target = $region68
        $region67: #{tpu_custom_call.1} parent=63 // pred_region
          %s411 = smul.u32 8, %s23
          %p412 = scmp.lt.s32.totalorder %s411, 15
          %s413 = scalar_select %p412, %s411, 15
          %s414 = smul.addr %s413, 8
          %s415 = smul.addr %s414, 4
          %s416 = scalar_lea.vmem %s0, %s415
          %s417 = smul.u32 8, %s23
        $region68: #{tpu_custom_call.1} parent=63 // pred_fallthru
          _
        // Predicated region
        $region69: #{tpu_custom_call.1} parent=63 // pred_check
          %p418 = pneg %p69
        $region70: #{tpu_custom_call.1} parent=63 // pred_check_branch
          %420 = sbr.rel (%p418) target = $region72
        $region71: #{tpu_custom_call.1} parent=63 // pred_region
          %s421 = smul.u32 32, %s23
          %p422 = scmp.lt.s32.totalorder %s421, 63
          %s423 = scalar_select %p422, %s421, 63
          %s424 = smul.addr %s423, 4
          %s425 = scalar_lea.vmem %s1, %s424
          %s426 = smul.u32 32, %s23
        $region72: #{tpu_custom_call.1} parent=63 // pred_fallthru
          _
      $region64: #{tpu_custom_call.1} parent=5 // pred_fallthru
        _
      %p427 = scmp.le.s32.totalorder 1, %s23
      %p428 = scmp.lt.s32.totalorder %s23, 3
      %p429 = pnand %p427, %p428
      %p430 = pneg %p429
      // Predicated region
      $region73: #{tpu_custom_call.1} parent=5 // pred_check
        _
      $region74: #{tpu_custom_call.1} parent=5 // pred_check_branch
        %432 = sbr.rel (%p429) target = $region76
      $region75: #{tpu_custom_call.1} parent=5 // pred_region
        %s433 = ssub.s32 %s23, 1
        %s434 = smul.u32 8, %s28
        %p435 = scmp.lt.s32.totalorder %s434, 15
        %s436 = scalar_select %p435, %s434, 15
        %s437 = smul.addr %s436, 8
        %s438 = smul.addr %s437, 4
        %s439 = scalar_lea.vmem %s0, %s438
        %p440 = pneg %p49
        %p441 = pneg %p46
        %s442 = smul.u32 32, %s28
        %p443 = scmp.lt.s32.totalorder %s442, 63
        %s444 = scalar_select %p443, %s442, 63
        %s445 = smul.addr %s444, 4
        %s446 = scalar_lea.vmem %s1, %s445
        %p447 = pneg %p75
        %p448 = pneg %p72
        %p449 = pneg %p96
        %p450 = pneg %p93
        %p451 = pneg %p117
        %p452 = pneg %p114
        %p453 = pneg %p138
        %p454 = pneg %p135
        %p455 = pneg %p159
        %p456 = pneg %p156
        %p457 = pneg %p180
        %p458 = pneg %p177
        %p459 = pneg %p201
        %p460 = pneg %p198
        %p461 = pneg %p222
        %p462 = pneg %p219
        %p463 = pneg %p243
        %p464 = pneg %p240
        %p465 = pneg %p264
        %p466 = pneg %p261
        %p467 = pneg %p285
        %p468 = pneg %p282
        %p469 = pneg %p306
        %p470 = pneg %p303
        %p471 = pneg %p327
        %p472 = pneg %p324
        %p473 = pneg %p353
        %p474 = pneg %p350
        %s475 = sand.u32 %s340, 1
        %s476 = scalar_lea.sflag [#allocation4], %s475
        %s477 = sand.u32 %s340, 1
        %s478 = smul.addr %s477, 8
        %s479 = scalar_lea.vmem [#allocation3], %s478
        %s480 = smul.u32 8, %s28
        %p481 = scmp.lt.s32.totalorder %s480, 15
        %s482 = scalar_select %p481, %s480, 15
        %s483 = smul.addr %s482, 8
        %s484 = smul.addr %s483, 4
        %s485 = scalar_lea.vmem %s0, %s484
        %s486 = smul.u32 8, %s28
        %s487 = smul.u32 32, %s28
        %p488 = scmp.lt.s32.totalorder %s487, 63
        %s489 = scalar_select %p488, %s487, 63
        %s490 = smul.addr %s489, 4
        %s491 = scalar_lea.vmem %s1, %s490
        %s492 = smul.u32 32, %s28
        %v494 = vld [vmem:[%s491] sm:$0xf]
        %v495 = vld [vmem:[%s491 + $0x4] sm:$0xf]
        %v496 = vld [vmem:[%s491 + $0x8] sm:$0xf]
        %v497 = vld [vmem:[%s491 + $0xc] sm:$0xf]
        %v498 = vld [vmem:[%s491 + $0x10] sm:$0xf]
        %v499 = vld [vmem:[%s491 + $0x14] sm:$0xf]
        %v500 = vld [vmem:[%s491 + $0x18] sm:$0xf]
        %v501 = vld [vmem:[%s491 + $0x1c] sm:$0xf]
        %v502 = vld [vmem:[%s491 + $0x20] sm:$0xf]
        %v503 = vld [vmem:[%s491 + $0x24] sm:$0xf]
        %v504 = vld [vmem:[%s491 + $0x28] sm:$0xf]
        %v505 = vld [vmem:[%s491 + $0x2c] sm:$0xf]
        %v506 = vld [vmem:[%s491 + $0x30] sm:$0xf]
        %v507 = vld [vmem:[%s491 + $0x34] sm:$0xf]
        %v508 = vld [vmem:[%s491 + $0x38] sm:$0xf]
        %v509 = vld [vmem:[%s491 + $0x3c] sm:$0xf]
        %v510 = vld [vmem:[%s491 + $0x40] sm:$0xf]
        %v511 = vld [vmem:[%s491 + $0x44] sm:$0xf]
        %v512 = vld [vmem:[%s491 + $0x48] sm:$0xf]
        %v513 = vld [vmem:[%s491 + $0x4c] sm:$0xf]
        %v514 = vld [vmem:[%s491 + $0x50] sm:$0xf]
        %v515 = vld [vmem:[%s491 + $0x54] sm:$0xf]
        %v516 = vld [vmem:[%s491 + $0x58] sm:$0xf]
        %v517 = vld [vmem:[%s491 + $0x5c] sm:$0xf]
        %v518 = vld [vmem:[%s491 + $0x60] sm:$0xf]
        %v519 = vld [vmem:[%s491 + $0x64] sm:$0xf]
        %v520 = vld [vmem:[%s491 + $0x68] sm:$0xf]
        %v521 = vld [vmem:[%s491 + $0x6c] sm:$0xf]
        %v522 = vld [vmem:[%s491 + $0x70] sm:$0xf]
        %v523 = vld [vmem:[%s491 + $0x74] sm:$0xf]
        %v524 = vld [vmem:[%s491 + $0x78] sm:$0xf]
        %v525 = vld [vmem:[%s491 + $0x7c] sm:$0xf]
        %v526 = vunpack.c.l.bf16 %v494
        %v527 = vunpack.c.l.bf16 %v495
        %v528 = vunpack.c.l.bf16 %v496
        %v529 = vunpack.c.l.bf16 %v497
        %v530 = vunpack.c.l.bf16 %v498
        %v531 = vunpack.c.l.bf16 %v499
        %v532 = vunpack.c.l.bf16 %v500
        %v533 = vunpack.c.l.bf16 %v501
        %v534 = vunpack.c.l.bf16 %v502
        %v535 = vunpack.c.l.bf16 %v503
        %v536 = vunpack.c.l.bf16 %v504
        %v537 = vunpack.c.l.bf16 %v505
        %v538 = vunpack.c.l.bf16 %v506
        %v539 = vunpack.c.l.bf16 %v507
        %v540 = vunpack.c.l.bf16 %v508
        %v541 = vunpack.c.l.bf16 %v509
        %v542 = vunpack.c.l.bf16 %v510
        %v543 = vunpack.c.l.bf16 %v511
        %v544 = vunpack.c.l.bf16 %v512
        %v545 = vunpack.c.l.bf16 %v513
        %v546 = vunpack.c.l.bf16 %v514
        %v547 = vunpack.c.l.bf16 %v515
        %v548 = vunpack.c.l.bf16 %v516
        %v549 = vunpack.c.l.bf16 %v517
        %v550 = vunpack.c.l.bf16 %v518
        %v551 = vunpack.c.l.bf16 %v519
        %v552 = vunpack.c.l.bf16 %v520
        %v553 = vunpack.c.l.bf16 %v521
        %v554 = vunpack.c.l.bf16 %v522
        %v555 = vunpack.c.l.bf16 %v523
        %v556 = vunpack.c.l.bf16 %v524
        %v557 = vunpack.c.l.bf16 %v525
        %v558 = vlaneseq
        %v559 = vand.u32 %v558, 127
        %vm560 = vcmp.eq.s32.totalorder %v559, 0
        %vm561 = vcmp.eq.s32.totalorder %v559, 31
        %vm562 = vcmask 1047808
        %563 = vrot.lane.b32.xlu0 %v526, 32
        %v564 = vpop.permute.xlu0 %563
        %v565 = vsel %vm562, %v564, %v526
        %566 = vrot.lane.b32.xlu0 %v527, 32
        %v567 = vpop.permute.xlu0 %566
        %v568 = vsel %vm562, %v567, %v527
        %569 = vrot.lane.b32.xlu0 %v528, 32
        %v570 = vpop.permute.xlu0 %569
        %v571 = vsel %vm562, %v570, %v528
        %572 = vrot.lane.b32.xlu0 %v529, 32
        %v573 = vpop.permute.xlu0 %572
        %v574 = vsel %vm562, %v573, %v529
        %575 = vrot.lane.b32.xlu0 %v530, 32
        %v576 = vpop.permute.xlu0 %575
        %v577 = vsel %vm562, %v576, %v530
        %578 = vrot.lane.b32.xlu0 %v531, 32
        %v579 = vpop.permute.xlu0 %578
        %v580 = vsel %vm562, %v579, %v531
        %581 = vrot.lane.b32.xlu0 %v532, 32
        %v582 = vpop.permute.xlu0 %581
        %v583 = vsel %vm562, %v582, %v532
        %584 = vrot.lane.b32.xlu0 %v533, 32
        %v585 = vpop.permute.xlu0 %584
        %v586 = vsel %vm562, %v585, %v533
        %587 = vrot.lane.b32.xlu0 %v534, 32
        %v588 = vpop.permute.xlu0 %587
        %v589 = vsel %vm562, %v588, %v534
        %590 = vrot.lane.b32.xlu0 %v535, 32
        %v591 = vpop.permute.xlu0 %590
        %v592 = vsel %vm562, %v591, %v535
        %593 = vrot.lane.b32.xlu0 %v536, 32
        %v594 = vpop.permute.xlu0 %593
        %v595 = vsel %vm562, %v594, %v536
        %596 = vrot.lane.b32.xlu0 %v537, 32
        %v597 = vpop.permute.xlu0 %596
        %v598 = vsel %vm562, %v597, %v537
        %599 = vrot.lane.b32.xlu0 %v538, 32
        %v600 = vpop.permute.xlu0 %599
        %v601 = vsel %vm562, %v600, %v538
        %602 = vrot.lane.b32.xlu0 %v539, 32
        %v603 = vpop.permute.xlu0 %602
        %v604 = vsel %vm562, %v603, %v539
        %605 = vrot.lane.b32.xlu0 %v540, 32
        %v606 = vpop.permute.xlu0 %605
        %v607 = vsel %vm562, %v606, %v540
        %608 = vrot.lane.b32.xlu0 %v541, 32
        %v609 = vpop.permute.xlu0 %608
        %v610 = vsel %vm562, %v609, %v541
        %611 = vrot.lane.b32.xlu0 %v542, 32
        %v612 = vpop.permute.xlu0 %611
        %v613 = vsel %vm562, %v612, %v542
        %614 = vrot.lane.b32.xlu0 %v543, 32
        %v615 = vpop.permute.xlu0 %614
        %v616 = vsel %vm562, %v615, %v543
        %617 = vrot.lane.b32.xlu0 %v544, 32
        %v618 = vpop.permute.xlu0 %617
        %v619 = vsel %vm562, %v618, %v544
        %620 = vrot.lane.b32.xlu0 %v545, 32
        %v621 = vpop.permute.xlu0 %620
        %v622 = vsel %vm562, %v621, %v545
        %623 = vrot.lane.b32.xlu0 %v546, 32
        %v624 = vpop.permute.xlu0 %623
        %v625 = vsel %vm562, %v624, %v546
        %626 = vrot.lane.b32.xlu0 %v547, 32
        %v627 = vpop.permute.xlu0 %626
        %v628 = vsel %vm562, %v627, %v547
        %629 = vrot.lane.b32.xlu0 %v548, 32
        %v630 = vpop.permute.xlu0 %629
        %v631 = vsel %vm562, %v630, %v548
        %632 = vrot.lane.b32.xlu0 %v549, 32
        %v633 = vpop.permute.xlu0 %632
        %v634 = vsel %vm562, %v633, %v549
        %635 = vrot.lane.b32.xlu0 %v550, 32
        %v636 = vpop.permute.xlu0 %635
        %v637 = vsel %vm562, %v636, %v550
        %638 = vrot.lane.b32.xlu0 %v551, 32
        %v639 = vpop.permute.xlu0 %638
        %v640 = vsel %vm562, %v639, %v551
        %641 = vrot.lane.b32.xlu0 %v552, 32
        %v642 = vpop.permute.xlu0 %641
        %v643 = vsel %vm562, %v642, %v552
        %644 = vrot.lane.b32.xlu0 %v553, 32
        %v645 = vpop.permute.xlu0 %644
        %v646 = vsel %vm562, %v645, %v553
        %647 = vrot.lane.b32.xlu0 %v554, 32
        %v648 = vpop.permute.xlu0 %647
        %v649 = vsel %vm562, %v648, %v554
        %650 = vrot.lane.b32.xlu0 %v555, 32
        %v651 = vpop.permute.xlu0 %650
        %v652 = vsel %vm562, %v651, %v555
        %653 = vrot.lane.b32.xlu0 %v556, 32
        %v654 = vpop.permute.xlu0 %653
        %v655 = vsel %vm562, %v654, %v556
        %656 = vrot.lane.b32.xlu0 %v557, 32
        %v657 = vpop.permute.xlu0 %656
        %v658 = vsel %vm562, %v657, %v557
        %659 = vrot.lane.b32.xlu0 %v565, 32
        %v660 = vpop.permute.xlu0 %659
        %661 = vrot.lane.b32.xlu0 %v568, 32
        %v662 = vpop.permute.xlu0 %661
        %663 = vrot.lane.b32.xlu0 %v571, 32
        %v664 = vpop.permute.xlu0 %663
        %665 = vrot.lane.b32.xlu0 %v574, 32
        %v666 = vpop.permute.xlu0 %665
        %667 = vrot.lane.b32.xlu0 %v577, 32
        %v668 = vpop.permute.xlu0 %667
        %669 = vrot.lane.b32.xlu0 %v580, 32
        %v670 = vpop.permute.xlu0 %669
        %671 = vrot.lane.b32.xlu0 %v583, 32
        %v672 = vpop.permute.xlu0 %671
        %673 = vrot.lane.b32.xlu0 %v586, 32
        %v674 = vpop.permute.xlu0 %673
        %675 = vrot.lane.b32.xlu0 %v589, 32
        %v676 = vpop.permute.xlu0 %675
        %677 = vrot.lane.b32.xlu0 %v592, 32
        %v678 = vpop.permute.xlu0 %677
        %679 = vrot.lane.b32.xlu0 %v595, 32
        %v680 = vpop.permute.xlu0 %679
        %681 = vrot.lane.b32.xlu0 %v598, 32
        %v682 = vpop.permute.xlu0 %681
        %683 = vrot.lane.b32.xlu0 %v601, 32
        %v684 = vpop.permute.xlu0 %683
        %685 = vrot.lane.b32.xlu0 %v604, 32
        %v686 = vpop.permute.xlu0 %685
        %687 = vrot.lane.b32.xlu0 %v607, 32
        %v688 = vpop.permute.xlu0 %687
        %689 = vrot.lane.b32.xlu0 %v610, 32
        %v690 = vpop.permute.xlu0 %689
        %691 = vrot.lane.b32.xlu0 %v613, 32
        %v692 = vpop.permute.xlu0 %691
        %693 = vrot.lane.b32.xlu0 %v616, 32
        %v694 = vpop.permute.xlu0 %693
        %695 = vrot.lane.b32.xlu0 %v619, 32
        %v696 = vpop.permute.xlu0 %695
        %697 = vrot.lane.b32.xlu0 %v622, 32
        %v698 = vpop.permute.xlu0 %697
        %699 = vrot.lane.b32.xlu0 %v625, 32
        %v700 = vpop.permute.xlu0 %699
        %701 = vrot.lane.b32.xlu0 %v628, 32
        %v702 = vpop.permute.xlu0 %701
        %703 = vrot.lane.b32.xlu0 %v631, 32
        %v704 = vpop.permute.xlu0 %703
        %705 = vrot.lane.b32.xlu0 %v634, 32
        %v706 = vpop.permute.xlu0 %705
        %707 = vrot.lane.b32.xlu0 %v637, 32
        %v708 = vpop.permute.xlu0 %707
        %709 = vrot.lane.b32.xlu0 %v640, 32
        %v710 = vpop.permute.xlu0 %709
        %711 = vrot.lane.b32.xlu0 %v643, 32
        %v712 = vpop.permute.xlu0 %711
        %713 = vrot.lane.b32.xlu0 %v646, 32
        %v714 = vpop.permute.xlu0 %713
        %715 = vrot.lane.b32.xlu0 %v649, 32
        %v716 = vpop.permute.xlu0 %715
        %717 = vrot.lane.b32.xlu0 %v652, 32
        %v718 = vpop.permute.xlu0 %717
        %719 = vrot.lane.b32.xlu0 %v655, 32
        %v720 = vpop.permute.xlu0 %719
        %721 = vrot.lane.b32.xlu0 %v658, 32
        %v722 = vpop.permute.xlu0 %721
        %v723 = vsel %vm562, %v660, %v526
        %v724 = vsel %vm562, %v662, %v527
        %v725 = vsel %vm562, %v664, %v528
        %v726 = vsel %vm562, %v666, %v529
        %v727 = vsel %vm562, %v668, %v530
        %v728 = vsel %vm562, %v670, %v531
        %v729 = vsel %vm562, %v672, %v532
        %v730 = vsel %vm562, %v674, %v533
        %v731 = vsel %vm562, %v676, %v534
        %v732 = vsel %vm562, %v678, %v535
        %v733 = vsel %vm562, %v680, %v536
        %v734 = vsel %vm562, %v682, %v537
        %v735 = vsel %vm562, %v684, %v538
        %v736 = vsel %vm562, %v686, %v539
        %v737 = vsel %vm562, %v688, %v540
        %v738 = vsel %vm562, %v690, %v541
        %v739 = vsel %vm562, %v692, %v542
        %v740 = vsel %vm562, %v694, %v543
        %v741 = vsel %vm562, %v696, %v544
        %v742 = vsel %vm562, %v698, %v545
        %v743 = vsel %vm562, %v700, %v546
        %v744 = vsel %vm562, %v702, %v547
        %v745 = vsel %vm562, %v704, %v548
        %v746 = vsel %vm562, %v706, %v549
        %v747 = vsel %vm562, %v708, %v550
        %v748 = vsel %vm562, %v710, %v551
        %v749 = vsel %vm562, %v712, %v552
        %v750 = vsel %vm562, %v714, %v553
        %v751 = vsel %vm562, %v716, %v554
        %v752 = vsel %vm562, %v718, %v555
        %v753 = vsel %vm562, %v720, %v556
        %v754 = vsel %vm562, %v722, %v557
        %787 = vrot.lane.b32.xlu0 %v723, 127
        %v788 = vpop.permute.xlu0 %787
        %789 = vrot.lane.b32.xlu0 %v724, 127
        %v790 = vpop.permute.xlu0 %789
        %791 = vrot.lane.b32.xlu0 %v725, 127
        %v792 = vpop.permute.xlu0 %791
        %793 = vrot.lane.b32.xlu0 %v726, 127
        %v794 = vpop.permute.xlu0 %793
        %795 = vrot.lane.b32.xlu0 %v727, 127
        %v796 = vpop.permute.xlu0 %795
        %797 = vrot.lane.b32.xlu0 %v728, 127
        %v798 = vpop.permute.xlu0 %797
        %799 = vrot.lane.b32.xlu0 %v729, 127
        %v800 = vpop.permute.xlu0 %799
        %801 = vrot.lane.b32.xlu0 %v730, 127
        %v802 = vpop.permute.xlu0 %801
        %803 = vrot.lane.b32.xlu0 %v731, 127
        %v804 = vpop.permute.xlu0 %803
        %805 = vrot.lane.b32.xlu0 %v732, 127
        %v806 = vpop.permute.xlu0 %805
        %807 = vrot.lane.b32.xlu0 %v733, 127
        %v808 = vpop.permute.xlu0 %807
        %809 = vrot.lane.b32.xlu0 %v734, 127
        %v810 = vpop.permute.xlu0 %809
        %811 = vrot.lane.b32.xlu0 %v735, 127
        %v812 = vpop.permute.xlu0 %811
        %813 = vrot.lane.b32.xlu0 %v736, 127
        %v814 = vpop.permute.xlu0 %813
        %815 = vrot.lane.b32.xlu0 %v737, 127
        %v816 = vpop.permute.xlu0 %815
        %817 = vrot.lane.b32.xlu0 %v738, 127
        %v818 = vpop.permute.xlu0 %817
        %819 = vrot.lane.b32.xlu0 %v739, 127
        %v820 = vpop.permute.xlu0 %819
        %821 = vrot.lane.b32.xlu0 %v740, 127
        %v822 = vpop.permute.xlu0 %821
        %823 = vrot.lane.b32.xlu0 %v741, 127
        %v824 = vpop.permute.xlu0 %823
        %825 = vrot.lane.b32.xlu0 %v742, 127
        %v826 = vpop.permute.xlu0 %825
        %827 = vrot.lane.b32.xlu0 %v743, 127
        %v828 = vpop.permute.xlu0 %827
        %829 = vrot.lane.b32.xlu0 %v744, 127
        %v830 = vpop.permute.xlu0 %829
        %831 = vrot.lane.b32.xlu0 %v745, 127
        %v832 = vpop.permute.xlu0 %831
        %833 = vrot.lane.b32.xlu0 %v746, 127
        %v834 = vpop.permute.xlu0 %833
        %835 = vrot.lane.b32.xlu0 %v747, 127
        %v836 = vpop.permute.xlu0 %835
        %837 = vrot.lane.b32.xlu0 %v748, 127
        %v838 = vpop.permute.xlu0 %837
        %839 = vrot.lane.b32.xlu0 %v749, 127
        %v840 = vpop.permute.xlu0 %839
        %841 = vrot.lane.b32.xlu0 %v750, 127
        %v842 = vpop.permute.xlu0 %841
        %843 = vrot.lane.b32.xlu0 %v751, 127
        %v844 = vpop.permute.xlu0 %843
        %845 = vrot.lane.b32.xlu0 %v752, 127
        %v846 = vpop.permute.xlu0 %845
        %847 = vrot.lane.b32.xlu0 %v753, 127
        %v848 = vpop.permute.xlu0 %847
        %849 = vrot.lane.b32.xlu0 %v754, 127
        %v850 = vpop.permute.xlu0 %849
        %v883 = vsel %vm561, -inf, %v788
        %v884 = vsel %vm561, -inf, %v790
        %v885 = vsel %vm561, -inf, %v792
        %v886 = vsel %vm561, -inf, %v794
        %v887 = vsel %vm561, -inf, %v796
        %v888 = vsel %vm561, -inf, %v798
        %v889 = vsel %vm561, -inf, %v800
        %v890 = vsel %vm561, -inf, %v802
        %v891 = vsel %vm561, -inf, %v804
        %v892 = vsel %vm561, -inf, %v806
        %v893 = vsel %vm561, -inf, %v808
        %v894 = vsel %vm561, -inf, %v810
        %v895 = vsel %vm561, -inf, %v812
        %v896 = vsel %vm561, -inf, %v814
        %v897 = vsel %vm561, -inf, %v816
        %v898 = vsel %vm561, -inf, %v818
        %v899 = vsel %vm561, -inf, %v820
        %v900 = vsel %vm561, -inf, %v822
        %v901 = vsel %vm561, -inf, %v824
        %v902 = vsel %vm561, -inf, %v826
        %v903 = vsel %vm561, -inf, %v828
        %v904 = vsel %vm561, -inf, %v830
        %v905 = vsel %vm561, -inf, %v832
        %v906 = vsel %vm561, -inf, %v834
        %v907 = vsel %vm561, -inf, %v836
        %v908 = vsel %vm561, -inf, %v838
        %v909 = vsel %vm561, -inf, %v840
        %v910 = vsel %vm561, -inf, %v842
        %v911 = vsel %vm561, -inf, %v844
        %v912 = vsel %vm561, -inf, %v846
        %v913 = vsel %vm561, -inf, %v848
        %v914 = vsel %vm561, -inf, %v850
        %915 = vrot.lane.b32.xlu0 %v723, 97
        %v916 = vpop.permute.xlu0 %915
        %917 = vrot.lane.b32.xlu0 %v724, 97
        %v918 = vpop.permute.xlu0 %917
        %919 = vrot.lane.b32.xlu0 %v725, 97
        %v920 = vpop.permute.xlu0 %919
        %921 = vrot.lane.b32.xlu0 %v726, 97
        %v922 = vpop.permute.xlu0 %921
        %923 = vrot.lane.b32.xlu0 %v727, 97
        %v924 = vpop.permute.xlu0 %923
        %925 = vrot.lane.b32.xlu0 %v728, 97
        %v926 = vpop.permute.xlu0 %925
        %927 = vrot.lane.b32.xlu0 %v729, 97
        %v928 = vpop.permute.xlu0 %927
        %929 = vrot.lane.b32.xlu0 %v730, 97
        %v930 = vpop.permute.xlu0 %929
        %931 = vrot.lane.b32.xlu0 %v731, 97
        %v932 = vpop.permute.xlu0 %931
        %933 = vrot.lane.b32.xlu0 %v732, 97
        %v934 = vpop.permute.xlu0 %933
        %935 = vrot.lane.b32.xlu0 %v733, 97
        %v936 = vpop.permute.xlu0 %935
        %937 = vrot.lane.b32.xlu0 %v734, 97
        %v938 = vpop.permute.xlu0 %937
        %939 = vrot.lane.b32.xlu0 %v735, 97
        %v940 = vpop.permute.xlu0 %939
        %941 = vrot.lane.b32.xlu0 %v736, 97
        %v942 = vpop.permute.xlu0 %941
        %943 = vrot.lane.b32.xlu0 %v737, 97
        %v944 = vpop.permute.xlu0 %943
        %945 = vrot.lane.b32.xlu0 %v738, 97
        %v946 = vpop.permute.xlu0 %945
        %947 = vrot.lane.b32.xlu0 %v739, 97
        %v948 = vpop.permute.xlu0 %947
        %949 = vrot.lane.b32.xlu0 %v740, 97
        %v950 = vpop.permute.xlu0 %949
        %951 = vrot.lane.b32.xlu0 %v741, 97
        %v952 = vpop.permute.xlu0 %951
        %953 = vrot.lane.b32.xlu0 %v742, 97
        %v954 = vpop.permute.xlu0 %953
        %955 = vrot.lane.b32.xlu0 %v743, 97
        %v956 = vpop.permute.xlu0 %955
        %957 = vrot.lane.b32.xlu0 %v744, 97
        %v958 = vpop.permute.xlu0 %957
        %959 = vrot.lane.b32.xlu0 %v745, 97
        %v960 = vpop.permute.xlu0 %959
        %961 = vrot.lane.b32.xlu0 %v746, 97
        %v962 = vpop.permute.xlu0 %961
        %963 = vrot.lane.b32.xlu0 %v747, 97
        %v964 = vpop.permute.xlu0 %963
        %965 = vrot.lane.b32.xlu0 %v748, 97
        %v966 = vpop.permute.xlu0 %965
        %967 = vrot.lane.b32.xlu0 %v749, 97
        %v968 = vpop.permute.xlu0 %967
        %969 = vrot.lane.b32.xlu0 %v750, 97
        %v970 = vpop.permute.xlu0 %969
        %971 = vrot.lane.b32.xlu0 %v751, 97
        %v972 = vpop.permute.xlu0 %971
        %973 = vrot.lane.b32.xlu0 %v752, 97
        %v974 = vpop.permute.xlu0 %973
        %975 = vrot.lane.b32.xlu0 %v753, 97
        %v976 = vpop.permute.xlu0 %975
        %977 = vrot.lane.b32.xlu0 %v754, 97
        %v978 = vpop.permute.xlu0 %977
        %v1011 = vsel %vm560, -inf, %v916
        %v1012 = vsel %vm560, -inf, %v918
        %v1013 = vsel %vm560, -inf, %v920
        %v1014 = vsel %vm560, -inf, %v922
        %v1015 = vsel %vm560, -inf, %v924
        %v1016 = vsel %vm560, -inf, %v926
        %v1017 = vsel %vm560, -inf, %v928
        %v1018 = vsel %vm560, -inf, %v930
        %v1019 = vsel %vm560, -inf, %v932
        %v1020 = vsel %vm560, -inf, %v934
        %v1021 = vsel %vm560, -inf, %v936
        %v1022 = vsel %vm560, -inf, %v938
        %v1023 = vsel %vm560, -inf, %v940
        %v1024 = vsel %vm560, -inf, %v942
        %v1025 = vsel %vm560, -inf, %v944
        %v1026 = vsel %vm560, -inf, %v946
        %v1027 = vsel %vm560, -inf, %v948
        %v1028 = vsel %vm560, -inf, %v950
        %v1029 = vsel %vm560, -inf, %v952
        %v1030 = vsel %vm560, -inf, %v954
        %v1031 = vsel %vm560, -inf, %v956
        %v1032 = vsel %vm560, -inf, %v958
        %v1033 = vsel %vm560, -inf, %v960
        %v1034 = vsel %vm560, -inf, %v962
        %v1035 = vsel %vm560, -inf, %v964
        %v1036 = vsel %vm560, -inf, %v966
        %v1037 = vsel %vm560, -inf, %v968
        %v1038 = vsel %vm560, -inf, %v970
        %v1039 = vsel %vm560, -inf, %v972
        %v1040 = vsel %vm560, -inf, %v974
        %v1041 = vsel %vm560, -inf, %v976
        %v1042 = vsel %vm560, -inf, %v978
        %v1043 = vmax.f32 %v883, %v526
        %v1044 = vmax.f32 %v884, %v527
        %v1045 = vmax.f32 %v885, %v528
        %v1046 = vmax.f32 %v886, %v529
        %v1047 = vmax.f32 %v887, %v530
        %v1048 = vmax.f32 %v888, %v531
        %v1049 = vmax.f32 %v889, %v532
        %v1050 = vmax.f32 %v890, %v533
        %v1051 = vmax.f32 %v891, %v534
        %v1052 = vmax.f32 %v892, %v535
        %v1053 = vmax.f32 %v893, %v536
        %v1054 = vmax.f32 %v894, %v537
        %v1055 = vmax.f32 %v895, %v538
        %v1056 = vmax.f32 %v896, %v539
        %v1057 = vmax.f32 %v897, %v540
        %v1058 = vmax.f32 %v898, %v541
        %v1059 = vmax.f32 %v899, %v542
        %v1060 = vmax.f32 %v900, %v543
        %v1061 = vmax.f32 %v901, %v544
        %v1062 = vmax.f32 %v902, %v545
        %v1063 = vmax.f32 %v903, %v546
        %v1064 = vmax.f32 %v904, %v547
        %v1065 = vmax.f32 %v905, %v548
        %v1066 = vmax.f32 %v906, %v549
        %v1067 = vmax.f32 %v907, %v550
        %v1068 = vmax.f32 %v908, %v551
        %v1069 = vmax.f32 %v909, %v552
        %v1070 = vmax.f32 %v910, %v553
        %v1071 = vmax.f32 %v911, %v554
        %v1072 = vmax.f32 %v912, %v555
        %v1073 = vmax.f32 %v913, %v556
        %v1074 = vmax.f32 %v914, %v557
        %v1075 = vmax.f32 %v1043, %v1011
        %v1076 = vmax.f32 %v1044, %v1012
        %v1077 = vmax.f32 %v1045, %v1013
        %v1078 = vmax.f32 %v1046, %v1014
        %v1079 = vmax.f32 %v1047, %v1015
        %v1080 = vmax.f32 %v1048, %v1016
        %v1081 = vmax.f32 %v1049, %v1017
        %v1082 = vmax.f32 %v1050, %v1018
        %v1083 = vmax.f32 %v1051, %v1019
        %v1084 = vmax.f32 %v1052, %v1020
        %v1085 = vmax.f32 %v1053, %v1021
        %v1086 = vmax.f32 %v1054, %v1022
        %v1087 = vmax.f32 %v1055, %v1023
        %v1088 = vmax.f32 %v1056, %v1024
        %v1089 = vmax.f32 %v1057, %v1025
        %v1090 = vmax.f32 %v1058, %v1026
        %v1091 = vmax.f32 %v1059, %v1027
        %v1092 = vmax.f32 %v1060, %v1028
        %v1093 = vmax.f32 %v1061, %v1029
        %v1094 = vmax.f32 %v1062, %v1030
        %v1095 = vmax.f32 %v1063, %v1031
        %v1096 = vmax.f32 %v1064, %v1032
        %v1097 = vmax.f32 %v1065, %v1033
        %v1098 = vmax.f32 %v1066, %v1034
        %v1099 = vmax.f32 %v1067, %v1035
        %v1100 = vmax.f32 %v1068, %v1036
        %v1101 = vmax.f32 %v1069, %v1037
        %v1102 = vmax.f32 %v1070, %v1038
        %v1103 = vmax.f32 %v1071, %v1039
        %v1104 = vmax.f32 %v1072, %v1040
        %v1105 = vmax.f32 %v1073, %v1041
        %v1106 = vmax.f32 %v1074, %v1042
        %1107 = vrot.lane.b32.xlu0 %v1075, 32
        %v1108 = vpop.permute.xlu0 %1107
        %v1109 = vsel %vm562, %v1108, %v1075
        %1110 = vrot.lane.b32.xlu0 %v1076, 32
        %v1111 = vpop.permute.xlu0 %1110
        %v1112 = vsel %vm562, %v1111, %v1076
        %1113 = vrot.lane.b32.xlu0 %v1077, 32
        %v1114 = vpop.permute.xlu0 %1113
        %v1115 = vsel %vm562, %v1114, %v1077
        %1116 = vrot.lane.b32.xlu0 %v1078, 32
        %v1117 = vpop.permute.xlu0 %1116
        %v1118 = vsel %vm562, %v1117, %v1078
        %1119 = vrot.lane.b32.xlu0 %v1079, 32
        %v1120 = vpop.permute.xlu0 %1119
        %v1121 = vsel %vm562, %v1120, %v1079
        %1122 = vrot.lane.b32.xlu0 %v1080, 32
        %v1123 = vpop.permute.xlu0 %1122
        %v1124 = vsel %vm562, %v1123, %v1080
        %1125 = vrot.lane.b32.xlu0 %v1081, 32
        %v1126 = vpop.permute.xlu0 %1125
        %v1127 = vsel %vm562, %v1126, %v1081
        %1128 = vrot.lane.b32.xlu0 %v1082, 32
        %v1129 = vpop.permute.xlu0 %1128
        %v1130 = vsel %vm562, %v1129, %v1082
        %1131 = vrot.lane.b32.xlu0 %v1083, 32
        %v1132 = vpop.permute.xlu0 %1131
        %v1133 = vsel %vm562, %v1132, %v1083
        %1134 = vrot.lane.b32.xlu0 %v1084, 32
        %v1135 = vpop.permute.xlu0 %1134
        %v1136 = vsel %vm562, %v1135, %v1084
        %1137 = vrot.lane.b32.xlu0 %v1085, 32
        %v1138 = vpop.permute.xlu0 %1137
        %v1139 = vsel %vm562, %v1138, %v1085
        %1140 = vrot.lane.b32.xlu0 %v1086, 32
        %v1141 = vpop.permute.xlu0 %1140
        %v1142 = vsel %vm562, %v1141, %v1086
        %1143 = vrot.lane.b32.xlu0 %v1087, 32
        %v1144 = vpop.permute.xlu0 %1143
        %v1145 = vsel %vm562, %v1144, %v1087
        %1146 = vrot.lane.b32.xlu0 %v1088, 32
        %v1147 = vpop.permute.xlu0 %1146
        %v1148 = vsel %vm562, %v1147, %v1088
        %1149 = vrot.lane.b32.xlu0 %v1089, 32
        %v1150 = vpop.permute.xlu0 %1149
        %v1151 = vsel %vm562, %v1150, %v1089
        %1152 = vrot.lane.b32.xlu0 %v1090, 32
        %v1153 = vpop.permute.xlu0 %1152
        %v1154 = vsel %vm562, %v1153, %v1090
        %1155 = vrot.lane.b32.xlu0 %v1091, 32
        %v1156 = vpop.permute.xlu0 %1155
        %v1157 = vsel %vm562, %v1156, %v1091
        %1158 = vrot.lane.b32.xlu0 %v1092, 32
        %v1159 = vpop.permute.xlu0 %1158
        %v1160 = vsel %vm562, %v1159, %v1092
        %1161 = vrot.lane.b32.xlu0 %v1093, 32
        %v1162 = vpop.permute.xlu0 %1161
        %v1163 = vsel %vm562, %v1162, %v1093
        %1164 = vrot.lane.b32.xlu0 %v1094, 32
        %v1165 = vpop.permute.xlu0 %1164
        %v1166 = vsel %vm562, %v1165, %v1094
        %1167 = vrot.lane.b32.xlu0 %v1095, 32
        %v1168 = vpop.permute.xlu0 %1167
        %v1169 = vsel %vm562, %v1168, %v1095
        %1170 = vrot.lane.b32.xlu0 %v1096, 32
        %v1171 = vpop.permute.xlu0 %1170
        %v1172 = vsel %vm562, %v1171, %v1096
        %1173 = vrot.lane.b32.xlu0 %v1097, 32
        %v1174 = vpop.permute.xlu0 %1173
        %v1175 = vsel %vm562, %v1174, %v1097
        %1176 = vrot.lane.b32.xlu0 %v1098, 32
        %v1177 = vpop.permute.xlu0 %1176
        %v1178 = vsel %vm562, %v1177, %v1098
        %1179 = vrot.lane.b32.xlu0 %v1099, 32
        %v1180 = vpop.permute.xlu0 %1179
        %v1181 = vsel %vm562, %v1180, %v1099
        %1182 = vrot.lane.b32.xlu0 %v1100, 32
        %v1183 = vpop.permute.xlu0 %1182
        %v1184 = vsel %vm562, %v1183, %v1100
        %1185 = vrot.lane.b32.xlu0 %v1101, 32
        %v1186 = vpop.permute.xlu0 %1185
        %v1187 = vsel %vm562, %v1186, %v1101
        %1188 = vrot.lane.b32.xlu0 %v1102, 32
        %v1189 = vpop.permute.xlu0 %1188
        %v1190 = vsel %vm562, %v1189, %v1102
        %1191 = vrot.lane.b32.xlu0 %v1103, 32
        %v1192 = vpop.permute.xlu0 %1191
        %v1193 = vsel %vm562, %v1192, %v1103
        %1194 = vrot.lane.b32.xlu0 %v1104, 32
        %v1195 = vpop.permute.xlu0 %1194
        %v1196 = vsel %vm562, %v1195, %v1104
        %1197 = vrot.lane.b32.xlu0 %v1105, 32
        %v1198 = vpop.permute.xlu0 %1197
        %v1199 = vsel %vm562, %v1198, %v1105
        %1200 = vrot.lane.b32.xlu0 %v1106, 32
        %v1201 = vpop.permute.xlu0 %1200
        %v1202 = vsel %vm562, %v1201, %v1106
        %1203 = vrot.lane.b32.xlu0 %v1109, 32
        %v1204 = vpop.permute.xlu0 %1203
        %1205 = vrot.lane.b32.xlu0 %v1112, 32
        %v1206 = vpop.permute.xlu0 %1205
        %1207 = vrot.lane.b32.xlu0 %v1115, 32
        %v1208 = vpop.permute.xlu0 %1207
        %1209 = vrot.lane.b32.xlu0 %v1118, 32
        %v1210 = vpop.permute.xlu0 %1209
        %1211 = vrot.lane.b32.xlu0 %v1121, 32
        %v1212 = vpop.permute.xlu0 %1211
        %1213 = vrot.lane.b32.xlu0 %v1124, 32
        %v1214 = vpop.permute.xlu0 %1213
        %1215 = vrot.lane.b32.xlu0 %v1127, 32
        %v1216 = vpop.permute.xlu0 %1215
        %1217 = vrot.lane.b32.xlu0 %v1130, 32
        %v1218 = vpop.permute.xlu0 %1217
        %1219 = vrot.lane.b32.xlu0 %v1133, 32
        %v1220 = vpop.permute.xlu0 %1219
        %1221 = vrot.lane.b32.xlu0 %v1136, 32
        %v1222 = vpop.permute.xlu0 %1221
        %1223 = vrot.lane.b32.xlu0 %v1139, 32
        %v1224 = vpop.permute.xlu0 %1223
        %1225 = vrot.lane.b32.xlu0 %v1142, 32
        %v1226 = vpop.permute.xlu0 %1225
        %1227 = vrot.lane.b32.xlu0 %v1145, 32
        %v1228 = vpop.permute.xlu0 %1227
        %1229 = vrot.lane.b32.xlu0 %v1148, 32
        %v1230 = vpop.permute.xlu0 %1229
        %1231 = vrot.lane.b32.xlu0 %v1151, 32
        %v1232 = vpop.permute.xlu0 %1231
        %1233 = vrot.lane.b32.xlu0 %v1154, 32
        %v1234 = vpop.permute.xlu0 %1233
        %1235 = vrot.lane.b32.xlu0 %v1157, 32
        %v1236 = vpop.permute.xlu0 %1235
        %1237 = vrot.lane.b32.xlu0 %v1160, 32
        %v1238 = vpop.permute.xlu0 %1237
        %1239 = vrot.lane.b32.xlu0 %v1163, 32
        %v1240 = vpop.permute.xlu0 %1239
        %1241 = vrot.lane.b32.xlu0 %v1166, 32
        %v1242 = vpop.permute.xlu0 %1241
        %1243 = vrot.lane.b32.xlu0 %v1169, 32
        %v1244 = vpop.permute.xlu0 %1243
        %1245 = vrot.lane.b32.xlu0 %v1172, 32
        %v1246 = vpop.permute.xlu0 %1245
        %1247 = vrot.lane.b32.xlu0 %v1175, 32
        %v1248 = vpop.permute.xlu0 %1247
        %1249 = vrot.lane.b32.xlu0 %v1178, 32
        %v1250 = vpop.permute.xlu0 %1249
        %1251 = vrot.lane.b32.xlu0 %v1181, 32
        %v1252 = vpop.permute.xlu0 %1251
        %1253 = vrot.lane.b32.xlu0 %v1184, 32
        %v1254 = vpop.permute.xlu0 %1253
        %1255 = vrot.lane.b32.xlu0 %v1187, 32
        %v1256 = vpop.permute.xlu0 %1255
        %1257 = vrot.lane.b32.xlu0 %v1190, 32
        %v1258 = vpop.permute.xlu0 %1257
        %1259 = vrot.lane.b32.xlu0 %v1193, 32
        %v1260 = vpop.permute.xlu0 %1259
        %1261 = vrot.lane.b32.xlu0 %v1196, 32
        %v1262 = vpop.permute.xlu0 %1261
        %1263 = vrot.lane.b32.xlu0 %v1199, 32
        %v1264 = vpop.permute.xlu0 %1263
        %1265 = vrot.lane.b32.xlu0 %v1202, 32
        %v1266 = vpop.permute.xlu0 %1265
        %v1267 = vsel %vm562, %v1204, %v1075
        %v1268 = vsel %vm562, %v1206, %v1076
        %v1269 = vsel %vm562, %v1208, %v1077
        %v1270 = vsel %vm562, %v1210, %v1078
        %v1271 = vsel %vm562, %v1212, %v1079
        %v1272 = vsel %vm562, %v1214, %v1080
        %v1273 = vsel %vm562, %v1216, %v1081
        %v1274 = vsel %vm562, %v1218, %v1082
        %v1275 = vsel %vm562, %v1220, %v1083
        %v1276 = vsel %vm562, %v1222, %v1084
        %v1277 = vsel %vm562, %v1224, %v1085
        %v1278 = vsel %vm562, %v1226, %v1086
        %v1279 = vsel %vm562, %v1228, %v1087
        %v1280 = vsel %vm562, %v1230, %v1088
        %v1281 = vsel %vm562, %v1232, %v1089
        %v1282 = vsel %vm562, %v1234, %v1090
        %v1283 = vsel %vm562, %v1236, %v1091
        %v1284 = vsel %vm562, %v1238, %v1092
        %v1285 = vsel %vm562, %v1240, %v1093
        %v1286 = vsel %vm562, %v1242, %v1094
        %v1287 = vsel %vm562, %v1244, %v1095
        %v1288 = vsel %vm562, %v1246, %v1096
        %v1289 = vsel %vm562, %v1248, %v1097
        %v1290 = vsel %vm562, %v1250, %v1098
        %v1291 = vsel %vm562, %v1252, %v1099
        %v1292 = vsel %vm562, %v1254, %v1100
        %v1293 = vsel %vm562, %v1256, %v1101
        %v1294 = vsel %vm562, %v1258, %v1102
        %v1295 = vsel %vm562, %v1260, %v1103
        %v1296 = vsel %vm562, %v1262, %v1104
        %v1297 = vsel %vm562, %v1264, %v1105
        %v1298 = vsel %vm562, %v1266, %v1106
        %1331 = vrot.lane.b32.xlu0 %v1267, 127
        %v1332 = vpop.permute.xlu0 %1331
        %1333 = vrot.lane.b32.xlu0 %v1268, 127
        %v1334 = vpop.permute.xlu0 %1333
        %1335 = vrot.lane.b32.xlu0 %v1269, 127
        %v1336 = vpop.permute.xlu0 %1335
        %1337 = vrot.lane.b32.xlu0 %v1270, 127
        %v1338 = vpop.permute.xlu0 %1337
        %1339 = vrot.lane.b32.xlu0 %v1271, 127
        %v1340 = vpop.permute.xlu0 %1339
        %1341 = vrot.lane.b32.xlu0 %v1272, 127
        %v1342 = vpop.permute.xlu0 %1341
        %1343 = vrot.lane.b32.xlu0 %v1273, 127
        %v1344 = vpop.permute.xlu0 %1343
        %1345 = vrot.lane.b32.xlu0 %v1274, 127
        %v1346 = vpop.permute.xlu0 %1345
        %1347 = vrot.lane.b32.xlu0 %v1275, 127
        %v1348 = vpop.permute.xlu0 %1347
        %1349 = vrot.lane.b32.xlu0 %v1276, 127
        %v1350 = vpop.permute.xlu0 %1349
        %1351 = vrot.lane.b32.xlu0 %v1277, 127
        %v1352 = vpop.permute.xlu0 %1351
        %1353 = vrot.lane.b32.xlu0 %v1278, 127
        %v1354 = vpop.permute.xlu0 %1353
        %1355 = vrot.lane.b32.xlu0 %v1279, 127
        %v1356 = vpop.permute.xlu0 %1355
        %1357 = vrot.lane.b32.xlu0 %v1280, 127
        %v1358 = vpop.permute.xlu0 %1357
        %1359 = vrot.lane.b32.xlu0 %v1281, 127
        %v1360 = vpop.permute.xlu0 %1359
        %1361 = vrot.lane.b32.xlu0 %v1282, 127
        %v1362 = vpop.permute.xlu0 %1361
        %1363 = vrot.lane.b32.xlu0 %v1283, 127
        %v1364 = vpop.permute.xlu0 %1363
        %1365 = vrot.lane.b32.xlu0 %v1284, 127
        %v1366 = vpop.permute.xlu0 %1365
        %1367 = vrot.lane.b32.xlu0 %v1285, 127
        %v1368 = vpop.permute.xlu0 %1367
        %1369 = vrot.lane.b32.xlu0 %v1286, 127
        %v1370 = vpop.permute.xlu0 %1369
        %1371 = vrot.lane.b32.xlu0 %v1287, 127
        %v1372 = vpop.permute.xlu0 %1371
        %1373 = vrot.lane.b32.xlu0 %v1288, 127
        %v1374 = vpop.permute.xlu0 %1373
        %1375 = vrot.lane.b32.xlu0 %v1289, 127
        %v1376 = vpop.permute.xlu0 %1375
        %1377 = vrot.lane.b32.xlu0 %v1290, 127
        %v1378 = vpop.permute.xlu0 %1377
        %1379 = vrot.lane.b32.xlu0 %v1291, 127
        %v1380 = vpop.permute.xlu0 %1379
        %1381 = vrot.lane.b32.xlu0 %v1292, 127
        %v1382 = vpop.permute.xlu0 %1381
        %1383 = vrot.lane.b32.xlu0 %v1293, 127
        %v1384 = vpop.permute.xlu0 %1383
        %1385 = vrot.lane.b32.xlu0 %v1294, 127
        %v1386 = vpop.permute.xlu0 %1385
        %1387 = vrot.lane.b32.xlu0 %v1295, 127
        %v1388 = vpop.permute.xlu0 %1387
        %1389 = vrot.lane.b32.xlu0 %v1296, 127
        %v1390 = vpop.permute.xlu0 %1389
        %1391 = vrot.lane.b32.xlu0 %v1297, 127
        %v1392 = vpop.permute.xlu0 %1391
        %1393 = vrot.lane.b32.xlu0 %v1298, 127
        %v1394 = vpop.permute.xlu0 %1393
        %v1427 = vsel %vm561, -inf, %v1332
        %v1428 = vsel %vm561, -inf, %v1334
        %v1429 = vsel %vm561, -inf, %v1336
        %v1430 = vsel %vm561, -inf, %v1338
        %v1431 = vsel %vm561, -inf, %v1340
        %v1432 = vsel %vm561, -inf, %v1342
        %v1433 = vsel %vm561, -inf, %v1344
        %v1434 = vsel %vm561, -inf, %v1346
        %v1435 = vsel %vm561, -inf, %v1348
        %v1436 = vsel %vm561, -inf, %v1350
        %v1437 = vsel %vm561, -inf, %v1352
        %v1438 = vsel %vm561, -inf, %v1354
        %v1439 = vsel %vm561, -inf, %v1356
        %v1440 = vsel %vm561, -inf, %v1358
        %v1441 = vsel %vm561, -inf, %v1360
        %v1442 = vsel %vm561, -inf, %v1362
        %v1443 = vsel %vm561, -inf, %v1364
        %v1444 = vsel %vm561, -inf, %v1366
        %v1445 = vsel %vm561, -inf, %v1368
        %v1446 = vsel %vm561, -inf, %v1370
        %v1447 = vsel %vm561, -inf, %v1372
        %v1448 = vsel %vm561, -inf, %v1374
        %v1449 = vsel %vm561, -inf, %v1376
        %v1450 = vsel %vm561, -inf, %v1378
        %v1451 = vsel %vm561, -inf, %v1380
        %v1452 = vsel %vm561, -inf, %v1382
        %v1453 = vsel %vm561, -inf, %v1384
        %v1454 = vsel %vm561, -inf, %v1386
        %v1455 = vsel %vm561, -inf, %v1388
        %v1456 = vsel %vm561, -inf, %v1390
        %v1457 = vsel %vm561, -inf, %v1392
        %v1458 = vsel %vm561, -inf, %v1394
        %1459 = vrot.lane.b32.xlu0 %v1267, 97
        %v1460 = vpop.permute.xlu0 %1459
        %1461 = vrot.lane.b32.xlu0 %v1268, 97
        %v1462 = vpop.permute.xlu0 %1461
        %1463 = vrot.lane.b32.xlu0 %v1269, 97
        %v1464 = vpop.permute.xlu0 %1463
        %1465 = vrot.lane.b32.xlu0 %v1270, 97
        %v1466 = vpop.permute.xlu0 %1465
        %1467 = vrot.lane.b32.xlu0 %v1271, 97
        %v1468 = vpop.permute.xlu0 %1467
        %1469 = vrot.lane.b32.xlu0 %v1272, 97
        %v1470 = vpop.permute.xlu0 %1469
        %1471 = vrot.lane.b32.xlu0 %v1273, 97
        %v1472 = vpop.permute.xlu0 %1471
        %1473 = vrot.lane.b32.xlu0 %v1274, 97
        %v1474 = vpop.permute.xlu0 %1473
        %1475 = vrot.lane.b32.xlu0 %v1275, 97
        %v1476 = vpop.permute.xlu0 %1475
        %1477 = vrot.lane.b32.xlu0 %v1276, 97
        %v1478 = vpop.permute.xlu0 %1477
        %1479 = vrot.lane.b32.xlu0 %v1277, 97
        %v1480 = vpop.permute.xlu0 %1479
        %1481 = vrot.lane.b32.xlu0 %v1278, 97
        %v1482 = vpop.permute.xlu0 %1481
        %1483 = vrot.lane.b32.xlu0 %v1279, 97
        %v1484 = vpop.permute.xlu0 %1483
        %1485 = vrot.lane.b32.xlu0 %v1280, 97
        %v1486 = vpop.permute.xlu0 %1485
        %1487 = vrot.lane.b32.xlu0 %v1281, 97
        %v1488 = vpop.permute.xlu0 %1487
        %1489 = vrot.lane.b32.xlu0 %v1282, 97
        %v1490 = vpop.permute.xlu0 %1489
        %1491 = vrot.lane.b32.xlu0 %v1283, 97
        %v1492 = vpop.permute.xlu0 %1491
        %1493 = vrot.lane.b32.xlu0 %v1284, 97
        %v1494 = vpop.permute.xlu0 %1493
        %1495 = vrot.lane.b32.xlu0 %v1285, 97
        %v1496 = vpop.permute.xlu0 %1495
        %1497 = vrot.lane.b32.xlu0 %v1286, 97
        %v1498 = vpop.permute.xlu0 %1497
        %1499 = vrot.lane.b32.xlu0 %v1287, 97
        %v1500 = vpop.permute.xlu0 %1499
        %1501 = vrot.lane.b32.xlu0 %v1288, 97
        %v1502 = vpop.permute.xlu0 %1501
        %1503 = vrot.lane.b32.xlu0 %v1289, 97
        %v1504 = vpop.permute.xlu0 %1503
        %1505 = vrot.lane.b32.xlu0 %v1290, 97
        %v1506 = vpop.permute.xlu0 %1505
        %1507 = vrot.lane.b32.xlu0 %v1291, 97
        %v1508 = vpop.permute.xlu0 %1507
        %1509 = vrot.lane.b32.xlu0 %v1292, 97
        %v1510 = vpop.permute.xlu0 %1509
        %1511 = vrot.lane.b32.xlu0 %v1293, 97
        %v1512 = vpop.permute.xlu0 %1511
        %1513 = vrot.lane.b32.xlu0 %v1294, 97
        %v1514 = vpop.permute.xlu0 %1513
        %1515 = vrot.lane.b32.xlu0 %v1295, 97
        %v1516 = vpop.permute.xlu0 %1515
        %1517 = vrot.lane.b32.xlu0 %v1296, 97
        %v1518 = vpop.permute.xlu0 %1517
        %1519 = vrot.lane.b32.xlu0 %v1297, 97
        %v1520 = vpop.permute.xlu0 %1519
        %1521 = vrot.lane.b32.xlu0 %v1298, 97
        %v1522 = vpop.permute.xlu0 %1521
        %v1555 = vsel %vm560, -inf, %v1460
        %v1556 = vsel %vm560, -inf, %v1462
        %v1557 = vsel %vm560, -inf, %v1464
        %v1558 = vsel %vm560, -inf, %v1466
        %v1559 = vsel %vm560, -inf, %v1468
        %v1560 = vsel %vm560, -inf, %v1470
        %v1561 = vsel %vm560, -inf, %v1472
        %v1562 = vsel %vm560, -inf, %v1474
        %v1563 = vsel %vm560, -inf, %v1476
        %v1564 = vsel %vm560, -inf, %v1478
        %v1565 = vsel %vm560, -inf, %v1480
        %v1566 = vsel %vm560, -inf, %v1482
        %v1567 = vsel %vm560, -inf, %v1484
        %v1568 = vsel %vm560, -inf, %v1486
        %v1569 = vsel %vm560, -inf, %v1488
        %v1570 = vsel %vm560, -inf, %v1490
        %v1571 = vsel %vm560, -inf, %v1492
        %v1572 = vsel %vm560, -inf, %v1494
        %v1573 = vsel %vm560, -inf, %v1496
        %v1574 = vsel %vm560, -inf, %v1498
        %v1575 = vsel %vm560, -inf, %v1500
        %v1576 = vsel %vm560, -inf, %v1502
        %v1577 = vsel %vm560, -inf, %v1504
        %v1578 = vsel %vm560, -inf, %v1506
        %v1579 = vsel %vm560, -inf, %v1508
        %v1580 = vsel %vm560, -inf, %v1510
        %v1581 = vsel %vm560, -inf, %v1512
        %v1582 = vsel %vm560, -inf, %v1514
        %v1583 = vsel %vm560, -inf, %v1516
        %v1584 = vsel %vm560, -inf, %v1518
        %v1585 = vsel %vm560, -inf, %v1520
        %v1586 = vsel %vm560, -inf, %v1522
        %v1587 = vmax.f32 %v1427, %v1075
        %v1588 = vmax.f32 %v1428, %v1076
        %v1589 = vmax.f32 %v1429, %v1077
        %v1590 = vmax.f32 %v1430, %v1078
        %v1591 = vmax.f32 %v1431, %v1079
        %v1592 = vmax.f32 %v1432, %v1080
        %v1593 = vmax.f32 %v1433, %v1081
        %v1594 = vmax.f32 %v1434, %v1082
        %v1595 = vmax.f32 %v1435, %v1083
        %v1596 = vmax.f32 %v1436, %v1084
        %v1597 = vmax.f32 %v1437, %v1085
        %v1598 = vmax.f32 %v1438, %v1086
        %v1599 = vmax.f32 %v1439, %v1087
        %v1600 = vmax.f32 %v1440, %v1088
        %v1601 = vmax.f32 %v1441, %v1089
        %v1602 = vmax.f32 %v1442, %v1090
        %v1603 = vmax.f32 %v1443, %v1091
        %v1604 = vmax.f32 %v1444, %v1092
        %v1605 = vmax.f32 %v1445, %v1093
        %v1606 = vmax.f32 %v1446, %v1094
        %v1607 = vmax.f32 %v1447, %v1095
        %v1608 = vmax.f32 %v1448, %v1096
        %v1609 = vmax.f32 %v1449, %v1097
        %v1610 = vmax.f32 %v1450, %v1098
        %v1611 = vmax.f32 %v1451, %v1099
        %v1612 = vmax.f32 %v1452, %v1100
        %v1613 = vmax.f32 %v1453, %v1101
        %v1614 = vmax.f32 %v1454, %v1102
        %v1615 = vmax.f32 %v1455, %v1103
        %v1616 = vmax.f32 %v1456, %v1104
        %v1617 = vmax.f32 %v1457, %v1105
        %v1618 = vmax.f32 %v1458, %v1106
        %v1619 = vmax.f32 %v1587, %v1555
        %v1620 = vmax.f32 %v1588, %v1556
        %v1621 = vmax.f32 %v1589, %v1557
        %v1622 = vmax.f32 %v1590, %v1558
        %v1623 = vmax.f32 %v1591, %v1559
        %v1624 = vmax.f32 %v1592, %v1560
        %v1625 = vmax.f32 %v1593, %v1561
        %v1626 = vmax.f32 %v1594, %v1562
        %v1627 = vmax.f32 %v1595, %v1563
        %v1628 = vmax.f32 %v1596, %v1564
        %v1629 = vmax.f32 %v1597, %v1565
        %v1630 = vmax.f32 %v1598, %v1566
        %v1631 = vmax.f32 %v1599, %v1567
        %v1632 = vmax.f32 %v1600, %v1568
        %v1633 = vmax.f32 %v1601, %v1569
        %v1634 = vmax.f32 %v1602, %v1570
        %v1635 = vmax.f32 %v1603, %v1571
        %v1636 = vmax.f32 %v1604, %v1572
        %v1637 = vmax.f32 %v1605, %v1573
        %v1638 = vmax.f32 %v1606, %v1574
        %v1639 = vmax.f32 %v1607, %v1575
        %v1640 = vmax.f32 %v1608, %v1576
        %v1641 = vmax.f32 %v1609, %v1577
        %v1642 = vmax.f32 %v1610, %v1578
        %v1643 = vmax.f32 %v1611, %v1579
        %v1644 = vmax.f32 %v1612, %v1580
        %v1645 = vmax.f32 %v1613, %v1581
        %v1646 = vmax.f32 %v1614, %v1582
        %v1647 = vmax.f32 %v1615, %v1583
        %v1648 = vmax.f32 %v1616, %v1584
        %v1649 = vmax.f32 %v1617, %v1585
        %v1650 = vmax.f32 %v1618, %v1586
        %1651 = vrot.lane.b32.xlu0 %v1619, 32
        %v1652 = vpop.permute.xlu0 %1651
        %v1653 = vsel %vm562, %v1652, %v1619
        %1654 = vrot.lane.b32.xlu0 %v1620, 32
        %v1655 = vpop.permute.xlu0 %1654
        %v1656 = vsel %vm562, %v1655, %v1620
        %1657 = vrot.lane.b32.xlu0 %v1621, 32
        %v1658 = vpop.permute.xlu0 %1657
        %v1659 = vsel %vm562, %v1658, %v1621
        %1660 = vrot.lane.b32.xlu0 %v1622, 32
        %v1661 = vpop.permute.xlu0 %1660
        %v1662 = vsel %vm562, %v1661, %v1622
        %1663 = vrot.lane.b32.xlu0 %v1623, 32
        %v1664 = vpop.permute.xlu0 %1663
        %v1665 = vsel %vm562, %v1664, %v1623
        %1666 = vrot.lane.b32.xlu0 %v1624, 32
        %v1667 = vpop.permute.xlu0 %1666
        %v1668 = vsel %vm562, %v1667, %v1624
        %1669 = vrot.lane.b32.xlu0 %v1625, 32
        %v1670 = vpop.permute.xlu0 %1669
        %v1671 = vsel %vm562, %v1670, %v1625
        %1672 = vrot.lane.b32.xlu0 %v1626, 32
        %v1673 = vpop.permute.xlu0 %1672
        %v1674 = vsel %vm562, %v1673, %v1626
        %1675 = vrot.lane.b32.xlu0 %v1627, 32
        %v1676 = vpop.permute.xlu0 %1675
        %v1677 = vsel %vm562, %v1676, %v1627
        %1678 = vrot.lane.b32.xlu0 %v1628, 32
        %v1679 = vpop.permute.xlu0 %1678
        %v1680 = vsel %vm562, %v1679, %v1628
        %1681 = vrot.lane.b32.xlu0 %v1629, 32
        %v1682 = vpop.permute.xlu0 %1681
        %v1683 = vsel %vm562, %v1682, %v1629
        %1684 = vrot.lane.b32.xlu0 %v1630, 32
        %v1685 = vpop.permute.xlu0 %1684
        %v1686 = vsel %vm562, %v1685, %v1630
        %1687 = vrot.lane.b32.xlu0 %v1631, 32
        %v1688 = vpop.permute.xlu0 %1687
        %v1689 = vsel %vm562, %v1688, %v1631
        %1690 = vrot.lane.b32.xlu0 %v1632, 32
        %v1691 = vpop.permute.xlu0 %1690
        %v1692 = vsel %vm562, %v1691, %v1632
        %1693 = vrot.lane.b32.xlu0 %v1633, 32
        %v1694 = vpop.permute.xlu0 %1693
        %v1695 = vsel %vm562, %v1694, %v1633
        %1696 = vrot.lane.b32.xlu0 %v1634, 32
        %v1697 = vpop.permute.xlu0 %1696
        %v1698 = vsel %vm562, %v1697, %v1634
        %1699 = vrot.lane.b32.xlu0 %v1635, 32
        %v1700 = vpop.permute.xlu0 %1699
        %v1701 = vsel %vm562, %v1700, %v1635
        %1702 = vrot.lane.b32.xlu0 %v1636, 32
        %v1703 = vpop.permute.xlu0 %1702
        %v1704 = vsel %vm562, %v1703, %v1636
        %1705 = vrot.lane.b32.xlu0 %v1637, 32
        %v1706 = vpop.permute.xlu0 %1705
        %v1707 = vsel %vm562, %v1706, %v1637
        %1708 = vrot.lane.b32.xlu0 %v1638, 32
        %v1709 = vpop.permute.xlu0 %1708
        %v1710 = vsel %vm562, %v1709, %v1638
        %1711 = vrot.lane.b32.xlu0 %v1639, 32
        %v1712 = vpop.permute.xlu0 %1711
        %v1713 = vsel %vm562, %v1712, %v1639
        %1714 = vrot.lane.b32.xlu0 %v1640, 32
        %v1715 = vpop.permute.xlu0 %1714
        %v1716 = vsel %vm562, %v1715, %v1640
        %1717 = vrot.lane.b32.xlu0 %v1641, 32
        %v1718 = vpop.permute.xlu0 %1717
        %v1719 = vsel %vm562, %v1718, %v1641
        %1720 = vrot.lane.b32.xlu0 %v1642, 32
        %v1721 = vpop.permute.xlu0 %1720
        %v1722 = vsel %vm562, %v1721, %v1642
        %1723 = vrot.lane.b32.xlu0 %v1643, 32
        %v1724 = vpop.permute.xlu0 %1723
        %v1725 = vsel %vm562, %v1724, %v1643
        %1726 = vrot.lane.b32.xlu0 %v1644, 32
        %v1727 = vpop.permute.xlu0 %1726
        %v1728 = vsel %vm562, %v1727, %v1644
        %1729 = vrot.lane.b32.xlu0 %v1645, 32
        %v1730 = vpop.permute.xlu0 %1729
        %v1731 = vsel %vm562, %v1730, %v1645
        %1732 = vrot.lane.b32.xlu0 %v1646, 32
        %v1733 = vpop.permute.xlu0 %1732
        %v1734 = vsel %vm562, %v1733, %v1646
        %1735 = vrot.lane.b32.xlu0 %v1647, 32
        %v1736 = vpop.permute.xlu0 %1735
        %v1737 = vsel %vm562, %v1736, %v1647
        %1738 = vrot.lane.b32.xlu0 %v1648, 32
        %v1739 = vpop.permute.xlu0 %1738
        %v1740 = vsel %vm562, %v1739, %v1648
        %1741 = vrot.lane.b32.xlu0 %v1649, 32
        %v1742 = vpop.permute.xlu0 %1741
        %v1743 = vsel %vm562, %v1742, %v1649
        %1744 = vrot.lane.b32.xlu0 %v1650, 32
        %v1745 = vpop.permute.xlu0 %1744
        %v1746 = vsel %vm562, %v1745, %v1650
        %1747 = vrot.lane.b32.xlu0 %v1653, 32
        %v1748 = vpop.permute.xlu0 %1747
        %1749 = vrot.lane.b32.xlu0 %v1656, 32
        %v1750 = vpop.permute.xlu0 %1749
        %1751 = vrot.lane.b32.xlu0 %v1659, 32
        %v1752 = vpop.permute.xlu0 %1751
        %1753 = vrot.lane.b32.xlu0 %v1662, 32
        %v1754 = vpop.permute.xlu0 %1753
        %1755 = vrot.lane.b32.xlu0 %v1665, 32
        %v1756 = vpop.permute.xlu0 %1755
        %1757 = vrot.lane.b32.xlu0 %v1668, 32
        %v1758 = vpop.permute.xlu0 %1757
        %1759 = vrot.lane.b32.xlu0 %v1671, 32
        %v1760 = vpop.permute.xlu0 %1759
        %1761 = vrot.lane.b32.xlu0 %v1674, 32
        %v1762 = vpop.permute.xlu0 %1761
        %1763 = vrot.lane.b32.xlu0 %v1677, 32
        %v1764 = vpop.permute.xlu0 %1763
        %1765 = vrot.lane.b32.xlu0 %v1680, 32
        %v1766 = vpop.permute.xlu0 %1765
        %1767 = vrot.lane.b32.xlu0 %v1683, 32
        %v1768 = vpop.permute.xlu0 %1767
        %1769 = vrot.lane.b32.xlu0 %v1686, 32
        %v1770 = vpop.permute.xlu0 %1769
        %1771 = vrot.lane.b32.xlu0 %v1689, 32
        %v1772 = vpop.permute.xlu0 %1771
        %1773 = vrot.lane.b32.xlu0 %v1692, 32
        %v1774 = vpop.permute.xlu0 %1773
        %1775 = vrot.lane.b32.xlu0 %v1695, 32
        %v1776 = vpop.permute.xlu0 %1775
        %1777 = vrot.lane.b32.xlu0 %v1698, 32
        %v1778 = vpop.permute.xlu0 %1777
        %1779 = vrot.lane.b32.xlu0 %v1701, 32
        %v1780 = vpop.permute.xlu0 %1779
        %1781 = vrot.lane.b32.xlu0 %v1704, 32
        %v1782 = vpop.permute.xlu0 %1781
        %1783 = vrot.lane.b32.xlu0 %v1707, 32
        %v1784 = vpop.permute.xlu0 %1783
        %1785 = vrot.lane.b32.xlu0 %v1710, 32
        %v1786 = vpop.permute.xlu0 %1785
        %1787 = vrot.lane.b32.xlu0 %v1713, 32
        %v1788 = vpop.permute.xlu0 %1787
        %1789 = vrot.lane.b32.xlu0 %v1716, 32
        %v1790 = vpop.permute.xlu0 %1789
        %1791 = vrot.lane.b32.xlu0 %v1719, 32
        %v1792 = vpop.permute.xlu0 %1791
        %1793 = vrot.lane.b32.xlu0 %v1722, 32
        %v1794 = vpop.permute.xlu0 %1793
        %1795 = vrot.lane.b32.xlu0 %v1725, 32
        %v1796 = vpop.permute.xlu0 %1795
        %1797 = vrot.lane.b32.xlu0 %v1728, 32
        %v1798 = vpop.permute.xlu0 %1797
        %1799 = vrot.lane.b32.xlu0 %v1731, 32
        %v1800 = vpop.permute.xlu0 %1799
        %1801 = vrot.lane.b32.xlu0 %v1734, 32
        %v1802 = vpop.permute.xlu0 %1801
        %1803 = vrot.lane.b32.xlu0 %v1737, 32
        %v1804 = vpop.permute.xlu0 %1803
        %1805 = vrot.lane.b32.xlu0 %v1740, 32
        %v1806 = vpop.permute.xlu0 %1805
        %1807 = vrot.lane.b32.xlu0 %v1743, 32
        %v1808 = vpop.permute.xlu0 %1807
        %1809 = vrot.lane.b32.xlu0 %v1746, 32
        %v1810 = vpop.permute.xlu0 %1809
        %v1811 = vsel %vm562, %v1748, %v1619
        %v1812 = vsel %vm562, %v1750, %v1620
        %v1813 = vsel %vm562, %v1752, %v1621
        %v1814 = vsel %vm562, %v1754, %v1622
        %v1815 = vsel %vm562, %v1756, %v1623
        %v1816 = vsel %vm562, %v1758, %v1624
        %v1817 = vsel %vm562, %v1760, %v1625
        %v1818 = vsel %vm562, %v1762, %v1626
        %v1819 = vsel %vm562, %v1764, %v1627
        %v1820 = vsel %vm562, %v1766, %v1628
        %v1821 = vsel %vm562, %v1768, %v1629
        %v1822 = vsel %vm562, %v1770, %v1630
        %v1823 = vsel %vm562, %v1772, %v1631
        %v1824 = vsel %vm562, %v1774, %v1632
        %v1825 = vsel %vm562, %v1776, %v1633
        %v1826 = vsel %vm562, %v1778, %v1634
        %v1827 = vsel %vm562, %v1780, %v1635
        %v1828 = vsel %vm562, %v1782, %v1636
        %v1829 = vsel %vm562, %v1784, %v1637
        %v1830 = vsel %vm562, %v1786, %v1638
        %v1831 = vsel %vm562, %v1788, %v1639
        %v1832 = vsel %vm562, %v1790, %v1640
        %v1833 = vsel %vm562, %v1792, %v1641
        %v1834 = vsel %vm562, %v1794, %v1642
        %v1835 = vsel %vm562, %v1796, %v1643
        %v1836 = vsel %vm562, %v1798, %v1644
        %v1837 = vsel %vm562, %v1800, %v1645
        %v1838 = vsel %vm562, %v1802, %v1646
        %v1839 = vsel %vm562, %v1804, %v1647
        %v1840 = vsel %vm562, %v1806, %v1648
        %v1841 = vsel %vm562, %v1808, %v1649
        %v1842 = vsel %vm562, %v1810, %v1650
        %1875 = vrot.lane.b32.xlu0 %v1811, 127
        %v1876 = vpop.permute.xlu0 %1875
        %1877 = vrot.lane.b32.xlu0 %v1812, 127
        %v1878 = vpop.permute.xlu0 %1877
        %1879 = vrot.lane.b32.xlu0 %v1813, 127
        %v1880 = vpop.permute.xlu0 %1879
        %1881 = vrot.lane.b32.xlu0 %v1814, 127
        %v1882 = vpop.permute.xlu0 %1881
        %1883 = vrot.lane.b32.xlu0 %v1815, 127
        %v1884 = vpop.permute.xlu0 %1883
        %1885 = vrot.lane.b32.xlu0 %v1816, 127
        %v1886 = vpop.permute.xlu0 %1885
        %1887 = vrot.lane.b32.xlu0 %v1817, 127
        %v1888 = vpop.permute.xlu0 %1887
        %1889 = vrot.lane.b32.xlu0 %v1818, 127
        %v1890 = vpop.permute.xlu0 %1889
        %1891 = vrot.lane.b32.xlu0 %v1819, 127
        %v1892 = vpop.permute.xlu0 %1891
        %1893 = vrot.lane.b32.xlu0 %v1820, 127
        %v1894 = vpop.permute.xlu0 %1893
        %1895 = vrot.lane.b32.xlu0 %v1821, 127
        %v1896 = vpop.permute.xlu0 %1895
        %1897 = vrot.lane.b32.xlu0 %v1822, 127
        %v1898 = vpop.permute.xlu0 %1897
        %1899 = vrot.lane.b32.xlu0 %v1823, 127
        %v1900 = vpop.permute.xlu0 %1899
        %1901 = vrot.lane.b32.xlu0 %v1824, 127
        %v1902 = vpop.permute.xlu0 %1901
        %1903 = vrot.lane.b32.xlu0 %v1825, 127
        %v1904 = vpop.permute.xlu0 %1903
        %1905 = vrot.lane.b32.xlu0 %v1826, 127
        %v1906 = vpop.permute.xlu0 %1905
        %1907 = vrot.lane.b32.xlu0 %v1827, 127
        %v1908 = vpop.permute.xlu0 %1907
        %1909 = vrot.lane.b32.xlu0 %v1828, 127
        %v1910 = vpop.permute.xlu0 %1909
        %1911 = vrot.lane.b32.xlu0 %v1829, 127
        %v1912 = vpop.permute.xlu0 %1911
        %1913 = vrot.lane.b32.xlu0 %v1830, 127
        %v1914 = vpop.permute.xlu0 %1913
        %1915 = vrot.lane.b32.xlu0 %v1831, 127
        %v1916 = vpop.permute.xlu0 %1915
        %1917 = vrot.lane.b32.xlu0 %v1832, 127
        %v1918 = vpop.permute.xlu0 %1917
        %1919 = vrot.lane.b32.xlu0 %v1833, 127
        %v1920 = vpop.permute.xlu0 %1919
        %1921 = vrot.lane.b32.xlu0 %v1834, 127
        %v1922 = vpop.permute.xlu0 %1921
        %1923 = vrot.lane.b32.xlu0 %v1835, 127
        %v1924 = vpop.permute.xlu0 %1923
        %1925 = vrot.lane.b32.xlu0 %v1836, 127
        %v1926 = vpop.permute.xlu0 %1925
        %1927 = vrot.lane.b32.xlu0 %v1837, 127
        %v1928 = vpop.permute.xlu0 %1927
        %1929 = vrot.lane.b32.xlu0 %v1838, 127
        %v1930 = vpop.permute.xlu0 %1929
        %1931 = vrot.lane.b32.xlu0 %v1839, 127
        %v1932 = vpop.permute.xlu0 %1931
        %1933 = vrot.lane.b32.xlu0 %v1840, 127
        %v1934 = vpop.permute.xlu0 %1933
        %1935 = vrot.lane.b32.xlu0 %v1841, 127
        %v1936 = vpop.permute.xlu0 %1935
        %1937 = vrot.lane.b32.xlu0 %v1842, 127
        %v1938 = vpop.permute.xlu0 %1937
        %v1971 = vsel %vm561, -inf, %v1876
        %v1972 = vsel %vm561, -inf, %v1878
        %v1973 = vsel %vm561, -inf, %v1880
        %v1974 = vsel %vm561, -inf, %v1882
        %v1975 = vsel %vm561, -inf, %v1884
        %v1976 = vsel %vm561, -inf, %v1886
        %v1977 = vsel %vm561, -inf, %v1888
        %v1978 = vsel %vm561, -inf, %v1890
        %v1979 = vsel %vm561, -inf, %v1892
        %v1980 = vsel %vm561, -inf, %v1894
        %v1981 = vsel %vm561, -inf, %v1896
        %v1982 = vsel %vm561, -inf, %v1898
        %v1983 = vsel %vm561, -inf, %v1900
        %v1984 = vsel %vm561, -inf, %v1902
        %v1985 = vsel %vm561, -inf, %v1904
        %v1986 = vsel %vm561, -inf, %v1906
        %v1987 = vsel %vm561, -inf, %v1908
        %v1988 = vsel %vm561, -inf, %v1910
        %v1989 = vsel %vm561, -inf, %v1912
        %v1990 = vsel %vm561, -inf, %v1914
        %v1991 = vsel %vm561, -inf, %v1916
        %v1992 = vsel %vm561, -inf, %v1918
        %v1993 = vsel %vm561, -inf, %v1920
        %v1994 = vsel %vm561, -inf, %v1922
        %v1995 = vsel %vm561, -inf, %v1924
        %v1996 = vsel %vm561, -inf, %v1926
        %v1997 = vsel %vm561, -inf, %v1928
        %v1998 = vsel %vm561, -inf, %v1930
        %v1999 = vsel %vm561, -inf, %v1932
        %v2000 = vsel %vm561, -inf, %v1934
        %v2001 = vsel %vm561, -inf, %v1936
        %v2002 = vsel %vm561, -inf, %v1938
        %2003 = vrot.lane.b32.xlu0 %v1811, 97
        %v2004 = vpop.permute.xlu0 %2003
        %2005 = vrot.lane.b32.xlu0 %v1812, 97
        %v2006 = vpop.permute.xlu0 %2005
        %2007 = vrot.lane.b32.xlu0 %v1813, 97
        %v2008 = vpop.permute.xlu0 %2007
        %2009 = vrot.lane.b32.xlu0 %v1814, 97
        %v2010 = vpop.permute.xlu0 %2009
        %2011 = vrot.lane.b32.xlu0 %v1815, 97
        %v2012 = vpop.permute.xlu0 %2011
        %2013 = vrot.lane.b32.xlu0 %v1816, 97
        %v2014 = vpop.permute.xlu0 %2013
        %2015 = vrot.lane.b32.xlu0 %v1817, 97
        %v2016 = vpop.permute.xlu0 %2015
        %2017 = vrot.lane.b32.xlu0 %v1818, 97
        %v2018 = vpop.permute.xlu0 %2017
        %2019 = vrot.lane.b32.xlu0 %v1819, 97
        %v2020 = vpop.permute.xlu0 %2019
        %2021 = vrot.lane.b32.xlu0 %v1820, 97
        %v2022 = vpop.permute.xlu0 %2021
        %2023 = vrot.lane.b32.xlu0 %v1821, 97
        %v2024 = vpop.permute.xlu0 %2023
        %2025 = vrot.lane.b32.xlu0 %v1822, 97
        %v2026 = vpop.permute.xlu0 %2025
        %2027 = vrot.lane.b32.xlu0 %v1823, 97
        %v2028 = vpop.permute.xlu0 %2027
        %2029 = vrot.lane.b32.xlu0 %v1824, 97
        %v2030 = vpop.permute.xlu0 %2029
        %2031 = vrot.lane.b32.xlu0 %v1825, 97
        %v2032 = vpop.permute.xlu0 %2031
        %2033 = vrot.lane.b32.xlu0 %v1826, 97
        %v2034 = vpop.permute.xlu0 %2033
        %2035 = vrot.lane.b32.xlu0 %v1827, 97
        %v2036 = vpop.permute.xlu0 %2035
        %2037 = vrot.lane.b32.xlu0 %v1828, 97
        %v2038 = vpop.permute.xlu0 %2037
        %2039 = vrot.lane.b32.xlu0 %v1829, 97
        %v2040 = vpop.permute.xlu0 %2039
        %2041 = vrot.lane.b32.xlu0 %v1830, 97
        %v2042 = vpop.permute.xlu0 %2041
        %2043 = vrot.lane.b32.xlu0 %v1831, 97
        %v2044 = vpop.permute.xlu0 %2043
        %2045 = vrot.lane.b32.xlu0 %v1832, 97
        %v2046 = vpop.permute.xlu0 %2045
        %2047 = vrot.lane.b32.xlu0 %v1833, 97
        %v2048 = vpop.permute.xlu0 %2047
        %2049 = vrot.lane.b32.xlu0 %v1834, 97
        %v2050 = vpop.permute.xlu0 %2049
        %2051 = vrot.lane.b32.xlu0 %v1835, 97
        %v2052 = vpop.permute.xlu0 %2051
        %2053 = vrot.lane.b32.xlu0 %v1836, 97
        %v2054 = vpop.permute.xlu0 %2053
        %2055 = vrot.lane.b32.xlu0 %v1837, 97
        %v2056 = vpop.permute.xlu0 %2055
        %2057 = vrot.lane.b32.xlu0 %v1838, 97
        %v2058 = vpop.permute.xlu0 %2057
        %2059 = vrot.lane.b32.xlu0 %v1839, 97
        %v2060 = vpop.permute.xlu0 %2059
        %2061 = vrot.lane.b32.xlu0 %v1840, 97
        %v2062 = vpop.permute.xlu0 %2061
        %2063 = vrot.lane.b32.xlu0 %v1841, 97
        %v2064 = vpop.permute.xlu0 %2063
        %2065 = vrot.lane.b32.xlu0 %v1842, 97
        %v2066 = vpop.permute.xlu0 %2065
        %v2099 = vsel %vm560, -inf, %v2004
        %v2100 = vsel %vm560, -inf, %v2006
        %v2101 = vsel %vm560, -inf, %v2008
        %v2102 = vsel %vm560, -inf, %v2010
        %v2103 = vsel %vm560, -inf, %v2012
        %v2104 = vsel %vm560, -inf, %v2014
        %v2105 = vsel %vm560, -inf, %v2016
        %v2106 = vsel %vm560, -inf, %v2018
        %v2107 = vsel %vm560, -inf, %v2020
        %v2108 = vsel %vm560, -inf, %v2022
        %v2109 = vsel %vm560, -inf, %v2024
        %v2110 = vsel %vm560, -inf, %v2026
        %v2111 = vsel %vm560, -inf, %v2028
        %v2112 = vsel %vm560, -inf, %v2030
        %v2113 = vsel %vm560, -inf, %v2032
        %v2114 = vsel %vm560, -inf, %v2034
        %v2115 = vsel %vm560, -inf, %v2036
        %v2116 = vsel %vm560, -inf, %v2038
        %v2117 = vsel %vm560, -inf, %v2040
        %v2118 = vsel %vm560, -inf, %v2042
        %v2119 = vsel %vm560, -inf, %v2044
        %v2120 = vsel %vm560, -inf, %v2046
        %v2121 = vsel %vm560, -inf, %v2048
        %v2122 = vsel %vm560, -inf, %v2050
        %v2123 = vsel %vm560, -inf, %v2052
        %v2124 = vsel %vm560, -inf, %v2054
        %v2125 = vsel %vm560, -inf, %v2056
        %v2126 = vsel %vm560, -inf, %v2058
        %v2127 = vsel %vm560, -inf, %v2060
        %v2128 = vsel %vm560, -inf, %v2062
        %v2129 = vsel %vm560, -inf, %v2064
        %v2130 = vsel %vm560, -inf, %v2066
        %v2131 = vmax.f32 %v1971, %v1619
        %v2132 = vmax.f32 %v1972, %v1620
        %v2133 = vmax.f32 %v1973, %v1621
        %v2134 = vmax.f32 %v1974, %v1622
        %v2135 = vmax.f32 %v1975, %v1623
        %v2136 = vmax.f32 %v1976, %v1624
        %v2137 = vmax.f32 %v1977, %v1625
        %v2138 = vmax.f32 %v1978, %v1626
        %v2139 = vmax.f32 %v1979, %v1627
        %v2140 = vmax.f32 %v1980, %v1628
        %v2141 = vmax.f32 %v1981, %v1629
        %v2142 = vmax.f32 %v1982, %v1630
        %v2143 = vmax.f32 %v1983, %v1631
        %v2144 = vmax.f32 %v1984, %v1632
        %v2145 = vmax.f32 %v1985, %v1633
        %v2146 = vmax.f32 %v1986, %v1634
        %v2147 = vmax.f32 %v1987, %v1635
        %v2148 = vmax.f32 %v1988, %v1636
        %v2149 = vmax.f32 %v1989, %v1637
        %v2150 = vmax.f32 %v1990, %v1638
        %v2151 = vmax.f32 %v1991, %v1639
        %v2152 = vmax.f32 %v1992, %v1640
        %v2153 = vmax.f32 %v1993, %v1641
        %v2154 = vmax.f32 %v1994, %v1642
        %v2155 = vmax.f32 %v1995, %v1643
        %v2156 = vmax.f32 %v1996, %v1644
        %v2157 = vmax.f32 %v1997, %v1645
        %v2158 = vmax.f32 %v1998, %v1646
        %v2159 = vmax.f32 %v1999, %v1647
        %v2160 = vmax.f32 %v2000, %v1648
        %v2161 = vmax.f32 %v2001, %v1649
        %v2162 = vmax.f32 %v2002, %v1650
        %v2163 = vmax.f32 %v2131, %v2099
        %v2164 = vmax.f32 %v2132, %v2100
        %v2165 = vmax.f32 %v2133, %v2101
        %v2166 = vmax.f32 %v2134, %v2102
        %v2167 = vmax.f32 %v2135, %v2103
        %v2168 = vmax.f32 %v2136, %v2104
        %v2169 = vmax.f32 %v2137, %v2105
        %v2170 = vmax.f32 %v2138, %v2106
        %v2171 = vmax.f32 %v2139, %v2107
        %v2172 = vmax.f32 %v2140, %v2108
        %v2173 = vmax.f32 %v2141, %v2109
        %v2174 = vmax.f32 %v2142, %v2110
        %v2175 = vmax.f32 %v2143, %v2111
        %v2176 = vmax.f32 %v2144, %v2112
        %v2177 = vmax.f32 %v2145, %v2113
        %v2178 = vmax.f32 %v2146, %v2114
        %v2179 = vmax.f32 %v2147, %v2115
        %v2180 = vmax.f32 %v2148, %v2116
        %v2181 = vmax.f32 %v2149, %v2117
        %v2182 = vmax.f32 %v2150, %v2118
        %v2183 = vmax.f32 %v2151, %v2119
        %v2184 = vmax.f32 %v2152, %v2120
        %v2185 = vmax.f32 %v2153, %v2121
        %v2186 = vmax.f32 %v2154, %v2122
        %v2187 = vmax.f32 %v2155, %v2123
        %v2188 = vmax.f32 %v2156, %v2124
        %v2189 = vmax.f32 %v2157, %v2125
        %v2190 = vmax.f32 %v2158, %v2126
        %v2191 = vmax.f32 %v2159, %v2127
        %v2192 = vmax.f32 %v2160, %v2128
        %v2193 = vmax.f32 %v2161, %v2129
        %v2194 = vmax.f32 %v2162, %v2130
        %v2195 = vpack.c.bf16 %v2164, %v2163
        %v2196 = vpack.c.bf16 %v2166, %v2165
        %v2197 = vpack.c.bf16 %v2168, %v2167
        %v2198 = vpack.c.bf16 %v2170, %v2169
        %v2199 = vpack.c.bf16 %v2172, %v2171
        %v2200 = vpack.c.bf16 %v2174, %v2173
        %v2201 = vpack.c.bf16 %v2176, %v2175
        %v2202 = vpack.c.bf16 %v2178, %v2177
        %v2203 = vpack.c.bf16 %v2180, %v2179
        %v2204 = vpack.c.bf16 %v2182, %v2181
        %v2205 = vpack.c.bf16 %v2184, %v2183
        %v2206 = vpack.c.bf16 %v2186, %v2185
        %v2207 = vpack.c.bf16 %v2188, %v2187
        %v2208 = vpack.c.bf16 %v2190, %v2189
        %v2209 = vpack.c.bf16 %v2192, %v2191
        %v2210 = vpack.c.bf16 %v2194, %v2193
        %v2211 = vld [vmem:[%s2] sm:$0xf]
        %v2212 = vld [vmem:[%s2 + $0x4] sm:$0xf]
        %v2213 = vld [vmem:[%s2 + $0x8] sm:$0xf]
        %v2214 = vld [vmem:[%s2 + $0xc] sm:$0xf]
        %v2219 = vunpack.c.l.b16 %v2211
        %v2220 = vunpack.c.l.b16 %v2212
        %v2221 = vunpack.c.l.b16 %v2213
        %v2222 = vunpack.c.l.b16 %v2214
        %v2223 = vpack.c.b16 %v2220, %v2219
        %v2224 = vpack.c.b16 %v2222, %v2221
        %vm2227 = vcmask 261120
        %v2229 = vsel %vm2227, %v2195, 0
        %v2232 = vsel %vm2227, %v2196, 0
        %v2235 = vsel %vm2227, %v2197, 0
        %v2238 = vsel %vm2227, %v2198, 0
        %v2241 = vsel %vm2227, %v2199, 0
        %v2244 = vsel %vm2227, %v2200, 0
        %v2247 = vsel %vm2227, %v2201, 0
        %v2250 = vsel %vm2227, %v2202, 0
        %v2253 = vsel %vm2227, %v2203, 0
        %v2256 = vsel %vm2227, %v2204, 0
        %v2259 = vsel %vm2227, %v2205, 0
        %v2262 = vsel %vm2227, %v2206, 0
        %v2265 = vsel %vm2227, %v2207, 0
        %v2268 = vsel %vm2227, %v2208, 0
        %v2271 = vsel %vm2227, %v2209, 0
        %v2274 = vsel %vm2227, %v2210, 0
        %2276 = vmatprep.subr.bf16.mxu0 0
        %2277 = vmatpush1.bf16.msra.mxu0 0
        %2278 = vmatprep.subr.bf16.mxu0 0
        %2279 = vmatpush1.bf16.msra.mxu0 0
        %2280 = vmatprep.subr.bf16.mxu0 0
        %2281 = vmatpush1.bf16.msra.mxu0 0
        %2282 = vmatprep.subr.bf16.mxu0 0
        %2283 = vmatpush1.bf16.msra.mxu0 0
        %2284 = vmatprep.subr.bf16.mxu0 0
        %2285 = vmatpush1.bf16.msra.mxu0 0
        %2286 = vmatprep.subr.bf16.mxu0 0
        %2287 = vmatpush1.bf16.msra.mxu0 0
        %2288 = vmatprep.subr.bf16.mxu0 0
        %2289 = vmatpush1.bf16.msra.mxu0 %v2224
        %2290 = vmatprep.subr.bf16.mxu0 0
        %2291 = vmatpush1.bf16.msra.mxu0 %v2223
        %2292 = vmatprep.subr.bf16.mxu0 0
        %2293 = vmatpush2.bf16.msra.mxu0 0
        %2294 = vmatprep.subr.bf16.mxu0 0
        %2295 = vmatpush2.bf16.msra.mxu0 0
        %2296 = vmatprep.subr.bf16.mxu0 0
        %2297 = vmatpush2.bf16.msra.mxu0 0
        %2298 = vmatprep.subr.bf16.mxu0 0
        %2299 = vmatpush2.bf16.msra.mxu0 0
        %2300 = vmatprep.subr.bf16.mxu0 0
        %2301 = vmatpush2.bf16.msra.mxu0 0
        %2302 = vmatprep.subr.bf16.mxu0 0
        %2303 = vmatpush2.bf16.msra.mxu0 0
        %2304 = vmatprep.subr.bf16.mxu0 0
        %2305 = vmatpush2.bf16.msra.mxu0 0
        %2306 = vmatprep.subr.bf16.mxu0 0
        %2307 = vmatpush2.bf16.msra.mxu0 0
        %2308 = vmatprep.mubr.bf16.mxu0 0
        %2309 = vmatmul.mubr.bf16.gmra.mxu0 %v2229
        %v2310 = vpop.f32.mrf.mxu0
        %v2311 = vadd.f32 0.0, %v2310
        %v2312 = vpop.f32.mrf.mxu0
        %v2313 = vpop.f32.mrf.mxu0
        %v2314 = vadd.f32 0.0, %v2313
        %v2315 = vpop.f32.mrf.mxu0
        %2316 = vmatprep.mubr.bf16.mxu0 0
        %2317 = vmatmul.mubr.bf16.gmra.mxu0 %v2232
        %v2318 = vpop.f32.mrf.mxu0
        %v2319 = vadd.f32 0.0, %v2318
        %v2320 = vpop.f32.mrf.mxu0
        %v2321 = vpop.f32.mrf.mxu0
        %v2322 = vadd.f32 0.0, %v2321
        %v2323 = vpop.f32.mrf.mxu0
        %2324 = vmatprep.mubr.bf16.mxu0 0
        %2325 = vmatmul.mubr.bf16.gmra.mxu0 %v2235
        %v2326 = vpop.f32.mrf.mxu0
        %v2327 = vadd.f32 0.0, %v2326
        %v2328 = vpop.f32.mrf.mxu0
        %v2329 = vpop.f32.mrf.mxu0
        %v2330 = vadd.f32 0.0, %v2329
        %v2331 = vpop.f32.mrf.mxu0
        %2332 = vmatprep.mubr.bf16.mxu0 0
        %2333 = vmatmul.mubr.bf16.gmra.mxu0 %v2238
        %v2334 = vpop.f32.mrf.mxu0
        %v2335 = vadd.f32 0.0, %v2334
        %v2336 = vpop.f32.mrf.mxu0
        %v2337 = vpop.f32.mrf.mxu0
        %v2338 = vadd.f32 0.0, %v2337
        %v2339 = vpop.f32.mrf.mxu0
        %2340 = vmatprep.mubr.bf16.mxu0 0
        %2341 = vmatmul.mubr.bf16.gmra.mxu0 %v2241
        %v2342 = vpop.f32.mrf.mxu0
        %v2343 = vadd.f32 0.0, %v2342
        %v2344 = vpop.f32.mrf.mxu0
        %v2345 = vpop.f32.mrf.mxu0
        %v2346 = vadd.f32 0.0, %v2345
        %v2347 = vpop.f32.mrf.mxu0
        %2348 = vmatprep.mubr.bf16.mxu0 0
        %2349 = vmatmul.mubr.bf16.gmra.mxu0 %v2244
        %v2350 = vpop.f32.mrf.mxu0
        %v2351 = vadd.f32 0.0, %v2350
        %v2352 = vpop.f32.mrf.mxu0
        %v2353 = vpop.f32.mrf.mxu0
        %v2354 = vadd.f32 0.0, %v2353
        %v2355 = vpop.f32.mrf.mxu0
        %2356 = vmatprep.mubr.bf16.mxu0 0
        %2357 = vmatmul.mubr.bf16.gmra.mxu0 %v2247
        %v2358 = vpop.f32.mrf.mxu0
        %v2359 = vadd.f32 0.0, %v2358
        %v2360 = vpop.f32.mrf.mxu0
        %v2361 = vpop.f32.mrf.mxu0
        %v2362 = vadd.f32 0.0, %v2361
        %v2363 = vpop.f32.mrf.mxu0
        %2364 = vmatprep.mubr.bf16.mxu0 0
        %2365 = vmatmul.mubr.bf16.gmra.mxu0 %v2250
        %v2366 = vpop.f32.mrf.mxu0
        %v2367 = vadd.f32 0.0, %v2366
        %v2368 = vpop.f32.mrf.mxu0
        %v2369 = vpop.f32.mrf.mxu0
        %v2370 = vadd.f32 0.0, %v2369
        %v2371 = vpop.f32.mrf.mxu0
        %2372 = vmatprep.mubr.bf16.mxu0 0
        %2373 = vmatmul.mubr.bf16.gmra.mxu0 %v2253
        %v2374 = vpop.f32.mrf.mxu0
        %v2375 = vadd.f32 0.0, %v2374
        %v2376 = vpop.f32.mrf.mxu0
        %v2377 = vpop.f32.mrf.mxu0
        %v2378 = vadd.f32 0.0, %v2377
        %v2379 = vpop.f32.mrf.mxu0
        %2380 = vmatprep.mubr.bf16.mxu0 0
        %2381 = vmatmul.mubr.bf16.gmra.mxu0 %v2256
        %v2382 = vpop.f32.mrf.mxu0
        %v2383 = vadd.f32 0.0, %v2382
        %v2384 = vpop.f32.mrf.mxu0
        %v2385 = vpop.f32.mrf.mxu0
        %v2386 = vadd.f32 0.0, %v2385
        %v2387 = vpop.f32.mrf.mxu0
        %2388 = vmatprep.mubr.bf16.mxu0 0
        %2389 = vmatmul.mubr.bf16.gmra.mxu0 %v2259
        %v2390 = vpop.f32.mrf.mxu0
        %v2391 = vadd.f32 0.0, %v2390
        %v2392 = vpop.f32.mrf.mxu0
        %v2393 = vpop.f32.mrf.mxu0
        %v2394 = vadd.f32 0.0, %v2393
        %v2395 = vpop.f32.mrf.mxu0
        %2396 = vmatprep.mubr.bf16.mxu0 0
        %2397 = vmatmul.mubr.bf16.gmra.mxu0 %v2262
        %v2398 = vpop.f32.mrf.mxu0
        %v2399 = vadd.f32 0.0, %v2398
        %v2400 = vpop.f32.mrf.mxu0
        %v2401 = vpop.f32.mrf.mxu0
        %v2402 = vadd.f32 0.0, %v2401
        %v2403 = vpop.f32.mrf.mxu0
        %2404 = vmatprep.mubr.bf16.mxu0 0
        %2405 = vmatmul.mubr.bf16.gmra.mxu0 %v2265
        %v2406 = vpop.f32.mrf.mxu0
        %v2407 = vadd.f32 0.0, %v2406
        %v2408 = vpop.f32.mrf.mxu0
        %v2409 = vpop.f32.mrf.mxu0
        %v2410 = vadd.f32 0.0, %v2409
        %v2411 = vpop.f32.mrf.mxu0
        %2412 = vmatprep.mubr.bf16.mxu0 0
        %2413 = vmatmul.mubr.bf16.gmra.mxu0 %v2268
        %v2414 = vpop.f32.mrf.mxu0
        %v2415 = vadd.f32 0.0, %v2414
        %v2416 = vpop.f32.mrf.mxu0
        %v2417 = vpop.f32.mrf.mxu0
        %v2418 = vadd.f32 0.0, %v2417
        %v2419 = vpop.f32.mrf.mxu0
        %2420 = vmatprep.mubr.bf16.mxu0 0
        %2421 = vmatmul.mubr.bf16.gmra.mxu0 %v2271
        %v2422 = vpop.f32.mrf.mxu0
        %v2423 = vadd.f32 0.0, %v2422
        %v2424 = vpop.f32.mrf.mxu0
        %v2425 = vpop.f32.mrf.mxu0
        %v2426 = vadd.f32 0.0, %v2425
        %v2427 = vpop.f32.mrf.mxu0
        %2428 = vmatprep.mubr.bf16.mxu0 0
        %2429 = vmatmul.mubr.bf16.gmra.mxu0 %v2274
        %v2430 = vpop.f32.mrf.mxu0
        %v2431 = vadd.f32 0.0, %v2430
        %v2432 = vpop.f32.mrf.mxu0
        %v2433 = vpop.f32.mrf.mxu0
        %v2434 = vadd.f32 0.0, %v2433
        %v2435 = vpop.f32.mrf.mxu0
        %2436 = vdwg.mxu0
        %v2437 = vlaneseq
        %v2438 = vshrl.u32 %v2437, 7
        %v2439 = vadd.s32 %v2438, 8
        %v2440 = vadd.s32 %v2438, 16
        %v2441 = vadd.s32 %v2438, 24
        %v2442 = vadd.s32 %v2438, 32
        %v2443 = vadd.s32 %v2438, 40
        %v2444 = vadd.s32 %v2438, 48
        %v2445 = vadd.s32 %v2438, 56
        %v2446 = vadd.s32 %v2438, 64
        %v2447 = vadd.s32 %v2438, 72
        %v2448 = vadd.s32 %v2438, 80
        %v2449 = vadd.s32 %v2438, 88
        %v2450 = vadd.s32 %v2438, 96
        %v2451 = vadd.s32 %v2438, 104
        %v2452 = vadd.s32 %v2438, 112
        %v2453 = vadd.s32 %v2438, 120
        %v2454 = vadd.s32 %v2438, 128
        %v2455 = vadd.s32 %v2438, 136
        %v2456 = vadd.s32 %v2438, 144
        %v2457 = vadd.s32 %v2438, 152
        %v2458 = vadd.s32 %v2438, 160
        %v2459 = vadd.s32 %v2438, 168
        %v2460 = vadd.s32 %v2438, 176
        %v2461 = vadd.s32 %v2438, 184
        %v2462 = vadd.s32 %v2438, 192
        %v2463 = vadd.s32 %v2438, 200
        %v2464 = vadd.s32 %v2438, 208
        %v2465 = vadd.s32 %v2438, 216
        %v2466 = vadd.s32 %v2438, 224
        %v2467 = vadd.s32 %v2438, 232
        %v2468 = vadd.s32 %v2438, 240
        %v2469 = vadd.s32 %v2438, 248
        %vm2470 = vcmp.lt.s32.totalorder %v2438, 0
        %v2471 = vsub.s32 0, %v2438
        %v2472 = vsel %vm2470, %v2471, %v2438
        %v2473 = vshrl.u32 %v2472, 5
        %v2474 = vand.u32 %v2472, 31
        %v2475 = vsub.s32 0, %v2474
        %v2476 = vsel %vm2470, %v2475, %v2474
        %vm2477 = vcmp.lt.s32.totalorder %v2439, 0
        %v2478 = vsub.s32 0, %v2439
        %v2479 = vsel %vm2477, %v2478, %v2439
        %v2480 = vshrl.u32 %v2479, 5
        %v2481 = vand.u32 %v2479, 31
        %v2482 = vsub.s32 0, %v2481
        %v2483 = vsel %vm2477, %v2482, %v2481
        %vm2484 = vcmp.lt.s32.totalorder %v2440, 0
        %v2485 = vsub.s32 0, %v2440
        %v2486 = vsel %vm2484, %v2485, %v2440
        %v2487 = vshrl.u32 %v2486, 5
        %v2488 = vand.u32 %v2486, 31
        %v2489 = vsub.s32 0, %v2488
        %v2490 = vsel %vm2484, %v2489, %v2488
        %vm2491 = vcmp.lt.s32.totalorder %v2441, 0
        %v2492 = vsub.s32 0, %v2441
        %v2493 = vsel %vm2491, %v2492, %v2441
        %v2494 = vshrl.u32 %v2493, 5
        %v2495 = vand.u32 %v2493, 31
        %v2496 = vsub.s32 0, %v2495
        %v2497 = vsel %vm2491, %v2496, %v2495
        %vm2498 = vcmp.lt.s32.totalorder %v2442, 0
        %v2499 = vsub.s32 0, %v2442
        %v2500 = vsel %vm2498, %v2499, %v2442
        %v2501 = vshrl.u32 %v2500, 5
        %v2502 = vand.u32 %v2500, 31
        %v2503 = vsub.s32 0, %v2502
        %v2504 = vsel %vm2498, %v2503, %v2502
        %vm2505 = vcmp.lt.s32.totalorder %v2443, 0
        %v2506 = vsub.s32 0, %v2443
        %v2507 = vsel %vm2505, %v2506, %v2443
        %v2508 = vshrl.u32 %v2507, 5
        %v2509 = vand.u32 %v2507, 31
        %v2510 = vsub.s32 0, %v2509
        %v2511 = vsel %vm2505, %v2510, %v2509
        %vm2512 = vcmp.lt.s32.totalorder %v2444, 0
        %v2513 = vsub.s32 0, %v2444
        %v2514 = vsel %vm2512, %v2513, %v2444
        %v2515 = vshrl.u32 %v2514, 5
        %v2516 = vand.u32 %v2514, 31
        %v2517 = vsub.s32 0, %v2516
        %v2518 = vsel %vm2512, %v2517, %v2516
        %vm2519 = vcmp.lt.s32.totalorder %v2445, 0
        %v2520 = vsub.s32 0, %v2445
        %v2521 = vsel %vm2519, %v2520, %v2445
        %v2522 = vshrl.u32 %v2521, 5
        %v2523 = vand.u32 %v2521, 31
        %v2524 = vsub.s32 0, %v2523
        %v2525 = vsel %vm2519, %v2524, %v2523
        %vm2526 = vcmp.lt.s32.totalorder %v2446, 0
        %v2527 = vsub.s32 0, %v2446
        %v2528 = vsel %vm2526, %v2527, %v2446
        %v2529 = vshrl.u32 %v2528, 5
        %v2530 = vand.u32 %v2528, 31
        %v2531 = vsub.s32 0, %v2530
        %v2532 = vsel %vm2526, %v2531, %v2530
        %vm2533 = vcmp.lt.s32.totalorder %v2447, 0
        %v2534 = vsub.s32 0, %v2447
        %v2535 = vsel %vm2533, %v2534, %v2447
        %v2536 = vshrl.u32 %v2535, 5
        %v2537 = vand.u32 %v2535, 31
        %v2538 = vsub.s32 0, %v2537
        %v2539 = vsel %vm2533, %v2538, %v2537
        %vm2540 = vcmp.lt.s32.totalorder %v2448, 0
        %v2541 = vsub.s32 0, %v2448
        %v2542 = vsel %vm2540, %v2541, %v2448
        %v2543 = vshrl.u32 %v2542, 5
        %v2544 = vand.u32 %v2542, 31
        %v2545 = vsub.s32 0, %v2544
        %v2546 = vsel %vm2540, %v2545, %v2544
        %vm2547 = vcmp.lt.s32.totalorder %v2449, 0
        %v2548 = vsub.s32 0, %v2449
        %v2549 = vsel %vm2547, %v2548, %v2449
        %v2550 = vshrl.u32 %v2549, 5
        %v2551 = vand.u32 %v2549, 31
        %v2552 = vsub.s32 0, %v2551
        %v2553 = vsel %vm2547, %v2552, %v2551
        %vm2554 = vcmp.lt.s32.totalorder %v2450, 0
        %v2555 = vsub.s32 0, %v2450
        %v2556 = vsel %vm2554, %v2555, %v2450
        %v2557 = vshrl.u32 %v2556, 5
        %v2558 = vand.u32 %v2556, 31
        %v2559 = vsub.s32 0, %v2558
        %v2560 = vsel %vm2554, %v2559, %v2558
        %vm2561 = vcmp.lt.s32.totalorder %v2451, 0
        %v2562 = vsub.s32 0, %v2451
        %v2563 = vsel %vm2561, %v2562, %v2451
        %v2564 = vshrl.u32 %v2563, 5
        %v2565 = vand.u32 %v2563, 31
        %v2566 = vsub.s32 0, %v2565
        %v2567 = vsel %vm2561, %v2566, %v2565
        %vm2568 = vcmp.lt.s32.totalorder %v2452, 0
        %v2569 = vsub.s32 0, %v2452
        %v2570 = vsel %vm2568, %v2569, %v2452
        %v2571 = vshrl.u32 %v2570, 5
        %v2572 = vand.u32 %v2570, 31
        %v2573 = vsub.s32 0, %v2572
        %v2574 = vsel %vm2568, %v2573, %v2572
        %vm2575 = vcmp.lt.s32.totalorder %v2453, 0
        %v2576 = vsub.s32 0, %v2453
        %v2577 = vsel %vm2575, %v2576, %v2453
        %v2578 = vshrl.u32 %v2577, 5
        %v2579 = vand.u32 %v2577, 31
        %v2580 = vsub.s32 0, %v2579
        %v2581 = vsel %vm2575, %v2580, %v2579
        %vm2582 = vcmp.lt.s32.totalorder %v2454, 0
        %v2583 = vsub.s32 0, %v2454
        %v2584 = vsel %vm2582, %v2583, %v2454
        %v2585 = vshrl.u32 %v2584, 5
        %v2586 = vand.u32 %v2584, 31
        %v2587 = vsub.s32 0, %v2586
        %v2588 = vsel %vm2582, %v2587, %v2586
        %vm2589 = vcmp.lt.s32.totalorder %v2455, 0
        %v2590 = vsub.s32 0, %v2455
        %v2591 = vsel %vm2589, %v2590, %v2455
        %v2592 = vshrl.u32 %v2591, 5
        %v2593 = vand.u32 %v2591, 31
        %v2594 = vsub.s32 0, %v2593
        %v2595 = vsel %vm2589, %v2594, %v2593
        %vm2596 = vcmp.lt.s32.totalorder %v2456, 0
        %v2597 = vsub.s32 0, %v2456
        %v2598 = vsel %vm2596, %v2597, %v2456
        %v2599 = vshrl.u32 %v2598, 5
        %v2600 = vand.u32 %v2598, 31
        %v2601 = vsub.s32 0, %v2600
        %v2602 = vsel %vm2596, %v2601, %v2600
        %vm2603 = vcmp.lt.s32.totalorder %v2457, 0
        %v2604 = vsub.s32 0, %v2457
        %v2605 = vsel %vm2603, %v2604, %v2457
        %v2606 = vshrl.u32 %v2605, 5
        %v2607 = vand.u32 %v2605, 31
        %v2608 = vsub.s32 0, %v2607
        %v2609 = vsel %vm2603, %v2608, %v2607
        %vm2610 = vcmp.lt.s32.totalorder %v2458, 0
        %v2611 = vsub.s32 0, %v2458
        %v2612 = vsel %vm2610, %v2611, %v2458
        %v2613 = vshrl.u32 %v2612, 5
        %v2614 = vand.u32 %v2612, 31
        %v2615 = vsub.s32 0, %v2614
        %v2616 = vsel %vm2610, %v2615, %v2614
        %vm2617 = vcmp.lt.s32.totalorder %v2459, 0
        %v2618 = vsub.s32 0, %v2459
        %v2619 = vsel %vm2617, %v2618, %v2459
        %v2620 = vshrl.u32 %v2619, 5
        %v2621 = vand.u32 %v2619, 31
        %v2622 = vsub.s32 0, %v2621
        %v2623 = vsel %vm2617, %v2622, %v2621
        %vm2624 = vcmp.lt.s32.totalorder %v2460, 0
        %v2625 = vsub.s32 0, %v2460
        %v2626 = vsel %vm2624, %v2625, %v2460
        %v2627 = vshrl.u32 %v2626, 5
        %v2628 = vand.u32 %v2626, 31
        %v2629 = vsub.s32 0, %v2628
        %v2630 = vsel %vm2624, %v2629, %v2628
        %vm2631 = vcmp.lt.s32.totalorder %v2461, 0
        %v2632 = vsub.s32 0, %v2461
        %v2633 = vsel %vm2631, %v2632, %v2461
        %v2634 = vshrl.u32 %v2633, 5
        %v2635 = vand.u32 %v2633, 31
        %v2636 = vsub.s32 0, %v2635
        %v2637 = vsel %vm2631, %v2636, %v2635
        %vm2638 = vcmp.lt.s32.totalorder %v2462, 0
        %v2639 = vsub.s32 0, %v2462
        %v2640 = vsel %vm2638, %v2639, %v2462
        %v2641 = vshrl.u32 %v2640, 5
        %v2642 = vand.u32 %v2640, 31
        %v2643 = vsub.s32 0, %v2642
        %v2644 = vsel %vm2638, %v2643, %v2642
        %vm2645 = vcmp.lt.s32.totalorder %v2463, 0
        %v2646 = vsub.s32 0, %v2463
        %v2647 = vsel %vm2645, %v2646, %v2463
        %v2648 = vshrl.u32 %v2647, 5
        %v2649 = vand.u32 %v2647, 31
        %v2650 = vsub.s32 0, %v2649
        %v2651 = vsel %vm2645, %v2650, %v2649
        %vm2652 = vcmp.lt.s32.totalorder %v2464, 0
        %v2653 = vsub.s32 0, %v2464
        %v2654 = vsel %vm2652, %v2653, %v2464
        %v2655 = vshrl.u32 %v2654, 5
        %v2656 = vand.u32 %v2654, 31
        %v2657 = vsub.s32 0, %v2656
        %v2658 = vsel %vm2652, %v2657, %v2656
        %vm2659 = vcmp.lt.s32.totalorder %v2465, 0
        %v2660 = vsub.s32 0, %v2465
        %v2661 = vsel %vm2659, %v2660, %v2465
        %v2662 = vshrl.u32 %v2661, 5
        %v2663 = vand.u32 %v2661, 31
        %v2664 = vsub.s32 0, %v2663
        %v2665 = vsel %vm2659, %v2664, %v2663
        %vm2666 = vcmp.lt.s32.totalorder %v2466, 0
        %v2667 = vsub.s32 0, %v2466
        %v2668 = vsel %vm2666, %v2667, %v2466
        %v2669 = vshrl.u32 %v2668, 5
        %v2670 = vand.u32 %v2668, 31
        %v2671 = vsub.s32 0, %v2670
        %v2672 = vsel %vm2666, %v2671, %v2670
        %vm2673 = vcmp.lt.s32.totalorder %v2467, 0
        %v2674 = vsub.s32 0, %v2467
        %v2675 = vsel %vm2673, %v2674, %v2467
        %v2676 = vshrl.u32 %v2675, 5
        %v2677 = vand.u32 %v2675, 31
        %v2678 = vsub.s32 0, %v2677
        %v2679 = vsel %vm2673, %v2678, %v2677
        %vm2680 = vcmp.lt.s32.totalorder %v2468, 0
        %v2681 = vsub.s32 0, %v2468
        %v2682 = vsel %vm2680, %v2681, %v2468
        %v2683 = vshrl.u32 %v2682, 5
        %v2684 = vand.u32 %v2682, 31
        %v2685 = vsub.s32 0, %v2684
        %v2686 = vsel %vm2680, %v2685, %v2684
        %vm2687 = vcmp.lt.s32.totalorder %v2469, 0
        %v2688 = vsub.s32 0, %v2469
        %v2689 = vsel %vm2687, %v2688, %v2469
        %v2690 = vshrl.u32 %v2689, 5
        %v2691 = vand.u32 %v2689, 31
        %v2692 = vsub.s32 0, %v2691
        %v2693 = vsel %vm2687, %v2692, %v2691
        %vm2694 = vcmp.ne.s32.totalorder %v2476, 0
        %vm2695 = vcmp.ne.s32.totalorder %v2483, 0
        %vm2696 = vcmp.ne.s32.totalorder %v2490, 0
        %vm2697 = vcmp.ne.s32.totalorder %v2497, 0
        %vm2698 = vcmp.ne.s32.totalorder %v2504, 0
        %vm2699 = vcmp.ne.s32.totalorder %v2511, 0
        %vm2700 = vcmp.ne.s32.totalorder %v2518, 0
        %vm2701 = vcmp.ne.s32.totalorder %v2525, 0
        %vm2702 = vcmp.ne.s32.totalorder %v2532, 0
        %vm2703 = vcmp.ne.s32.totalorder %v2539, 0
        %vm2704 = vcmp.ne.s32.totalorder %v2546, 0
        %vm2705 = vcmp.ne.s32.totalorder %v2553, 0
        %vm2706 = vcmp.ne.s32.totalorder %v2560, 0
        %vm2707 = vcmp.ne.s32.totalorder %v2567, 0
        %vm2708 = vcmp.ne.s32.totalorder %v2574, 0
        %vm2709 = vcmp.ne.s32.totalorder %v2581, 0
        %vm2710 = vcmp.ne.s32.totalorder %v2588, 0
        %vm2711 = vcmp.ne.s32.totalorder %v2595, 0
        %vm2712 = vcmp.ne.s32.totalorder %v2602, 0
        %vm2713 = vcmp.ne.s32.totalorder %v2609, 0
        %vm2714 = vcmp.ne.s32.totalorder %v2616, 0
        %vm2715 = vcmp.ne.s32.totalorder %v2623, 0
        %vm2716 = vcmp.ne.s32.totalorder %v2630, 0
        %vm2717 = vcmp.ne.s32.totalorder %v2637, 0
        %vm2718 = vcmp.ne.s32.totalorder %v2644, 0
        %vm2719 = vcmp.ne.s32.totalorder %v2651, 0
        %vm2720 = vcmp.ne.s32.totalorder %v2658, 0
        %vm2721 = vcmp.ne.s32.totalorder %v2665, 0
        %vm2722 = vcmp.ne.s32.totalorder %v2672, 0
        %vm2723 = vcmp.ne.s32.totalorder %v2679, 0
        %vm2724 = vcmp.ne.s32.totalorder %v2686, 0
        %vm2725 = vcmp.ne.s32.totalorder %v2693, 0
        %vm2726 = vcmp.lt.s32.totalorder %v2476, 0
        %vm2727 = vcmp.lt.s32.totalorder %v2483, 0
        %vm2728 = vcmp.lt.s32.totalorder %v2490, 0
        %vm2729 = vcmp.lt.s32.totalorder %v2497, 0
        %vm2730 = vcmp.lt.s32.totalorder %v2504, 0
        %vm2731 = vcmp.lt.s32.totalorder %v2511, 0
        %vm2732 = vcmp.lt.s32.totalorder %v2518, 0
        %vm2733 = vcmp.lt.s32.totalorder %v2525, 0
        %vm2734 = vcmp.lt.s32.totalorder %v2532, 0
        %vm2735 = vcmp.lt.s32.totalorder %v2539, 0
        %vm2736 = vcmp.lt.s32.totalorder %v2546, 0
        %vm2737 = vcmp.lt.s32.totalorder %v2553, 0
        %vm2738 = vcmp.lt.s32.totalorder %v2560, 0
        %vm2739 = vcmp.lt.s32.totalorder %v2567, 0
        %vm2740 = vcmp.lt.s32.totalorder %v2574, 0
        %vm2741 = vcmp.lt.s32.totalorder %v2581, 0
        %vm2742 = vcmp.lt.s32.totalorder %v2588, 0
        %vm2743 = vcmp.lt.s32.totalorder %v2595, 0
        %vm2744 = vcmp.lt.s32.totalorder %v2602, 0
        %vm2745 = vcmp.lt.s32.totalorder %v2609, 0
        %vm2746 = vcmp.lt.s32.totalorder %v2616, 0
        %vm2747 = vcmp.lt.s32.totalorder %v2623, 0
        %vm2748 = vcmp.lt.s32.totalorder %v2630, 0
        %vm2749 = vcmp.lt.s32.totalorder %v2637, 0
        %vm2750 = vcmp.lt.s32.totalorder %v2644, 0
        %vm2751 = vcmp.lt.s32.totalorder %v2651, 0
        %vm2752 = vcmp.lt.s32.totalorder %v2658, 0
        %vm2753 = vcmp.lt.s32.totalorder %v2665, 0
        %vm2754 = vcmp.lt.s32.totalorder %v2672, 0
        %vm2755 = vcmp.lt.s32.totalorder %v2679, 0
        %vm2756 = vcmp.lt.s32.totalorder %v2686, 0
        %vm2757 = vcmp.lt.s32.totalorder %v2693, 0
        %vm2758 = vmand %vm2726, %vm2694
        %vm2759 = vmand %vm2727, %vm2695
        %vm2760 = vmand %vm2728, %vm2696
        %vm2761 = vmand %vm2729, %vm2697
        %vm2762 = vmand %vm2730, %vm2698
        %vm2763 = vmand %vm2731, %vm2699
        %vm2764 = vmand %vm2732, %vm2700
        %vm2765 = vmand %vm2733, %vm2701
        %vm2766 = vmand %vm2734, %vm2702
        %vm2767 = vmand %vm2735, %vm2703
        %vm2768 = vmand %vm2736, %vm2704
        %vm2769 = vmand %vm2737, %vm2705
        %vm2770 = vmand %vm2738, %vm2706
        %vm2771 = vmand %vm2739, %vm2707
        %vm2772 = vmand %vm2740, %vm2708
        %vm2773 = vmand %vm2741, %vm2709
        %vm2774 = vmand %vm2742, %vm2710
        %vm2775 = vmand %vm2743, %vm2711
        %vm2776 = vmand %vm2744, %vm2712
        %vm2777 = vmand %vm2745, %vm2713
        %vm2778 = vmand %vm2746, %vm2714
        %vm2779 = vmand %vm2747, %vm2715
        %vm2780 = vmand %vm2748, %vm2716
        %vm2781 = vmand %vm2749, %vm2717
        %vm2782 = vmand %vm2750, %vm2718
        %vm2783 = vmand %vm2751, %vm2719
        %vm2784 = vmand %vm2752, %vm2720
        %vm2785 = vmand %vm2753, %vm2721
        %vm2786 = vmand %vm2754, %vm2722
        %vm2787 = vmand %vm2755, %vm2723
        %vm2788 = vmand %vm2756, %vm2724
        %vm2789 = vmand %vm2757, %vm2725
        %v2790 = vadd.s32 %v2476, 32
        %v2791 = vadd.s32 %v2483, 32
        %v2792 = vadd.s32 %v2490, 32
        %v2793 = vadd.s32 %v2497, 32
        %v2794 = vadd.s32 %v2504, 32
        %v2795 = vadd.s32 %v2511, 32
        %v2796 = vadd.s32 %v2518, 32
        %v2797 = vadd.s32 %v2525, 32
        %v2798 = vadd.s32 %v2532, 32
        %v2799 = vadd.s32 %v2539, 32
        %v2800 = vadd.s32 %v2546, 32
        %v2801 = vadd.s32 %v2553, 32
        %v2802 = vadd.s32 %v2560, 32
        %v2803 = vadd.s32 %v2567, 32
        %v2804 = vadd.s32 %v2574, 32
        %v2805 = vadd.s32 %v2581, 32
        %v2806 = vadd.s32 %v2588, 32
        %v2807 = vadd.s32 %v2595, 32
        %v2808 = vadd.s32 %v2602, 32
        %v2809 = vadd.s32 %v2609, 32
        %v2810 = vadd.s32 %v2616, 32
        %v2811 = vadd.s32 %v2623, 32
        %v2812 = vadd.s32 %v2630, 32
        %v2813 = vadd.s32 %v2637, 32
        %v2814 = vadd.s32 %v2644, 32
        %v2815 = vadd.s32 %v2651, 32
        %v2816 = vadd.s32 %v2658, 32
        %v2817 = vadd.s32 %v2665, 32
        %v2818 = vadd.s32 %v2672, 32
        %v2819 = vadd.s32 %v2679, 32
        %v2820 = vadd.s32 %v2686, 32
        %v2821 = vadd.s32 %v2693, 32
        %v2822 = vsel %vm2758, %v2790, %v2476
        %v2823 = vsel %vm2759, %v2791, %v2483
        %v2824 = vsel %vm2760, %v2792, %v2490
        %v2825 = vsel %vm2761, %v2793, %v2497
        %v2826 = vsel %vm2762, %v2794, %v2504
        %v2827 = vsel %vm2763, %v2795, %v2511
        %v2828 = vsel %vm2764, %v2796, %v2518
        %v2829 = vsel %vm2765, %v2797, %v2525
        %v2830 = vsel %vm2766, %v2798, %v2532
        %v2831 = vsel %vm2767, %v2799, %v2539
        %v2832 = vsel %vm2768, %v2800, %v2546
        %v2833 = vsel %vm2769, %v2801, %v2553
        %v2834 = vsel %vm2770, %v2802, %v2560
        %v2835 = vsel %vm2771, %v2803, %v2567
        %v2836 = vsel %vm2772, %v2804, %v2574
        %v2837 = vsel %vm2773, %v2805, %v2581
        %v2838 = vsel %vm2774, %v2806, %v2588
        %v2839 = vsel %vm2775, %v2807, %v2595
        %v2840 = vsel %vm2776, %v2808, %v2602
        %v2841 = vsel %vm2777, %v2809, %v2609
        %v2842 = vsel %vm2778, %v2810, %v2616
        %v2843 = vsel %vm2779, %v2811, %v2623
        %v2844 = vsel %vm2780, %v2812, %v2630
        %v2845 = vsel %vm2781, %v2813, %v2637
        %v2846 = vsel %vm2782, %v2814, %v2644
        %v2847 = vsel %vm2783, %v2815, %v2651
        %v2848 = vsel %vm2784, %v2816, %v2658
        %v2849 = vsel %vm2785, %v2817, %v2665
        %v2850 = vsel %vm2786, %v2818, %v2672
        %v2851 = vsel %vm2787, %v2819, %v2679
        %v2852 = vsel %vm2788, %v2820, %v2686
        %v2853 = vsel %vm2789, %v2821, %v2693
        %vm2854 = vcmp.eq.s32.totalorder %v2822, 0
        %vm2855 = vcmp.eq.s32.totalorder %v2823, 0
        %vm2856 = vcmp.eq.s32.totalorder %v2824, 0
        %vm2857 = vcmp.eq.s32.totalorder %v2825, 0
        %vm2858 = vcmp.eq.s32.totalorder %v2826, 0
        %vm2859 = vcmp.eq.s32.totalorder %v2827, 0
        %vm2860 = vcmp.eq.s32.totalorder %v2828, 0
        %vm2861 = vcmp.eq.s32.totalorder %v2829, 0
        %vm2862 = vcmp.eq.s32.totalorder %v2830, 0
        %vm2863 = vcmp.eq.s32.totalorder %v2831, 0
        %vm2864 = vcmp.eq.s32.totalorder %v2832, 0
        %vm2865 = vcmp.eq.s32.totalorder %v2833, 0
        %vm2866 = vcmp.eq.s32.totalorder %v2834, 0
        %vm2867 = vcmp.eq.s32.totalorder %v2835, 0
        %vm2868 = vcmp.eq.s32.totalorder %v2836, 0
        %vm2869 = vcmp.eq.s32.totalorder %v2837, 0
        %vm2870 = vcmp.eq.s32.totalorder %v2838, 0
        %vm2871 = vcmp.eq.s32.totalorder %v2839, 0
        %vm2872 = vcmp.eq.s32.totalorder %v2840, 0
        %vm2873 = vcmp.eq.s32.totalorder %v2841, 0
        %vm2874 = vcmp.eq.s32.totalorder %v2842, 0
        %vm2875 = vcmp.eq.s32.totalorder %v2843, 0
        %vm2876 = vcmp.eq.s32.totalorder %v2844, 0
        %vm2877 = vcmp.eq.s32.totalorder %v2845, 0
        %vm2878 = vcmp.eq.s32.totalorder %v2846, 0
        %vm2879 = vcmp.eq.s32.totalorder %v2847, 0
        %vm2880 = vcmp.eq.s32.totalorder %v2848, 0
        %vm2881 = vcmp.eq.s32.totalorder %v2849, 0
        %vm2882 = vcmp.eq.s32.totalorder %v2850, 0
        %vm2883 = vcmp.eq.s32.totalorder %v2851, 0
        %vm2884 = vcmp.eq.s32.totalorder %v2852, 0
        %vm2885 = vcmp.eq.s32.totalorder %v2853, 0
        %vm2886 = vcmp.eq.s32.totalorder %v2822, 31
        %vm2887 = vcmp.eq.s32.totalorder %v2823, 31
        %vm2888 = vcmp.eq.s32.totalorder %v2824, 31
        %vm2889 = vcmp.eq.s32.totalorder %v2825, 31
        %vm2890 = vcmp.eq.s32.totalorder %v2826, 31
        %vm2891 = vcmp.eq.s32.totalorder %v2827, 31
        %vm2892 = vcmp.eq.s32.totalorder %v2828, 31
        %vm2893 = vcmp.eq.s32.totalorder %v2829, 31
        %vm2894 = vcmp.eq.s32.totalorder %v2830, 31
        %vm2895 = vcmp.eq.s32.totalorder %v2831, 31
        %vm2896 = vcmp.eq.s32.totalorder %v2832, 31
        %vm2897 = vcmp.eq.s32.totalorder %v2833, 31
        %vm2898 = vcmp.eq.s32.totalorder %v2834, 31
        %vm2899 = vcmp.eq.s32.totalorder %v2835, 31
        %vm2900 = vcmp.eq.s32.totalorder %v2836, 31
        %vm2901 = vcmp.eq.s32.totalorder %v2837, 31
        %vm2902 = vcmp.eq.s32.totalorder %v2838, 31
        %vm2903 = vcmp.eq.s32.totalorder %v2839, 31
        %vm2904 = vcmp.eq.s32.totalorder %v2840, 31
        %vm2905 = vcmp.eq.s32.totalorder %v2841, 31
        %vm2906 = vcmp.eq.s32.totalorder %v2842, 31
        %vm2907 = vcmp.eq.s32.totalorder %v2843, 31
        %vm2908 = vcmp.eq.s32.totalorder %v2844, 31
        %vm2909 = vcmp.eq.s32.totalorder %v2845, 31
        %vm2910 = vcmp.eq.s32.totalorder %v2846, 31
        %vm2911 = vcmp.eq.s32.totalorder %v2847, 31
        %vm2912 = vcmp.eq.s32.totalorder %v2848, 31
        %vm2913 = vcmp.eq.s32.totalorder %v2849, 31
        %vm2914 = vcmp.eq.s32.totalorder %v2850, 31
        %vm2915 = vcmp.eq.s32.totalorder %v2851, 31
        %vm2916 = vcmp.eq.s32.totalorder %v2852, 31
        %vm2917 = vcmp.eq.s32.totalorder %v2853, 31
        %v2918 = vrot.slane %v2311, 1
        %v2919 = vrot.slane %v2314, 1
        %v2920 = vrot.slane %v2319, 1
        %v2921 = vrot.slane %v2322, 1
        %v2922 = vrot.slane %v2327, 1
        %v2923 = vrot.slane %v2330, 1
        %v2924 = vrot.slane %v2335, 1
        %v2925 = vrot.slane %v2338, 1
        %v2926 = vrot.slane %v2343, 1
        %v2927 = vrot.slane %v2346, 1
        %v2928 = vrot.slane %v2351, 1
        %v2929 = vrot.slane %v2354, 1
        %v2930 = vrot.slane %v2359, 1
        %v2931 = vrot.slane %v2362, 1
        %v2932 = vrot.slane %v2367, 1
        %v2933 = vrot.slane %v2370, 1
        %v2934 = vrot.slane %v2375, 1
        %v2935 = vrot.slane %v2378, 1
        %v2936 = vrot.slane %v2383, 1
        %v2937 = vrot.slane %v2386, 1
        %v2938 = vrot.slane %v2391, 1
        %v2939 = vrot.slane %v2394, 1
        %v2940 = vrot.slane %v2399, 1
        %v2941 = vrot.slane %v2402, 1
        %v2942 = vrot.slane %v2407, 1
        %v2943 = vrot.slane %v2410, 1
        %v2944 = vrot.slane %v2415, 1
        %v2945 = vrot.slane %v2418, 1
        %v2946 = vrot.slane %v2423, 1
        %v2947 = vrot.slane %v2426, 1
        %v2948 = vrot.slane %v2431, 1
        %v2949 = vrot.slane %v2434, 1
        %vm2950 = vcmp.lt.s32.totalorder %v2438, 7
        %v2951 = vsel %vm2950, %v2948, %v2949
        %v2952 = vsel %vm2950, %v2947, %v2948
        %v2953 = vsel %vm2950, %v2946, %v2947
        %v2954 = vsel %vm2950, %v2945, %v2946
        %v2955 = vsel %vm2950, %v2944, %v2945
        %v2956 = vsel %vm2950, %v2943, %v2944
        %v2957 = vsel %vm2950, %v2942, %v2943
        %v2958 = vsel %vm2950, %v2941, %v2942
        %v2959 = vsel %vm2950, %v2940, %v2941
        %v2960 = vsel %vm2950, %v2939, %v2940
        %v2961 = vsel %vm2950, %v2938, %v2939
        %v2962 = vsel %vm2950, %v2937, %v2938
        %v2963 = vsel %vm2950, %v2936, %v2937
        %v2964 = vsel %vm2950, %v2935, %v2936
        %v2965 = vsel %vm2950, %v2934, %v2935
        %v2966 = vsel %vm2950, %v2933, %v2934
        %v2967 = vsel %vm2950, %v2932, %v2933
        %v2968 = vsel %vm2950, %v2931, %v2932
        %v2969 = vsel %vm2950, %v2930, %v2931
        %v2970 = vsel %vm2950, %v2929, %v2930
        %v2971 = vsel %vm2950, %v2928, %v2929
        %v2972 = vsel %vm2950, %v2927, %v2928
        %v2973 = vsel %vm2950, %v2926, %v2927
        %v2974 = vsel %vm2950, %v2925, %v2926
        %v2975 = vsel %vm2950, %v2924, %v2925
        %v2976 = vsel %vm2950, %v2923, %v2924
        %v2977 = vsel %vm2950, %v2922, %v2923
        %v2978 = vsel %vm2950, %v2921, %v2922
        %v2979 = vsel %vm2950, %v2920, %v2921
        %v2980 = vsel %vm2950, %v2919, %v2920
        %v2981 = vsel %vm2950, %v2918, %v2919
        %v2982 = vsel %vm2950, %v2949, %v2918
        %v2983 = vsel %vm2886, -inf, %v2981
        %v2984 = vsel %vm2887, -inf, %v2980
        %v2985 = vsel %vm2888, -inf, %v2979
        %v2986 = vsel %vm2889, -inf, %v2978
        %v2987 = vsel %vm2890, -inf, %v2977
        %v2988 = vsel %vm2891, -inf, %v2976
        %v2989 = vsel %vm2892, -inf, %v2975
        %v2990 = vsel %vm2893, -inf, %v2974
        %v2991 = vsel %vm2894, -inf, %v2973
        %v2992 = vsel %vm2895, -inf, %v2972
        %v2993 = vsel %vm2896, -inf, %v2971
        %v2994 = vsel %vm2897, -inf, %v2970
        %v2995 = vsel %vm2898, -inf, %v2969
        %v2996 = vsel %vm2899, -inf, %v2968
        %v2997 = vsel %vm2900, -inf, %v2967
        %v2998 = vsel %vm2901, -inf, %v2966
        %v2999 = vsel %vm2902, -inf, %v2965
        %v3000 = vsel %vm2903, -inf, %v2964
        %v3001 = vsel %vm2904, -inf, %v2963
        %v3002 = vsel %vm2905, -inf, %v2962
        %v3003 = vsel %vm2906, -inf, %v2961
        %v3004 = vsel %vm2907, -inf, %v2960
        %v3005 = vsel %vm2908, -inf, %v2959
        %v3006 = vsel %vm2909, -inf, %v2958
        %v3007 = vsel %vm2910, -inf, %v2957
        %v3008 = vsel %vm2911, -inf, %v2956
        %v3009 = vsel %vm2912, -inf, %v2955
        %v3010 = vsel %vm2913, -inf, %v2954
        %v3011 = vsel %vm2914, -inf, %v2953
        %v3012 = vsel %vm2915, -inf, %v2952
        %v3013 = vsel %vm2916, -inf, %v2951
        %v3014 = vsel %vm2917, -inf, %v2982
        %v3015 = vrot.slane %v2311, 7
        %v3016 = vrot.slane %v2314, 7
        %v3017 = vrot.slane %v2319, 7
        %v3018 = vrot.slane %v2322, 7
        %v3019 = vrot.slane %v2327, 7
        %v3020 = vrot.slane %v2330, 7
        %v3021 = vrot.slane %v2335, 7
        %v3022 = vrot.slane %v2338, 7
        %v3023 = vrot.slane %v2343, 7
        %v3024 = vrot.slane %v2346, 7
        %v3025 = vrot.slane %v2351, 7
        %v3026 = vrot.slane %v2354, 7
        %v3027 = vrot.slane %v2359, 7
        %v3028 = vrot.slane %v2362, 7
        %v3029 = vrot.slane %v2367, 7
        %v3030 = vrot.slane %v2370, 7
        %v3031 = vrot.slane %v2375, 7
        %v3032 = vrot.slane %v2378, 7
        %v3033 = vrot.slane %v2383, 7
        %v3034 = vrot.slane %v2386, 7
        %v3035 = vrot.slane %v2391, 7
        %v3036 = vrot.slane %v2394, 7
        %v3037 = vrot.slane %v2399, 7
        %v3038 = vrot.slane %v2402, 7
        %v3039 = vrot.slane %v2407, 7
        %v3040 = vrot.slane %v2410, 7
        %v3041 = vrot.slane %v2415, 7
        %v3042 = vrot.slane %v2418, 7
        %v3043 = vrot.slane %v2423, 7
        %v3044 = vrot.slane %v2426, 7
        %v3045 = vrot.slane %v2431, 7
        %v3046 = vrot.slane %v2434, 7
        %vm3047 = vcmp.lt.s32.totalorder %v2438, 1
        %v3048 = vsel %vm3047, %v3045, %v3046
        %v3049 = vsel %vm3047, %v3044, %v3045
        %v3050 = vsel %vm3047, %v3043, %v3044
        %v3051 = vsel %vm3047, %v3042, %v3043
        %v3052 = vsel %vm3047, %v3041, %v3042
        %v3053 = vsel %vm3047, %v3040, %v3041
        %v3054 = vsel %vm3047, %v3039, %v3040
        %v3055 = vsel %vm3047, %v3038, %v3039
        %v3056 = vsel %vm3047, %v3037, %v3038
        %v3057 = vsel %vm3047, %v3036, %v3037
        %v3058 = vsel %vm3047, %v3035, %v3036
        %v3059 = vsel %vm3047, %v3034, %v3035
        %v3060 = vsel %vm3047, %v3033, %v3034
        %v3061 = vsel %vm3047, %v3032, %v3033
        %v3062 = vsel %vm3047, %v3031, %v3032
        %v3063 = vsel %vm3047, %v3030, %v3031
        %v3064 = vsel %vm3047, %v3029, %v3030
        %v3065 = vsel %vm3047, %v3028, %v3029
        %v3066 = vsel %vm3047, %v3027, %v3028
        %v3067 = vsel %vm3047, %v3026, %v3027
        %v3068 = vsel %vm3047, %v3025, %v3026
        %v3069 = vsel %vm3047, %v3024, %v3025
        %v3070 = vsel %vm3047, %v3023, %v3024
        %v3071 = vsel %vm3047, %v3022, %v3023
        %v3072 = vsel %vm3047, %v3021, %v3022
        %v3073 = vsel %vm3047, %v3020, %v3021
        %v3074 = vsel %vm3047, %v3019, %v3020
        %v3075 = vsel %vm3047, %v3018, %v3019
        %v3076 = vsel %vm3047, %v3017, %v3018
        %v3077 = vsel %vm3047, %v3016, %v3017
        %v3078 = vsel %vm3047, %v3015, %v3016
        %v3079 = vsel %vm3047, %v3046, %v3015
        %v3080 = vsel %vm2854, -inf, %v3079
        %v3081 = vsel %vm2855, -inf, %v3078
        %v3082 = vsel %vm2856, -inf, %v3077
        %v3083 = vsel %vm2857, -inf, %v3076
        %v3084 = vsel %vm2858, -inf, %v3075
        %v3085 = vsel %vm2859, -inf, %v3074
        %v3086 = vsel %vm2860, -inf, %v3073
        %v3087 = vsel %vm2861, -inf, %v3072
        %v3088 = vsel %vm2862, -inf, %v3071
        %v3089 = vsel %vm2863, -inf, %v3070
        %v3090 = vsel %vm2864, -inf, %v3069
        %v3091 = vsel %vm2865, -inf, %v3068
        %v3092 = vsel %vm2866, -inf, %v3067
        %v3093 = vsel %vm2867, -inf, %v3066
        %v3094 = vsel %vm2868, -inf, %v3065
        %v3095 = vsel %vm2869, -inf, %v3064
        %v3096 = vsel %vm2870, -inf, %v3063
        %v3097 = vsel %vm2871, -inf, %v3062
        %v3098 = vsel %vm2872, -inf, %v3061
        %v3099 = vsel %vm2873, -inf, %v3060
        %v3100 = vsel %vm2874, -inf, %v3059
        %v3101 = vsel %vm2875, -inf, %v3058
        %v3102 = vsel %vm2876, -inf, %v3057
        %v3103 = vsel %vm2877, -inf, %v3056
        %v3104 = vsel %vm2878, -inf, %v3055
        %v3105 = vsel %vm2879, -inf, %v3054
        %v3106 = vsel %vm2880, -inf, %v3053
        %v3107 = vsel %vm2881, -inf, %v3052
        %v3108 = vsel %vm2882, -inf, %v3051
        %v3109 = vsel %vm2883, -inf, %v3050
        %v3110 = vsel %vm2884, -inf, %v3049
        %v3111 = vsel %vm2885, -inf, %v3048
        %v3112 = vmax.f32 %v2983, %v2311
        %v3113 = vmax.f32 %v2984, %v2314
        %v3114 = vmax.f32 %v2985, %v2319
        %v3115 = vmax.f32 %v2986, %v2322
        %v3116 = vmax.f32 %v2987, %v2327
        %v3117 = vmax.f32 %v2988, %v2330
        %v3118 = vmax.f32 %v2989, %v2335
        %v3119 = vmax.f32 %v2990, %v2338
        %v3120 = vmax.f32 %v2991, %v2343
        %v3121 = vmax.f32 %v2992, %v2346
        %v3122 = vmax.f32 %v2993, %v2351
        %v3123 = vmax.f32 %v2994, %v2354
        %v3124 = vmax.f32 %v2995, %v2359
        %v3125 = vmax.f32 %v2996, %v2362
        %v3126 = vmax.f32 %v2997, %v2367
        %v3127 = vmax.f32 %v2998, %v2370
        %v3128 = vmax.f32 %v2999, %v2375
        %v3129 = vmax.f32 %v3000, %v2378
        %v3130 = vmax.f32 %v3001, %v2383
        %v3131 = vmax.f32 %v3002, %v2386
        %v3132 = vmax.f32 %v3003, %v2391
        %v3133 = vmax.f32 %v3004, %v2394
        %v3134 = vmax.f32 %v3005, %v2399
        %v3135 = vmax.f32 %v3006, %v2402
        %v3136 = vmax.f32 %v3007, %v2407
        %v3137 = vmax.f32 %v3008, %v2410
        %v3138 = vmax.f32 %v3009, %v2415
        %v3139 = vmax.f32 %v3010, %v2418
        %v3140 = vmax.f32 %v3011, %v2423
        %v3141 = vmax.f32 %v3012, %v2426
        %v3142 = vmax.f32 %v3013, %v2431
        %v3143 = vmax.f32 %v3014, %v2434
        %v3144 = vmax.f32 %v3112, %v3080
        %v3145 = vmax.f32 %v3113, %v3081
        %v3146 = vmax.f32 %v3114, %v3082
        %v3147 = vmax.f32 %v3115, %v3083
        %v3148 = vmax.f32 %v3116, %v3084
        %v3149 = vmax.f32 %v3117, %v3085
        %v3150 = vmax.f32 %v3118, %v3086
        %v3151 = vmax.f32 %v3119, %v3087
        %v3152 = vmax.f32 %v3120, %v3088
        %v3153 = vmax.f32 %v3121, %v3089
        %v3154 = vmax.f32 %v3122, %v3090
        %v3155 = vmax.f32 %v3123, %v3091
        %v3156 = vmax.f32 %v3124, %v3092
        %v3157 = vmax.f32 %v3125, %v3093
        %v3158 = vmax.f32 %v3126, %v3094
        %v3159 = vmax.f32 %v3127, %v3095
        %v3160 = vmax.f32 %v3128, %v3096
        %v3161 = vmax.f32 %v3129, %v3097
        %v3162 = vmax.f32 %v3130, %v3098
        %v3163 = vmax.f32 %v3131, %v3099
        %v3164 = vmax.f32 %v3132, %v3100
        %v3165 = vmax.f32 %v3133, %v3101
        %v3166 = vmax.f32 %v3134, %v3102
        %v3167 = vmax.f32 %v3135, %v3103
        %v3168 = vmax.f32 %v3136, %v3104
        %v3169 = vmax.f32 %v3137, %v3105
        %v3170 = vmax.f32 %v3138, %v3106
        %v3171 = vmax.f32 %v3139, %v3107
        %v3172 = vmax.f32 %v3140, %v3108
        %v3173 = vmax.f32 %v3141, %v3109
        %v3174 = vmax.f32 %v3142, %v3110
        %v3175 = vmax.f32 %v3143, %v3111
        %v3176 = vrot.slane %v3144, 1
        %v3177 = vrot.slane %v3145, 1
        %v3178 = vrot.slane %v3146, 1
        %v3179 = vrot.slane %v3147, 1
        %v3180 = vrot.slane %v3148, 1
        %v3181 = vrot.slane %v3149, 1
        %v3182 = vrot.slane %v3150, 1
        %v3183 = vrot.slane %v3151, 1
        %v3184 = vrot.slane %v3152, 1
        %v3185 = vrot.slane %v3153, 1
        %v3186 = vrot.slane %v3154, 1
        %v3187 = vrot.slane %v3155, 1
        %v3188 = vrot.slane %v3156, 1
        %v3189 = vrot.slane %v3157, 1
        %v3190 = vrot.slane %v3158, 1
        %v3191 = vrot.slane %v3159, 1
        %v3192 = vrot.slane %v3160, 1
        %v3193 = vrot.slane %v3161, 1
        %v3194 = vrot.slane %v3162, 1
        %v3195 = vrot.slane %v3163, 1
        %v3196 = vrot.slane %v3164, 1
        %v3197 = vrot.slane %v3165, 1
        %v3198 = vrot.slane %v3166, 1
        %v3199 = vrot.slane %v3167, 1
        %v3200 = vrot.slane %v3168, 1
        %v3201 = vrot.slane %v3169, 1
        %v3202 = vrot.slane %v3170, 1
        %v3203 = vrot.slane %v3171, 1
        %v3204 = vrot.slane %v3172, 1
        %v3205 = vrot.slane %v3173, 1
        %v3206 = vrot.slane %v3174, 1
        %v3207 = vrot.slane %v3175, 1
        %v3208 = vsel %vm2950, %v3206, %v3207
        %v3209 = vsel %vm2950, %v3205, %v3206
        %v3210 = vsel %vm2950, %v3204, %v3205
        %v3211 = vsel %vm2950, %v3203, %v3204
        %v3212 = vsel %vm2950, %v3202, %v3203
        %v3213 = vsel %vm2950, %v3201, %v3202
        %v3214 = vsel %vm2950, %v3200, %v3201
        %v3215 = vsel %vm2950, %v3199, %v3200
        %v3216 = vsel %vm2950, %v3198, %v3199
        %v3217 = vsel %vm2950, %v3197, %v3198
        %v3218 = vsel %vm2950, %v3196, %v3197
        %v3219 = vsel %vm2950, %v3195, %v3196
        %v3220 = vsel %vm2950, %v3194, %v3195
        %v3221 = vsel %vm2950, %v3193, %v3194
        %v3222 = vsel %vm2950, %v3192, %v3193
        %v3223 = vsel %vm2950, %v3191, %v3192
        %v3224 = vsel %vm2950, %v3190, %v3191
        %v3225 = vsel %vm2950, %v3189, %v3190
        %v3226 = vsel %vm2950, %v3188, %v3189
        %v3227 = vsel %vm2950, %v3187, %v3188
        %v3228 = vsel %vm2950, %v3186, %v3187
        %v3229 = vsel %vm2950, %v3185, %v3186
        %v3230 = vsel %vm2950, %v3184, %v3185
        %v3231 = vsel %vm2950, %v3183, %v3184
        %v3232 = vsel %vm2950, %v3182, %v3183
        %v3233 = vsel %vm2950, %v3181, %v3182
        %v3234 = vsel %vm2950, %v3180, %v3181
        %v3235 = vsel %vm2950, %v3179, %v3180
        %v3236 = vsel %vm2950, %v3178, %v3179
        %v3237 = vsel %vm2950, %v3177, %v3178
        %v3238 = vsel %vm2950, %v3176, %v3177
        %v3239 = vsel %vm2950, %v3207, %v3176
        %v3240 = vsel %vm2886, -inf, %v3238
        %v3241 = vsel %vm2887, -inf, %v3237
        %v3242 = vsel %vm2888, -inf, %v3236
        %v3243 = vsel %vm2889, -inf, %v3235
        %v3244 = vsel %vm2890, -inf, %v3234
        %v3245 = vsel %vm2891, -inf, %v3233
        %v3246 = vsel %vm2892, -inf, %v3232
        %v3247 = vsel %vm2893, -inf, %v3231
        %v3248 = vsel %vm2894, -inf, %v3230
        %v3249 = vsel %vm2895, -inf, %v3229
        %v3250 = vsel %vm2896, -inf, %v3228
        %v3251 = vsel %vm2897, -inf, %v3227
        %v3252 = vsel %vm2898, -inf, %v3226
        %v3253 = vsel %vm2899, -inf, %v3225
        %v3254 = vsel %vm2900, -inf, %v3224
        %v3255 = vsel %vm2901, -inf, %v3223
        %v3256 = vsel %vm2902, -inf, %v3222
        %v3257 = vsel %vm2903, -inf, %v3221
        %v3258 = vsel %vm2904, -inf, %v3220
        %v3259 = vsel %vm2905, -inf, %v3219
        %v3260 = vsel %vm2906, -inf, %v3218
        %v3261 = vsel %vm2907, -inf, %v3217
        %v3262 = vsel %vm2908, -inf, %v3216
        %v3263 = vsel %vm2909, -inf, %v3215
        %v3264 = vsel %vm2910, -inf, %v3214
        %v3265 = vsel %vm2911, -inf, %v3213
        %v3266 = vsel %vm2912, -inf, %v3212
        %v3267 = vsel %vm2913, -inf, %v3211
        %v3268 = vsel %vm2914, -inf, %v3210
        %v3269 = vsel %vm2915, -inf, %v3209
        %v3270 = vsel %vm2916, -inf, %v3208
        %v3271 = vsel %vm2917, -inf, %v3239
        %v3272 = vrot.slane %v3144, 7
        %v3273 = vrot.slane %v3145, 7
        %v3274 = vrot.slane %v3146, 7
        %v3275 = vrot.slane %v3147, 7
        %v3276 = vrot.slane %v3148, 7
        %v3277 = vrot.slane %v3149, 7
        %v3278 = vrot.slane %v3150, 7
        %v3279 = vrot.slane %v3151, 7
        %v3280 = vrot.slane %v3152, 7
        %v3281 = vrot.slane %v3153, 7
        %v3282 = vrot.slane %v3154, 7
        %v3283 = vrot.slane %v3155, 7
        %v3284 = vrot.slane %v3156, 7
        %v3285 = vrot.slane %v3157, 7
        %v3286 = vrot.slane %v3158, 7
        %v3287 = vrot.slane %v3159, 7
        %v3288 = vrot.slane %v3160, 7
        %v3289 = vrot.slane %v3161, 7
        %v3290 = vrot.slane %v3162, 7
        %v3291 = vrot.slane %v3163, 7
        %v3292 = vrot.slane %v3164, 7
        %v3293 = vrot.slane %v3165, 7
        %v3294 = vrot.slane %v3166, 7
        %v3295 = vrot.slane %v3167, 7
        %v3296 = vrot.slane %v3168, 7
        %v3297 = vrot.slane %v3169, 7
        %v3298 = vrot.slane %v3170, 7
        %v3299 = vrot.slane %v3171, 7
        %v3300 = vrot.slane %v3172, 7
        %v3301 = vrot.slane %v3173, 7
        %v3302 = vrot.slane %v3174, 7
        %v3303 = vrot.slane %v3175, 7
        %v3304 = vsel %vm3047, %v3302, %v3303
        %v3305 = vsel %vm3047, %v3301, %v3302
        %v3306 = vsel %vm3047, %v3300, %v3301
        %v3307 = vsel %vm3047, %v3299, %v3300
        %v3308 = vsel %vm3047, %v3298, %v3299
        %v3309 = vsel %vm3047, %v3297, %v3298
        %v3310 = vsel %vm3047, %v3296, %v3297
        %v3311 = vsel %vm3047, %v3295, %v3296
        %v3312 = vsel %vm3047, %v3294, %v3295
        %v3313 = vsel %vm3047, %v3293, %v3294
        %v3314 = vsel %vm3047, %v3292, %v3293
        %v3315 = vsel %vm3047, %v3291, %v3292
        %v3316 = vsel %vm3047, %v3290, %v3291
        %v3317 = vsel %vm3047, %v3289, %v3290
        %v3318 = vsel %vm3047, %v3288, %v3289
        %v3319 = vsel %vm3047, %v3287, %v3288
        %v3320 = vsel %vm3047, %v3286, %v3287
        %v3321 = vsel %vm3047, %v3285, %v3286
        %v3322 = vsel %vm3047, %v3284, %v3285
        %v3323 = vsel %vm3047, %v3283, %v3284
        %v3324 = vsel %vm3047, %v3282, %v3283
        %v3325 = vsel %vm3047, %v3281, %v3282
        %v3326 = vsel %vm3047, %v3280, %v3281
        %v3327 = vsel %vm3047, %v3279, %v3280
        %v3328 = vsel %vm3047, %v3278, %v3279
        %v3329 = vsel %vm3047, %v3277, %v3278
        %v3330 = vsel %vm3047, %v3276, %v3277
        %v3331 = vsel %vm3047, %v3275, %v3276
        %v3332 = vsel %vm3047, %v3274, %v3275
        %v3333 = vsel %vm3047, %v3273, %v3274
        %v3334 = vsel %vm3047, %v3272, %v3273
        %v3335 = vsel %vm3047, %v3303, %v3272
        %v3336 = vsel %vm2854, -inf, %v3335
        %v3337 = vsel %vm2855, -inf, %v3334
        %v3338 = vsel %vm2856, -inf, %v3333
        %v3339 = vsel %vm2857, -inf, %v3332
        %v3340 = vsel %vm2858, -inf, %v3331
        %v3341 = vsel %vm2859, -inf, %v3330
        %v3342 = vsel %vm2860, -inf, %v3329
        %v3343 = vsel %vm2861, -inf, %v3328
        %v3344 = vsel %vm2862, -inf, %v3327
        %v3345 = vsel %vm2863, -inf, %v3326
        %v3346 = vsel %vm2864, -inf, %v3325
        %v3347 = vsel %vm2865, -inf, %v3324
        %v3348 = vsel %vm2866, -inf, %v3323
        %v3349 = vsel %vm2867, -inf, %v3322
        %v3350 = vsel %vm2868, -inf, %v3321
        %v3351 = vsel %vm2869, -inf, %v3320
        %v3352 = vsel %vm2870, -inf, %v3319
        %v3353 = vsel %vm2871, -inf, %v3318
        %v3354 = vsel %vm2872, -inf, %v3317
        %v3355 = vsel %vm2873, -inf, %v3316
        %v3356 = vsel %vm2874, -inf, %v3315
        %v3357 = vsel %vm2875, -inf, %v3314
        %v3358 = vsel %vm2876, -inf, %v3313
        %v3359 = vsel %vm2877, -inf, %v3312
        %v3360 = vsel %vm2878, -inf, %v3311
        %v3361 = vsel %vm2879, -inf, %v3310
        %v3362 = vsel %vm2880, -inf, %v3309
        %v3363 = vsel %vm2881, -inf, %v3308
        %v3364 = vsel %vm2882, -inf, %v3307
        %v3365 = vsel %vm2883, -inf, %v3306
        %v3366 = vsel %vm2884, -inf, %v3305
        %v3367 = vsel %vm2885, -inf, %v3304
        %v3368 = vmax.f32 %v3240, %v3144
        %v3369 = vmax.f32 %v3241, %v3145
        %v3370 = vmax.f32 %v3242, %v3146
        %v3371 = vmax.f32 %v3243, %v3147
        %v3372 = vmax.f32 %v3244, %v3148
        %v3373 = vmax.f32 %v3245, %v3149
        %v3374 = vmax.f32 %v3246, %v3150
        %v3375 = vmax.f32 %v3247, %v3151
        %v3376 = vmax.f32 %v3248, %v3152
        %v3377 = vmax.f32 %v3249, %v3153
        %v3378 = vmax.f32 %v3250, %v3154
        %v3379 = vmax.f32 %v3251, %v3155
        %v3380 = vmax.f32 %v3252, %v3156
        %v3381 = vmax.f32 %v3253, %v3157
        %v3382 = vmax.f32 %v3254, %v3158
        %v3383 = vmax.f32 %v3255, %v3159
        %v3384 = vmax.f32 %v3256, %v3160
        %v3385 = vmax.f32 %v3257, %v3161
        %v3386 = vmax.f32 %v3258, %v3162
        %v3387 = vmax.f32 %v3259, %v3163
        %v3388 = vmax.f32 %v3260, %v3164
        %v3389 = vmax.f32 %v3261, %v3165
        %v3390 = vmax.f32 %v3262, %v3166
        %v3391 = vmax.f32 %v3263, %v3167
        %v3392 = vmax.f32 %v3264, %v3168
        %v3393 = vmax.f32 %v3265, %v3169
        %v3394 = vmax.f32 %v3266, %v3170
        %v3395 = vmax.f32 %v3267, %v3171
        %v3396 = vmax.f32 %v3268, %v3172
        %v3397 = vmax.f32 %v3269, %v3173
        %v3398 = vmax.f32 %v3270, %v3174
        %v3399 = vmax.f32 %v3271, %v3175
        %v3400 = vmax.f32 %v3368, %v3336
        %v3401 = vmax.f32 %v3369, %v3337
        %v3402 = vmax.f32 %v3370, %v3338
        %v3403 = vmax.f32 %v3371, %v3339
        %v3404 = vmax.f32 %v3372, %v3340
        %v3405 = vmax.f32 %v3373, %v3341
        %v3406 = vmax.f32 %v3374, %v3342
        %v3407 = vmax.f32 %v3375, %v3343
        %v3408 = vmax.f32 %v3376, %v3344
        %v3409 = vmax.f32 %v3377, %v3345
        %v3410 = vmax.f32 %v3378, %v3346
        %v3411 = vmax.f32 %v3379, %v3347
        %v3412 = vmax.f32 %v3380, %v3348
        %v3413 = vmax.f32 %v3381, %v3349
        %v3414 = vmax.f32 %v3382, %v3350
        %v3415 = vmax.f32 %v3383, %v3351
        %v3416 = vmax.f32 %v3384, %v3352
        %v3417 = vmax.f32 %v3385, %v3353
        %v3418 = vmax.f32 %v3386, %v3354
        %v3419 = vmax.f32 %v3387, %v3355
        %v3420 = vmax.f32 %v3388, %v3356
        %v3421 = vmax.f32 %v3389, %v3357
        %v3422 = vmax.f32 %v3390, %v3358
        %v3423 = vmax.f32 %v3391, %v3359
        %v3424 = vmax.f32 %v3392, %v3360
        %v3425 = vmax.f32 %v3393, %v3361
        %v3426 = vmax.f32 %v3394, %v3362
        %v3427 = vmax.f32 %v3395, %v3363
        %v3428 = vmax.f32 %v3396, %v3364
        %v3429 = vmax.f32 %v3397, %v3365
        %v3430 = vmax.f32 %v3398, %v3366
        %v3431 = vmax.f32 %v3399, %v3367
        %v3432 = vrot.slane %v3400, 1
        %v3433 = vrot.slane %v3401, 1
        %v3434 = vrot.slane %v3402, 1
        %v3435 = vrot.slane %v3403, 1
        %v3436 = vrot.slane %v3404, 1
        %v3437 = vrot.slane %v3405, 1
        %v3438 = vrot.slane %v3406, 1
        %v3439 = vrot.slane %v3407, 1
        %v3440 = vrot.slane %v3408, 1
        %v3441 = vrot.slane %v3409, 1
        %v3442 = vrot.slane %v3410, 1
        %v3443 = vrot.slane %v3411, 1
        %v3444 = vrot.slane %v3412, 1
        %v3445 = vrot.slane %v3413, 1
        %v3446 = vrot.slane %v3414, 1
        %v3447 = vrot.slane %v3415, 1
        %v3448 = vrot.slane %v3416, 1
        %v3449 = vrot.slane %v3417, 1
        %v3450 = vrot.slane %v3418, 1
        %v3451 = vrot.slane %v3419, 1
        %v3452 = vrot.slane %v3420, 1
        %v3453 = vrot.slane %v3421, 1
        %v3454 = vrot.slane %v3422, 1
        %v3455 = vrot.slane %v3423, 1
        %v3456 = vrot.slane %v3424, 1
        %v3457 = vrot.slane %v3425, 1
        %v3458 = vrot.slane %v3426, 1
        %v3459 = vrot.slane %v3427, 1
        %v3460 = vrot.slane %v3428, 1
        %v3461 = vrot.slane %v3429, 1
        %v3462 = vrot.slane %v3430, 1
        %v3463 = vrot.slane %v3431, 1
        %v3464 = vsel %vm2950, %v3462, %v3463
        %v3465 = vsel %vm2950, %v3461, %v3462
        %v3466 = vsel %vm2950, %v3460, %v3461
        %v3467 = vsel %vm2950, %v3459, %v3460
        %v3468 = vsel %vm2950, %v3458, %v3459
        %v3469 = vsel %vm2950, %v3457, %v3458
        %v3470 = vsel %vm2950, %v3456, %v3457
        %v3471 = vsel %vm2950, %v3455, %v3456
        %v3472 = vsel %vm2950, %v3454, %v3455
        %v3473 = vsel %vm2950, %v3453, %v3454
        %v3474 = vsel %vm2950, %v3452, %v3453
        %v3475 = vsel %vm2950, %v3451, %v3452
        %v3476 = vsel %vm2950, %v3450, %v3451
        %v3477 = vsel %vm2950, %v3449, %v3450
        %v3478 = vsel %vm2950, %v3448, %v3449
        %v3479 = vsel %vm2950, %v3447, %v3448
        %v3480 = vsel %vm2950, %v3446, %v3447
        %v3481 = vsel %vm2950, %v3445, %v3446
        %v3482 = vsel %vm2950, %v3444, %v3445
        %v3483 = vsel %vm2950, %v3443, %v3444
        %v3484 = vsel %vm2950, %v3442, %v3443
        %v3485 = vsel %vm2950, %v3441, %v3442
        %v3486 = vsel %vm2950, %v3440, %v3441
        %v3487 = vsel %vm2950, %v3439, %v3440
        %v3488 = vsel %vm2950, %v3438, %v3439
        %v3489 = vsel %vm2950, %v3437, %v3438
        %v3490 = vsel %vm2950, %v3436, %v3437
        %v3491 = vsel %vm2950, %v3435, %v3436
        %v3492 = vsel %vm2950, %v3434, %v3435
        %v3493 = vsel %vm2950, %v3433, %v3434
        %v3494 = vsel %vm2950, %v3432, %v3433
        %v3495 = vsel %vm2950, %v3463, %v3432
        %v3496 = vsel %vm2886, -inf, %v3494
        %v3497 = vsel %vm2887, -inf, %v3493
        %v3498 = vsel %vm2888, -inf, %v3492
        %v3499 = vsel %vm2889, -inf, %v3491
        %v3500 = vsel %vm2890, -inf, %v3490
        %v3501 = vsel %vm2891, -inf, %v3489
        %v3502 = vsel %vm2892, -inf, %v3488
        %v3503 = vsel %vm2893, -inf, %v3487
        %v3504 = vsel %vm2894, -inf, %v3486
        %v3505 = vsel %vm2895, -inf, %v3485
        %v3506 = vsel %vm2896, -inf, %v3484
        %v3507 = vsel %vm2897, -inf, %v3483
        %v3508 = vsel %vm2898, -inf, %v3482
        %v3509 = vsel %vm2899, -inf, %v3481
        %v3510 = vsel %vm2900, -inf, %v3480
        %v3511 = vsel %vm2901, -inf, %v3479
        %v3512 = vsel %vm2902, -inf, %v3478
        %v3513 = vsel %vm2903, -inf, %v3477
        %v3514 = vsel %vm2904, -inf, %v3476
        %v3515 = vsel %vm2905, -inf, %v3475
        %v3516 = vsel %vm2906, -inf, %v3474
        %v3517 = vsel %vm2907, -inf, %v3473
        %v3518 = vsel %vm2908, -inf, %v3472
        %v3519 = vsel %vm2909, -inf, %v3471
        %v3520 = vsel %vm2910, -inf, %v3470
        %v3521 = vsel %vm2911, -inf, %v3469
        %v3522 = vsel %vm2912, -inf, %v3468
        %v3523 = vsel %vm2913, -inf, %v3467
        %v3524 = vsel %vm2914, -inf, %v3466
        %v3525 = vsel %vm2915, -inf, %v3465
        %v3526 = vsel %vm2916, -inf, %v3464
        %v3527 = vsel %vm2917, -inf, %v3495
        %v3528 = vrot.slane %v3400, 7
        %v3529 = vrot.slane %v3401, 7
        %v3530 = vrot.slane %v3402, 7
        %v3531 = vrot.slane %v3403, 7
        %v3532 = vrot.slane %v3404, 7
        %v3533 = vrot.slane %v3405, 7
        %v3534 = vrot.slane %v3406, 7
        %v3535 = vrot.slane %v3407, 7
        %v3536 = vrot.slane %v3408, 7
        %v3537 = vrot.slane %v3409, 7
        %v3538 = vrot.slane %v3410, 7
        %v3539 = vrot.slane %v3411, 7
        %v3540 = vrot.slane %v3412, 7
        %v3541 = vrot.slane %v3413, 7
        %v3542 = vrot.slane %v3414, 7
        %v3543 = vrot.slane %v3415, 7
        %v3544 = vrot.slane %v3416, 7
        %v3545 = vrot.slane %v3417, 7
        %v3546 = vrot.slane %v3418, 7
        %v3547 = vrot.slane %v3419, 7
        %v3548 = vrot.slane %v3420, 7
        %v3549 = vrot.slane %v3421, 7
        %v3550 = vrot.slane %v3422, 7
        %v3551 = vrot.slane %v3423, 7
        %v3552 = vrot.slane %v3424, 7
        %v3553 = vrot.slane %v3425, 7
        %v3554 = vrot.slane %v3426, 7
        %v3555 = vrot.slane %v3427, 7
        %v3556 = vrot.slane %v3428, 7
        %v3557 = vrot.slane %v3429, 7
        %v3558 = vrot.slane %v3430, 7
        %v3559 = vrot.slane %v3431, 7
        %v3560 = vsel %vm3047, %v3558, %v3559
        %v3561 = vsel %vm3047, %v3557, %v3558
        %v3562 = vsel %vm3047, %v3556, %v3557
        %v3563 = vsel %vm3047, %v3555, %v3556
        %v3564 = vsel %vm3047, %v3554, %v3555
        %v3565 = vsel %vm3047, %v3553, %v3554
        %v3566 = vsel %vm3047, %v3552, %v3553
        %v3567 = vsel %vm3047, %v3551, %v3552
        %v3568 = vsel %vm3047, %v3550, %v3551
        %v3569 = vsel %vm3047, %v3549, %v3550
        %v3570 = vsel %vm3047, %v3548, %v3549
        %v3571 = vsel %vm3047, %v3547, %v3548
        %v3572 = vsel %vm3047, %v3546, %v3547
        %v3573 = vsel %vm3047, %v3545, %v3546
        %v3574 = vsel %vm3047, %v3544, %v3545
        %v3575 = vsel %vm3047, %v3543, %v3544
        %v3576 = vsel %vm3047, %v3542, %v3543
        %v3577 = vsel %vm3047, %v3541, %v3542
        %v3578 = vsel %vm3047, %v3540, %v3541
        %v3579 = vsel %vm3047, %v3539, %v3540
        %v3580 = vsel %vm3047, %v3538, %v3539
        %v3581 = vsel %vm3047, %v3537, %v3538
        %v3582 = vsel %vm3047, %v3536, %v3537
        %v3583 = vsel %vm3047, %v3535, %v3536
        %v3584 = vsel %vm3047, %v3534, %v3535
        %v3585 = vsel %vm3047, %v3533, %v3534
        %v3586 = vsel %vm3047, %v3532, %v3533
        %v3587 = vsel %vm3047, %v3531, %v3532
        %v3588 = vsel %vm3047, %v3530, %v3531
        %v3589 = vsel %vm3047, %v3529, %v3530
        %v3590 = vsel %vm3047, %v3528, %v3529
        %v3591 = vsel %vm3047, %v3559, %v3528
        %v3592 = vsel %vm2854, -inf, %v3591
        %v3593 = vsel %vm2855, -inf, %v3590
        %v3594 = vsel %vm2856, -inf, %v3589
        %v3595 = vsel %vm2857, -inf, %v3588
        %v3596 = vsel %vm2858, -inf, %v3587
        %v3597 = vsel %vm2859, -inf, %v3586
        %v3598 = vsel %vm2860, -inf, %v3585
        %v3599 = vsel %vm2861, -inf, %v3584
        %v3600 = vsel %vm2862, -inf, %v3583
        %v3601 = vsel %vm2863, -inf, %v3582
        %v3602 = vsel %vm2864, -inf, %v3581
        %v3603 = vsel %vm2865, -inf, %v3580
        %v3604 = vsel %vm2866, -inf, %v3579
        %v3605 = vsel %vm2867, -inf, %v3578
        %v3606 = vsel %vm2868, -inf, %v3577
        %v3607 = vsel %vm2869, -inf, %v3576
        %v3608 = vsel %vm2870, -inf, %v3575
        %v3609 = vsel %vm2871, -inf, %v3574
        %v3610 = vsel %vm2872, -inf, %v3573
        %v3611 = vsel %vm2873, -inf, %v3572
        %v3612 = vsel %vm2874, -inf, %v3571
        %v3613 = vsel %vm2875, -inf, %v3570
        %v3614 = vsel %vm2876, -inf, %v3569
        %v3615 = vsel %vm2877, -inf, %v3568
        %v3616 = vsel %vm2878, -inf, %v3567
        %v3617 = vsel %vm2879, -inf, %v3566
        %v3618 = vsel %vm2880, -inf, %v3565
        %v3619 = vsel %vm2881, -inf, %v3564
        %v3620 = vsel %vm2882, -inf, %v3563
        %v3621 = vsel %vm2883, -inf, %v3562
        %v3622 = vsel %vm2884, -inf, %v3561
        %v3623 = vsel %vm2885, -inf, %v3560
        %v3624 = vmax.f32 %v3496, %v3400
        %v3625 = vmax.f32 %v3497, %v3401
        %v3626 = vmax.f32 %v3498, %v3402
        %v3627 = vmax.f32 %v3499, %v3403
        %v3628 = vmax.f32 %v3500, %v3404
        %v3629 = vmax.f32 %v3501, %v3405
        %v3630 = vmax.f32 %v3502, %v3406
        %v3631 = vmax.f32 %v3503, %v3407
        %v3632 = vmax.f32 %v3504, %v3408
        %v3633 = vmax.f32 %v3505, %v3409
        %v3634 = vmax.f32 %v3506, %v3410
        %v3635 = vmax.f32 %v3507, %v3411
        %v3636 = vmax.f32 %v3508, %v3412
        %v3637 = vmax.f32 %v3509, %v3413
        %v3638 = vmax.f32 %v3510, %v3414
        %v3639 = vmax.f32 %v3511, %v3415
        %v3640 = vmax.f32 %v3512, %v3416
        %v3641 = vmax.f32 %v3513, %v3417
        %v3642 = vmax.f32 %v3514, %v3418
        %v3643 = vmax.f32 %v3515, %v3419
        %v3644 = vmax.f32 %v3516, %v3420
        %v3645 = vmax.f32 %v3517, %v3421
        %v3646 = vmax.f32 %v3518, %v3422
        %v3647 = vmax.f32 %v3519, %v3423
        %v3648 = vmax.f32 %v3520, %v3424
        %v3649 = vmax.f32 %v3521, %v3425
        %v3650 = vmax.f32 %v3522, %v3426
        %v3651 = vmax.f32 %v3523, %v3427
        %v3652 = vmax.f32 %v3524, %v3428
        %v3653 = vmax.f32 %v3525, %v3429
        %v3654 = vmax.f32 %v3526, %v3430
        %v3655 = vmax.f32 %v3527, %v3431
        %v3656 = vmax.f32 %v3624, %v3592
        %v3657 = vmax.f32 %v3625, %v3593
        %v3658 = vmax.f32 %v3626, %v3594
        %v3659 = vmax.f32 %v3627, %v3595
        %v3660 = vmax.f32 %v3628, %v3596
        %v3661 = vmax.f32 %v3629, %v3597
        %v3662 = vmax.f32 %v3630, %v3598
        %v3663 = vmax.f32 %v3631, %v3599
        %v3664 = vmax.f32 %v3632, %v3600
        %v3665 = vmax.f32 %v3633, %v3601
        %v3666 = vmax.f32 %v3634, %v3602
        %v3667 = vmax.f32 %v3635, %v3603
        %v3668 = vmax.f32 %v3636, %v3604
        %v3669 = vmax.f32 %v3637, %v3605
        %v3670 = vmax.f32 %v3638, %v3606
        %v3671 = vmax.f32 %v3639, %v3607
        %v3672 = vmax.f32 %v3640, %v3608
        %v3673 = vmax.f32 %v3641, %v3609
        %v3674 = vmax.f32 %v3642, %v3610
        %v3675 = vmax.f32 %v3643, %v3611
        %v3676 = vmax.f32 %v3644, %v3612
        %v3677 = vmax.f32 %v3645, %v3613
        %v3678 = vmax.f32 %v3646, %v3614
        %v3679 = vmax.f32 %v3647, %v3615
        %v3680 = vmax.f32 %v3648, %v3616
        %v3681 = vmax.f32 %v3649, %v3617
        %v3682 = vmax.f32 %v3650, %v3618
        %v3683 = vmax.f32 %v3651, %v3619
        %v3684 = vmax.f32 %v3652, %v3620
        %v3685 = vmax.f32 %v3653, %v3621
        %v3686 = vmax.f32 %v3654, %v3622
        %v3687 = vmax.f32 %v3655, %v3623
        %v3688 = vpack.c.bf16 %v3656, %v3656
        %v3689 = vpack.c.bf16 %v3660, %v3660
        %v3690 = vpack.c.bf16 %v3664, %v3664
        %v3691 = vpack.c.bf16 %v3668, %v3668
        %v3692 = vpack.c.bf16 %v3672, %v3672
        %v3693 = vpack.c.bf16 %v3676, %v3676
        %v3694 = vpack.c.bf16 %v3680, %v3680
        %v3695 = vpack.c.bf16 %v3684, %v3684
        %v3704 = vunpack.c.l.b16 %v3688
        %v3705 = vunpack.c.l.b16 %v3689
        %v3706 = vunpack.c.l.b16 %v3690
        %v3707 = vunpack.c.l.b16 %v3691
        %v3708 = vunpack.c.l.b16 %v3692
        %v3709 = vunpack.c.l.b16 %v3693
        %v3710 = vunpack.c.l.b16 %v3694
        %v3711 = vunpack.c.l.b16 %v3695
        %v3712 = vpack.c.b16 %v3704, %v3704
        %v3713 = vpack.c.b16 %v3705, %v3705
        %v3714 = vpack.c.b16 %v3706, %v3706
        %v3715 = vpack.c.b16 %v3707, %v3707
        %v3716 = vpack.c.b16 %v3708, %v3708
        %v3717 = vpack.c.b16 %v3709, %v3709
        %v3718 = vpack.c.b16 %v3710, %v3710
        %v3719 = vpack.c.b16 %v3711, %v3711
        %v3720 = vunpack.c.l.b16 %v3712
        %v3721 = vunpack.c.l.b16 %v3713
        %v3722 = vunpack.c.l.b16 %v3714
        %v3723 = vunpack.c.l.b16 %v3715
        %v3724 = vunpack.c.l.b16 %v3716
        %v3725 = vunpack.c.l.b16 %v3717
        %v3726 = vunpack.c.l.b16 %v3718
        %v3727 = vunpack.c.l.b16 %v3719
        %v3728 = vrot.slane %v3721, 7
        %vm3729 = vcmask 1041409
        %v3730 = vsel %vm3729, %v3728, %v3720
        %v3731 = vrot.slane %v3722, 6
        %vm3732 = vcmask 1042434
        %v3733 = vsel %vm3732, %v3731, %v3730
        %v3734 = vrot.slane %v3723, 5
        %vm3735 = vcmask 1043459
        %v3736 = vsel %vm3735, %v3734, %v3733
        %v3737 = vrot.slane %v3724, 4
        %vm3738 = vcmask 1044484
        %v3739 = vsel %vm3738, %v3737, %v3736
        %v3740 = vrot.slane %v3725, 3
        %vm3741 = vcmask 1045509
        %v3742 = vsel %vm3741, %v3740, %v3739
        %v3743 = vrot.slane %v3726, 2
        %vm3744 = vcmask 1046534
        %v3745 = vsel %vm3744, %v3743, %v3742
        %v3746 = vrot.slane %v3727, 1
        %vm3747 = vcmask 1047559
        %v3748 = vsel %vm3747, %v3746, %v3745
        %v3749 = vpack.c.b16 %v3748, %v3748
        %vm3751 = vcmask 60416
        %3752 = vst.msk [vmem:[#allocation2] sm:$0xf] %vm3751, %v3749
        %v3753 = vrot.slane %v3720, 4
        %v3754 = vrot.slane %v3721, 3
        %v3755 = vsel %vm3729, %v3754, %v3753
        %v3756 = vrot.slane %v3722, 2
        %v3757 = vsel %vm3732, %v3756, %v3755
        %v3758 = vrot.slane %v3723, 1
        %v3759 = vsel %vm3735, %v3758, %v3757
        %v3760 = vsel %vm3738, %v3724, %v3759
        %v3761 = vrot.slane %v3725, 7
        %v3762 = vsel %vm3741, %v3761, %v3760
        %v3763 = vrot.slane %v3726, 6
        %v3764 = vsel %vm3744, %v3763, %v3762
        %v3765 = vrot.slane %v3727, 5
        %v3766 = vsel %vm3747, %v3765, %v3764
        %v3767 = vpack.c.b16 %v3766, %v3766
        %3768 = vrot.lane.b32.xlu0 %v3767, 8
        %v3769 = vpop.permute.xlu0 %3768
        %vm3771 = vcmask 126016
        %3772 = vst.msk [vmem:[#allocation2] sm:$0xf] %vm3771, %v3769
        %v3773 = vpack.c.bf16 %v3657, %v3657
        %v3774 = vpack.c.bf16 %v3661, %v3661
        %v3775 = vpack.c.bf16 %v3665, %v3665
        %v3776 = vpack.c.bf16 %v3669, %v3669
        %v3777 = vpack.c.bf16 %v3673, %v3673
        %v3778 = vpack.c.bf16 %v3677, %v3677
        %v3779 = vpack.c.bf16 %v3681, %v3681
        %v3780 = vpack.c.bf16 %v3685, %v3685
        %v3789 = vunpack.c.l.b16 %v3773
        %v3790 = vunpack.c.l.b16 %v3774
        %v3791 = vunpack.c.l.b16 %v3775
        %v3792 = vunpack.c.l.b16 %v3776
        %v3793 = vunpack.c.l.b16 %v3777
        %v3794 = vunpack.c.l.b16 %v3778
        %v3795 = vunpack.c.l.b16 %v3779
        %v3796 = vunpack.c.l.b16 %v3780
        %v3797 = vpack.c.b16 %v3789, %v3789
        %v3798 = vpack.c.b16 %v3790, %v3790
        %v3799 = vpack.c.b16 %v3791, %v3791
        %v3800 = vpack.c.b16 %v3792, %v3792
        %v3801 = vpack.c.b16 %v3793, %v3793
        %v3802 = vpack.c.b16 %v3794, %v3794
        %v3803 = vpack.c.b16 %v3795, %v3795
        %v3804 = vpack.c.b16 %v3796, %v3796
        %v3805 = vunpack.c.l.b16 %v3797
        %v3806 = vunpack.c.l.b16 %v3798
        %v3807 = vunpack.c.l.b16 %v3799
        %v3808 = vunpack.c.l.b16 %v3800
        %v3809 = vunpack.c.l.b16 %v3801
        %v3810 = vunpack.c.l.b16 %v3802
        %v3811 = vunpack.c.l.b16 %v3803
        %v3812 = vunpack.c.l.b16 %v3804
        %v3813 = vrot.slane %v3806, 7
        %v3814 = vsel %vm3729, %v3813, %v3805
        %v3815 = vrot.slane %v3807, 6
        %v3816 = vsel %vm3732, %v3815, %v3814
        %v3817 = vrot.slane %v3808, 5
        %v3818 = vsel %vm3735, %v3817, %v3816
        %v3819 = vrot.slane %v3809, 4
        %v3820 = vsel %vm3738, %v3819, %v3818
        %v3821 = vrot.slane %v3810, 3
        %v3822 = vsel %vm3741, %v3821, %v3820
        %v3823 = vrot.slane %v3811, 2
        %v3824 = vsel %vm3744, %v3823, %v3822
        %v3825 = vrot.slane %v3812, 1
        %v3826 = vsel %vm3747, %v3825, %v3824
        %v3827 = vpack.c.b16 %v3826, %v3826
        %3828 = vrot.lane.b32.xlu0 %v3827, 16
        %v3829 = vpop.permute.xlu0 %3828
        %vm3831 = vcmask 191616
        %3832 = vst.msk [vmem:[#allocation2] sm:$0xf] %vm3831, %v3829
        %v3833 = vrot.slane %v3805, 4
        %v3834 = vrot.slane %v3806, 3
        %v3835 = vsel %vm3729, %v3834, %v3833
        %v3836 = vrot.slane %v3807, 2
        %v3837 = vsel %vm3732, %v3836, %v3835
        %v3838 = vrot.slane %v3808, 1
        %v3839 = vsel %vm3735, %v3838, %v3837
        %v3840 = vsel %vm3738, %v3809, %v3839
        %v3841 = vrot.slane %v3810, 7
        %v3842 = vsel %vm3741, %v3841, %v3840
        %v3843 = vrot.slane %v3811, 6
        %v3844 = vsel %vm3744, %v3843, %v3842
        %v3845 = vrot.slane %v3812, 5
        %v3846 = vsel %vm3747, %v3845, %v3844
        %v3847 = vpack.c.b16 %v3846, %v3846
        %3848 = vrot.lane.b32.xlu0 %v3847, 24
        %v3849 = vpop.permute.xlu0 %3848
        %vm3851 = vcmask 257216
        %3852 = vst.msk [vmem:[#allocation2] sm:$0xf] %vm3851, %v3849
        %v3853 = vpack.c.bf16 %v3658, %v3658
        %v3854 = vpack.c.bf16 %v3662, %v3662
        %v3855 = vpack.c.bf16 %v3666, %v3666
        %v3856 = vpack.c.bf16 %v3670, %v3670
        %v3857 = vpack.c.bf16 %v3674, %v3674
        %v3858 = vpack.c.bf16 %v3678, %v3678
        %v3859 = vpack.c.bf16 %v3682, %v3682
        %v3860 = vpack.c.bf16 %v3686, %v3686
        %v3869 = vunpack.c.l.b16 %v3853
        %v3870 = vunpack.c.l.b16 %v3854
        %v3871 = vunpack.c.l.b16 %v3855
        %v3872 = vunpack.c.l.b16 %v3856
        %v3873 = vunpack.c.l.b16 %v3857
        %v3874 = vunpack.c.l.b16 %v3858
        %v3875 = vunpack.c.l.b16 %v3859
        %v3876 = vunpack.c.l.b16 %v3860
        %v3877 = vpack.c.b16 %v3869, %v3869
        %v3878 = vpack.c.b16 %v3870, %v3870
        %v3879 = vpack.c.b16 %v3871, %v3871
        %v3880 = vpack.c.b16 %v3872, %v3872
        %v3881 = vpack.c.b16 %v3873, %v3873
        %v3882 = vpack.c.b16 %v3874, %v3874
        %v3883 = vpack.c.b16 %v3875, %v3875
        %v3884 = vpack.c.b16 %v3876, %v3876
        %v3885 = vunpack.c.l.b16 %v3877
        %v3886 = vunpack.c.l.b16 %v3878
        %v3887 = vunpack.c.l.b16 %v3879
        %v3888 = vunpack.c.l.b16 %v3880
        %v3889 = vunpack.c.l.b16 %v3881
        %v3890 = vunpack.c.l.b16 %v3882
        %v3891 = vunpack.c.l.b16 %v3883
        %v3892 = vunpack.c.l.b16 %v3884
        %v3893 = vrot.slane %v3886, 7
        %v3894 = vsel %vm3729, %v3893, %v3885
        %v3895 = vrot.slane %v3887, 6
        %v3896 = vsel %vm3732, %v3895, %v3894
        %v3897 = vrot.slane %v3888, 5
        %v3898 = vsel %vm3735, %v3897, %v3896
        %v3899 = vrot.slane %v3889, 4
        %v3900 = vsel %vm3738, %v3899, %v3898
        %v3901 = vrot.slane %v3890, 3
        %v3902 = vsel %vm3741, %v3901, %v3900
        %v3903 = vrot.slane %v3891, 2
        %v3904 = vsel %vm3744, %v3903, %v3902
        %v3905 = vrot.slane %v3892, 1
        %v3906 = vsel %vm3747, %v3905, %v3904
        %v3907 = vpack.c.b16 %v3906, %v3906
        %3908 = vrot.lane.b32.xlu0 %v3907, 32
        %v3909 = vpop.permute.xlu0 %3908
        %vm3911 = vcmask 322816
        %3912 = vst.msk [vmem:[#allocation2] sm:$0xf] %vm3911, %v3909
        %v3913 = vrot.slane %v3885, 4
        %v3914 = vrot.slane %v3886, 3
        %v3915 = vsel %vm3729, %v3914, %v3913
        %v3916 = vrot.slane %v3887, 2
        %v3917 = vsel %vm3732, %v3916, %v3915
        %v3918 = vrot.slane %v3888, 1
        %v3919 = vsel %vm3735, %v3918, %v3917
        %v3920 = vsel %vm3738, %v3889, %v3919
        %v3921 = vrot.slane %v3890, 7
        %v3922 = vsel %vm3741, %v3921, %v3920
        %v3923 = vrot.slane %v3891, 6
        %v3924 = vsel %vm3744, %v3923, %v3922
        %v3925 = vrot.slane %v3892, 5
        %v3926 = vsel %vm3747, %v3925, %v3924
        %v3927 = vpack.c.b16 %v3926, %v3926
        %3928 = vrot.lane.b32.xlu0 %v3927, 40
        %v3929 = vpop.permute.xlu0 %3928
        %vm3931 = vcmask 388416
        %3932 = vst.msk [vmem:[#allocation2] sm:$0xf] %vm3931, %v3929
        %v3933 = vpack.c.bf16 %v3659, %v3659
        %v3934 = vpack.c.bf16 %v3663, %v3663
        %v3935 = vpack.c.bf16 %v3667, %v3667
        %v3936 = vpack.c.bf16 %v3671, %v3671
        %v3937 = vpack.c.bf16 %v3675, %v3675
        %v3938 = vpack.c.bf16 %v3679, %v3679
        %v3939 = vpack.c.bf16 %v3683, %v3683
        %v3940 = vpack.c.bf16 %v3687, %v3687
        %v3949 = vunpack.c.l.b16 %v3933
        %v3950 = vunpack.c.l.b16 %v3934
        %v3951 = vunpack.c.l.b16 %v3935
        %v3952 = vunpack.c.l.b16 %v3936
        %v3953 = vunpack.c.l.b16 %v3937
        %v3954 = vunpack.c.l.b16 %v3938
        %v3955 = vunpack.c.l.b16 %v3939
        %v3956 = vunpack.c.l.b16 %v3940
        %v3957 = vpack.c.b16 %v3949, %v3949
        %v3958 = vpack.c.b16 %v3950, %v3950
        %v3959 = vpack.c.b16 %v3951, %v3951
        %v3960 = vpack.c.b16 %v3952, %v3952
        %v3961 = vpack.c.b16 %v3953, %v3953
        %v3962 = vpack.c.b16 %v3954, %v3954
        %v3963 = vpack.c.b16 %v3955, %v3955
        %v3964 = vpack.c.b16 %v3956, %v3956
        %v3965 = vunpack.c.l.b16 %v3957
        %v3966 = vunpack.c.l.b16 %v3958
        %v3967 = vunpack.c.l.b16 %v3959
        %v3968 = vunpack.c.l.b16 %v3960
        %v3969 = vunpack.c.l.b16 %v3961
        %v3970 = vunpack.c.l.b16 %v3962
        %v3971 = vunpack.c.l.b16 %v3963
        %v3972 = vunpack.c.l.b16 %v3964
        %v3973 = vrot.slane %v3966, 7
        %v3974 = vsel %vm3729, %v3973, %v3965
        %v3975 = vrot.slane %v3967, 6
        %v3976 = vsel %vm3732, %v3975, %v3974
        %v3977 = vrot.slane %v3968, 5
        %v3978 = vsel %vm3735, %v3977, %v3976
        %v3979 = vrot.slane %v3969, 4
        %v3980 = vsel %vm3738, %v3979, %v3978
        %v3981 = vrot.slane %v3970, 3
        %v3982 = vsel %vm3741, %v3981, %v3980
        %v3983 = vrot.slane %v3971, 2
        %v3984 = vsel %vm3744, %v3983, %v3982
        %v3985 = vrot.slane %v3972, 1
        %v3986 = vsel %vm3747, %v3985, %v3984
        %v3987 = vpack.c.b16 %v3986, %v3986
        %3988 = vrot.lane.b32.xlu0 %v3987, 48
        %v3989 = vpop.permute.xlu0 %3988
        %vm3991 = vcmask 454016
        %3992 = vst.msk [vmem:[#allocation2] sm:$0xf] %vm3991, %v3989
        %v3993 = vrot.slane %v3965, 4
        %v3994 = vrot.slane %v3966, 3
        %v3995 = vsel %vm3729, %v3994, %v3993
        %v3996 = vrot.slane %v3967, 2
        %v3997 = vsel %vm3732, %v3996, %v3995
        %v3998 = vrot.slane %v3968, 1
        %v3999 = vsel %vm3735, %v3998, %v3997
        %v4000 = vsel %vm3738, %v3969, %v3999
        %v4001 = vrot.slane %v3970, 7
        %v4002 = vsel %vm3741, %v4001, %v4000
        %v4003 = vrot.slane %v3971, 6
        %v4004 = vsel %vm3744, %v4003, %v4002
        %v4005 = vrot.slane %v3972, 5
        %v4006 = vsel %vm3747, %v4005, %v4004
        %v4007 = vpack.c.b16 %v4006, %v4006
        %4008 = vrot.lane.b32.xlu0 %v4007, 56
        %v4009 = vpop.permute.xlu0 %4008
        %vm4011 = vcmask 519616
        %4012 = vst.msk [vmem:[#allocation2] sm:$0xf] %vm4011, %v4009
        %v4013 = vld [vmem:[%s485] sm:$0xf]
        %v4014 = vld [vmem:[%s485 + $0x4] sm:$0xf]
        %v4015 = vld [vmem:[%s485 + $0x8] sm:$0xf]
        %v4016 = vld [vmem:[%s485 + $0xc] sm:$0xf]
        %v4017 = vld [vmem:[%s485 + $0x10] sm:$0xf]
        %v4018 = vld [vmem:[%s485 + $0x14] sm:$0xf]
        %v4019 = vld [vmem:[%s485 + $0x18] sm:$0xf]
        %v4020 = vld [vmem:[%s485 + $0x1c] sm:$0xf]
        %v4021 = vld [vmem:[%s485 + $0x20] sm:$0xf]
        %v4022 = vld [vmem:[%s485 + $0x24] sm:$0xf]
        %v4023 = vld [vmem:[%s485 + $0x28] sm:$0xf]
        %v4024 = vld [vmem:[%s485 + $0x2c] sm:$0xf]
        %v4025 = vld [vmem:[%s485 + $0x30] sm:$0xf]
        %v4026 = vld [vmem:[%s485 + $0x34] sm:$0xf]
        %v4027 = vld [vmem:[%s485 + $0x38] sm:$0xf]
        %v4028 = vld [vmem:[%s485 + $0x3c] sm:$0xf]
        %v4029 = vld [vmem:[%s485 + $0x40] sm:$0xf]
        %v4030 = vld [vmem:[%s485 + $0x44] sm:$0xf]
        %v4031 = vld [vmem:[%s485 + $0x48] sm:$0xf]
        %v4032 = vld [vmem:[%s485 + $0x4c] sm:$0xf]
        %v4033 = vld [vmem:[%s485 + $0x50] sm:$0xf]
        %v4034 = vld [vmem:[%s485 + $0x54] sm:$0xf]
        %v4035 = vld [vmem:[%s485 + $0x58] sm:$0xf]
        %v4036 = vld [vmem:[%s485 + $0x5c] sm:$0xf]
        %v4037 = vld [vmem:[%s485 + $0x60] sm:$0xf]
        %v4038 = vld [vmem:[%s485 + $0x64] sm:$0xf]
        %v4039 = vld [vmem:[%s485 + $0x68] sm:$0xf]
        %v4040 = vld [vmem:[%s485 + $0x6c] sm:$0xf]
        %v4041 = vld [vmem:[%s485 + $0x70] sm:$0xf]
        %v4042 = vld [vmem:[%s485 + $0x74] sm:$0xf]
        %v4043 = vld [vmem:[%s485 + $0x78] sm:$0xf]
        %v4044 = vld [vmem:[%s485 + $0x7c] sm:$0xf]
        %v4045 = vld [vmem:[%s485 + $0x80] sm:$0xf]
        %v4046 = vld [vmem:[%s485 + $0x84] sm:$0xf]
        %v4047 = vld [vmem:[%s485 + $0x88] sm:$0xf]
        %v4048 = vld [vmem:[%s485 + $0x8c] sm:$0xf]
        %v4049 = vld [vmem:[%s485 + $0x90] sm:$0xf]
        %v4050 = vld [vmem:[%s485 + $0x94] sm:$0xf]
        %v4051 = vld [vmem:[%s485 + $0x98] sm:$0xf]
        %v4052 = vld [vmem:[%s485 + $0x9c] sm:$0xf]
        %v4053 = vld [vmem:[%s485 + $0xa0] sm:$0xf]
        %v4054 = vld [vmem:[%s485 + $0xa4] sm:$0xf]
        %v4055 = vld [vmem:[%s485 + $0xa8] sm:$0xf]
        %v4056 = vld [vmem:[%s485 + $0xac] sm:$0xf]
        %v4057 = vld [vmem:[%s485 + $0xb0] sm:$0xf]
        %v4058 = vld [vmem:[%s485 + $0xb4] sm:$0xf]
        %v4059 = vld [vmem:[%s485 + $0xb8] sm:$0xf]
        %v4060 = vld [vmem:[%s485 + $0xbc] sm:$0xf]
        %v4061 = vld [vmem:[%s485 + $0xc0] sm:$0xf]
        %v4062 = vld [vmem:[%s485 + $0xc4] sm:$0xf]
        %v4063 = vld [vmem:[%s485 + $0xc8] sm:$0xf]
        %v4064 = vld [vmem:[%s485 + $0xcc] sm:$0xf]
        %v4065 = vld [vmem:[%s485 + $0xd0] sm:$0xf]
        %v4066 = vld [vmem:[%s485 + $0xd4] sm:$0xf]
        %v4067 = vld [vmem:[%s485 + $0xd8] sm:$0xf]
        %v4068 = vld [vmem:[%s485 + $0xdc] sm:$0xf]
        %v4069 = vld [vmem:[%s485 + $0xe0] sm:$0xf]
        %v4070 = vld [vmem:[%s485 + $0xe4] sm:$0xf]
        %v4071 = vld [vmem:[%s485 + $0xe8] sm:$0xf]
        %v4072 = vld [vmem:[%s485 + $0xec] sm:$0xf]
        %v4073 = vld [vmem:[%s485 + $0xf0] sm:$0xf]
        %v4074 = vld [vmem:[%s485 + $0xf4] sm:$0xf]
        %v4075 = vld [vmem:[%s485 + $0xf8] sm:$0xf]
        %v4076 = vld [vmem:[%s485 + $0xfc] sm:$0xf]
        %v4077 = vunpack.c.l.bf16 %v4013
        %v4078 = vunpack.c.l.bf16 %v4014
        %v4079 = vunpack.c.l.bf16 %v4015
        %v4080 = vunpack.c.l.bf16 %v4016
        %v4081 = vunpack.c.l.bf16 %v4017
        %v4082 = vunpack.c.l.bf16 %v4018
        %v4083 = vunpack.c.l.bf16 %v4019
        %v4084 = vunpack.c.l.bf16 %v4020
        %v4085 = vunpack.c.l.bf16 %v4021
        %v4086 = vunpack.c.l.bf16 %v4022
        %v4087 = vunpack.c.l.bf16 %v4023
        %v4088 = vunpack.c.l.bf16 %v4024
        %v4089 = vunpack.c.l.bf16 %v4025
        %v4090 = vunpack.c.l.bf16 %v4026
        %v4091 = vunpack.c.l.bf16 %v4027
        %v4092 = vunpack.c.l.bf16 %v4028
        %v4093 = vunpack.c.l.bf16 %v4029
        %v4094 = vunpack.c.l.bf16 %v4030
        %v4095 = vunpack.c.l.bf16 %v4031
        %v4096 = vunpack.c.l.bf16 %v4032
        %v4097 = vunpack.c.l.bf16 %v4033
        %v4098 = vunpack.c.l.bf16 %v4034
        %v4099 = vunpack.c.l.bf16 %v4035
        %v4100 = vunpack.c.l.bf16 %v4036
        %v4101 = vunpack.c.l.bf16 %v4037
        %v4102 = vunpack.c.l.bf16 %v4038
        %v4103 = vunpack.c.l.bf16 %v4039
        %v4104 = vunpack.c.l.bf16 %v4040
        %v4105 = vunpack.c.l.bf16 %v4041
        %v4106 = vunpack.c.l.bf16 %v4042
        %v4107 = vunpack.c.l.bf16 %v4043
        %v4108 = vunpack.c.l.bf16 %v4044
        %v4109 = vunpack.c.l.bf16 %v4045
        %v4110 = vunpack.c.l.bf16 %v4046
        %v4111 = vunpack.c.l.bf16 %v4047
        %v4112 = vunpack.c.l.bf16 %v4048
        %v4113 = vunpack.c.l.bf16 %v4049
        %v4114 = vunpack.c.l.bf16 %v4050
        %v4115 = vunpack.c.l.bf16 %v4051
        %v4116 = vunpack.c.l.bf16 %v4052
        %v4117 = vunpack.c.l.bf16 %v4053
        %v4118 = vunpack.c.l.bf16 %v4054
        %v4119 = vunpack.c.l.bf16 %v4055
        %v4120 = vunpack.c.l.bf16 %v4056
        %v4121 = vunpack.c.l.bf16 %v4057
        %v4122 = vunpack.c.l.bf16 %v4058
        %v4123 = vunpack.c.l.bf16 %v4059
        %v4124 = vunpack.c.l.bf16 %v4060
        %v4125 = vunpack.c.l.bf16 %v4061
        %v4126 = vunpack.c.l.bf16 %v4062
        %v4127 = vunpack.c.l.bf16 %v4063
        %v4128 = vunpack.c.l.bf16 %v4064
        %v4129 = vunpack.c.l.bf16 %v4065
        %v4130 = vunpack.c.l.bf16 %v4066
        %v4131 = vunpack.c.l.bf16 %v4067
        %v4132 = vunpack.c.l.bf16 %v4068
        %v4133 = vunpack.c.l.bf16 %v4069
        %v4134 = vunpack.c.l.bf16 %v4070
        %v4135 = vunpack.c.l.bf16 %v4071
        %v4136 = vunpack.c.l.bf16 %v4072
        %v4137 = vunpack.c.l.bf16 %v4073
        %v4138 = vunpack.c.l.bf16 %v4074
        %v4139 = vunpack.c.l.bf16 %v4075
        %v4140 = vunpack.c.l.bf16 %v4076
        %v4141 = vsel %vm2227, %v4077, 0.0
        %v4142 = vsel %vm2227, %v4078, 0.0
        %v4143 = vadd.f32 %v4141, %v4142
        %v4144 = vsel %vm2227, %v4079, 0.0
        %v4145 = vadd.f32 %v4143, %v4144
        %v4146 = vsel %vm2227, %v4080, 0.0
        %v4147 = vadd.f32 %v4145, %v4146
        %v4148 = vsel %vm2227, %v4081, 0.0
        %v4149 = vadd.f32 %v4147, %v4148
        %v4150 = vsel %vm2227, %v4082, 0.0
        %v4151 = vadd.f32 %v4149, %v4150
        %v4152 = vsel %vm2227, %v4083, 0.0
        %v4153 = vadd.f32 %v4151, %v4152
        %v4154 = vsel %vm2227, %v4084, 0.0
        %v4155 = vadd.f32 %v4153, %v4154
        %v4156 = vrot.slane %v4155, 4
        %v4157 = vadd.f32 %v4155, %v4156
        %v4158 = vrot.slane %v4157, 2
        %v4159 = vadd.f32 %v4157, %v4158
        %v4160 = vrot.slane %v4159, 1
        %v4161 = vadd.f32 %v4159, %v4160
        %v4162 = vsel %vm2227, %v4085, 0.0
        %v4163 = vsel %vm2227, %v4086, 0.0
        %v4164 = vadd.f32 %v4162, %v4163
        %v4165 = vsel %vm2227, %v4087, 0.0
        %v4166 = vadd.f32 %v4164, %v4165
        %v4167 = vsel %vm2227, %v4088, 0.0
        %v4168 = vadd.f32 %v4166, %v4167
        %v4169 = vsel %vm2227, %v4089, 0.0
        %v4170 = vadd.f32 %v4168, %v4169
        %v4171 = vsel %vm2227, %v4090, 0.0
        %v4172 = vadd.f32 %v4170, %v4171
        %v4173 = vsel %vm2227, %v4091, 0.0
        %v4174 = vadd.f32 %v4172, %v4173
        %v4175 = vsel %vm2227, %v4092, 0.0
        %v4176 = vadd.f32 %v4174, %v4175
        %v4177 = vrot.slane %v4176, 4
        %v4178 = vadd.f32 %v4176, %v4177
        %v4179 = vrot.slane %v4178, 2
        %v4180 = vadd.f32 %v4178, %v4179
        %v4181 = vrot.slane %v4180, 1
        %v4182 = vadd.f32 %v4180, %v4181
        %v4183 = vsel %vm2227, %v4093, 0.0
        %v4184 = vsel %vm2227, %v4094, 0.0
        %v4185 = vadd.f32 %v4183, %v4184
        %v4186 = vsel %vm2227, %v4095, 0.0
        %v4187 = vadd.f32 %v4185, %v4186
        %v4188 = vsel %vm2227, %v4096, 0.0
        %v4189 = vadd.f32 %v4187, %v4188
        %v4190 = vsel %vm2227, %v4097, 0.0
        %v4191 = vadd.f32 %v4189, %v4190
        %v4192 = vsel %vm2227, %v4098, 0.0
        %v4193 = vadd.f32 %v4191, %v4192
        %v4194 = vsel %vm2227, %v4099, 0.0
        %v4195 = vadd.f32 %v4193, %v4194
        %v4196 = vsel %vm2227, %v4100, 0.0
        %v4197 = vadd.f32 %v4195, %v4196
        %v4198 = vrot.slane %v4197, 4
        %v4199 = vadd.f32 %v4197, %v4198
        %v4200 = vrot.slane %v4199, 2
        %v4201 = vadd.f32 %v4199, %v4200
        %v4202 = vrot.slane %v4201, 1
        %v4203 = vadd.f32 %v4201, %v4202
        %v4204 = vsel %vm2227, %v4101, 0.0
        %v4205 = vsel %vm2227, %v4102, 0.0
        %v4206 = vadd.f32 %v4204, %v4205
        %v4207 = vsel %vm2227, %v4103, 0.0
        %v4208 = vadd.f32 %v4206, %v4207
        %v4209 = vsel %vm2227, %v4104, 0.0
        %v4210 = vadd.f32 %v4208, %v4209
        %v4211 = vsel %vm2227, %v4105, 0.0
        %v4212 = vadd.f32 %v4210, %v4211
        %v4213 = vsel %vm2227, %v4106, 0.0
        %v4214 = vadd.f32 %v4212, %v4213
        %v4215 = vsel %vm2227, %v4107, 0.0
        %v4216 = vadd.f32 %v4214, %v4215
        %v4217 = vsel %vm2227, %v4108, 0.0
        %v4218 = vadd.f32 %v4216, %v4217
        %v4219 = vrot.slane %v4218, 4
        %v4220 = vadd.f32 %v4218, %v4219
        %v4221 = vrot.slane %v4220, 2
        %v4222 = vadd.f32 %v4220, %v4221
        %v4223 = vrot.slane %v4222, 1
        %v4224 = vadd.f32 %v4222, %v4223
        %v4225 = vsel %vm2227, %v4109, 0.0
        %v4226 = vsel %vm2227, %v4110, 0.0
        %v4227 = vadd.f32 %v4225, %v4226
        %v4228 = vsel %vm2227, %v4111, 0.0
        %v4229 = vadd.f32 %v4227, %v4228
        %v4230 = vsel %vm2227, %v4112, 0.0
        %v4231 = vadd.f32 %v4229, %v4230
        %v4232 = vsel %vm2227, %v4113, 0.0
        %v4233 = vadd.f32 %v4231, %v4232
        %v4234 = vsel %vm2227, %v4114, 0.0
        %v4235 = vadd.f32 %v4233, %v4234
        %v4236 = vsel %vm2227, %v4115, 0.0
        %v4237 = vadd.f32 %v4235, %v4236
        %v4238 = vsel %vm2227, %v4116, 0.0
        %v4239 = vadd.f32 %v4237, %v4238
        %v4240 = vrot.slane %v4239, 4
        %v4241 = vadd.f32 %v4239, %v4240
        %v4242 = vrot.slane %v4241, 2
        %v4243 = vadd.f32 %v4241, %v4242
        %v4244 = vrot.slane %v4243, 1
        %v4245 = vadd.f32 %v4243, %v4244
        %v4246 = vsel %vm2227, %v4117, 0.0
        %v4247 = vsel %vm2227, %v4118, 0.0
        %v4248 = vadd.f32 %v4246, %v4247
        %v4249 = vsel %vm2227, %v4119, 0.0
        %v4250 = vadd.f32 %v4248, %v4249
        %v4251 = vsel %vm2227, %v4120, 0.0
        %v4252 = vadd.f32 %v4250, %v4251
        %v4253 = vsel %vm2227, %v4121, 0.0
        %v4254 = vadd.f32 %v4252, %v4253
        %v4255 = vsel %vm2227, %v4122, 0.0
        %v4256 = vadd.f32 %v4254, %v4255
        %v4257 = vsel %vm2227, %v4123, 0.0
        %v4258 = vadd.f32 %v4256, %v4257
        %v4259 = vsel %vm2227, %v4124, 0.0
        %v4260 = vadd.f32 %v4258, %v4259
        %v4261 = vrot.slane %v4260, 4
        %v4262 = vadd.f32 %v4260, %v4261
        %v4263 = vrot.slane %v4262, 2
        %v4264 = vadd.f32 %v4262, %v4263
        %v4265 = vrot.slane %v4264, 1
        %v4266 = vadd.f32 %v4264, %v4265
        %v4267 = vsel %vm2227, %v4125, 0.0
        %v4268 = vsel %vm2227, %v4126, 0.0
        %v4269 = vadd.f32 %v4267, %v4268
        %v4270 = vsel %vm2227, %v4127, 0.0
        %v4271 = vadd.f32 %v4269, %v4270
        %v4272 = vsel %vm2227, %v4128, 0.0
        %v4273 = vadd.f32 %v4271, %v4272
        %v4274 = vsel %vm2227, %v4129, 0.0
        %v4275 = vadd.f32 %v4273, %v4274
        %v4276 = vsel %vm2227, %v4130, 0.0
        %v4277 = vadd.f32 %v4275, %v4276
        %v4278 = vsel %vm2227, %v4131, 0.0
        %v4279 = vadd.f32 %v4277, %v4278
        %v4280 = vsel %vm2227, %v4132, 0.0
        %v4281 = vadd.f32 %v4279, %v4280
        %v4282 = vrot.slane %v4281, 4
        %v4283 = vadd.f32 %v4281, %v4282
        %v4284 = vrot.slane %v4283, 2
        %v4285 = vadd.f32 %v4283, %v4284
        %v4286 = vrot.slane %v4285, 1
        %v4287 = vadd.f32 %v4285, %v4286
        %v4288 = vsel %vm2227, %v4133, 0.0
        %v4289 = vsel %vm2227, %v4134, 0.0
        %v4290 = vadd.f32 %v4288, %v4289
        %v4291 = vsel %vm2227, %v4135, 0.0
        %v4292 = vadd.f32 %v4290, %v4291
        %v4293 = vsel %vm2227, %v4136, 0.0
        %v4294 = vadd.f32 %v4292, %v4293
        %v4295 = vsel %vm2227, %v4137, 0.0
        %v4296 = vadd.f32 %v4294, %v4295
        %v4297 = vsel %vm2227, %v4138, 0.0
        %v4298 = vadd.f32 %v4296, %v4297
        %v4299 = vsel %vm2227, %v4139, 0.0
        %v4300 = vadd.f32 %v4298, %v4299
        %v4301 = vsel %vm2227, %v4140, 0.0
        %v4302 = vadd.f32 %v4300, %v4301
        %v4303 = vrot.slane %v4302, 4
        %v4304 = vadd.f32 %v4302, %v4303
        %v4305 = vrot.slane %v4304, 2
        %v4306 = vadd.f32 %v4304, %v4305
        %v4307 = vrot.slane %v4306, 1
        %v4308 = vadd.f32 %v4306, %v4307
        %v4309 = vrcp.pop 64.0
        %v4310 = vmul.f32 %v4161, %v4309
        %v4311 = vmul.f32 %v4182, %v4309
        %v4312 = vmul.f32 %v4203, %v4309
        %v4313 = vmul.f32 %v4224, %v4309
        %v4314 = vmul.f32 %v4245, %v4309
        %v4315 = vmul.f32 %v4266, %v4309
        %v4316 = vmul.f32 %v4287, %v4309
        %v4317 = vmul.f32 %v4308, %v4309
        %v4318 = vld [vmem:[%s3] sm:$0xf]
        %v4319 = vld [vmem:[%s3 + $0x4] sm:$0xf]
        %v4320 = vld [vmem:[%s3 + $0x8] sm:$0xf]
        %v4321 = vld [vmem:[%s3 + $0xc] sm:$0xf]
        %v4322 = vpack.c.bf16 %v4310, %v4310
        %v4323 = vpack.c.bf16 %v4311, %v4311
        %v4324 = vpack.c.bf16 %v4312, %v4312
        %v4325 = vpack.c.bf16 %v4313, %v4313
        %v4326 = vpack.c.bf16 %v4314, %v4314
        %v4327 = vpack.c.bf16 %v4315, %v4315
        %v4328 = vpack.c.bf16 %v4316, %v4316
        %v4329 = vpack.c.bf16 %v4317, %v4317
        %v4330 = vld [vmem:[#allocation2] sm:$0xf]
        %v4331 = vld [vmem:[%s4] sm:$0xf]
        %v4332 = vld [vmem:[%s4 + $0x4] sm:$0xf]
        %v4333 = vld [vmem:[%s4 + $0x8] sm:$0xf]
        %v4334 = vld [vmem:[%s4 + $0xc] sm:$0xf]
        %v4335 = vld [vmem:[%s4 + $0x10] sm:$0xf]
        %v4336 = vld [vmem:[%s4 + $0x14] sm:$0xf]
        %v4337 = vld [vmem:[%s4 + $0x18] sm:$0xf]
        %v4338 = vld [vmem:[%s4 + $0x1c] sm:$0xf]
        %v4347 = vunpack.c.l.b16 %v4331
        %v4348 = vunpack.c.l.b16 %v4332
        %v4349 = vunpack.c.l.b16 %v4333
        %v4350 = vunpack.c.l.b16 %v4334
        %v4351 = vunpack.c.l.b16 %v4335
        %v4352 = vunpack.c.l.b16 %v4336
        %v4353 = vunpack.c.l.b16 %v4337
        %v4354 = vunpack.c.l.b16 %v4338
        %v4355 = vpack.c.b16 %v4348, %v4347
        %v4356 = vpack.c.b16 %v4350, %v4349
        %v4357 = vpack.c.b16 %v4352, %v4351
        %v4358 = vpack.c.b16 %v4354, %v4353
        %vm4363 = vcmask 523264
        %v4365 = vsel %vm4363, %v4330, 0
        %4367 = vmatprep.subr.bf16.mxu0 0
        %4368 = vmatpush1.bf16.msra.mxu0 0
        %4369 = vmatprep.subr.bf16.mxu0 0
        %4370 = vmatpush1.bf16.msra.mxu0 0
        %4371 = vmatprep.subr.bf16.mxu0 0
        %4372 = vmatpush1.bf16.msra.mxu0 0
        %4373 = vmatprep.subr.bf16.mxu0 0
        %4374 = vmatpush1.bf16.msra.mxu0 0
        %4375 = vmatprep.subr.bf16.mxu0 0
        %4376 = vmatpush1.bf16.msra.mxu0 %v4358
        %4377 = vmatprep.subr.bf16.mxu0 0
        %4378 = vmatpush1.bf16.msra.mxu0 %v4357
        %4379 = vmatprep.subr.bf16.mxu0 0
        %4380 = vmatpush1.bf16.msra.mxu0 %v4356
        %4381 = vmatprep.subr.bf16.mxu0 0
        %4382 = vmatpush1.bf16.msra.mxu0 %v4355
        %4383 = vmatprep.subr.bf16.mxu0 0
        %4384 = vmatpush2.bf16.msra.mxu0 0
        %4385 = vmatprep.subr.bf16.mxu0 0
        %4386 = vmatpush2.bf16.msra.mxu0 0
        %4387 = vmatprep.subr.bf16.mxu0 0
        %4388 = vmatpush2.bf16.msra.mxu0 0
        %4389 = vmatprep.subr.bf16.mxu0 0
        %4390 = vmatpush2.bf16.msra.mxu0 0
        %4391 = vmatprep.subr.bf16.mxu0 0
        %4392 = vmatpush2.bf16.msra.mxu0 0
        %4393 = vmatprep.subr.bf16.mxu0 0
        %4394 = vmatpush2.bf16.msra.mxu0 0
        %4395 = vmatprep.subr.bf16.mxu0 0
        %4396 = vmatpush2.bf16.msra.mxu0 0
        %4397 = vmatprep.subr.bf16.mxu0 0
        %4398 = vmatpush2.bf16.msra.mxu0 0
        %4399 = vmatprep.mubr.bf16.mxu0 0
        %4400 = vmatmul.mubr.bf16.gmra.mxu0 %v4365
        %v4401 = vpop.f32.mrf.mxu0
        %v4402 = vadd.f32 0.0, %v4401
        %v4403 = vpop.f32.mrf.mxu0
        %v4404 = vpop.f32.mrf.mxu0
        %v4405 = vpop.f32.mrf.mxu0
        %4406 = vdwg.mxu0
        %v4415 = vunpack.c.l.b16 %v4322
        %v4416 = vunpack.c.l.b16 %v4323
        %v4417 = vunpack.c.l.b16 %v4324
        %v4418 = vunpack.c.l.b16 %v4325
        %v4419 = vunpack.c.l.b16 %v4326
        %v4420 = vunpack.c.l.b16 %v4327
        %v4421 = vunpack.c.l.b16 %v4328
        %v4422 = vunpack.c.l.b16 %v4329
        %v4423 = vsel %vm3729, %v4416, %v4415
        %v4424 = vsel %vm3732, %v4417, %v4423
        %v4425 = vsel %vm3735, %v4418, %v4424
        %v4426 = vsel %vm3738, %v4419, %v4425
        %v4427 = vsel %vm3741, %v4420, %v4426
        %v4428 = vsel %vm3744, %v4421, %v4427
        %v4429 = vsel %vm3747, %v4422, %v4428
        %v4430 = vpack.c.b16 %v4429, %v4429
        %v4435 = vunpack.c.l.b16 %v4318
        %v4436 = vunpack.c.l.b16 %v4319
        %v4437 = vunpack.c.l.b16 %v4320
        %v4438 = vunpack.c.l.b16 %v4321
        %v4439 = vpack.c.b16 %v4436, %v4435
        %v4440 = vpack.c.b16 %v4438, %v4437
        %v4444 = vsel %vm2227, %v4430, 0
        %4446 = vmatprep.subr.bf16.mxu0 0
        %4447 = vmatpush1.bf16.msra.mxu0 0
        %4448 = vmatprep.subr.bf16.mxu0 0
        %4449 = vmatpush1.bf16.msra.mxu0 0
        %4450 = vmatprep.subr.bf16.mxu0 0
        %4451 = vmatpush1.bf16.msra.mxu0 0
        %4452 = vmatprep.subr.bf16.mxu0 0
        %4453 = vmatpush1.bf16.msra.mxu0 0
        %4454 = vmatprep.subr.bf16.mxu0 0
        %4455 = vmatpush1.bf16.msra.mxu0 0
        %4456 = vmatprep.subr.bf16.mxu0 0
        %4457 = vmatpush1.bf16.msra.mxu0 0
        %4458 = vmatprep.subr.bf16.mxu0 0
        %4459 = vmatpush1.bf16.msra.mxu0 %v4440
        %4460 = vmatprep.subr.bf16.mxu0 0
        %4461 = vmatpush1.bf16.msra.mxu0 %v4439
        %4462 = vmatprep.subr.bf16.mxu0 0
        %4463 = vmatpush2.bf16.msra.mxu0 0
        %4464 = vmatprep.subr.bf16.mxu0 0
        %4465 = vmatpush2.bf16.msra.mxu0 0
        %4466 = vmatprep.subr.bf16.mxu0 0
        %4467 = vmatpush2.bf16.msra.mxu0 0
        %4468 = vmatprep.subr.bf16.mxu0 0
        %4469 = vmatpush2.bf16.msra.mxu0 0
        %4470 = vmatprep.subr.bf16.mxu0 0
        %4471 = vmatpush2.bf16.msra.mxu0 0
        %4472 = vmatprep.subr.bf16.mxu0 0
        %4473 = vmatpush2.bf16.msra.mxu0 0
        %4474 = vmatprep.subr.bf16.mxu0 0
        %4475 = vmatpush2.bf16.msra.mxu0 0
        %4476 = vmatprep.subr.bf16.mxu0 0
        %4477 = vmatpush2.bf16.msra.mxu0 0
        %4478 = vmatprep.mubr.bf16.mxu0 0
        %4479 = vmatmul.mubr.bf16.gmra.mxu0 %v4444
        %v4480 = vpop.f32.mrf.mxu0
        %v4481 = vadd.f32 %v4402, %v4480
        %v4482 = vpop.f32.mrf.mxu0
        %v4483 = vpop.f32.mrf.mxu0
        %v4484 = vpop.f32.mrf.mxu0
        %4485 = vdwg.mxu0
        %v4486 = vld [vmem:[%s5] sm:$0xf]
        %v4487 = vld [vmem:[%s5 + $0x4] sm:$0xf]
        %v4488 = vld [vmem:[%s5 + $0x8] sm:$0xf]
        %v4489 = vld [vmem:[%s5 + $0xc] sm:$0xf]
        %v4490 = vld [vmem:[%s5 + $0x10] sm:$0xf]
        %v4491 = vld [vmem:[%s5 + $0x14] sm:$0xf]
        %v4492 = vpack.c.bf16 %v4481, %v4481
        %v4499 = vunpack.c.l.b16 %v4486
        %v4500 = vunpack.c.l.b16 %v4487
        %v4501 = vunpack.c.l.b16 %v4488
        %v4502 = vunpack.c.l.b16 %v4489
        %v4503 = vunpack.c.l.b16 %v4490
        %v4504 = vunpack.c.l.b16 %v4491
        %v4505 = vpack.c.b16 %v4500, %v4499
        %v4506 = vpack.c.b16 %v4502, %v4501
        %v4507 = vpack.c.b16 %v4504, %v4503
        %vm4511 = vcmask 392192
        %v4513 = vsel %vm4511, %v4492, 0
        %4515 = vmatprep.subr.bf16.mxu0 0
        %4516 = vmatpush1.bf16.msra.mxu0 0
        %4517 = vmatprep.subr.bf16.mxu0 0
        %4518 = vmatpush1.bf16.msra.mxu0 0
        %4519 = vmatprep.subr.bf16.mxu0 0
        %4520 = vmatpush1.bf16.msra.mxu0 0
        %4521 = vmatprep.subr.bf16.mxu0 0
        %4522 = vmatpush1.bf16.msra.mxu0 0
        %4523 = vmatprep.subr.bf16.mxu0 0
        %4524 = vmatpush1.bf16.msra.mxu0 0
        %4525 = vmatprep.subr.bf16.mxu0 0
        %4526 = vmatpush1.bf16.msra.mxu0 %v4507
        %4527 = vmatprep.subr.bf16.mxu0 0
        %4528 = vmatpush1.bf16.msra.mxu0 %v4506
        %4529 = vmatprep.subr.bf16.mxu0 0
        %4530 = vmatpush1.bf16.msra.mxu0 %v4505
        %4531 = vmatprep.subr.bf16.mxu0 0
        %4532 = vmatpush2.bf16.msra.mxu0 0
        %4533 = vmatprep.subr.bf16.mxu0 0
        %4534 = vmatpush2.bf16.msra.mxu0 0
        %4535 = vmatprep.subr.bf16.mxu0 0
        %4536 = vmatpush2.bf16.msra.mxu0 0
        %4537 = vmatprep.subr.bf16.mxu0 0
        %4538 = vmatpush2.bf16.msra.mxu0 0
        %4539 = vmatprep.subr.bf16.mxu0 0
        %4540 = vmatpush2.bf16.msra.mxu0 0
        %4541 = vmatprep.subr.bf16.mxu0 0
        %4542 = vmatpush2.bf16.msra.mxu0 0
        %4543 = vmatprep.subr.bf16.mxu0 0
        %4544 = vmatpush2.bf16.msra.mxu0 0
        %4545 = vmatprep.subr.bf16.mxu0 0
        %4546 = vmatpush2.bf16.msra.mxu0 0
        %4547 = vmatprep.mubr.bf16.mxu0 0
        %4548 = vmatmul.mubr.bf16.gmra.mxu0 %v4513
        %v4549 = vpop.f32.mrf.mxu0
        %v4550 = vadd.f32 0.0, %v4549
        %v4551 = vpop.f32.mrf.mxu0
        %v4552 = vpop.f32.mrf.mxu0
        %v4553 = vpop.f32.mrf.mxu0
        %4554 = vdwg.mxu0
        %v4555 = vmax.f32 %v4550, 0.0
        %v4556 = vld [vmem:[%s6] sm:$0xf]
        %v4557 = vld [vmem:[%s6 + $0x4] sm:$0xf]
        %v4558 = vld [vmem:[%s6 + $0x8] sm:$0xf]
        %v4559 = vld [vmem:[%s6 + $0xc] sm:$0xf]
        %v4560 = vld [vmem:[%s6 + $0x10] sm:$0xf]
        %v4561 = vld [vmem:[%s6 + $0x14] sm:$0xf]
        %v4568 = vunpack.c.l.b16 %v4556
        %v4569 = vunpack.c.l.b16 %v4557
        %v4570 = vunpack.c.l.b16 %v4558
        %v4571 = vunpack.c.l.b16 %v4559
        %v4572 = vunpack.c.l.b16 %v4560
        %v4573 = vunpack.c.l.b16 %v4561
        %v4574 = vpack.c.b16 %v4569, %v4568
        %v4575 = vpack.c.b16 %v4571, %v4570
        %v4576 = vpack.c.b16 %v4573, %v4572
        %4580 = vmatprep.subr.bf16.mxu0 0
        %4581 = vmatpush1.bf16.msra.mxu0 0
        %4582 = vmatprep.subr.bf16.mxu0 0
        %4583 = vmatpush1.bf16.msra.mxu0 0
        %4584 = vmatprep.subr.bf16.mxu0 0
        %4585 = vmatpush1.bf16.msra.mxu0 0
        %4586 = vmatprep.subr.bf16.mxu0 0
        %4587 = vmatpush1.bf16.msra.mxu0 0
        %4588 = vmatprep.subr.bf16.mxu0 0
        %4589 = vmatpush1.bf16.msra.mxu0 0
        %4590 = vmatprep.subr.bf16.mxu0 0
        %4591 = vmatpush1.bf16.msra.mxu0 %v4576
        %4592 = vmatprep.subr.bf16.mxu0 0
        %4593 = vmatpush1.bf16.msra.mxu0 %v4575
        %4594 = vmatprep.subr.bf16.mxu0 0
        %4595 = vmatpush1.bf16.msra.mxu0 %v4574
        %4596 = vmatprep.subr.bf16.mxu0 0
        %4597 = vmatpush2.bf16.msra.mxu0 0
        %4598 = vmatprep.subr.bf16.mxu0 0
        %4599 = vmatpush2.bf16.msra.mxu0 0
        %4600 = vmatprep.subr.bf16.mxu0 0
        %4601 = vmatpush2.bf16.msra.mxu0 0
        %4602 = vmatprep.subr.bf16.mxu0 0
        %4603 = vmatpush2.bf16.msra.mxu0 0
        %4604 = vmatprep.subr.bf16.mxu0 0
        %4605 = vmatpush2.bf16.msra.mxu0 0
        %4606 = vmatprep.subr.bf16.mxu0 0
        %4607 = vmatpush2.bf16.msra.mxu0 0
        %4608 = vmatprep.subr.bf16.mxu0 0
        %4609 = vmatpush2.bf16.msra.mxu0 0
        %4610 = vmatprep.subr.bf16.mxu0 0
        %4611 = vmatpush2.bf16.msra.mxu0 0
        %4612 = vmatprep.mubr.bf16.mxu0 0
        %4613 = vmatmul.mubr.bf16.gmra.mxu0 %v4513
        %v4614 = vpop.f32.mrf.mxu0
        %v4615 = vadd.f32 0.0, %v4614
        %v4616 = vpop.f32.mrf.mxu0
        %v4617 = vpop.f32.mrf.mxu0
        %v4618 = vpop.f32.mrf.mxu0
        %4619 = vdwg.mxu0
        %v4620 = vmax.f32 %v4615, 0.0
        %v4621 = vld [vmem:[%s7] sm:$0xf]
        %v4622 = vld [vmem:[%s7 + $0x4] sm:$0xf]
        %v4623 = vld [vmem:[%s7 + $0x8] sm:$0xf]
        %v4624 = vpack.c.bf16 %v4555, %v4555
        %v4628 = vunpack.c.l.b16 %v4621
        %v4629 = vunpack.c.l.b16 %v4622
        %v4630 = vunpack.c.l.b16 %v4623
        %v4631 = vpack.c.b16 %v4629, %v4628
        %v4632 = vpack.c.b16 %v4630, %v4630
        %vm4634 = vcmask 195584
        %v4636 = vsel %vm4634, %v4624, 0
        %vm4638 = vcmask 1043456
        %v4640 = vsel %vm4638, %v4632, 0
        %4642 = vmatprep.subr.bf16.mxu0 0
        %4643 = vmatpush1.bf16.msra.mxu0 0
        %4644 = vmatprep.subr.bf16.mxu0 0
        %4645 = vmatpush1.bf16.msra.mxu0 0
        %4646 = vmatprep.subr.bf16.mxu0 0
        %4647 = vmatpush1.bf16.msra.mxu0 0
        %4648 = vmatprep.subr.bf16.mxu0 0
        %4649 = vmatpush1.bf16.msra.mxu0 0
        %4650 = vmatprep.subr.bf16.mxu0 0
        %4651 = vmatpush1.bf16.msra.mxu0 0
        %4652 = vmatprep.subr.bf16.mxu0 0
        %4653 = vmatpush1.bf16.msra.mxu0 0
        %4654 = vmatprep.subr.bf16.mxu0 0
        %4655 = vmatpush1.bf16.msra.mxu0 %v4640
        %4656 = vmatprep.subr.bf16.mxu0 0
        %4657 = vmatpush1.bf16.msra.mxu0 %v4631
        %4658 = vmatprep.subr.bf16.mxu0 0
        %4659 = vmatpush2.bf16.msra.mxu0 0
        %4660 = vmatprep.subr.bf16.mxu0 0
        %4661 = vmatpush2.bf16.msra.mxu0 0
        %4662 = vmatprep.subr.bf16.mxu0 0
        %4663 = vmatpush2.bf16.msra.mxu0 0
        %4664 = vmatprep.subr.bf16.mxu0 0
        %4665 = vmatpush2.bf16.msra.mxu0 0
        %4666 = vmatprep.subr.bf16.mxu0 0
        %4667 = vmatpush2.bf16.msra.mxu0 0
        %4668 = vmatprep.subr.bf16.mxu0 0
        %4669 = vmatpush2.bf16.msra.mxu0 0
        %4670 = vmatprep.subr.bf16.mxu0 0
        %4671 = vmatpush2.bf16.msra.mxu0 0
        %4672 = vmatprep.subr.bf16.mxu0 0
        %4673 = vmatpush2.bf16.msra.mxu0 0
        %4674 = vmatprep.mubr.bf16.mxu0 0
        %4675 = vmatmul.mubr.bf16.gmra.mxu0 %v4636
        %v4676 = vpop.f32.mrf.mxu0
        %v4677 = vadd.f32 0.0, %v4676
        %v4678 = vpop.f32.mrf.mxu0
        %v4679 = vpop.f32.mrf.mxu0
        %v4680 = vpop.f32.mrf.mxu0
        %4681 = vdwg.mxu0
        %v4682 = vld [vmem:[%s8] sm:$0xf]
        %v4683 = vld [vmem:[%s8 + $0x4] sm:$0xf]
        %v4684 = vld [vmem:[%s8 + $0x8] sm:$0xf]
        %v4685 = vld [vmem:[%s9] sm:$0xf]
        %v4686 = vld [vmem:[%s9 + $0x4] sm:$0xf]
        %v4687 = vld [vmem:[%s9 + $0x8] sm:$0xf]
        %v4688 = vpack.c.bf16 %v4620, %v4620
        %v4692 = vunpack.c.l.b16 %v4685
        %v4693 = vunpack.c.l.b16 %v4686
        %v4694 = vunpack.c.l.b16 %v4687
        %v4695 = vpack.c.b16 %v4693, %v4692
        %v4696 = vpack.c.b16 %v4694, %v4694
        %v4699 = vsel %vm4634, %v4688, 0
        %v4702 = vsel %vm4638, %v4696, 0
        %4704 = vmatprep.subr.bf16.mxu0 0
        %4705 = vmatpush1.bf16.msra.mxu0 0
        %4706 = vmatprep.subr.bf16.mxu0 0
        %4707 = vmatpush1.bf16.msra.mxu0 0
        %4708 = vmatprep.subr.bf16.mxu0 0
        %4709 = vmatpush1.bf16.msra.mxu0 0
        %4710 = vmatprep.subr.bf16.mxu0 0
        %4711 = vmatpush1.bf16.msra.mxu0 0
        %4712 = vmatprep.subr.bf16.mxu0 0
        %4713 = vmatpush1.bf16.msra.mxu0 0
        %4714 = vmatprep.subr.bf16.mxu0 0
        %4715 = vmatpush1.bf16.msra.mxu0 0
        %4716 = vmatprep.subr.bf16.mxu0 0
        %4717 = vmatpush1.bf16.msra.mxu0 %v4702
        %4718 = vmatprep.subr.bf16.mxu0 0
        %4719 = vmatpush1.bf16.msra.mxu0 %v4695
        %4720 = vmatprep.subr.bf16.mxu0 0
        %4721 = vmatpush2.bf16.msra.mxu0 0
        %4722 = vmatprep.subr.bf16.mxu0 0
        %4723 = vmatpush2.bf16.msra.mxu0 0
        %4724 = vmatprep.subr.bf16.mxu0 0
        %4725 = vmatpush2.bf16.msra.mxu0 0
        %4726 = vmatprep.subr.bf16.mxu0 0
        %4727 = vmatpush2.bf16.msra.mxu0 0
        %4728 = vmatprep.subr.bf16.mxu0 0
        %4729 = vmatpush2.bf16.msra.mxu0 0
        %4730 = vmatprep.subr.bf16.mxu0 0
        %4731 = vmatpush2.bf16.msra.mxu0 0
        %4732 = vmatprep.subr.bf16.mxu0 0
        %4733 = vmatpush2.bf16.msra.mxu0 0
        %4734 = vmatprep.subr.bf16.mxu0 0
        %4735 = vmatpush2.bf16.msra.mxu0 0
        %4736 = vmatprep.mubr.bf16.mxu0 0
        %4737 = vmatmul.mubr.bf16.gmra.mxu0 %v4699
        %v4738 = vpop.f32.mrf.mxu0
        %v4739 = vadd.f32 0.0, %v4738
        %v4740 = vpop.f32.mrf.mxu0
        %v4741 = vpop.f32.mrf.mxu0
        %v4742 = vpop.f32.mrf.mxu0
        %4743 = vdwg.mxu0
        %v4747 = vunpack.c.l.b16 %v4682
        %v4748 = vunpack.c.l.b16 %v4683
        %v4749 = vunpack.c.l.b16 %v4684
        %v4750 = vpack.c.b16 %v4748, %v4747
        %v4751 = vpack.c.b16 %v4749, %v4749
        %v4754 = vsel %vm4638, %v4751, 0
        %4756 = vmatprep.subr.bf16.mxu0 0
        %4757 = vmatpush1.bf16.msra.mxu0 0
        %4758 = vmatprep.subr.bf16.mxu0 0
        %4759 = vmatpush1.bf16.msra.mxu0 0
        %4760 = vmatprep.subr.bf16.mxu0 0
        %4761 = vmatpush1.bf16.msra.mxu0 0
        %4762 = vmatprep.subr.bf16.mxu0 0
        %4763 = vmatpush1.bf16.msra.mxu0 0
        %4764 = vmatprep.subr.bf16.mxu0 0
        %4765 = vmatpush1.bf16.msra.mxu0 0
        %4766 = vmatprep.subr.bf16.mxu0 0
        %4767 = vmatpush1.bf16.msra.mxu0 0
        %4768 = vmatprep.subr.bf16.mxu0 0
        %4769 = vmatpush1.bf16.msra.mxu0 %v4754
        %4770 = vmatprep.subr.bf16.mxu0 0
        %4771 = vmatpush1.bf16.msra.mxu0 %v4750
        %4772 = vmatprep.subr.bf16.mxu0 0
        %4773 = vmatpush2.bf16.msra.mxu0 0
        %4774 = vmatprep.subr.bf16.mxu0 0
        %4775 = vmatpush2.bf16.msra.mxu0 0
        %4776 = vmatprep.subr.bf16.mxu0 0
        %4777 = vmatpush2.bf16.msra.mxu0 0
        %4778 = vmatprep.subr.bf16.mxu0 0
        %4779 = vmatpush2.bf16.msra.mxu0 0
        %4780 = vmatprep.subr.bf16.mxu0 0
        %4781 = vmatpush2.bf16.msra.mxu0 0
        %4782 = vmatprep.subr.bf16.mxu0 0
        %4783 = vmatpush2.bf16.msra.mxu0 0
        %4784 = vmatprep.subr.bf16.mxu0 0
        %4785 = vmatpush2.bf16.msra.mxu0 0
        %4786 = vmatprep.subr.bf16.mxu0 0
        %4787 = vmatpush2.bf16.msra.mxu0 0
        %4788 = vmatprep.mubr.bf16.mxu0 0
        %4789 = vmatmul.mubr.bf16.gmra.mxu0 %v4636
        %v4790 = vpop.f32.mrf.mxu0
        %v4791 = vadd.f32 %v4739, %v4790
        %v4792 = vpop.f32.mrf.mxu0
        %v4793 = vpop.f32.mrf.mxu0
        %v4794 = vpop.f32.mrf.mxu0
        %4795 = vdwg.mxu0
        %v4796 = vsub.f32 0.0, %v4791
        %v4797 = vmul.f32 %v4796, 1.442695
        %v4798 = vpow.pop %v4797
        %v4799 = vadd.f32 %v4798, 1.0
        %v4800 = vrcp.pop %v4799
        %v4801 = vmul.f32 1.0, %v4800
        %4803 = vset.pattern.permute.xlu0 0
        %4804 = vperm.xlu0 %4803, %v4801
        %v4805 = vpop.permute.xlu0 %4804
        %v4807 = vmul.f32 %v4805, %v4555
        %4808 = vset.pattern.permute.xlu0 1
        %4809 = vperm.xlu0 %4808, %v4801
        %v4810 = vpop.permute.xlu0 %4809
        %v4812 = vmul.f32 %v4810, %v4620
        %v4813 = vld [vmem:[%s10] sm:$0xf]
        %v4814 = vld [vmem:[%s10 + $0x4] sm:$0xf]
        %v4815 = vld [vmem:[%s10 + $0x8] sm:$0xf]
        %v4816 = vpack.c.bf16 %v4807, %v4807
        %v4817 = vld [vmem:[%s11] sm:$0xf]
        %v4818 = vld [vmem:[%s11 + $0x4] sm:$0xf]
        %v4819 = vld [vmem:[%s11 + $0x8] sm:$0xf]
        %v4820 = vpack.c.bf16 %v4812, %v4812
        %v4824 = vunpack.c.l.b16 %v4817
        %v4825 = vunpack.c.l.b16 %v4818
        %v4826 = vunpack.c.l.b16 %v4819
        %v4827 = vpack.c.b16 %v4825, %v4824
        %v4828 = vpack.c.b16 %v4826, %v4826
        %v4831 = vsel %vm4634, %v4820, 0
        %v4834 = vsel %vm4638, %v4828, 0
        %4836 = vmatprep.subr.bf16.mxu0 0
        %4837 = vmatpush1.bf16.msra.mxu0 0
        %4838 = vmatprep.subr.bf16.mxu0 0
        %4839 = vmatpush1.bf16.msra.mxu0 0
        %4840 = vmatprep.subr.bf16.mxu0 0
        %4841 = vmatpush1.bf16.msra.mxu0 0
        %4842 = vmatprep.subr.bf16.mxu0 0
        %4843 = vmatpush1.bf16.msra.mxu0 0
        %4844 = vmatprep.subr.bf16.mxu0 0
        %4845 = vmatpush1.bf16.msra.mxu0 0
        %4846 = vmatprep.subr.bf16.mxu0 0
        %4847 = vmatpush1.bf16.msra.mxu0 0
        %4848 = vmatprep.subr.bf16.mxu0 0
        %4849 = vmatpush1.bf16.msra.mxu0 %v4834
        %4850 = vmatprep.subr.bf16.mxu0 0
        %4851 = vmatpush1.bf16.msra.mxu0 %v4827
        %4852 = vmatprep.subr.bf16.mxu0 0
        %4853 = vmatpush2.bf16.msra.mxu0 0
        %4854 = vmatprep.subr.bf16.mxu0 0
        %4855 = vmatpush2.bf16.msra.mxu0 0
        %4856 = vmatprep.subr.bf16.mxu0 0
        %4857 = vmatpush2.bf16.msra.mxu0 0
        %4858 = vmatprep.subr.bf16.mxu0 0
        %4859 = vmatpush2.bf16.msra.mxu0 0
        %4860 = vmatprep.subr.bf16.mxu0 0
        %4861 = vmatpush2.bf16.msra.mxu0 0
        %4862 = vmatprep.subr.bf16.mxu0 0
        %4863 = vmatpush2.bf16.msra.mxu0 0
        %4864 = vmatprep.subr.bf16.mxu0 0
        %4865 = vmatpush2.bf16.msra.mxu0 0
        %4866 = vmatprep.subr.bf16.mxu0 0
        %4867 = vmatpush2.bf16.msra.mxu0 0
        %4868 = vmatprep.mubr.bf16.mxu0 0
        %4869 = vmatmul.mubr.bf16.gmra.mxu0 %v4831
        %v4870 = vpop.f32.mrf.mxu0
        %v4871 = vadd.f32 0.0, %v4870
        %v4872 = vpop.f32.mrf.mxu0
        %v4873 = vpop.f32.mrf.mxu0
        %v4874 = vpop.f32.mrf.mxu0
        %4875 = vdwg.mxu0
        %v4879 = vunpack.c.l.b16 %v4813
        %v4880 = vunpack.c.l.b16 %v4814
        %v4881 = vunpack.c.l.b16 %v4815
        %v4882 = vpack.c.b16 %v4880, %v4879
        %v4883 = vpack.c.b16 %v4881, %v4881
        %v4886 = vsel %vm4634, %v4816, 0
        %v4889 = vsel %vm4638, %v4883, 0
        %4891 = vmatprep.subr.bf16.mxu0 0
        %4892 = vmatpush1.bf16.msra.mxu0 0
        %4893 = vmatprep.subr.bf16.mxu0 0
        %4894 = vmatpush1.bf16.msra.mxu0 0
        %4895 = vmatprep.subr.bf16.mxu0 0
        %4896 = vmatpush1.bf16.msra.mxu0 0
        %4897 = vmatprep.subr.bf16.mxu0 0
        %4898 = vmatpush1.bf16.msra.mxu0 0
        %4899 = vmatprep.subr.bf16.mxu0 0
        %4900 = vmatpush1.bf16.msra.mxu0 0
        %4901 = vmatprep.subr.bf16.mxu0 0
        %4902 = vmatpush1.bf16.msra.mxu0 0
        %4903 = vmatprep.subr.bf16.mxu0 0
        %4904 = vmatpush1.bf16.msra.mxu0 %v4889
        %4905 = vmatprep.subr.bf16.mxu0 0
        %4906 = vmatpush1.bf16.msra.mxu0 %v4882
        %4907 = vmatprep.subr.bf16.mxu0 0
        %4908 = vmatpush2.bf16.msra.mxu0 0
        %4909 = vmatprep.subr.bf16.mxu0 0
        %4910 = vmatpush2.bf16.msra.mxu0 0
        %4911 = vmatprep.subr.bf16.mxu0 0
        %4912 = vmatpush2.bf16.msra.mxu0 0
        %4913 = vmatprep.subr.bf16.mxu0 0
        %4914 = vmatpush2.bf16.msra.mxu0 0
        %4915 = vmatprep.subr.bf16.mxu0 0
        %4916 = vmatpush2.bf16.msra.mxu0 0
        %4917 = vmatprep.subr.bf16.mxu0 0
        %4918 = vmatpush2.bf16.msra.mxu0 0
        %4919 = vmatprep.subr.bf16.mxu0 0
        %4920 = vmatpush2.bf16.msra.mxu0 0
        %4921 = vmatprep.subr.bf16.mxu0 0
        %4922 = vmatpush2.bf16.msra.mxu0 0
        %4923 = vmatprep.mubr.bf16.mxu0 0
        %4924 = vmatmul.mubr.bf16.gmra.mxu0 %v4886
        %v4925 = vpop.f32.mrf.mxu0
        %v4926 = vadd.f32 %v4871, %v4925
        %v4927 = vpop.f32.mrf.mxu0
        %v4928 = vpop.f32.mrf.mxu0
        %v4929 = vpop.f32.mrf.mxu0
        %4930 = vdwg.mxu0
        %v4931 = vmax.f32 %v4926, 0.0
        %v4932 = vld [vmem:[%s12] sm:$0xf]
        %v4933 = vld [vmem:[%s12 + $0x4] sm:$0xf]
        %v4934 = vld [vmem:[%s12 + $0x8] sm:$0xf]
        %v4935 = vld [vmem:[%s12 + $0xc] sm:$0xf]
        %v4936 = vld [vmem:[%s12 + $0x10] sm:$0xf]
        %v4937 = vld [vmem:[%s12 + $0x14] sm:$0xf]
        %v4938 = vpack.c.bf16 %v4931, %v4931
        %v4945 = vunpack.c.l.b16 %v4932
        %v4946 = vunpack.c.l.b16 %v4933
        %v4947 = vunpack.c.l.b16 %v4934
        %v4948 = vunpack.c.l.b16 %v4935
        %v4949 = vunpack.c.l.b16 %v4936
        %v4950 = vunpack.c.l.b16 %v4937
        %v4951 = vpack.c.b16 %v4946, %v4945
        %v4952 = vpack.c.b16 %v4948, %v4947
        %v4953 = vpack.c.b16 %v4950, %v4949
        %v4958 = vsel %vm4511, %v4938, 0
        %4960 = vmatprep.subr.bf16.mxu0 0
        %4961 = vmatpush1.bf16.msra.mxu0 0
        %4962 = vmatprep.subr.bf16.mxu0 0
        %4963 = vmatpush1.bf16.msra.mxu0 0
        %4964 = vmatprep.subr.bf16.mxu0 0
        %4965 = vmatpush1.bf16.msra.mxu0 0
        %4966 = vmatprep.subr.bf16.mxu0 0
        %4967 = vmatpush1.bf16.msra.mxu0 0
        %4968 = vmatprep.subr.bf16.mxu0 0
        %4969 = vmatpush1.bf16.msra.mxu0 0
        %4970 = vmatprep.subr.bf16.mxu0 0
        %4971 = vmatpush1.bf16.msra.mxu0 %v4953
        %4972 = vmatprep.subr.bf16.mxu0 0
        %4973 = vmatpush1.bf16.msra.mxu0 %v4952
        %4974 = vmatprep.subr.bf16.mxu0 0
        %4975 = vmatpush1.bf16.msra.mxu0 %v4951
        %4976 = vmatprep.subr.bf16.mxu0 0
        %4977 = vmatpush2.bf16.msra.mxu0 0
        %4978 = vmatprep.subr.bf16.mxu0 0
        %4979 = vmatpush2.bf16.msra.mxu0 0
        %4980 = vmatprep.subr.bf16.mxu0 0
        %4981 = vmatpush2.bf16.msra.mxu0 0
        %4982 = vmatprep.subr.bf16.mxu0 0
        %4983 = vmatpush2.bf16.msra.mxu0 0
        %4984 = vmatprep.subr.bf16.mxu0 0
        %4985 = vmatpush2.bf16.msra.mxu0 0
        %4986 = vmatprep.subr.bf16.mxu0 0
        %4987 = vmatpush2.bf16.msra.mxu0 0
        %4988 = vmatprep.subr.bf16.mxu0 0
        %4989 = vmatpush2.bf16.msra.mxu0 0
        %4990 = vmatprep.subr.bf16.mxu0 0
        %4991 = vmatpush2.bf16.msra.mxu0 0
        %4992 = vmatprep.mubr.bf16.mxu0 0
        %4993 = vmatmul.mubr.bf16.gmra.mxu0 %v4958
        %v4994 = vpop.f32.mrf.mxu0
        %v4995 = vadd.f32 0.0, %v4994
        %v4996 = vpop.f32.mrf.mxu0
        %v4997 = vpop.f32.mrf.mxu0
        %v4998 = vpop.f32.mrf.mxu0
        %4999 = vdwg.mxu0
        %v5000 = vmax.f32 %v4995, 0.0
        %v5001 = vld [vmem:[%s13] sm:$0xf]
        %v5002 = vld [vmem:[%s13 + $0x4] sm:$0xf]
        %v5003 = vld [vmem:[%s13 + $0x8] sm:$0xf]
        %v5004 = vld [vmem:[%s13 + $0xc] sm:$0xf]
        %v5005 = vpack.c.bf16 %v5000, %v5000
        %v5010 = vunpack.c.l.b16 %v5001
        %v5011 = vunpack.c.l.b16 %v5002
        %v5012 = vunpack.c.l.b16 %v5003
        %v5013 = vunpack.c.l.b16 %v5004
        %v5014 = vpack.c.b16 %v5011, %v5010
        %v5015 = vpack.c.b16 %v5013, %v5012
        %v5019 = vsel %vm2227, %v5005, 0
        %5021 = vmatprep.subr.bf16.mxu0 0
        %5022 = vmatpush1.bf16.msra.mxu0 0
        %5023 = vmatprep.subr.bf16.mxu0 0
        %5024 = vmatpush1.bf16.msra.mxu0 0
        %5025 = vmatprep.subr.bf16.mxu0 0
        %5026 = vmatpush1.bf16.msra.mxu0 0
        %5027 = vmatprep.subr.bf16.mxu0 0
        %5028 = vmatpush1.bf16.msra.mxu0 0
        %5029 = vmatprep.subr.bf16.mxu0 0
        %5030 = vmatpush1.bf16.msra.mxu0 0
        %5031 = vmatprep.subr.bf16.mxu0 0
        %5032 = vmatpush1.bf16.msra.mxu0 0
        %5033 = vmatprep.subr.bf16.mxu0 0
        %5034 = vmatpush1.bf16.msra.mxu0 %v5015
        %5035 = vmatprep.subr.bf16.mxu0 0
        %5036 = vmatpush1.bf16.msra.mxu0 %v5014
        %5037 = vmatprep.subr.bf16.mxu0 0
        %5038 = vmatpush2.bf16.msra.mxu0 0
        %5039 = vmatprep.subr.bf16.mxu0 0
        %5040 = vmatpush2.bf16.msra.mxu0 0
        %5041 = vmatprep.subr.bf16.mxu0 0
        %5042 = vmatpush2.bf16.msra.mxu0 0
        %5043 = vmatprep.subr.bf16.mxu0 0
        %5044 = vmatpush2.bf16.msra.mxu0 0
        %5045 = vmatprep.subr.bf16.mxu0 0
        %5046 = vmatpush2.bf16.msra.mxu0 0
        %5047 = vmatprep.subr.bf16.mxu0 0
        %5048 = vmatpush2.bf16.msra.mxu0 0
        %5049 = vmatprep.subr.bf16.mxu0 0
        %5050 = vmatpush2.bf16.msra.mxu0 0
        %5051 = vmatprep.subr.bf16.mxu0 0
        %5052 = vmatpush2.bf16.msra.mxu0 0
        %5053 = vmatprep.mubr.bf16.mxu0 0
        %5054 = vmatmul.mubr.bf16.gmra.mxu0 %v5019
        %v5055 = vpop.f32.mrf.mxu0
        %v5056 = vadd.f32 0.0, %v5055
        %v5057 = vpop.f32.mrf.mxu0
        %v5058 = vpop.f32.mrf.mxu0
        %v5059 = vpop.f32.mrf.mxu0
        %5060 = vdwg.mxu0
        %vm5061 = vcmask 39936
        %v5062 = vsel %vm5061, %v5056, -inf
        %5063 = vmax.xlane.f32.xlu0 %v5062
        %v5064 = vpop.xlane.xlu0 %5063
        %v5065 = vsub.f32 %v5056, %v5064
        %v5066 = vmul.f32 %v5065, 1.442695
        %v5067 = vpow.pop %v5066
        %v5068 = vsel %vm5061, %v5067, 0.0
        %5069 = vadd.xlane.f32.xlu0 %v5068
        %v5070 = vpop.xlane.xlu0 %5069
        %v5071 = vrcp.pop %v5070
        %v5072 = vmul.f32 %v5067, %v5071
        %vm5073 = vcmask 31744
        %5074 = vst.msk [vmem:[%s479] sm:$0xff] %vm5073, %v4677
        %5076 = vrot.lane.b32.xlu0 %v5072, 4
        %v5077 = vpop.permute.xlu0 %5076
        %vm5079 = vcmask 72736
        %5080 = vst.msk [vmem:[%s479] sm:$0xff] %vm5079, %v5077
        %s5081 = sand.u32 %s340, 1
        %s5082 = scalar_lea.sflag [#allocation4], %s5081
        %s5083 = sand.u32 %s340, 1
        %s5084 = smul.addr %s5083, 8
        %s5085 = scalar_lea.vmem [#allocation3], %s5084
        // Predicated region
        $region77: #{tpu_custom_call.1} parent=75 // pred_check
          %p5086 = pneg %p350
        $region78: #{tpu_custom_call.1} parent=75 // pred_check_branch
          %5088 = sbr.rel (%p5086) target = $region80
        $region79: #{tpu_custom_call.1} parent=75 // pred_region
          %s5090 = ssub.s32 128, 128
          %5091 = vsyncadd %s5082, %s5090
          %s5092 = smul.addr %s28, 128
          %s5093 = scalar_lea.hbm %s14, %s5092
          %s5095 = sshll.u32 %s5085, 4
          %s5096 = int_to_ptr.vmem [resolvable:$true] %s5095
          %5098 = dma.vmem_to_hbm [thread:$0]  %s5096, 128, %s5093, %s5082
        $region80: #{tpu_custom_call.1} parent=75 // pred_fallthru
          _
      $region76: #{tpu_custom_call.1} parent=5 // pred_fallthru
        _
      %p5099 = scmp.le.s32.totalorder 2, %s23
      // Predicated region
      $region81: #{tpu_custom_call.1} parent=5 // pred_check
        %p5100 = pneg %p5099
      $region82: #{tpu_custom_call.1} parent=5 // pred_check_branch
        %5102 = sbr.rel (%p5100) target = $region84
      $region83: #{tpu_custom_call.1} parent=5 // pred_region
        %s5103 = ssub.s32 %s23, 2
        // Predicated region
        $region85: #{tpu_custom_call.1} parent=83 // pred_check
          %p5104 = pneg %p356
        $region86: #{tpu_custom_call.1} parent=83 // pred_check_branch
          %5106 = sbr.rel (%p5104) target = $region88
        $region87: #{tpu_custom_call.1} parent=83 // pred_region
          %s5107 = sand.u32 %s341, 1
          %s5108 = scalar_lea.sflag [#allocation4], %s5107
          %s5109 = sand.u32 %s341, 1
          %s5110 = smul.addr %s5109, 8
          %s5111 = scalar_lea.vmem [#allocation3], %s5110
          %5112 = dma.done %s5108, 128
        $region88: #{tpu_custom_call.1} parent=83 // pred_fallthru
          _
      $region84: #{tpu_custom_call.1} parent=5 // pred_fallthru
        _
    $region6: #{tpu_custom_call.1} parent=1 // loop_footer
      %s27 = sadd.s32 1, %s23
    $region7: #{tpu_custom_call.1} parent=1 // loop_footer_branch
      %22 = sbr.rel target = $region3
    $region8: #{tpu_custom_call.1} parent=1 // loop_exit
      _
    %5113 = vsyncpa [#allocation4], 1
    %s5114 = scalar_lea.sflag [#allocation4], 1
    %5115 = vsyncpa %s5114, 1

// kernel: tpu_custom_call.1
$region0: #{tpu_custom_call.1}
  #allocation0 [shape = 'u32[]', space=smem, size = 0x4, offset = 0x4, fixed_abs, tag = 'smem constant byte address 0x4 - core index']
  #allocation1 [shape = 'u32[144,128]{1,0:T(1,128)}', space=vmem, size = 0x12000, scoped, tag = 'internal scratch']
  #allocation2 [shape = 'bf16[8,64]{1,0:T(8,128)(2,1)}', space=vmem, size = 0x800, scoped, tag = 'scratch operand']
  %s0 = inlined_call_operand.vmem [shape: bf16[16,64,32], index: 0, kind: input, shape index: {}]
  %s1 = inlined_call_operand.vmem [shape: bf16[512,32], index: 1, kind: input, shape index: {}]
  %s2 = inlined_call_operand.vmem [shape: bf16[32,8], index: 2, kind: input, shape index: {}]
  %s3 = inlined_call_operand.vmem [shape: bf16[32,48], index: 3, kind: input, shape index: {}]
  %s4 = inlined_call_operand.vmem [shape: bf16[64,48], index: 4, kind: input, shape index: {}]
  %s5 = inlined_call_operand.vmem [shape: bf16[48,24], index: 5, kind: input, shape index: {}]
  %s6 = inlined_call_operand.vmem [shape: bf16[48,24], index: 6, kind: input, shape index: {}]
  %s7 = inlined_call_operand.vmem [shape: bf16[24,4], index: 7, kind: input, shape index: {}]
  %s8 = inlined_call_operand.vmem [shape: bf16[24,2], index: 8, kind: input, shape index: {}]
  %s9 = inlined_call_operand.vmem [shape: bf16[24,2], index: 9, kind: input, shape index: {}]
  %s10 = inlined_call_operand.vmem [shape: bf16[24,48], index: 10, kind: input, shape index: {}]
  %s11 = inlined_call_operand.vmem [shape: bf16[24,48], index: 11, kind: input, shape index: {}]
  %s12 = inlined_call_operand.vmem [shape: bf16[48,32], index: 12, kind: input, shape index: {}]
  %s13 = inlined_call_operand.vmem [shape: bf16[32,5], index: 13, kind: input, shape index: {}]
  %s14 = inlined_call_operand.hbm [shape: f32[16,9], index: 14, kind: output, shape index: {}]
  %s15 = sld [smem:[#allocation0]]
  $region89: #{tpu_custom_call.1} parent=0
    _
  %s17 = ssub.s32 1, %s15
  %s18 = scalar_select 0, %s17, %s15
  $region1: #{tpu_custom_call.1} parent=0
    #allocation3 [shape = 'u8[8192]{0}', space=vmem, size = 0x2000, scoped, tag = 'output window, operand 0']
    #allocation4 [shape = 's32[2]{0}', space=sflag, size = 0x8, scoped, tag = 'scoped memory for tpu_custom_call.1']
    %19 = vsyncpa [#allocation4], 0
    %s20 = scalar_lea.sflag [#allocation4], 1
    %21 = vsyncpa %s20, 0
    loop: start=0, step=1, limit=4
    $region2: #{tpu_custom_call.1} parent=1 // loop_pre_header
      _
    $region3: #{tpu_custom_call.1} parent=1 // loop_header
      %s23 = sphi 0, %s27
      %p24 = scmp.ge.s32.totalorder %s23, 4
      %s33 = sphi 0, %s35
      %s36 = sphi 0, %s33
      %s37 = sphi 0, %s36
      %s53 = sphi 0, %s37
      %s59 = sphi 0, %s61
      %s62 = sphi 0, %s59
      %s63 = sphi 0, %s62
      %s79 = sphi 0, %s63
      %s83 = sphi 0, %s83
      %s85 = sphi 0, %s83
      %s86 = sphi 0, %s85
      %s100 = sphi 0, %s86
      %s104 = sphi 0, %s104
      %s106 = sphi 0, %s104
      %s107 = sphi 0, %s106
      %s121 = sphi 0, %s107
      %s125 = sphi 0, %s125
      %s127 = sphi 0, %s125
      %s128 = sphi 0, %s127
      %s142 = sphi 0, %s128
      %s146 = sphi 0, %s146
      %s148 = sphi 0, %s146
      %s149 = sphi 0, %s148
      %s163 = sphi 0, %s149
      %s167 = sphi 0, %s167
      %s169 = sphi 0, %s167
      %s170 = sphi 0, %s169
      %s184 = sphi 0, %s170
      %s188 = sphi 0, %s188
      %s190 = sphi 0, %s188
      %s191 = sphi 0, %s190
      %s205 = sphi 0, %s191
      %s209 = sphi 0, %s209
      %s211 = sphi 0, %s209
      %s212 = sphi 0, %s211
      %s226 = sphi 0, %s212
      %s230 = sphi 0, %s230
      %s232 = sphi 0, %s230
      %s233 = sphi 0, %s232
      %s247 = sphi 0, %s233
      %s251 = sphi 0, %s251
      %s253 = sphi 0, %s251
      %s254 = sphi 0, %s253
      %s268 = sphi 0, %s254
      %s272 = sphi 0, %s272
      %s274 = sphi 0, %s272
      %s275 = sphi 0, %s274
      %s289 = sphi 0, %s275
      %s293 = sphi 0, %s293
      %s295 = sphi 0, %s293
      %s296 = sphi 0, %s295
      %s310 = sphi 0, %s296
      %s314 = sphi 0, %s314
      %s316 = sphi 0, %s314
      %s317 = sphi 0, %s316
      %s331 = sphi 0, %s317
      %s337 = sphi 0, %s339
      %s340 = sphi 0, %s337
      %s341 = sphi 0, %s340
      %s357 = sphi 0, %s341
    $region4: #{tpu_custom_call.1} parent=1 // loop_header_branch
      %26 = sbr.rel (%p24) target = $region8
    $region5: #{tpu_custom_call.1} parent=1 // loop_body
      %s28 = ssub.s32 %s23, 1
      %s29 = ssub.s32 %s23, 2
      %s30 = sadd.s32 %s23, 1
      %s31 = ssub.s32 %s23, %s30
      %p32 = scmp.eq.s32.totalorder %s31, 0
      %s34 = sadd.s32 %s33, 1
      %s35 = scalar_select %p32, %s33, %s34
      %p38 = pneg %p32
      %p39 = scmp.eq.s32.totalorder %s23, 1
      %p40 = por %p38, %p39
      %p41 = scmp.ne.s32.totalorder %s33, %s36
      %p42 = scmp.eq.s32.totalorder %s23, 0
      %p43 = por %p41, %p42
      %p44 = scmp.ne.s32.totalorder %s33, %s36
      %p45 = scmp.eq.s32.totalorder %s28, 1
      %p46 = por %p44, %p45
      %p47 = scmp.ne.s32.totalorder %s36, %s37
      %p48 = scmp.eq.s32.totalorder %s28, 0
      %p49 = por %p47, %p48
      %p50 = scmp.ne.s32.totalorder %s36, %s37
      %p51 = scmp.eq.s32.totalorder %s29, 1
      %p52 = por %p50, %p51
      %p54 = scmp.ne.s32.totalorder %s37, %s53
      %p55 = scmp.eq.s32.totalorder %s29, 0
      %p56 = por %p54, %p55
      %s57 = ssub.s32 %s23, %s30
      %p58 = scmp.eq.s32.totalorder %s57, 0
      %s60 = sadd.s32 %s59, 1
      %s61 = scalar_select %p58, %s59, %s60
      %p64 = pneg %p58
      %p65 = scmp.eq.s32.totalorder %s23, 1
      %p66 = por %p64, %p65
      %p67 = scmp.ne.s32.totalorder %s59, %s62
      %p68 = scmp.eq.s32.totalorder %s23, 0
      %p69 = por %p67, %p68
      %p70 = scmp.ne.s32.totalorder %s59, %s62
      %p71 = scmp.eq.s32.totalorder %s28, 1
      %p72 = por %p70, %p71
      %p73 = scmp.ne.s32.totalorder %s62, %s63
      %p74 = scmp.eq.s32.totalorder %s28, 0
      %p75 = por %p73, %p74
      %p76 = scmp.ne.s32.totalorder %s62, %s63
      %p77 = scmp.eq.s32.totalorder %s29, 1
      %p78 = por %p76, %p77
      %p80 = scmp.ne.s32.totalorder %s63, %s79
      %p81 = scmp.eq.s32.totalorder %s29, 0
      %p82 = por %p80, %p81
      %s84 = sadd.s32 %s83, 1
      %p87 = scmp.eq.s32.totalorder %s23, 1
      %p88 = scmp.ne.s32.totalorder %s83, %s85
      %p89 = scmp.eq.s32.totalorder %s23, 0
      %p90 = por %p88, %p89
      %p91 = scmp.ne.s32.totalorder %s83, %s85
      %p92 = scmp.eq.s32.totalorder %s28, 1
      %p93 = por %p91, %p92
      %p94 = scmp.ne.s32.totalorder %s85, %s86
      %p95 = scmp.eq.s32.totalorder %s28, 0
      %p96 = por %p94, %p95
      %p97 = scmp.ne.s32.totalorder %s85, %s86
      %p98 = scmp.eq.s32.totalorder %s29, 1
      %p99 = por %p97, %p98
      %p101 = scmp.ne.s32.totalorder %s86, %s100
      %p102 = scmp.eq.s32.totalorder %s29, 0
      %p103 = por %p101, %p102
      %s105 = sadd.s32 %s104, 1
      %p108 = scmp.eq.s32.totalorder %s23, 1
      %p109 = scmp.ne.s32.totalorder %s104, %s106
      %p110 = scmp.eq.s32.totalorder %s23, 0
      %p111 = por %p109, %p110
      %p112 = scmp.ne.s32.totalorder %s104, %s106
      %p113 = scmp.eq.s32.totalorder %s28, 1
      %p114 = por %p112, %p113
      %p115 = scmp.ne.s32.totalorder %s106, %s107
      %p116 = scmp.eq.s32.totalorder %s28, 0
      %p117 = por %p115, %p116
      %p118 = scmp.ne.s32.totalorder %s106, %s107
      %p119 = scmp.eq.s32.totalorder %s29, 1
      %p120 = por %p118, %p119
      %p122 = scmp.ne.s32.totalorder %s107, %s121
      %p123 = scmp.eq.s32.totalorder %s29, 0
      %p124 = por %p122, %p123
      %s126 = sadd.s32 %s125, 1
      %p129 = scmp.eq.s32.totalorder %s23, 1
      %p130 = scmp.ne.s32.totalorder %s125, %s127
      %p131 = scmp.eq.s32.totalorder %s23, 0
      %p132 = por %p130, %p131
      %p133 = scmp.ne.s32.totalorder %s125, %s127
      %p134 = scmp.eq.s32.totalorder %s28, 1
      %p135 = por %p133, %p134
      %p136 = scmp.ne.s32.totalorder %s127, %s128
      %p137 = scmp.eq.s32.totalorder %s28, 0
      %p138 = por %p136, %p137
      %p139 = scmp.ne.s32.totalorder %s127, %s128
      %p140 = scmp.eq.s32.totalorder %s29, 1
      %p141 = por %p139, %p140
      %p143 = scmp.ne.s32.totalorder %s128, %s142
      %p144 = scmp.eq.s32.totalorder %s29, 0
      %p145 = por %p143, %p144
      %s147 = sadd.s32 %s146, 1
      %p150 = scmp.eq.s32.totalorder %s23, 1
      %p151 = scmp.ne.s32.totalorder %s146, %s148
      %p152 = scmp.eq.s32.totalorder %s23, 0
      %p153 = por %p151, %p152
      %p154 = scmp.ne.s32.totalorder %s146, %s148
      %p155 = scmp.eq.s32.totalorder %s28, 1
      %p156 = por %p154, %p155
      %p157 = scmp.ne.s32.totalorder %s148, %s149
      %p158 = scmp.eq.s32.totalorder %s28, 0
      %p159 = por %p157, %p158
      %p160 = scmp.ne.s32.totalorder %s148, %s149
      %p161 = scmp.eq.s32.totalorder %s29, 1
      %p162 = por %p160, %p161
      %p164 = scmp.ne.s32.totalorder %s149, %s163
      %p165 = scmp.eq.s32.totalorder %s29, 0
      %p166 = por %p164, %p165
      %s168 = sadd.s32 %s167, 1
      %p171 = scmp.eq.s32.totalorder %s23, 1
      %p172 = scmp.ne.s32.totalorder %s167, %s169
      %p173 = scmp.eq.s32.totalorder %s23, 0
      %p174 = por %p172, %p173
      %p175 = scmp.ne.s32.totalorder %s167, %s169
      %p176 = scmp.eq.s32.totalorder %s28, 1
      %p177 = por %p175, %p176
      %p178 = scmp.ne.s32.totalorder %s169, %s170
      %p179 = scmp.eq.s32.totalorder %s28, 0
      %p180 = por %p178, %p179
      %p181 = scmp.ne.s32.totalorder %s169, %s170
      %p182 = scmp.eq.s32.totalorder %s29, 1
      %p183 = por %p181, %p182
      %p185 = scmp.ne.s32.totalorder %s170, %s184
      %p186 = scmp.eq.s32.totalorder %s29, 0
      %p187 = por %p185, %p186
      %s189 = sadd.s32 %s188, 1
      %p192 = scmp.eq.s32.totalorder %s23, 1
      %p193 = scmp.ne.s32.totalorder %s188, %s190
      %p194 = scmp.eq.s32.totalorder %s23, 0
      %p195 = por %p193, %p194
      %p196 = scmp.ne.s32.totalorder %s188, %s190
      %p197 = scmp.eq.s32.totalorder %s28, 1
      %p198 = por %p196, %p197
      %p199 = scmp.ne.s32.totalorder %s190, %s191
      %p200 = scmp.eq.s32.totalorder %s28, 0
      %p201 = por %p199, %p200
      %p202 = scmp.ne.s32.totalorder %s190, %s191
      %p203 = scmp.eq.s32.totalorder %s29, 1
      %p204 = por %p202, %p203
      %p206 = scmp.ne.s32.totalorder %s191, %s205
      %p207 = scmp.eq.s32.totalorder %s29, 0
      %p208 = por %p206, %p207
      %s210 = sadd.s32 %s209, 1
      %p213 = scmp.eq.s32.totalorder %s23, 1
      %p214 = scmp.ne.s32.totalorder %s209, %s211
      %p215 = scmp.eq.s32.totalorder %s23, 0
      %p216 = por %p214, %p215
      %p217 = scmp.ne.s32.totalorder %s209, %s211
      %p218 = scmp.eq.s32.totalorder %s28, 1
      %p219 = por %p217, %p218
      %p220 = scmp.ne.s32.totalorder %s211, %s212
      %p221 = scmp.eq.s32.totalorder %s28, 0
      %p222 = por %p220, %p221
      %p223 = scmp.ne.s32.totalorder %s211, %s212
      %p224 = scmp.eq.s32.totalorder %s29, 1
      %p225 = por %p223, %p224
      %p227 = scmp.ne.s32.totalorder %s212, %s226
      %p228 = scmp.eq.s32.totalorder %s29, 0
      %p229 = por %p227, %p228
      %s231 = sadd.s32 %s230, 1
      %p234 = scmp.eq.s32.totalorder %s23, 1
      %p235 = scmp.ne.s32.totalorder %s230, %s232
      %p236 = scmp.eq.s32.totalorder %s23, 0
      %p237 = por %p235, %p236
      %p238 = scmp.ne.s32.totalorder %s230, %s232
      %p239 = scmp.eq.s32.totalorder %s28, 1
      %p240 = por %p238, %p239
      %p241 = scmp.ne.s32.totalorder %s232, %s233
      %p242 = scmp.eq.s32.totalorder %s28, 0
      %p243 = por %p241, %p242
      %p244 = scmp.ne.s32.totalorder %s232, %s233
      %p245 = scmp.eq.s32.totalorder %s29, 1
      %p246 = por %p244, %p245
      %p248 = scmp.ne.s32.totalorder %s233, %s247
      %p249 = scmp.eq.s32.totalorder %s29, 0
      %p250 = por %p248, %p249
      %s252 = sadd.s32 %s251, 1
      %p255 = scmp.eq.s32.totalorder %s23, 1
      %p256 = scmp.ne.s32.totalorder %s251, %s253
      %p257 = scmp.eq.s32.totalorder %s23, 0
      %p258 = por %p256, %p257
      %p259 = scmp.ne.s32.totalorder %s251, %s253
      %p260 = scmp.eq.s32.totalorder %s28, 1
      %p261 = por %p259, %p260
      %p262 = scmp.ne.s32.totalorder %s253, %s254
      %p263 = scmp.eq.s32.totalorder %s28, 0
      %p264 = por %p262, %p263
      %p265 = scmp.ne.s32.totalorder %s253, %s254
      %p266 = scmp.eq.s32.totalorder %s29, 1
      %p267 = por %p265, %p266
      %p269 = scmp.ne.s32.totalorder %s254, %s268
      %p270 = scmp.eq.s32.totalorder %s29, 0
      %p271 = por %p269, %p270
      %s273 = sadd.s32 %s272, 1
      %p276 = scmp.eq.s32.totalorder %s23, 1
      %p277 = scmp.ne.s32.totalorder %s272, %s274
      %p278 = scmp.eq.s32.totalorder %s23, 0
      %p279 = por %p277, %p278
      %p280 = scmp.ne.s32.totalorder %s272, %s274
      %p281 = scmp.eq.s32.totalorder %s28, 1
      %p282 = por %p280, %p281
      %p283 = scmp.ne.s32.totalorder %s274, %s275
      %p284 = scmp.eq.s32.totalorder %s28, 0
      %p285 = por %p283, %p284
      %p286 = scmp.ne.s32.totalorder %s274, %s275
      %p287 = scmp.eq.s32.totalorder %s29, 1
      %p288 = por %p286, %p287
      %p290 = scmp.ne.s32.totalorder %s275, %s289
      %p291 = scmp.eq.s32.totalorder %s29, 0
      %p292 = por %p290, %p291
      %s294 = sadd.s32 %s293, 1
      %p297 = scmp.eq.s32.totalorder %s23, 1
      %p298 = scmp.ne.s32.totalorder %s293, %s295
      %p299 = scmp.eq.s32.totalorder %s23, 0
      %p300 = por %p298, %p299
      %p301 = scmp.ne.s32.totalorder %s293, %s295
      %p302 = scmp.eq.s32.totalorder %s28, 1
      %p303 = por %p301, %p302
      %p304 = scmp.ne.s32.totalorder %s295, %s296
      %p305 = scmp.eq.s32.totalorder %s28, 0
      %p306 = por %p304, %p305
      %p307 = scmp.ne.s32.totalorder %s295, %s296
      %p308 = scmp.eq.s32.totalorder %s29, 1
      %p309 = por %p307, %p308
      %p311 = scmp.ne.s32.totalorder %s296, %s310
      %p312 = scmp.eq.s32.totalorder %s29, 0
      %p313 = por %p311, %p312
      %s315 = sadd.s32 %s314, 1
      %p318 = scmp.eq.s32.totalorder %s23, 1
      %p319 = scmp.ne.s32.totalorder %s314, %s316
      %p320 = scmp.eq.s32.totalorder %s23, 0
      %p321 = por %p319, %p320
      %p322 = scmp.ne.s32.totalorder %s314, %s316
      %p323 = scmp.eq.s32.totalorder %s28, 1
      %p324 = por %p322, %p323
      %p325 = scmp.ne.s32.totalorder %s316, %s317
      %p326 = scmp.eq.s32.totalorder %s28, 0
      %p327 = por %p325, %p326
      %p328 = scmp.ne.s32.totalorder %s316, %s317
      %p329 = scmp.eq.s32.totalorder %s29, 1
      %p330 = por %p328, %p329
      %p332 = scmp.ne.s32.totalorder %s317, %s331
      %p333 = scmp.eq.s32.totalorder %s29, 0
      %p334 = por %p332, %p333
      %s335 = ssub.s32 %s23, %s30
      %p336 = scmp.eq.s32.totalorder %s335, 0
      %s338 = sadd.s32 %s337, 1
      %s339 = scalar_select %p336, %s337, %s338
      %p342 = pneg %p336
      %p343 = scmp.eq.s32.totalorder %s23, 1
      %p344 = por %p342, %p343
      %p345 = scmp.ne.s32.totalorder %s337, %s340
      %p346 = scmp.eq.s32.totalorder %s23, 0
      %p347 = por %p345, %p346
      %p348 = scmp.ne.s32.totalorder %s337, %s340
      %p349 = scmp.eq.s32.totalorder %s28, 1
      %p350 = por %p348, %p349
      %p351 = scmp.ne.s32.totalorder %s340, %s341
      %p352 = scmp.eq.s32.totalorder %s28, 0
      %p353 = por %p351, %p352
      %p354 = scmp.ne.s32.totalorder %s340, %s341
      %p355 = scmp.eq.s32.totalorder %s29, 1
      %p356 = por %p354, %p355
      %p358 = scmp.ne.s32.totalorder %s341, %s357
      %p359 = scmp.eq.s32.totalorder %s29, 0
      %p360 = por %p358, %p359
      %p361 = scmp.le.s32.totalorder 1, %s23
      %p362 = scmp.lt.s32.totalorder %s23, 3
      %p363 = pnand %p361, %p362
      %p364 = pneg %p363
      // Predicated region
      $region9: #{tpu_custom_call.1} parent=5 // pred_check
        _
      $region10: #{tpu_custom_call.1} parent=5 // pred_check_branch
        %366 = sbr.rel (%p363) target = $region12
      $region11: #{tpu_custom_call.1} parent=5 // pred_region
        %s367 = ssub.s32 %s23, 1
        // Predicated region
        $region13: #{tpu_custom_call.1} parent=11 // pred_check
          %p368 = pneg %p96
        $region14: #{tpu_custom_call.1} parent=11 // pred_check_branch
          %370 = sbr.rel (%p368) target = $region16
        $region15: #{tpu_custom_call.1} parent=11 // pred_region
          _
        $region16: #{tpu_custom_call.1} parent=11 // pred_fallthru
          _
        // Predicated region
        $region17: #{tpu_custom_call.1} parent=11 // pred_check
          %p371 = pneg %p117
        $region18: #{tpu_custom_call.1} parent=11 // pred_check_branch
          %373 = sbr.rel (%p371) target = $region20
        $region19: #{tpu_custom_call.1} parent=11 // pred_region
          _
        $region20: #{tpu_custom_call.1} parent=11 // pred_fallthru
          _
        // Predicated region
        $region21: #{tpu_custom_call.1} parent=11 // pred_check
          %p374 = pneg %p138
        $region22: #{tpu_custom_call.1} parent=11 // pred_check_branch
          %376 = sbr.rel (%p374) target = $region24
        $region23: #{tpu_custom_call.1} parent=11 // pred_region
          _
        $region24: #{tpu_custom_call.1} parent=11 // pred_fallthru
          _
        // Predicated region
        $region25: #{tpu_custom_call.1} parent=11 // pred_check
          %p377 = pneg %p159
        $region26: #{tpu_custom_call.1} parent=11 // pred_check_branch
          %379 = sbr.rel (%p377) target = $region28
        $region27: #{tpu_custom_call.1} parent=11 // pred_region
          _
        $region28: #{tpu_custom_call.1} parent=11 // pred_fallthru
          _
        // Predicated region
        $region29: #{tpu_custom_call.1} parent=11 // pred_check
          %p380 = pneg %p180
        $region30: #{tpu_custom_call.1} parent=11 // pred_check_branch
          %382 = sbr.rel (%p380) target = $region32
        $region31: #{tpu_custom_call.1} parent=11 // pred_region
          _
        $region32: #{tpu_custom_call.1} parent=11 // pred_fallthru
          _
        // Predicated region
        $region33: #{tpu_custom_call.1} parent=11 // pred_check
          %p383 = pneg %p201
        $region34: #{tpu_custom_call.1} parent=11 // pred_check_branch
          %385 = sbr.rel (%p383) target = $region36
        $region35: #{tpu_custom_call.1} parent=11 // pred_region
          _
        $region36: #{tpu_custom_call.1} parent=11 // pred_fallthru
          _
        // Predicated region
        $region37: #{tpu_custom_call.1} parent=11 // pred_check
          %p386 = pneg %p222
        $region38: #{tpu_custom_call.1} parent=11 // pred_check_branch
          %388 = sbr.rel (%p386) target = $region40
        $region39: #{tpu_custom_call.1} parent=11 // pred_region
          _
        $region40: #{tpu_custom_call.1} parent=11 // pred_fallthru
          _
        // Predicated region
        $region41: #{tpu_custom_call.1} parent=11 // pred_check
          %p389 = pneg %p243
        $region42: #{tpu_custom_call.1} parent=11 // pred_check_branch
          %391 = sbr.rel (%p389) target = $region44
        $region43: #{tpu_custom_call.1} parent=11 // pred_region
          _
        $region44: #{tpu_custom_call.1} parent=11 // pred_fallthru
          _
        // Predicated region
        $region45: #{tpu_custom_call.1} parent=11 // pred_check
          %p392 = pneg %p264
        $region46: #{tpu_custom_call.1} parent=11 // pred_check_branch
          %394 = sbr.rel (%p392) target = $region48
        $region47: #{tpu_custom_call.1} parent=11 // pred_region
          _
        $region48: #{tpu_custom_call.1} parent=11 // pred_fallthru
          _
        // Predicated region
        $region49: #{tpu_custom_call.1} parent=11 // pred_check
          %p395 = pneg %p285
        $region50: #{tpu_custom_call.1} parent=11 // pred_check_branch
          %397 = sbr.rel (%p395) target = $region52
        $region51: #{tpu_custom_call.1} parent=11 // pred_region
          _
        $region52: #{tpu_custom_call.1} parent=11 // pred_fallthru
          _
        // Predicated region
        $region53: #{tpu_custom_call.1} parent=11 // pred_check
          %p398 = pneg %p306
        $region54: #{tpu_custom_call.1} parent=11 // pred_check_branch
          %400 = sbr.rel (%p398) target = $region56
        $region55: #{tpu_custom_call.1} parent=11 // pred_region
          _
        $region56: #{tpu_custom_call.1} parent=11 // pred_fallthru
          _
        // Predicated region
        $region57: #{tpu_custom_call.1} parent=11 // pred_check
          %p401 = pneg %p327
        $region58: #{tpu_custom_call.1} parent=11 // pred_check_branch
          %403 = sbr.rel (%p401) target = $region60
        $region59: #{tpu_custom_call.1} parent=11 // pred_region
          _
        $region60: #{tpu_custom_call.1} parent=11 // pred_fallthru
          _
      $region12: #{tpu_custom_call.1} parent=5 // pred_fallthru
        _
      %p404 = scmp.lt.s32.totalorder %s23, 2
      // Predicated region
      $region61: #{tpu_custom_call.1} parent=5 // pred_check
        %p405 = pneg %p404
      $region62: #{tpu_custom_call.1} parent=5 // pred_check_branch
        %407 = sbr.rel (%p405) target = $region64
      $region63: #{tpu_custom_call.1} parent=5 // pred_region
        // Predicated region
        $region65: #{tpu_custom_call.1} parent=63 // pred_check
          %p408 = pneg %p43
        $region66: #{tpu_custom_call.1} parent=63 // pred_check_branch
          %410 = sbr.rel (%p408) target = $region68
        $region67: #{tpu_custom_call.1} parent=63 // pred_region
          %s411 = smul.u32 8, %s23
          %p412 = scmp.lt.s32.totalorder %s411, 15
          %s413 = scalar_select %p412, %s411, 15
          %s414 = smul.addr %s413, 8
          %s415 = smul.addr %s414, 4
          %s416 = scalar_lea.vmem %s0, %s415
          %s417 = smul.u32 8, %s23
        $region68: #{tpu_custom_call.1} parent=63 // pred_fallthru
          _
        // Predicated region
        $region69: #{tpu_custom_call.1} parent=63 // pred_check
          %p418 = pneg %p69
        $region70: #{tpu_custom_call.1} parent=63 // pred_check_branch
          %420 = sbr.rel (%p418) target = $region72
        $region71: #{tpu_custom_call.1} parent=63 // pred_region
          %s421 = smul.u32 32, %s23
          %p422 = scmp.lt.s32.totalorder %s421, 63
          %s423 = scalar_select %p422, %s421, 63
          %s424 = smul.addr %s423, 4
          %s425 = scalar_lea.vmem %s1, %s424
          %s426 = smul.u32 32, %s23
        $region72: #{tpu_custom_call.1} parent=63 // pred_fallthru
          _
      $region64: #{tpu_custom_call.1} parent=5 // pred_fallthru
        _
      %p427 = scmp.le.s32.totalorder 1, %s23
      %p428 = scmp.lt.s32.totalorder %s23, 3
      %p429 = pnand %p427, %p428
      %p430 = pneg %p429
      // Predicated region
      $region73: #{tpu_custom_call.1} parent=5 // pred_check
        _
      $region74: #{tpu_custom_call.1} parent=5 // pred_check_branch
        %432 = sbr.rel (%p429) target = $region76
      $region75: #{tpu_custom_call.1} parent=5 // pred_region
        %s433 = ssub.s32 %s23, 1
        %s434 = smul.u32 8, %s28
        %p435 = scmp.lt.s32.totalorder %s434, 15
        %s436 = scalar_select %p435, %s434, 15
        %s437 = smul.addr %s436, 8
        %s438 = smul.addr %s437, 4
        %s439 = scalar_lea.vmem %s0, %s438
        %p440 = pneg %p49
        %p441 = pneg %p46
        %s442 = smul.u32 32, %s28
        %p443 = scmp.lt.s32.totalorder %s442, 63
        %s444 = scalar_select %p443, %s442, 63
        %s445 = smul.addr %s444, 4
        %s446 = scalar_lea.vmem %s1, %s445
        %p447 = pneg %p75
        %p448 = pneg %p72
        %p449 = pneg %p96
        %p450 = pneg %p93
        %p451 = pneg %p117
        %p452 = pneg %p114
        %p453 = pneg %p138
        %p454 = pneg %p135
        %p455 = pneg %p159
        %p456 = pneg %p156
        %p457 = pneg %p180
        %p458 = pneg %p177
        %p459 = pneg %p201
        %p460 = pneg %p198
        %p461 = pneg %p222
        %p462 = pneg %p219
        %p463 = pneg %p243
        %p464 = pneg %p240
        %p465 = pneg %p264
        %p466 = pneg %p261
        %p467 = pneg %p285
        %p468 = pneg %p282
        %p469 = pneg %p306
        %p470 = pneg %p303
        %p471 = pneg %p327
        %p472 = pneg %p324
        %p473 = pneg %p353
        %p474 = pneg %p350
        %s475 = sand.u32 %s340, 1
        %s476 = scalar_lea.sflag [#allocation4], %s475
        %s477 = sand.u32 %s340, 1
        %s478 = smul.addr %s477, 8
        %s479 = scalar_lea.vmem [#allocation3], %s478
        %s480 = smul.u32 8, %s28
        %p481 = scmp.lt.s32.totalorder %s480, 15
        %s482 = scalar_select %p481, %s480, 15
        %s483 = smul.addr %s482, 8
        %s484 = smul.addr %s483, 4
        %s485 = scalar_lea.vmem %s0, %s484
        %s486 = smul.u32 8, %s28
        %s487 = smul.u32 32, %s28
        %p488 = scmp.lt.s32.totalorder %s487, 63
        %s489 = scalar_select %p488, %s487, 63
        %s490 = smul.addr %s489, 4
        %s491 = scalar_lea.vmem %s1, %s490
        %s492 = smul.u32 32, %s28
        %v494 = vld [vmem:[%s491] sm:$0xf]
        %v495 = vld [vmem:[%s491 + $0x4] sm:$0xf]
        %v496 = vld [vmem:[%s491 + $0x8] sm:$0xf]
        %v497 = vld [vmem:[%s491 + $0xc] sm:$0xf]
        %v498 = vld [vmem:[%s491 + $0x10] sm:$0xf]
        %v499 = vld [vmem:[%s491 + $0x14] sm:$0xf]
        %v500 = vld [vmem:[%s491 + $0x18] sm:$0xf]
        %v501 = vld [vmem:[%s491 + $0x1c] sm:$0xf]
        %v502 = vld [vmem:[%s491 + $0x20] sm:$0xf]
        %v503 = vld [vmem:[%s491 + $0x24] sm:$0xf]
        %v504 = vld [vmem:[%s491 + $0x28] sm:$0xf]
        %v505 = vld [vmem:[%s491 + $0x2c] sm:$0xf]
        %v506 = vld [vmem:[%s491 + $0x30] sm:$0xf]
        %v507 = vld [vmem:[%s491 + $0x34] sm:$0xf]
        %v508 = vld [vmem:[%s491 + $0x38] sm:$0xf]
        %v509 = vld [vmem:[%s491 + $0x3c] sm:$0xf]
        %v510 = vld [vmem:[%s491 + $0x40] sm:$0xf]
        %v511 = vld [vmem:[%s491 + $0x44] sm:$0xf]
        %v512 = vld [vmem:[%s491 + $0x48] sm:$0xf]
        %v513 = vld [vmem:[%s491 + $0x4c] sm:$0xf]
        %v514 = vld [vmem:[%s491 + $0x50] sm:$0xf]
        %v515 = vld [vmem:[%s491 + $0x54] sm:$0xf]
        %v516 = vld [vmem:[%s491 + $0x58] sm:$0xf]
        %v517 = vld [vmem:[%s491 + $0x5c] sm:$0xf]
        %v518 = vld [vmem:[%s491 + $0x60] sm:$0xf]
        %v519 = vld [vmem:[%s491 + $0x64] sm:$0xf]
        %v520 = vld [vmem:[%s491 + $0x68] sm:$0xf]
        %v521 = vld [vmem:[%s491 + $0x6c] sm:$0xf]
        %v522 = vld [vmem:[%s491 + $0x70] sm:$0xf]
        %v523 = vld [vmem:[%s491 + $0x74] sm:$0xf]
        %v524 = vld [vmem:[%s491 + $0x78] sm:$0xf]
        %v525 = vld [vmem:[%s491 + $0x7c] sm:$0xf]
        %v526 = vunpack.c.l.bf16 %v494
        %v527 = vunpack.c.l.bf16 %v495
        %v528 = vunpack.c.l.bf16 %v496
        %v529 = vunpack.c.l.bf16 %v497
        %v530 = vunpack.c.l.bf16 %v498
        %v531 = vunpack.c.l.bf16 %v499
        %v532 = vunpack.c.l.bf16 %v500
        %v533 = vunpack.c.l.bf16 %v501
        %v534 = vunpack.c.l.bf16 %v502
        %v535 = vunpack.c.l.bf16 %v503
        %v536 = vunpack.c.l.bf16 %v504
        %v537 = vunpack.c.l.bf16 %v505
        %v538 = vunpack.c.l.bf16 %v506
        %v539 = vunpack.c.l.bf16 %v507
        %v540 = vunpack.c.l.bf16 %v508
        %v541 = vunpack.c.l.bf16 %v509
        %v542 = vunpack.c.l.bf16 %v510
        %v543 = vunpack.c.l.bf16 %v511
        %v544 = vunpack.c.l.bf16 %v512
        %v545 = vunpack.c.l.bf16 %v513
        %v546 = vunpack.c.l.bf16 %v514
        %v547 = vunpack.c.l.bf16 %v515
        %v548 = vunpack.c.l.bf16 %v516
        %v549 = vunpack.c.l.bf16 %v517
        %v550 = vunpack.c.l.bf16 %v518
        %v551 = vunpack.c.l.bf16 %v519
        %v552 = vunpack.c.l.bf16 %v520
        %v553 = vunpack.c.l.bf16 %v521
        %v554 = vunpack.c.l.bf16 %v522
        %v555 = vunpack.c.l.bf16 %v523
        %v556 = vunpack.c.l.bf16 %v524
        %v557 = vunpack.c.l.bf16 %v525
        %v558 = vlaneseq
        %v559 = vand.u32 %v558, 127
        %vm560 = vcmp.eq.s32.totalorder %v559, 0
        %vm561 = vcmp.eq.s32.totalorder %v559, 31
        %vm562 = vcmask 1047808
        %563 = vrot.lane.b32.xlu0 %v526, 32
        %v564 = vpop.permute.xlu0 %563
        %v565 = vsel %vm562, %v564, %v526
        %566 = vrot.lane.b32.xlu0 %v527, 32
        %v567 = vpop.permute.xlu0 %566
        %v568 = vsel %vm562, %v567, %v527
        %569 = vrot.lane.b32.xlu0 %v528, 32
        %v570 = vpop.permute.xlu0 %569
        %v571 = vsel %vm562, %v570, %v528
        %572 = vrot.lane.b32.xlu0 %v529, 32
        %v573 = vpop.permute.xlu0 %572
        %v574 = vsel %vm562, %v573, %v529
        %575 = vrot.lane.b32.xlu0 %v530, 32
        %v576 = vpop.permute.xlu0 %575
        %v577 = vsel %vm562, %v576, %v530
        %578 = vrot.lane.b32.xlu0 %v531, 32
        %v579 = vpop.permute.xlu0 %578
        %v580 = vsel %vm562, %v579, %v531
        %581 = vrot.lane.b32.xlu0 %v532, 32
        %v582 = vpop.permute.xlu0 %581
        %v583 = vsel %vm562, %v582, %v532
        %584 = vrot.lane.b32.xlu0 %v533, 32
        %v585 = vpop.permute.xlu0 %584
        %v586 = vsel %vm562, %v585, %v533
        %587 = vrot.lane.b32.xlu0 %v534, 32
        %v588 = vpop.permute.xlu0 %587
        %v589 = vsel %vm562, %v588, %v534
        %590 = vrot.lane.b32.xlu0 %v535, 32
        %v591 = vpop.permute.xlu0 %590
        %v592 = vsel %vm562, %v591, %v535
        %593 = vrot.lane.b32.xlu0 %v536, 32
        %v594 = vpop.permute.xlu0 %593
        %v595 = vsel %vm562, %v594, %v536
        %596 = vrot.lane.b32.xlu0 %v537, 32
        %v597 = vpop.permute.xlu0 %596
        %v598 = vsel %vm562, %v597, %v537
        %599 = vrot.lane.b32.xlu0 %v538, 32
        %v600 = vpop.permute.xlu0 %599
        %v601 = vsel %vm562, %v600, %v538
        %602 = vrot.lane.b32.xlu0 %v539, 32
        %v603 = vpop.permute.xlu0 %602
        %v604 = vsel %vm562, %v603, %v539
        %605 = vrot.lane.b32.xlu0 %v540, 32
        %v606 = vpop.permute.xlu0 %605
        %v607 = vsel %vm562, %v606, %v540
        %608 = vrot.lane.b32.xlu0 %v541, 32
        %v609 = vpop.permute.xlu0 %608
        %v610 = vsel %vm562, %v609, %v541
        %611 = vrot.lane.b32.xlu0 %v542, 32
        %v612 = vpop.permute.xlu0 %611
        %v613 = vsel %vm562, %v612, %v542
        %614 = vrot.lane.b32.xlu0 %v543, 32
        %v615 = vpop.permute.xlu0 %614
        %v616 = vsel %vm562, %v615, %v543
        %617 = vrot.lane.b32.xlu0 %v544, 32
        %v618 = vpop.permute.xlu0 %617
        %v619 = vsel %vm562, %v618, %v544
        %620 = vrot.lane.b32.xlu0 %v545, 32
        %v621 = vpop.permute.xlu0 %620
        %v622 = vsel %vm562, %v621, %v545
        %623 = vrot.lane.b32.xlu0 %v546, 32
        %v624 = vpop.permute.xlu0 %623
        %v625 = vsel %vm562, %v624, %v546
        %626 = vrot.lane.b32.xlu0 %v547, 32
        %v627 = vpop.permute.xlu0 %626
        %v628 = vsel %vm562, %v627, %v547
        %629 = vrot.lane.b32.xlu0 %v548, 32
        %v630 = vpop.permute.xlu0 %629
        %v631 = vsel %vm562, %v630, %v548
        %632 = vrot.lane.b32.xlu0 %v549, 32
        %v633 = vpop.permute.xlu0 %632
        %v634 = vsel %vm562, %v633, %v549
        %635 = vrot.lane.b32.xlu0 %v550, 32
        %v636 = vpop.permute.xlu0 %635
        %v637 = vsel %vm562, %v636, %v550
        %638 = vrot.lane.b32.xlu0 %v551, 32
        %v639 = vpop.permute.xlu0 %638
        %v640 = vsel %vm562, %v639, %v551
        %641 = vrot.lane.b32.xlu0 %v552, 32
        %v642 = vpop.permute.xlu0 %641
        %v643 = vsel %vm562, %v642, %v552
        %644 = vrot.lane.b32.xlu0 %v553, 32
        %v645 = vpop.permute.xlu0 %644
        %v646 = vsel %vm562, %v645, %v553
        %647 = vrot.lane.b32.xlu0 %v554, 32
        %v648 = vpop.permute.xlu0 %647
        %v649 = vsel %vm562, %v648, %v554
        %650 = vrot.lane.b32.xlu0 %v555, 32
        %v651 = vpop.permute.xlu0 %650
        %v652 = vsel %vm562, %v651, %v555
        %653 = vrot.lane.b32.xlu0 %v556, 32
        %v654 = vpop.permute.xlu0 %653
        %v655 = vsel %vm562, %v654, %v556
        %656 = vrot.lane.b32.xlu0 %v557, 32
        %v657 = vpop.permute.xlu0 %656
        %v658 = vsel %vm562, %v657, %v557
        %659 = vrot.lane.b32.xlu0 %v565, 32
        %v660 = vpop.permute.xlu0 %659
        %661 = vrot.lane.b32.xlu0 %v568, 32
        %v662 = vpop.permute.xlu0 %661
        %663 = vrot.lane.b32.xlu0 %v571, 32
        %v664 = vpop.permute.xlu0 %663
        %665 = vrot.lane.b32.xlu0 %v574, 32
        %v666 = vpop.permute.xlu0 %665
        %667 = vrot.lane.b32.xlu0 %v577, 32
        %v668 = vpop.permute.xlu0 %667
        %669 = vrot.lane.b32.xlu0 %v580, 32
        %v670 = vpop.permute.xlu0 %669
        %671 = vrot.lane.b32.xlu0 %v583, 32
        %v672 = vpop.permute.xlu0 %671
        %673 = vrot.lane.b32.xlu0 %v586, 32
        %v674 = vpop.permute.xlu0 %673
        %675 = vrot.lane.b32.xlu0 %v589, 32
        %v676 = vpop.permute.xlu0 %675
        %677 = vrot.lane.b32.xlu0 %v592, 32
        %v678 = vpop.permute.xlu0 %677
        %679 = vrot.lane.b32.xlu0 %v595, 32
        %v680 = vpop.permute.xlu0 %679
        %681 = vrot.lane.b32.xlu0 %v598, 32
        %v682 = vpop.permute.xlu0 %681
        %683 = vrot.lane.b32.xlu0 %v601, 32
        %v684 = vpop.permute.xlu0 %683
        %685 = vrot.lane.b32.xlu0 %v604, 32
        %v686 = vpop.permute.xlu0 %685
        %687 = vrot.lane.b32.xlu0 %v607, 32
        %v688 = vpop.permute.xlu0 %687
        %689 = vrot.lane.b32.xlu0 %v610, 32
        %v690 = vpop.permute.xlu0 %689
        %691 = vrot.lane.b32.xlu0 %v613, 32
        %v692 = vpop.permute.xlu0 %691
        %693 = vrot.lane.b32.xlu0 %v616, 32
        %v694 = vpop.permute.xlu0 %693
        %695 = vrot.lane.b32.xlu0 %v619, 32
        %v696 = vpop.permute.xlu0 %695
        %697 = vrot.lane.b32.xlu0 %v622, 32
        %v698 = vpop.permute.xlu0 %697
        %699 = vrot.lane.b32.xlu0 %v625, 32
        %v700 = vpop.permute.xlu0 %699
        %701 = vrot.lane.b32.xlu0 %v628, 32
        %v702 = vpop.permute.xlu0 %701
        %703 = vrot.lane.b32.xlu0 %v631, 32
        %v704 = vpop.permute.xlu0 %703
        %705 = vrot.lane.b32.xlu0 %v634, 32
        %v706 = vpop.permute.xlu0 %705
        %707 = vrot.lane.b32.xlu0 %v637, 32
        %v708 = vpop.permute.xlu0 %707
        %709 = vrot.lane.b32.xlu0 %v640, 32
        %v710 = vpop.permute.xlu0 %709
        %711 = vrot.lane.b32.xlu0 %v643, 32
        %v712 = vpop.permute.xlu0 %711
        %713 = vrot.lane.b32.xlu0 %v646, 32
        %v714 = vpop.permute.xlu0 %713
        %715 = vrot.lane.b32.xlu0 %v649, 32
        %v716 = vpop.permute.xlu0 %715
        %717 = vrot.lane.b32.xlu0 %v652, 32
        %v718 = vpop.permute.xlu0 %717
        %719 = vrot.lane.b32.xlu0 %v655, 32
        %v720 = vpop.permute.xlu0 %719
        %721 = vrot.lane.b32.xlu0 %v658, 32
        %v722 = vpop.permute.xlu0 %721
        %v723 = vsel %vm562, %v660, %v526
        %v724 = vsel %vm562, %v662, %v527
        %v725 = vsel %vm562, %v664, %v528
        %v726 = vsel %vm562, %v666, %v529
        %v727 = vsel %vm562, %v668, %v530
        %v728 = vsel %vm562, %v670, %v531
        %v729 = vsel %vm562, %v672, %v532
        %v730 = vsel %vm562, %v674, %v533
        %v731 = vsel %vm562, %v676, %v534
        %v732 = vsel %vm562, %v678, %v535
        %v733 = vsel %vm562, %v680, %v536
        %v734 = vsel %vm562, %v682, %v537
        %v735 = vsel %vm562, %v684, %v538
        %v736 = vsel %vm562, %v686, %v539
        %v737 = vsel %vm562, %v688, %v540
        %v738 = vsel %vm562, %v690, %v541
        %v739 = vsel %vm562, %v692, %v542
        %v740 = vsel %vm562, %v694, %v543
        %v741 = vsel %vm562, %v696, %v544
        %v742 = vsel %vm562, %v698, %v545
        %v743 = vsel %vm562, %v700, %v546
        %v744 = vsel %vm562, %v702, %v547
        %v745 = vsel %vm562, %v704, %v548
        %v746 = vsel %vm562, %v706, %v549
        %v747 = vsel %vm562, %v708, %v550
        %v748 = vsel %vm562, %v710, %v551
        %v749 = vsel %vm562, %v712, %v552
        %v750 = vsel %vm562, %v714, %v553
        %v751 = vsel %vm562, %v716, %v554
        %v752 = vsel %vm562, %v718, %v555
        %v753 = vsel %vm562, %v720, %v556
        %v754 = vsel %vm562, %v722, %v557
        %787 = vrot.lane.b32.xlu0 %v723, 127
        %v788 = vpop.permute.xlu0 %787
        %789 = vrot.lane.b32.xlu0 %v724, 127
        %v790 = vpop.permute.xlu0 %789
        %791 = vrot.lane.b32.xlu0 %v725, 127
        %v792 = vpop.permute.xlu0 %791
        %793 = vrot.lane.b32.xlu0 %v726, 127
        %v794 = vpop.permute.xlu0 %793
        %795 = vrot.lane.b32.xlu0 %v727, 127
        %v796 = vpop.permute.xlu0 %795
        %797 = vrot.lane.b32.xlu0 %v728, 127
        %v798 = vpop.permute.xlu0 %797
        %799 = vrot.lane.b32.xlu0 %v729, 127
        %v800 = vpop.permute.xlu0 %799
        %801 = vrot.lane.b32.xlu0 %v730, 127
        %v802 = vpop.permute.xlu0 %801
        %803 = vrot.lane.b32.xlu0 %v731, 127
        %v804 = vpop.permute.xlu0 %803
        %805 = vrot.lane.b32.xlu0 %v732, 127
        %v806 = vpop.permute.xlu0 %805
        %807 = vrot.lane.b32.xlu0 %v733, 127
        %v808 = vpop.permute.xlu0 %807
        %809 = vrot.lane.b32.xlu0 %v734, 127
        %v810 = vpop.permute.xlu0 %809
        %811 = vrot.lane.b32.xlu0 %v735, 127
        %v812 = vpop.permute.xlu0 %811
        %813 = vrot.lane.b32.xlu0 %v736, 127
        %v814 = vpop.permute.xlu0 %813
        %815 = vrot.lane.b32.xlu0 %v737, 127
        %v816 = vpop.permute.xlu0 %815
        %817 = vrot.lane.b32.xlu0 %v738, 127
        %v818 = vpop.permute.xlu0 %817
        %819 = vrot.lane.b32.xlu0 %v739, 127
        %v820 = vpop.permute.xlu0 %819
        %821 = vrot.lane.b32.xlu0 %v740, 127
        %v822 = vpop.permute.xlu0 %821
        %823 = vrot.lane.b32.xlu0 %v741, 127
        %v824 = vpop.permute.xlu0 %823
        %825 = vrot.lane.b32.xlu0 %v742, 127
        %v826 = vpop.permute.xlu0 %825
        %827 = vrot.lane.b32.xlu0 %v743, 127
        %v828 = vpop.permute.xlu0 %827
        %829 = vrot.lane.b32.xlu0 %v744, 127
        %v830 = vpop.permute.xlu0 %829
        %831 = vrot.lane.b32.xlu0 %v745, 127
        %v832 = vpop.permute.xlu0 %831
        %833 = vrot.lane.b32.xlu0 %v746, 127
        %v834 = vpop.permute.xlu0 %833
        %835 = vrot.lane.b32.xlu0 %v747, 127
        %v836 = vpop.permute.xlu0 %835
        %837 = vrot.lane.b32.xlu0 %v748, 127
        %v838 = vpop.permute.xlu0 %837
        %839 = vrot.lane.b32.xlu0 %v749, 127
        %v840 = vpop.permute.xlu0 %839
        %841 = vrot.lane.b32.xlu0 %v750, 127
        %v842 = vpop.permute.xlu0 %841
        %843 = vrot.lane.b32.xlu0 %v751, 127
        %v844 = vpop.permute.xlu0 %843
        %845 = vrot.lane.b32.xlu0 %v752, 127
        %v846 = vpop.permute.xlu0 %845
        %847 = vrot.lane.b32.xlu0 %v753, 127
        %v848 = vpop.permute.xlu0 %847
        %849 = vrot.lane.b32.xlu0 %v754, 127
        %v850 = vpop.permute.xlu0 %849
        %v883 = vsel %vm561, -inf, %v788
        %v884 = vsel %vm561, -inf, %v790
        %v885 = vsel %vm561, -inf, %v792
        %v886 = vsel %vm561, -inf, %v794
        %v887 = vsel %vm561, -inf, %v796
        %v888 = vsel %vm561, -inf, %v798
        %v889 = vsel %vm561, -inf, %v800
        %v890 = vsel %vm561, -inf, %v802
        %v891 = vsel %vm561, -inf, %v804
        %v892 = vsel %vm561, -inf, %v806
        %v893 = vsel %vm561, -inf, %v808
        %v894 = vsel %vm561, -inf, %v810
        %v895 = vsel %vm561, -inf, %v812
        %v896 = vsel %vm561, -inf, %v814
        %v897 = vsel %vm561, -inf, %v816
        %v898 = vsel %vm561, -inf, %v818
        %v899 = vsel %vm561, -inf, %v820
        %v900 = vsel %vm561, -inf, %v822
        %v901 = vsel %vm561, -inf, %v824
        %v902 = vsel %vm561, -inf, %v826
        %v903 = vsel %vm561, -inf, %v828
        %v904 = vsel %vm561, -inf, %v830
        %v905 = vsel %vm561, -inf, %v832
        %v906 = vsel %vm561, -inf, %v834
        %v907 = vsel %vm561, -inf, %v836
        %v908 = vsel %vm561, -inf, %v838
        %v909 = vsel %vm561, -inf, %v840
        %v910 = vsel %vm561, -inf, %v842
        %v911 = vsel %vm561, -inf, %v844
        %v912 = vsel %vm561, -inf, %v846
        %v913 = vsel %vm561, -inf, %v848
        %v914 = vsel %vm561, -inf, %v850
        %915 = vrot.lane.b32.xlu0 %v723, 97
        %v916 = vpop.permute.xlu0 %915
        %917 = vrot.lane.b32.xlu0 %v724, 97
        %v918 = vpop.permute.xlu0 %917
        %919 = vrot.lane.b32.xlu0 %v725, 97
        %v920 = vpop.permute.xlu0 %919
        %921 = vrot.lane.b32.xlu0 %v726, 97
        %v922 = vpop.permute.xlu0 %921
        %923 = vrot.lane.b32.xlu0 %v727, 97
        %v924 = vpop.permute.xlu0 %923
        %925 = vrot.lane.b32.xlu0 %v728, 97
        %v926 = vpop.permute.xlu0 %925
        %927 = vrot.lane.b32.xlu0 %v729, 97
        %v928 = vpop.permute.xlu0 %927
        %929 = vrot.lane.b32.xlu0 %v730, 97
        %v930 = vpop.permute.xlu0 %929
        %931 = vrot.lane.b32.xlu0 %v731, 97
        %v932 = vpop.permute.xlu0 %931
        %933 = vrot.lane.b32.xlu0 %v732, 97
        %v934 = vpop.permute.xlu0 %933
        %935 = vrot.lane.b32.xlu0 %v733, 97
        %v936 = vpop.permute.xlu0 %935
        %937 = vrot.lane.b32.xlu0 %v734, 97
        %v938 = vpop.permute.xlu0 %937
        %939 = vrot.lane.b32.xlu0 %v735, 97
        %v940 = vpop.permute.xlu0 %939
        %941 = vrot.lane.b32.xlu0 %v736, 97
        %v942 = vpop.permute.xlu0 %941
        %943 = vrot.lane.b32.xlu0 %v737, 97
        %v944 = vpop.permute.xlu0 %943
        %945 = vrot.lane.b32.xlu0 %v738, 97
        %v946 = vpop.permute.xlu0 %945
        %947 = vrot.lane.b32.xlu0 %v739, 97
        %v948 = vpop.permute.xlu0 %947
        %949 = vrot.lane.b32.xlu0 %v740, 97
        %v950 = vpop.permute.xlu0 %949
        %951 = vrot.lane.b32.xlu0 %v741, 97
        %v952 = vpop.permute.xlu0 %951
        %953 = vrot.lane.b32.xlu0 %v742, 97
        %v954 = vpop.permute.xlu0 %953
        %955 = vrot.lane.b32.xlu0 %v743, 97
        %v956 = vpop.permute.xlu0 %955
        %957 = vrot.lane.b32.xlu0 %v744, 97
        %v958 = vpop.permute.xlu0 %957
        %959 = vrot.lane.b32.xlu0 %v745, 97
        %v960 = vpop.permute.xlu0 %959
        %961 = vrot.lane.b32.xlu0 %v746, 97
        %v962 = vpop.permute.xlu0 %961
        %963 = vrot.lane.b32.xlu0 %v747, 97
        %v964 = vpop.permute.xlu0 %963
        %965 = vrot.lane.b32.xlu0 %v748, 97
        %v966 = vpop.permute.xlu0 %965
        %967 = vrot.lane.b32.xlu0 %v749, 97
        %v968 = vpop.permute.xlu0 %967
        %969 = vrot.lane.b32.xlu0 %v750, 97
        %v970 = vpop.permute.xlu0 %969
        %971 = vrot.lane.b32.xlu0 %v751, 97
        %v972 = vpop.permute.xlu0 %971
        %973 = vrot.lane.b32.xlu0 %v752, 97
        %v974 = vpop.permute.xlu0 %973
        %975 = vrot.lane.b32.xlu0 %v753, 97
        %v976 = vpop.permute.xlu0 %975
        %977 = vrot.lane.b32.xlu0 %v754, 97
        %v978 = vpop.permute.xlu0 %977
        %v1011 = vsel %vm560, -inf, %v916
        %v1012 = vsel %vm560, -inf, %v918
        %v1013 = vsel %vm560, -inf, %v920
        %v1014 = vsel %vm560, -inf, %v922
        %v1015 = vsel %vm560, -inf, %v924
        %v1016 = vsel %vm560, -inf, %v926
        %v1017 = vsel %vm560, -inf, %v928
        %v1018 = vsel %vm560, -inf, %v930
        %v1019 = vsel %vm560, -inf, %v932
        %v1020 = vsel %vm560, -inf, %v934
        %v1021 = vsel %vm560, -inf, %v936
        %v1022 = vsel %vm560, -inf, %v938
        %v1023 = vsel %vm560, -inf, %v940
        %v1024 = vsel %vm560, -inf, %v942
        %v1025 = vsel %vm560, -inf, %v944
        %v1026 = vsel %vm560, -inf, %v946
        %v1027 = vsel %vm560, -inf, %v948
        %v1028 = vsel %vm560, -inf, %v950
        %v1029 = vsel %vm560, -inf, %v952
        %v1030 = vsel %vm560, -inf, %v954
        %v1031 = vsel %vm560, -inf, %v956
        %v1032 = vsel %vm560, -inf, %v958
        %v1033 = vsel %vm560, -inf, %v960
        %v1034 = vsel %vm560, -inf, %v962
        %v1035 = vsel %vm560, -inf, %v964
        %v1036 = vsel %vm560, -inf, %v966
        %v1037 = vsel %vm560, -inf, %v968
        %v1038 = vsel %vm560, -inf, %v970
        %v1039 = vsel %vm560, -inf, %v972
        %v1040 = vsel %vm560, -inf, %v974
        %v1041 = vsel %vm560, -inf, %v976
        %v1042 = vsel %vm560, -inf, %v978
        %v1043 = vmax.f32 %v883, %v526
        %v1044 = vmax.f32 %v884, %v527
        %v1045 = vmax.f32 %v885, %v528
        %v1046 = vmax.f32 %v886, %v529
        %v1047 = vmax.f32 %v887, %v530
        %v1048 = vmax.f32 %v888, %v531
        %v1049 = vmax.f32 %v889, %v532
        %v1050 = vmax.f32 %v890, %v533
        %v1051 = vmax.f32 %v891, %v534
        %v1052 = vmax.f32 %v892, %v535
        %v1053 = vmax.f32 %v893, %v536
        %v1054 = vmax.f32 %v894, %v537
        %v1055 = vmax.f32 %v895, %v538
        %v1056 = vmax.f32 %v896, %v539
        %v1057 = vmax.f32 %v897, %v540
        %v1058 = vmax.f32 %v898, %v541
        %v1059 = vmax.f32 %v899, %v542
        %v1060 = vmax.f32 %v900, %v543
        %v1061 = vmax.f32 %v901, %v544
        %v1062 = vmax.f32 %v902, %v545
        %v1063 = vmax.f32 %v903, %v546
        %v1064 = vmax.f32 %v904, %v547
        %v1065 = vmax.f32 %v905, %v548
        %v1066 = vmax.f32 %v906, %v549
        %v1067 = vmax.f32 %v907, %v550
        %v1068 = vmax.f32 %v908, %v551
        %v1069 = vmax.f32 %v909, %v552
        %v1070 = vmax.f32 %v910, %v553
        %v1071 = vmax.f32 %v911, %v554
        %v1072 = vmax.f32 %v912, %v555
        %v1073 = vmax.f32 %v913, %v556
        %v1074 = vmax.f32 %v914, %v557
        %v1075 = vmax.f32 %v1043, %v1011
        %v1076 = vmax.f32 %v1044, %v1012
        %v1077 = vmax.f32 %v1045, %v1013
        %v1078 = vmax.f32 %v1046, %v1014
        %v1079 = vmax.f32 %v1047, %v1015
        %v1080 = vmax.f32 %v1048, %v1016
        %v1081 = vmax.f32 %v1049, %v1017
        %v1082 = vmax.f32 %v1050, %v1018
        %v1083 = vmax.f32 %v1051, %v1019
        %v1084 = vmax.f32 %v1052, %v1020
        %v1085 = vmax.f32 %v1053, %v1021
        %v1086 = vmax.f32 %v1054, %v1022
        %v1087 = vmax.f32 %v1055, %v1023
        %v1088 = vmax.f32 %v1056, %v1024
        %v1089 = vmax.f32 %v1057, %v1025
        %v1090 = vmax.f32 %v1058, %v1026
        %v1091 = vmax.f32 %v1059, %v1027
        %v1092 = vmax.f32 %v1060, %v1028
        %v1093 = vmax.f32 %v1061, %v1029
        %v1094 = vmax.f32 %v1062, %v1030
        %v1095 = vmax.f32 %v1063, %v1031
        %v1096 = vmax.f32 %v1064, %v1032
        %v1097 = vmax.f32 %v1065, %v1033
        %v1098 = vmax.f32 %v1066, %v1034
        %v1099 = vmax.f32 %v1067, %v1035
        %v1100 = vmax.f32 %v1068, %v1036
        %v1101 = vmax.f32 %v1069, %v1037
        %v1102 = vmax.f32 %v1070, %v1038
        %v1103 = vmax.f32 %v1071, %v1039
        %v1104 = vmax.f32 %v1072, %v1040
        %v1105 = vmax.f32 %v1073, %v1041
        %v1106 = vmax.f32 %v1074, %v1042
        %1107 = vrot.lane.b32.xlu0 %v1075, 32
        %v1108 = vpop.permute.xlu0 %1107
        %v1109 = vsel %vm562, %v1108, %v1075
        %1110 = vrot.lane.b32.xlu0 %v1076, 32
        %v1111 = vpop.permute.xlu0 %1110
        %v1112 = vsel %vm562, %v1111, %v1076
        %1113 = vrot.lane.b32.xlu0 %v1077, 32
        %v1114 = vpop.permute.xlu0 %1113
        %v1115 = vsel %vm562, %v1114, %v1077
        %1116 = vrot.lane.b32.xlu0 %v1078, 32
        %v1117 = vpop.permute.xlu0 %1116
        %v1118 = vsel %vm562, %v1117, %v1078
        %1119 = vrot.lane.b32.xlu0 %v1079, 32
        %v1120 = vpop.permute.xlu0 %1119
        %v1121 = vsel %vm562, %v1120, %v1079
        %1122 = vrot.lane.b32.xlu0 %v1080, 32
        %v1123 = vpop.permute.xlu0 %1122
        %v1124 = vsel %vm562, %v1123, %v1080
        %1125 = vrot.lane.b32.xlu0 %v1081, 32
        %v1126 = vpop.permute.xlu0 %1125
        %v1127 = vsel %vm562, %v1126, %v1081
        %1128 = vrot.lane.b32.xlu0 %v1082, 32
        %v1129 = vpop.permute.xlu0 %1128
        %v1130 = vsel %vm562, %v1129, %v1082
        %1131 = vrot.lane.b32.xlu0 %v1083, 32
        %v1132 = vpop.permute.xlu0 %1131
        %v1133 = vsel %vm562, %v1132, %v1083
        %1134 = vrot.lane.b32.xlu0 %v1084, 32
        %v1135 = vpop.permute.xlu0 %1134
        %v1136 = vsel %vm562, %v1135, %v1084
        %1137 = vrot.lane.b32.xlu0 %v1085, 32
        %v1138 = vpop.permute.xlu0 %1137
        %v1139 = vsel %vm562, %v1138, %v1085
        %1140 = vrot.lane.b32.xlu0 %v1086, 32
        %v1141 = vpop.permute.xlu0 %1140
        %v1142 = vsel %vm562, %v1141, %v1086
        %1143 = vrot.lane.b32.xlu0 %v1087, 32
        %v1144 = vpop.permute.xlu0 %1143
        %v1145 = vsel %vm562, %v1144, %v1087
        %1146 = vrot.lane.b32.xlu0 %v1088, 32
        %v1147 = vpop.permute.xlu0 %1146
        %v1148 = vsel %vm562, %v1147, %v1088
        %1149 = vrot.lane.b32.xlu0 %v1089, 32
        %v1150 = vpop.permute.xlu0 %1149
        %v1151 = vsel %vm562, %v1150, %v1089
        %1152 = vrot.lane.b32.xlu0 %v1090, 32
        %v1153 = vpop.permute.xlu0 %1152
        %v1154 = vsel %vm562, %v1153, %v1090
        %1155 = vrot.lane.b32.xlu0 %v1091, 32
        %v1156 = vpop.permute.xlu0 %1155
        %v1157 = vsel %vm562, %v1156, %v1091
        %1158 = vrot.lane.b32.xlu0 %v1092, 32
        %v1159 = vpop.permute.xlu0 %1158
        %v1160 = vsel %vm562, %v1159, %v1092
        %1161 = vrot.lane.b32.xlu0 %v1093, 32
        %v1162 = vpop.permute.xlu0 %1161
        %v1163 = vsel %vm562, %v1162, %v1093
        %1164 = vrot.lane.b32.xlu0 %v1094, 32
        %v1165 = vpop.permute.xlu0 %1164
        %v1166 = vsel %vm562, %v1165, %v1094
        %1167 = vrot.lane.b32.xlu0 %v1095, 32
        %v1168 = vpop.permute.xlu0 %1167
        %v1169 = vsel %vm562, %v1168, %v1095
        %1170 = vrot.lane.b32.xlu0 %v1096, 32
        %v1171 = vpop.permute.xlu0 %1170
        %v1172 = vsel %vm562, %v1171, %v1096
        %1173 = vrot.lane.b32.xlu0 %v1097, 32
        %v1174 = vpop.permute.xlu0 %1173
        %v1175 = vsel %vm562, %v1174, %v1097
        %1176 = vrot.lane.b32.xlu0 %v1098, 32
        %v1177 = vpop.permute.xlu0 %1176
        %v1178 = vsel %vm562, %v1177, %v1098
        %1179 = vrot.lane.b32.xlu0 %v1099, 32
        %v1180 = vpop.permute.xlu0 %1179
        %v1181 = vsel %vm562, %v1180, %v1099
        %1182 = vrot.lane.b32.xlu0 %v1100, 32
        %v1183 = vpop.permute.xlu0 %1182
        %v1184 = vsel %vm562, %v1183, %v1100
        %1185 = vrot.lane.b32.xlu0 %v1101, 32
        %v1186 = vpop.permute.xlu0 %1185
        %v1187 = vsel %vm562, %v1186, %v1101
        %1188 = vrot.lane.b32.xlu0 %v1102, 32
        %v1189 = vpop.permute.xlu0 %1188
        %v1190 = vsel %vm562, %v1189, %v1102
        %1191 = vrot.lane.b32.xlu0 %v1103, 32
        %v1192 = vpop.permute.xlu0 %1191
        %v1193 = vsel %vm562, %v1192, %v1103
        %1194 = vrot.lane.b32.xlu0 %v1104, 32
        %v1195 = vpop.permute.xlu0 %1194
        %v1196 = vsel %vm562, %v1195, %v1104
        %1197 = vrot.lane.b32.xlu0 %v1105, 32
        %v1198 = vpop.permute.xlu0 %1197
        %v1199 = vsel %vm562, %v1198, %v1105
        %1200 = vrot.lane.b32.xlu0 %v1106, 32
        %v1201 = vpop.permute.xlu0 %1200
        %v1202 = vsel %vm562, %v1201, %v1106
        %1203 = vrot.lane.b32.xlu0 %v1109, 32
        %v1204 = vpop.permute.xlu0 %1203
        %1205 = vrot.lane.b32.xlu0 %v1112, 32
        %v1206 = vpop.permute.xlu0 %1205
        %1207 = vrot.lane.b32.xlu0 %v1115, 32
        %v1208 = vpop.permute.xlu0 %1207
        %1209 = vrot.lane.b32.xlu0 %v1118, 32
        %v1210 = vpop.permute.xlu0 %1209
        %1211 = vrot.lane.b32.xlu0 %v1121, 32
        %v1212 = vpop.permute.xlu0 %1211
        %1213 = vrot.lane.b32.xlu0 %v1124, 32
        %v1214 = vpop.permute.xlu0 %1213
        %1215 = vrot.lane.b32.xlu0 %v1127, 32
        %v1216 = vpop.permute.xlu0 %1215
        %1217 = vrot.lane.b32.xlu0 %v1130, 32
        %v1218 = vpop.permute.xlu0 %1217
        %1219 = vrot.lane.b32.xlu0 %v1133, 32
        %v1220 = vpop.permute.xlu0 %1219
        %1221 = vrot.lane.b32.xlu0 %v1136, 32
        %v1222 = vpop.permute.xlu0 %1221
        %1223 = vrot.lane.b32.xlu0 %v1139, 32
        %v1224 = vpop.permute.xlu0 %1223
        %1225 = vrot.lane.b32.xlu0 %v1142, 32
        %v1226 = vpop.permute.xlu0 %1225
        %1227 = vrot.lane.b32.xlu0 %v1145, 32
        %v1228 = vpop.permute.xlu0 %1227
        %1229 = vrot.lane.b32.xlu0 %v1148, 32
        %v1230 = vpop.permute.xlu0 %1229
        %1231 = vrot.lane.b32.xlu0 %v1151, 32
        %v1232 = vpop.permute.xlu0 %1231
        %1233 = vrot.lane.b32.xlu0 %v1154, 32
        %v1234 = vpop.permute.xlu0 %1233
        %1235 = vrot.lane.b32.xlu0 %v1157, 32
        %v1236 = vpop.permute.xlu0 %1235
        %1237 = vrot.lane.b32.xlu0 %v1160, 32
        %v1238 = vpop.permute.xlu0 %1237
        %1239 = vrot.lane.b32.xlu0 %v1163, 32
        %v1240 = vpop.permute.xlu0 %1239
        %1241 = vrot.lane.b32.xlu0 %v1166, 32
        %v1242 = vpop.permute.xlu0 %1241
        %1243 = vrot.lane.b32.xlu0 %v1169, 32
        %v1244 = vpop.permute.xlu0 %1243
        %1245 = vrot.lane.b32.xlu0 %v1172, 32
        %v1246 = vpop.permute.xlu0 %1245
        %1247 = vrot.lane.b32.xlu0 %v1175, 32
        %v1248 = vpop.permute.xlu0 %1247
        %1249 = vrot.lane.b32.xlu0 %v1178, 32
        %v1250 = vpop.permute.xlu0 %1249
        %1251 = vrot.lane.b32.xlu0 %v1181, 32
        %v1252 = vpop.permute.xlu0 %1251
        %1253 = vrot.lane.b32.xlu0 %v1184, 32
        %v1254 = vpop.permute.xlu0 %1253
        %1255 = vrot.lane.b32.xlu0 %v1187, 32
        %v1256 = vpop.permute.xlu0 %1255
        %1257 = vrot.lane.b32.xlu0 %v1190, 32
        %v1258 = vpop.permute.xlu0 %1257
        %1259 = vrot.lane.b32.xlu0 %v1193, 32
        %v1260 = vpop.permute.xlu0 %1259
        %1261 = vrot.lane.b32.xlu0 %v1196, 32
        %v1262 = vpop.permute.xlu0 %1261
        %1263 = vrot.lane.b32.xlu0 %v1199, 32
        %v1264 = vpop.permute.xlu0 %1263
        %1265 = vrot.lane.b32.xlu0 %v1202, 32
        %v1266 = vpop.permute.xlu0 %1265
        %v1267 = vsel %vm562, %v1204, %v1075
        %v1268 = vsel %vm562, %v1206, %v1076
        %v1269 = vsel %vm562, %v1208, %v1077
        %v1270 = vsel %vm562, %v1210, %v1078
        %v1271 = vsel %vm562, %v1212, %v1079
        %v1272 = vsel %vm562, %v1214, %v1080
        %v1273 = vsel %vm562, %v1216, %v1081
        %v1274 = vsel %vm562, %v1218, %v1082
        %v1275 = vsel %vm562, %v1220, %v1083
        %v1276 = vsel %vm562, %v1222, %v1084
        %v1277 = vsel %vm562, %v1224, %v1085
        %v1278 = vsel %vm562, %v1226, %v1086
        %v1279 = vsel %vm562, %v1228, %v1087
        %v1280 = vsel %vm562, %v1230, %v1088
        %v1281 = vsel %vm562, %v1232, %v1089
        %v1282 = vsel %vm562, %v1234, %v1090
        %v1283 = vsel %vm562, %v1236, %v1091
        %v1284 = vsel %vm562, %v1238, %v1092
        %v1285 = vsel %vm562, %v1240, %v1093
        %v1286 = vsel %vm562, %v1242, %v1094
        %v1287 = vsel %vm562, %v1244, %v1095
        %v1288 = vsel %vm562, %v1246, %v1096
        %v1289 = vsel %vm562, %v1248, %v1097
        %v1290 = vsel %vm562, %v1250, %v1098
        %v1291 = vsel %vm562, %v1252, %v1099
        %v1292 = vsel %vm562, %v1254, %v1100
        %v1293 = vsel %vm562, %v1256, %v1101
        %v1294 = vsel %vm562, %v1258, %v1102
        %v1295 = vsel %vm562, %v1260, %v1103
        %v1296 = vsel %vm562, %v1262, %v1104
        %v1297 = vsel %vm562, %v1264, %v1105
        %v1298 = vsel %vm562, %v1266, %v1106
        %1331 = vrot.lane.b32.xlu0 %v1267, 127
        %v1332 = vpop.permute.xlu0 %1331
        %1333 = vrot.lane.b32.xlu0 %v1268, 127
        %v1334 = vpop.permute.xlu0 %1333
        %1335 = vrot.lane.b32.xlu0 %v1269, 127
        %v1336 = vpop.permute.xlu0 %1335
        %1337 = vrot.lane.b32.xlu0 %v1270, 127
        %v1338 = vpop.permute.xlu0 %1337
        %1339 = vrot.lane.b32.xlu0 %v1271, 127
        %v1340 = vpop.permute.xlu0 %1339
        %1341 = vrot.lane.b32.xlu0 %v1272, 127
        %v1342 = vpop.permute.xlu0 %1341
        %1343 = vrot.lane.b32.xlu0 %v1273, 127
        %v1344 = vpop.permute.xlu0 %1343
        %1345 = vrot.lane.b32.xlu0 %v1274, 127
        %v1346 = vpop.permute.xlu0 %1345
        %1347 = vrot.lane.b32.xlu0 %v1275, 127
        %v1348 = vpop.permute.xlu0 %1347
        %1349 = vrot.lane.b32.xlu0 %v1276, 127
        %v1350 = vpop.permute.xlu0 %1349
        %1351 = vrot.lane.b32.xlu0 %v1277, 127
        %v1352 = vpop.permute.xlu0 %1351
        %1353 = vrot.lane.b32.xlu0 %v1278, 127
        %v1354 = vpop.permute.xlu0 %1353
        %1355 = vrot.lane.b32.xlu0 %v1279, 127
        %v1356 = vpop.permute.xlu0 %1355
        %1357 = vrot.lane.b32.xlu0 %v1280, 127
        %v1358 = vpop.permute.xlu0 %1357
        %1359 = vrot.lane.b32.xlu0 %v1281, 127
        %v1360 = vpop.permute.xlu0 %1359
        %1361 = vrot.lane.b32.xlu0 %v1282, 127
        %v1362 = vpop.permute.xlu0 %1361
        %1363 = vrot.lane.b32.xlu0 %v1283, 127
        %v1364 = vpop.permute.xlu0 %1363
        %1365 = vrot.lane.b32.xlu0 %v1284, 127
        %v1366 = vpop.permute.xlu0 %1365
        %1367 = vrot.lane.b32.xlu0 %v1285, 127
        %v1368 = vpop.permute.xlu0 %1367
        %1369 = vrot.lane.b32.xlu0 %v1286, 127
        %v1370 = vpop.permute.xlu0 %1369
        %1371 = vrot.lane.b32.xlu0 %v1287, 127
        %v1372 = vpop.permute.xlu0 %1371
        %1373 = vrot.lane.b32.xlu0 %v1288, 127
        %v1374 = vpop.permute.xlu0 %1373
        %1375 = vrot.lane.b32.xlu0 %v1289, 127
        %v1376 = vpop.permute.xlu0 %1375
        %1377 = vrot.lane.b32.xlu0 %v1290, 127
        %v1378 = vpop.permute.xlu0 %1377
        %1379 = vrot.lane.b32.xlu0 %v1291, 127
        %v1380 = vpop.permute.xlu0 %1379
        %1381 = vrot.lane.b32.xlu0 %v1292, 127
        %v1382 = vpop.permute.xlu0 %1381
        %1383 = vrot.lane.b32.xlu0 %v1293, 127
        %v1384 = vpop.permute.xlu0 %1383
        %1385 = vrot.lane.b32.xlu0 %v1294, 127
        %v1386 = vpop.permute.xlu0 %1385
        %1387 = vrot.lane.b32.xlu0 %v1295, 127
        %v1388 = vpop.permute.xlu0 %1387
        %1389 = vrot.lane.b32.xlu0 %v1296, 127
        %v1390 = vpop.permute.xlu0 %1389
        %1391 = vrot.lane.b32.xlu0 %v1297, 127
        %v1392 = vpop.permute.xlu0 %1391
        %1393 = vrot.lane.b32.xlu0 %v1298, 127
        %v1394 = vpop.permute.xlu0 %1393
        %v1427 = vsel %vm561, -inf, %v1332
        %v1428 = vsel %vm561, -inf, %v1334
        %v1429 = vsel %vm561, -inf, %v1336
        %v1430 = vsel %vm561, -inf, %v1338
        %v1431 = vsel %vm561, -inf, %v1340
        %v1432 = vsel %vm561, -inf, %v1342
        %v1433 = vsel %vm561, -inf, %v1344
        %v1434 = vsel %vm561, -inf, %v1346
        %v1435 = vsel %vm561, -inf, %v1348
        %v1436 = vsel %vm561, -inf, %v1350
        %v1437 = vsel %vm561, -inf, %v1352
        %v1438 = vsel %vm561, -inf, %v1354
        %v1439 = vsel %vm561, -inf, %v1356
        %v1440 = vsel %vm561, -inf, %v1358
        %v1441 = vsel %vm561, -inf, %v1360
        %v1442 = vsel %vm561, -inf, %v1362
        %v1443 = vsel %vm561, -inf, %v1364
        %v1444 = vsel %vm561, -inf, %v1366
        %v1445 = vsel %vm561, -inf, %v1368
        %v1446 = vsel %vm561, -inf, %v1370
        %v1447 = vsel %vm561, -inf, %v1372
        %v1448 = vsel %vm561, -inf, %v1374
        %v1449 = vsel %vm561, -inf, %v1376
        %v1450 = vsel %vm561, -inf, %v1378
        %v1451 = vsel %vm561, -inf, %v1380
        %v1452 = vsel %vm561, -inf, %v1382
        %v1453 = vsel %vm561, -inf, %v1384
        %v1454 = vsel %vm561, -inf, %v1386
        %v1455 = vsel %vm561, -inf, %v1388
        %v1456 = vsel %vm561, -inf, %v1390
        %v1457 = vsel %vm561, -inf, %v1392
        %v1458 = vsel %vm561, -inf, %v1394
        %1459 = vrot.lane.b32.xlu0 %v1267, 97
        %v1460 = vpop.permute.xlu0 %1459
        %1461 = vrot.lane.b32.xlu0 %v1268, 97
        %v1462 = vpop.permute.xlu0 %1461
        %1463 = vrot.lane.b32.xlu0 %v1269, 97
        %v1464 = vpop.permute.xlu0 %1463
        %1465 = vrot.lane.b32.xlu0 %v1270, 97
        %v1466 = vpop.permute.xlu0 %1465
        %1467 = vrot.lane.b32.xlu0 %v1271, 97
        %v1468 = vpop.permute.xlu0 %1467
        %1469 = vrot.lane.b32.xlu0 %v1272, 97
        %v1470 = vpop.permute.xlu0 %1469
        %1471 = vrot.lane.b32.xlu0 %v1273, 97
        %v1472 = vpop.permute.xlu0 %1471
        %1473 = vrot.lane.b32.xlu0 %v1274, 97
        %v1474 = vpop.permute.xlu0 %1473
        %1475 = vrot.lane.b32.xlu0 %v1275, 97
        %v1476 = vpop.permute.xlu0 %1475
        %1477 = vrot.lane.b32.xlu0 %v1276, 97
        %v1478 = vpop.permute.xlu0 %1477
        %1479 = vrot.lane.b32.xlu0 %v1277, 97
        %v1480 = vpop.permute.xlu0 %1479
        %1481 = vrot.lane.b32.xlu0 %v1278, 97
        %v1482 = vpop.permute.xlu0 %1481
        %1483 = vrot.lane.b32.xlu0 %v1279, 97
        %v1484 = vpop.permute.xlu0 %1483
        %1485 = vrot.lane.b32.xlu0 %v1280, 97
        %v1486 = vpop.permute.xlu0 %1485
        %1487 = vrot.lane.b32.xlu0 %v1281, 97
        %v1488 = vpop.permute.xlu0 %1487
        %1489 = vrot.lane.b32.xlu0 %v1282, 97
        %v1490 = vpop.permute.xlu0 %1489
        %1491 = vrot.lane.b32.xlu0 %v1283, 97
        %v1492 = vpop.permute.xlu0 %1491
        %1493 = vrot.lane.b32.xlu0 %v1284, 97
        %v1494 = vpop.permute.xlu0 %1493
        %1495 = vrot.lane.b32.xlu0 %v1285, 97
        %v1496 = vpop.permute.xlu0 %1495
        %1497 = vrot.lane.b32.xlu0 %v1286, 97
        %v1498 = vpop.permute.xlu0 %1497
        %1499 = vrot.lane.b32.xlu0 %v1287, 97
        %v1500 = vpop.permute.xlu0 %1499
        %1501 = vrot.lane.b32.xlu0 %v1288, 97
        %v1502 = vpop.permute.xlu0 %1501
        %1503 = vrot.lane.b32.xlu0 %v1289, 97
        %v1504 = vpop.permute.xlu0 %1503
        %1505 = vrot.lane.b32.xlu0 %v1290, 97
        %v1506 = vpop.permute.xlu0 %1505
        %1507 = vrot.lane.b32.xlu0 %v1291, 97
        %v1508 = vpop.permute.xlu0 %1507
        %1509 = vrot.lane.b32.xlu0 %v1292, 97
        %v1510 = vpop.permute.xlu0 %1509
        %1511 = vrot.lane.b32.xlu0 %v1293, 97
        %v1512 = vpop.permute.xlu0 %1511
        %1513 = vrot.lane.b32.xlu0 %v1294, 97
        %v1514 = vpop.permute.xlu0 %1513
        %1515 = vrot.lane.b32.xlu0 %v1295, 97
        %v1516 = vpop.permute.xlu0 %1515
        %1517 = vrot.lane.b32.xlu0 %v1296, 97
        %v1518 = vpop.permute.xlu0 %1517
        %1519 = vrot.lane.b32.xlu0 %v1297, 97
        %v1520 = vpop.permute.xlu0 %1519
        %1521 = vrot.lane.b32.xlu0 %v1298, 97
        %v1522 = vpop.permute.xlu0 %1521
        %v1555 = vsel %vm560, -inf, %v1460
        %v1556 = vsel %vm560, -inf, %v1462
        %v1557 = vsel %vm560, -inf, %v1464
        %v1558 = vsel %vm560, -inf, %v1466
        %v1559 = vsel %vm560, -inf, %v1468
        %v1560 = vsel %vm560, -inf, %v1470
        %v1561 = vsel %vm560, -inf, %v1472
        %v1562 = vsel %vm560, -inf, %v1474
        %v1563 = vsel %vm560, -inf, %v1476
        %v1564 = vsel %vm560, -inf, %v1478
        %v1565 = vsel %vm560, -inf, %v1480
        %v1566 = vsel %vm560, -inf, %v1482
        %v1567 = vsel %vm560, -inf, %v1484
        %v1568 = vsel %vm560, -inf, %v1486
        %v1569 = vsel %vm560, -inf, %v1488
        %v1570 = vsel %vm560, -inf, %v1490
        %v1571 = vsel %vm560, -inf, %v1492
        %v1572 = vsel %vm560, -inf, %v1494
        %v1573 = vsel %vm560, -inf, %v1496
        %v1574 = vsel %vm560, -inf, %v1498
        %v1575 = vsel %vm560, -inf, %v1500
        %v1576 = vsel %vm560, -inf, %v1502
        %v1577 = vsel %vm560, -inf, %v1504
        %v1578 = vsel %vm560, -inf, %v1506
        %v1579 = vsel %vm560, -inf, %v1508
        %v1580 = vsel %vm560, -inf, %v1510
        %v1581 = vsel %vm560, -inf, %v1512
        %v1582 = vsel %vm560, -inf, %v1514
        %v1583 = vsel %vm560, -inf, %v1516
        %v1584 = vsel %vm560, -inf, %v1518
        %v1585 = vsel %vm560, -inf, %v1520
        %v1586 = vsel %vm560, -inf, %v1522
        %v1587 = vmax.f32 %v1427, %v1075
        %v1588 = vmax.f32 %v1428, %v1076
        %v1589 = vmax.f32 %v1429, %v1077
        %v1590 = vmax.f32 %v1430, %v1078
        %v1591 = vmax.f32 %v1431, %v1079
        %v1592 = vmax.f32 %v1432, %v1080
        %v1593 = vmax.f32 %v1433, %v1081
        %v1594 = vmax.f32 %v1434, %v1082
        %v1595 = vmax.f32 %v1435, %v1083
        %v1596 = vmax.f32 %v1436, %v1084
        %v1597 = vmax.f32 %v1437, %v1085
        %v1598 = vmax.f32 %v1438, %v1086
        %v1599 = vmax.f32 %v1439, %v1087
        %v1600 = vmax.f32 %v1440, %v1088
        %v1601 = vmax.f32 %v1441, %v1089
        %v1602 = vmax.f32 %v1442, %v1090
        %v1603 = vmax.f32 %v1443, %v1091
        %v1604 = vmax.f32 %v1444, %v1092
        %v1605 = vmax.f32 %v1445, %v1093
        %v1606 = vmax.f32 %v1446, %v1094
        %v1607 = vmax.f32 %v1447, %v1095
        %v1608 = vmax.f32 %v1448, %v1096
        %v1609 = vmax.f32 %v1449, %v1097
        %v1610 = vmax.f32 %v1450, %v1098
        %v1611 = vmax.f32 %v1451, %v1099
        %v1612 = vmax.f32 %v1452, %v1100
        %v1613 = vmax.f32 %v1453, %v1101
        %v1614 = vmax.f32 %v1454, %v1102
        %v1615 = vmax.f32 %v1455, %v1103
        %v1616 = vmax.f32 %v1456, %v1104
        %v1617 = vmax.f32 %v1457, %v1105
        %v1618 = vmax.f32 %v1458, %v1106
        %v1619 = vmax.f32 %v1587, %v1555
        %v1620 = vmax.f32 %v1588, %v1556
        %v1621 = vmax.f32 %v1589, %v1557
        %v1622 = vmax.f32 %v1590, %v1558
        %v1623 = vmax.f32 %v1591, %v1559
        %v1624 = vmax.f32 %v1592, %v1560
        %v1625 = vmax.f32 %v1593, %v1561
        %v1626 = vmax.f32 %v1594, %v1562
        %v1627 = vmax.f32 %v1595, %v1563
        %v1628 = vmax.f32 %v1596, %v1564
        %v1629 = vmax.f32 %v1597, %v1565
        %v1630 = vmax.f32 %v1598, %v1566
        %v1631 = vmax.f32 %v1599, %v1567
        %v1632 = vmax.f32 %v1600, %v1568
        %v1633 = vmax.f32 %v1601, %v1569
        %v1634 = vmax.f32 %v1602, %v1570
        %v1635 = vmax.f32 %v1603, %v1571
        %v1636 = vmax.f32 %v1604, %v1572
        %v1637 = vmax.f32 %v1605, %v1573
        %v1638 = vmax.f32 %v1606, %v1574
        %v1639 = vmax.f32 %v1607, %v1575
        %v1640 = vmax.f32 %v1608, %v1576
        %v1641 = vmax.f32 %v1609, %v1577
        %v1642 = vmax.f32 %v1610, %v1578
        %v1643 = vmax.f32 %v1611, %v1579
        %v1644 = vmax.f32 %v1612, %v1580
        %v1645 = vmax.f32 %v1613, %v1581
        %v1646 = vmax.f32 %v1614, %v1582
        %v1647 = vmax.f32 %v1615, %v1583
        %v1648 = vmax.f32 %v1616, %v1584
        %v1649 = vmax.f32 %v1617, %v1585
        %v1650 = vmax.f32 %v1618, %v1586
        %1651 = vrot.lane.b32.xlu0 %v1619, 32
        %v1652 = vpop.permute.xlu0 %1651
        %v1653 = vsel %vm562, %v1652, %v1619
        %1654 = vrot.lane.b32.xlu0 %v1620, 32
        %v1655 = vpop.permute.xlu0 %1654
        %v1656 = vsel %vm562, %v1655, %v1620
        %1657 = vrot.lane.b32.xlu0 %v1621, 32
        %v1658 = vpop.permute.xlu0 %1657
        %v1659 = vsel %vm562, %v1658, %v1621
        %1660 = vrot.lane.b32.xlu0 %v1622, 32
        %v1661 = vpop.permute.xlu0 %1660
        %v1662 = vsel %vm562, %v1661, %v1622
        %1663 = vrot.lane.b32.xlu0 %v1623, 32
        %v1664 = vpop.permute.xlu0 %1663
        %v1665 = vsel %vm562, %v1664, %v1623
        %1666 = vrot.lane.b32.xlu0 %v1624, 32
        %v1667 = vpop.permute.xlu0 %1666
        %v1668 = vsel %vm562, %v1667, %v1624
        %1669 = vrot.lane.b32.xlu0 %v1625, 32
        %v1670 = vpop.permute.xlu0 %1669
        %v1671 = vsel %vm562, %v1670, %v1625
        %1672 = vrot.lane.b32.xlu0 %v1626, 32
        %v1673 = vpop.permute.xlu0 %1672
        %v1674 = vsel %vm562, %v1673, %v1626
        %1675 = vrot.lane.b32.xlu0 %v1627, 32
        %v1676 = vpop.permute.xlu0 %1675
        %v1677 = vsel %vm562, %v1676, %v1627
        %1678 = vrot.lane.b32.xlu0 %v1628, 32
        %v1679 = vpop.permute.xlu0 %1678
        %v1680 = vsel %vm562, %v1679, %v1628
        %1681 = vrot.lane.b32.xlu0 %v1629, 32
        %v1682 = vpop.permute.xlu0 %1681
        %v1683 = vsel %vm562, %v1682, %v1629
        %1684 = vrot.lane.b32.xlu0 %v1630, 32
        %v1685 = vpop.permute.xlu0 %1684
        %v1686 = vsel %vm562, %v1685, %v1630
        %1687 = vrot.lane.b32.xlu0 %v1631, 32
        %v1688 = vpop.permute.xlu0 %1687
        %v1689 = vsel %vm562, %v1688, %v1631
        %1690 = vrot.lane.b32.xlu0 %v1632, 32
        %v1691 = vpop.permute.xlu0 %1690
        %v1692 = vsel %vm562, %v1691, %v1632
        %1693 = vrot.lane.b32.xlu0 %v1633, 32
        %v1694 = vpop.permute.xlu0 %1693
        %v1695 = vsel %vm562, %v1694, %v1633
        %1696 = vrot.lane.b32.xlu0 %v1634, 32
        %v1697 = vpop.permute.xlu0 %1696
        %v1698 = vsel %vm562, %v1697, %v1634
        %1699 = vrot.lane.b32.xlu0 %v1635, 32
        %v1700 = vpop.permute.xlu0 %1699
        %v1701 = vsel %vm562, %v1700, %v1635
        %1702 = vrot.lane.b32.xlu0 %v1636, 32
        %v1703 = vpop.permute.xlu0 %1702
        %v1704 = vsel %vm562, %v1703, %v1636
        %1705 = vrot.lane.b32.xlu0 %v1637, 32
        %v1706 = vpop.permute.xlu0 %1705
        %v1707 = vsel %vm562, %v1706, %v1637
        %1708 = vrot.lane.b32.xlu0 %v1638, 32
        %v1709 = vpop.permute.xlu0 %1708
        %v1710 = vsel %vm562, %v1709, %v1638
        %1711 = vrot.lane.b32.xlu0 %v1639, 32
        %v1712 = vpop.permute.xlu0 %1711
        %v1713 = vsel %vm562, %v1712, %v1639
        %1714 = vrot.lane.b32.xlu0 %v1640, 32
        %v1715 = vpop.permute.xlu0 %1714
        %v1716 = vsel %vm562, %v1715, %v1640
        %1717 = vrot.lane.b32.xlu0 %v1641, 32
        %v1718 = vpop.permute.xlu0 %1717
        %v1719 = vsel %vm562, %v1718, %v1641
        %1720 = vrot.lane.b32.xlu0 %v1642, 32
        %v1721 = vpop.permute.xlu0 %1720
        %v1722 = vsel %vm562, %v1721, %v1642
        %1723 = vrot.lane.b32.xlu0 %v1643, 32
        %v1724 = vpop.permute.xlu0 %1723
        %v1725 = vsel %vm562, %v1724, %v1643
        %1726 = vrot.lane.b32.xlu0 %v1644, 32
        %v1727 = vpop.permute.xlu0 %1726
        %v1728 = vsel %vm562, %v1727, %v1644
        %1729 = vrot.lane.b32.xlu0 %v1645, 32
        %v1730 = vpop.permute.xlu0 %1729
        %v1731 = vsel %vm562, %v1730, %v1645
        %1732 = vrot.lane.b32.xlu0 %v1646, 32
        %v1733 = vpop.permute.xlu0 %1732
        %v1734 = vsel %vm562, %v1733, %v1646
        %1735 = vrot.lane.b32.xlu0 %v1647, 32
        %v1736 = vpop.permute.xlu0 %1735
        %v1737 = vsel %vm562, %v1736, %v1647
        %1738 = vrot.lane.b32.xlu0 %v1648, 32
        %v1739 = vpop.permute.xlu0 %1738
        %v1740 = vsel %vm562, %v1739, %v1648
        %1741 = vrot.lane.b32.xlu0 %v1649, 32
        %v1742 = vpop.permute.xlu0 %1741
        %v1743 = vsel %vm562, %v1742, %v1649
        %1744 = vrot.lane.b32.xlu0 %v1650, 32
        %v1745 = vpop.permute.xlu0 %1744
        %v1746 = vsel %vm562, %v1745, %v1650
        %1747 = vrot.lane.b32.xlu0 %v1653, 32
        %v1748 = vpop.permute.xlu0 %1747
        %1749 = vrot.lane.b32.xlu0 %v1656, 32
        %v1750 = vpop.permute.xlu0 %1749
        %1751 = vrot.lane.b32.xlu0 %v1659, 32
        %v1752 = vpop.permute.xlu0 %1751
        %1753 = vrot.lane.b32.xlu0 %v1662, 32
        %v1754 = vpop.permute.xlu0 %1753
        %1755 = vrot.lane.b32.xlu0 %v1665, 32
        %v1756 = vpop.permute.xlu0 %1755
        %1757 = vrot.lane.b32.xlu0 %v1668, 32
        %v1758 = vpop.permute.xlu0 %1757
        %1759 = vrot.lane.b32.xlu0 %v1671, 32
        %v1760 = vpop.permute.xlu0 %1759
        %1761 = vrot.lane.b32.xlu0 %v1674, 32
        %v1762 = vpop.permute.xlu0 %1761
        %1763 = vrot.lane.b32.xlu0 %v1677, 32
        %v1764 = vpop.permute.xlu0 %1763
        %1765 = vrot.lane.b32.xlu0 %v1680, 32
        %v1766 = vpop.permute.xlu0 %1765
        %1767 = vrot.lane.b32.xlu0 %v1683, 32
        %v1768 = vpop.permute.xlu0 %1767
        %1769 = vrot.lane.b32.xlu0 %v1686, 32
        %v1770 = vpop.permute.xlu0 %1769
        %1771 = vrot.lane.b32.xlu0 %v1689, 32
        %v1772 = vpop.permute.xlu0 %1771
        %1773 = vrot.lane.b32.xlu0 %v1692, 32
        %v1774 = vpop.permute.xlu0 %1773
        %1775 = vrot.lane.b32.xlu0 %v1695, 32
        %v1776 = vpop.permute.xlu0 %1775
        %1777 = vrot.lane.b32.xlu0 %v1698, 32
        %v1778 = vpop.permute.xlu0 %1777
        %1779 = vrot.lane.b32.xlu0 %v1701, 32
        %v1780 = vpop.permute.xlu0 %1779
        %1781 = vrot.lane.b32.xlu0 %v1704, 32
        %v1782 = vpop.permute.xlu0 %1781
        %1783 = vrot.lane.b32.xlu0 %v1707, 32
        %v1784 = vpop.permute.xlu0 %1783
        %1785 = vrot.lane.b32.xlu0 %v1710, 32
        %v1786 = vpop.permute.xlu0 %1785
        %1787 = vrot.lane.b32.xlu0 %v1713, 32
        %v1788 = vpop.permute.xlu0 %1787
        %1789 = vrot.lane.b32.xlu0 %v1716, 32
        %v1790 = vpop.permute.xlu0 %1789
        %1791 = vrot.lane.b32.xlu0 %v1719, 32
        %v1792 = vpop.permute.xlu0 %1791
        %1793 = vrot.lane.b32.xlu0 %v1722, 32
        %v1794 = vpop.permute.xlu0 %1793
        %1795 = vrot.lane.b32.xlu0 %v1725, 32
        %v1796 = vpop.permute.xlu0 %1795
        %1797 = vrot.lane.b32.xlu0 %v1728, 32
        %v1798 = vpop.permute.xlu0 %1797
        %1799 = vrot.lane.b32.xlu0 %v1731, 32
        %v1800 = vpop.permute.xlu0 %1799
        %1801 = vrot.lane.b32.xlu0 %v1734, 32
        %v1802 = vpop.permute.xlu0 %1801
        %1803 = vrot.lane.b32.xlu0 %v1737, 32
        %v1804 = vpop.permute.xlu0 %1803
        %1805 = vrot.lane.b32.xlu0 %v1740, 32
        %v1806 = vpop.permute.xlu0 %1805
        %1807 = vrot.lane.b32.xlu0 %v1743, 32
        %v1808 = vpop.permute.xlu0 %1807
        %1809 = vrot.lane.b32.xlu0 %v1746, 32
        %v1810 = vpop.permute.xlu0 %1809
        %v1811 = vsel %vm562, %v1748, %v1619
        %v1812 = vsel %vm562, %v1750, %v1620
        %v1813 = vsel %vm562, %v1752, %v1621
        %v1814 = vsel %vm562, %v1754, %v1622
        %v1815 = vsel %vm562, %v1756, %v1623
        %v1816 = vsel %vm562, %v1758, %v1624
        %v1817 = vsel %vm562, %v1760, %v1625
        %v1818 = vsel %vm562, %v1762, %v1626
        %v1819 = vsel %vm562, %v1764, %v1627
        %v1820 = vsel %vm562, %v1766, %v1628
        %v1821 = vsel %vm562, %v1768, %v1629
        %v1822 = vsel %vm562, %v1770, %v1630
        %v1823 = vsel %vm562, %v1772, %v1631
        %v1824 = vsel %vm562, %v1774, %v1632
        %v1825 = vsel %vm562, %v1776, %v1633
        %v1826 = vsel %vm562, %v1778, %v1634
        %v1827 = vsel %vm562, %v1780, %v1635
        %v1828 = vsel %vm562, %v1782, %v1636
        %v1829 = vsel %vm562, %v1784, %v1637
        %v1830 = vsel %vm562, %v1786, %v1638
        %v1831 = vsel %vm562, %v1788, %v1639
        %v1832 = vsel %vm562, %v1790, %v1640
        %v1833 = vsel %vm562, %v1792, %v1641
        %v1834 = vsel %vm562, %v1794, %v1642
        %v1835 = vsel %vm562, %v1796, %v1643
        %v1836 = vsel %vm562, %v1798, %v1644
        %v1837 = vsel %vm562, %v1800, %v1645
        %v1838 = vsel %vm562, %v1802, %v1646
        %v1839 = vsel %vm562, %v1804, %v1647
        %v1840 = vsel %vm562, %v1806, %v1648
        %v1841 = vsel %vm562, %v1808, %v1649
        %v1842 = vsel %vm562, %v1810, %v1650
        %1875 = vrot.lane.b32.xlu0 %v1811, 127
        %v1876 = vpop.permute.xlu0 %1875
        %1877 = vrot.lane.b32.xlu0 %v1812, 127
        %v1878 = vpop.permute.xlu0 %1877
        %1879 = vrot.lane.b32.xlu0 %v1813, 127
        %v1880 = vpop.permute.xlu0 %1879
        %1881 = vrot.lane.b32.xlu0 %v1814, 127
        %v1882 = vpop.permute.xlu0 %1881
        %1883 = vrot.lane.b32.xlu0 %v1815, 127
        %v1884 = vpop.permute.xlu0 %1883
        %1885 = vrot.lane.b32.xlu0 %v1816, 127
        %v1886 = vpop.permute.xlu0 %1885
        %1887 = vrot.lane.b32.xlu0 %v1817, 127
        %v1888 = vpop.permute.xlu0 %1887
        %1889 = vrot.lane.b32.xlu0 %v1818, 127
        %v1890 = vpop.permute.xlu0 %1889
        %1891 = vrot.lane.b32.xlu0 %v1819, 127
        %v1892 = vpop.permute.xlu0 %1891
        %1893 = vrot.lane.b32.xlu0 %v1820, 127
        %v1894 = vpop.permute.xlu0 %1893
        %1895 = vrot.lane.b32.xlu0 %v1821, 127
        %v1896 = vpop.permute.xlu0 %1895
        %1897 = vrot.lane.b32.xlu0 %v1822, 127
        %v1898 = vpop.permute.xlu0 %1897
        %1899 = vrot.lane.b32.xlu0 %v1823, 127
        %v1900 = vpop.permute.xlu0 %1899
        %1901 = vrot.lane.b32.xlu0 %v1824, 127
        %v1902 = vpop.permute.xlu0 %1901
        %1903 = vrot.lane.b32.xlu0 %v1825, 127
        %v1904 = vpop.permute.xlu0 %1903
        %1905 = vrot.lane.b32.xlu0 %v1826, 127
        %v1906 = vpop.permute.xlu0 %1905
        %1907 = vrot.lane.b32.xlu0 %v1827, 127
        %v1908 = vpop.permute.xlu0 %1907
        %1909 = vrot.lane.b32.xlu0 %v1828, 127
        %v1910 = vpop.permute.xlu0 %1909
        %1911 = vrot.lane.b32.xlu0 %v1829, 127
        %v1912 = vpop.permute.xlu0 %1911
        %1913 = vrot.lane.b32.xlu0 %v1830, 127
        %v1914 = vpop.permute.xlu0 %1913
        %1915 = vrot.lane.b32.xlu0 %v1831, 127
        %v1916 = vpop.permute.xlu0 %1915
        %1917 = vrot.lane.b32.xlu0 %v1832, 127
        %v1918 = vpop.permute.xlu0 %1917
        %1919 = vrot.lane.b32.xlu0 %v1833, 127
        %v1920 = vpop.permute.xlu0 %1919
        %1921 = vrot.lane.b32.xlu0 %v1834, 127
        %v1922 = vpop.permute.xlu0 %1921
        %1923 = vrot.lane.b32.xlu0 %v1835, 127
        %v1924 = vpop.permute.xlu0 %1923
        %1925 = vrot.lane.b32.xlu0 %v1836, 127
        %v1926 = vpop.permute.xlu0 %1925
        %1927 = vrot.lane.b32.xlu0 %v1837, 127
        %v1928 = vpop.permute.xlu0 %1927
        %1929 = vrot.lane.b32.xlu0 %v1838, 127
        %v1930 = vpop.permute.xlu0 %1929
        %1931 = vrot.lane.b32.xlu0 %v1839, 127
        %v1932 = vpop.permute.xlu0 %1931
        %1933 = vrot.lane.b32.xlu0 %v1840, 127
        %v1934 = vpop.permute.xlu0 %1933
        %1935 = vrot.lane.b32.xlu0 %v1841, 127
        %v1936 = vpop.permute.xlu0 %1935
        %1937 = vrot.lane.b32.xlu0 %v1842, 127
        %v1938 = vpop.permute.xlu0 %1937
        %v1971 = vsel %vm561, -inf, %v1876
        %v1972 = vsel %vm561, -inf, %v1878
        %v1973 = vsel %vm561, -inf, %v1880
        %v1974 = vsel %vm561, -inf, %v1882
        %v1975 = vsel %vm561, -inf, %v1884
        %v1976 = vsel %vm561, -inf, %v1886
        %v1977 = vsel %vm561, -inf, %v1888
        %v1978 = vsel %vm561, -inf, %v1890
        %v1979 = vsel %vm561, -inf, %v1892
        %v1980 = vsel %vm561, -inf, %v1894
        %v1981 = vsel %vm561, -inf, %v1896
        %v1982 = vsel %vm561, -inf, %v1898
        %v1983 = vsel %vm561, -inf, %v1900
        %v1984 = vsel %vm561, -inf, %v1902
        %v1985 = vsel %vm561, -inf, %v1904
        %v1986 = vsel %vm561, -inf, %v1906
        %v1987 = vsel %vm561, -inf, %v1908
        %v1988 = vsel %vm561, -inf, %v1910
        %v1989 = vsel %vm561, -inf, %v1912
        %v1990 = vsel %vm561, -inf, %v1914
        %v1991 = vsel %vm561, -inf, %v1916
        %v1992 = vsel %vm561, -inf, %v1918
        %v1993 = vsel %vm561, -inf, %v1920
        %v1994 = vsel %vm561, -inf, %v1922
        %v1995 = vsel %vm561, -inf, %v1924
        %v1996 = vsel %vm561, -inf, %v1926
        %v1997 = vsel %vm561, -inf, %v1928
        %v1998 = vsel %vm561, -inf, %v1930
        %v1999 = vsel %vm561, -inf, %v1932
        %v2000 = vsel %vm561, -inf, %v1934
        %v2001 = vsel %vm561, -inf, %v1936
        %v2002 = vsel %vm561, -inf, %v1938
        %2003 = vrot.lane.b32.xlu0 %v1811, 97
        %v2004 = vpop.permute.xlu0 %2003
        %2005 = vrot.lane.b32.xlu0 %v1812, 97
        %v2006 = vpop.permute.xlu0 %2005
        %2007 = vrot.lane.b32.xlu0 %v1813, 97
        %v2008 = vpop.permute.xlu0 %2007
        %2009 = vrot.lane.b32.xlu0 %v1814, 97
        %v2010 = vpop.permute.xlu0 %2009
        %2011 = vrot.lane.b32.xlu0 %v1815, 97
        %v2012 = vpop.permute.xlu0 %2011
        %2013 = vrot.lane.b32.xlu0 %v1816, 97
        %v2014 = vpop.permute.xlu0 %2013
        %2015 = vrot.lane.b32.xlu0 %v1817, 97
        %v2016 = vpop.permute.xlu0 %2015
        %2017 = vrot.lane.b32.xlu0 %v1818, 97
        %v2018 = vpop.permute.xlu0 %2017
        %2019 = vrot.lane.b32.xlu0 %v1819, 97
        %v2020 = vpop.permute.xlu0 %2019
        %2021 = vrot.lane.b32.xlu0 %v1820, 97
        %v2022 = vpop.permute.xlu0 %2021
        %2023 = vrot.lane.b32.xlu0 %v1821, 97
        %v2024 = vpop.permute.xlu0 %2023
        %2025 = vrot.lane.b32.xlu0 %v1822, 97
        %v2026 = vpop.permute.xlu0 %2025
        %2027 = vrot.lane.b32.xlu0 %v1823, 97
        %v2028 = vpop.permute.xlu0 %2027
        %2029 = vrot.lane.b32.xlu0 %v1824, 97
        %v2030 = vpop.permute.xlu0 %2029
        %2031 = vrot.lane.b32.xlu0 %v1825, 97
        %v2032 = vpop.permute.xlu0 %2031
        %2033 = vrot.lane.b32.xlu0 %v1826, 97
        %v2034 = vpop.permute.xlu0 %2033
        %2035 = vrot.lane.b32.xlu0 %v1827, 97
        %v2036 = vpop.permute.xlu0 %2035
        %2037 = vrot.lane.b32.xlu0 %v1828, 97
        %v2038 = vpop.permute.xlu0 %2037
        %2039 = vrot.lane.b32.xlu0 %v1829, 97
        %v2040 = vpop.permute.xlu0 %2039
        %2041 = vrot.lane.b32.xlu0 %v1830, 97
        %v2042 = vpop.permute.xlu0 %2041
        %2043 = vrot.lane.b32.xlu0 %v1831, 97
        %v2044 = vpop.permute.xlu0 %2043
        %2045 = vrot.lane.b32.xlu0 %v1832, 97
        %v2046 = vpop.permute.xlu0 %2045
        %2047 = vrot.lane.b32.xlu0 %v1833, 97
        %v2048 = vpop.permute.xlu0 %2047
        %2049 = vrot.lane.b32.xlu0 %v1834, 97
        %v2050 = vpop.permute.xlu0 %2049
        %2051 = vrot.lane.b32.xlu0 %v1835, 97
        %v2052 = vpop.permute.xlu0 %2051
        %2053 = vrot.lane.b32.xlu0 %v1836, 97
        %v2054 = vpop.permute.xlu0 %2053
        %2055 = vrot.lane.b32.xlu0 %v1837, 97
        %v2056 = vpop.permute.xlu0 %2055
        %2057 = vrot.lane.b32.xlu0 %v1838, 97
        %v2058 = vpop.permute.xlu0 %2057
        %2059 = vrot.lane.b32.xlu0 %v1839, 97
        %v2060 = vpop.permute.xlu0 %2059
        %2061 = vrot.lane.b32.xlu0 %v1840, 97
        %v2062 = vpop.permute.xlu0 %2061
        %2063 = vrot.lane.b32.xlu0 %v1841, 97
        %v2064 = vpop.permute.xlu0 %2063
        %2065 = vrot.lane.b32.xlu0 %v1842, 97
        %v2066 = vpop.permute.xlu0 %2065
        %v2099 = vsel %vm560, -inf, %v2004
        %v2100 = vsel %vm560, -inf, %v2006
        %v2101 = vsel %vm560, -inf, %v2008
        %v2102 = vsel %vm560, -inf, %v2010
        %v2103 = vsel %vm560, -inf, %v2012
        %v2104 = vsel %vm560, -inf, %v2014
        %v2105 = vsel %vm560, -inf, %v2016
        %v2106 = vsel %vm560, -inf, %v2018
        %v2107 = vsel %vm560, -inf, %v2020
        %v2108 = vsel %vm560, -inf, %v2022
        %v2109 = vsel %vm560, -inf, %v2024
        %v2110 = vsel %vm560, -inf, %v2026
        %v2111 = vsel %vm560, -inf, %v2028
        %v2112 = vsel %vm560, -inf, %v2030
        %v2113 = vsel %vm560, -inf, %v2032
        %v2114 = vsel %vm560, -inf, %v2034
        %v2115 = vsel %vm560, -inf, %v2036
        %v2116 = vsel %vm560, -inf, %v2038
        %v2117 = vsel %vm560, -inf, %v2040
        %v2118 = vsel %vm560, -inf, %v2042
        %v2119 = vsel %vm560, -inf, %v2044
        %v2120 = vsel %vm560, -inf, %v2046
        %v2121 = vsel %vm560, -inf, %v2048
        %v2122 = vsel %vm560, -inf, %v2050
        %v2123 = vsel %vm560, -inf, %v2052
        %v2124 = vsel %vm560, -inf, %v2054
        %v2125 = vsel %vm560, -inf, %v2056
        %v2126 = vsel %vm560, -inf, %v2058
        %v2127 = vsel %vm560, -inf, %v2060
        %v2128 = vsel %vm560, -inf, %v2062
        %v2129 = vsel %vm560, -inf, %v2064
        %v2130 = vsel %vm560, -inf, %v2066
        %v2131 = vmax.f32 %v1971, %v1619
        %v2132 = vmax.f32 %v1972, %v1620
        %v2133 = vmax.f32 %v1973, %v1621
        %v2134 = vmax.f32 %v1974, %v1622
        %v2135 = vmax.f32 %v1975, %v1623
        %v2136 = vmax.f32 %v1976, %v1624
        %v2137 = vmax.f32 %v1977, %v1625
        %v2138 = vmax.f32 %v1978, %v1626
        %v2139 = vmax.f32 %v1979, %v1627
        %v2140 = vmax.f32 %v1980, %v1628
        %v2141 = vmax.f32 %v1981, %v1629
        %v2142 = vmax.f32 %v1982, %v1630
        %v2143 = vmax.f32 %v1983, %v1631
        %v2144 = vmax.f32 %v1984, %v1632
        %v2145 = vmax.f32 %v1985, %v1633
        %v2146 = vmax.f32 %v1986, %v1634
        %v2147 = vmax.f32 %v1987, %v1635
        %v2148 = vmax.f32 %v1988, %v1636
        %v2149 = vmax.f32 %v1989, %v1637
        %v2150 = vmax.f32 %v1990, %v1638
        %v2151 = vmax.f32 %v1991, %v1639
        %v2152 = vmax.f32 %v1992, %v1640
        %v2153 = vmax.f32 %v1993, %v1641
        %v2154 = vmax.f32 %v1994, %v1642
        %v2155 = vmax.f32 %v1995, %v1643
        %v2156 = vmax.f32 %v1996, %v1644
        %v2157 = vmax.f32 %v1997, %v1645
        %v2158 = vmax.f32 %v1998, %v1646
        %v2159 = vmax.f32 %v1999, %v1647
        %v2160 = vmax.f32 %v2000, %v1648
        %v2161 = vmax.f32 %v2001, %v1649
        %v2162 = vmax.f32 %v2002, %v1650
        %v2163 = vmax.f32 %v2131, %v2099
        %v2164 = vmax.f32 %v2132, %v2100
        %v2165 = vmax.f32 %v2133, %v2101
        %v2166 = vmax.f32 %v2134, %v2102
        %v2167 = vmax.f32 %v2135, %v2103
        %v2168 = vmax.f32 %v2136, %v2104
        %v2169 = vmax.f32 %v2137, %v2105
        %v2170 = vmax.f32 %v2138, %v2106
        %v2171 = vmax.f32 %v2139, %v2107
        %v2172 = vmax.f32 %v2140, %v2108
        %v2173 = vmax.f32 %v2141, %v2109
        %v2174 = vmax.f32 %v2142, %v2110
        %v2175 = vmax.f32 %v2143, %v2111
        %v2176 = vmax.f32 %v2144, %v2112
        %v2177 = vmax.f32 %v2145, %v2113
        %v2178 = vmax.f32 %v2146, %v2114
        %v2179 = vmax.f32 %v2147, %v2115
        %v2180 = vmax.f32 %v2148, %v2116
        %v2181 = vmax.f32 %v2149, %v2117
        %v2182 = vmax.f32 %v2150, %v2118
        %v2183 = vmax.f32 %v2151, %v2119
        %v2184 = vmax.f32 %v2152, %v2120
        %v2185 = vmax.f32 %v2153, %v2121
        %v2186 = vmax.f32 %v2154, %v2122
        %v2187 = vmax.f32 %v2155, %v2123
        %v2188 = vmax.f32 %v2156, %v2124
        %v2189 = vmax.f32 %v2157, %v2125
        %v2190 = vmax.f32 %v2158, %v2126
        %v2191 = vmax.f32 %v2159, %v2127
        %v2192 = vmax.f32 %v2160, %v2128
        %v2193 = vmax.f32 %v2161, %v2129
        %v2194 = vmax.f32 %v2162, %v2130
        %v2195 = vpack.c.bf16 %v2164, %v2163
        %v2196 = vpack.c.bf16 %v2166, %v2165
        %v2197 = vpack.c.bf16 %v2168, %v2167
        %v2198 = vpack.c.bf16 %v2170, %v2169
        %v2199 = vpack.c.bf16 %v2172, %v2171
        %v2200 = vpack.c.bf16 %v2174, %v2173
        %v2201 = vpack.c.bf16 %v2176, %v2175
        %v2202 = vpack.c.bf16 %v2178, %v2177
        %v2203 = vpack.c.bf16 %v2180, %v2179
        %v2204 = vpack.c.bf16 %v2182, %v2181
        %v2205 = vpack.c.bf16 %v2184, %v2183
        %v2206 = vpack.c.bf16 %v2186, %v2185
        %v2207 = vpack.c.bf16 %v2188, %v2187
        %v2208 = vpack.c.bf16 %v2190, %v2189
        %v2209 = vpack.c.bf16 %v2192, %v2191
        %v2210 = vpack.c.bf16 %v2194, %v2193
        %v2211 = vld [vmem:[%s2] sm:$0xf]
        %v2212 = vld [vmem:[%s2 + $0x4] sm:$0xf]
        %v2213 = vld [vmem:[%s2 + $0x8] sm:$0xf]
        %v2214 = vld [vmem:[%s2 + $0xc] sm:$0xf]
        %v2219 = vunpack.c.l.b16 %v2211
        %v2220 = vunpack.c.l.b16 %v2212
        %v2221 = vunpack.c.l.b16 %v2213
        %v2222 = vunpack.c.l.b16 %v2214
        %v2223 = vpack.c.b16 %v2220, %v2219
        %v2224 = vpack.c.b16 %v2222, %v2221
        %vm2227 = vcmask 261120
        %v2229 = vsel %vm2227, %v2195, 0
        %v2232 = vsel %vm2227, %v2196, 0
        %v2235 = vsel %vm2227, %v2197, 0
        %v2238 = vsel %vm2227, %v2198, 0
        %v2241 = vsel %vm2227, %v2199, 0
        %v2244 = vsel %vm2227, %v2200, 0
        %v2247 = vsel %vm2227, %v2201, 0
        %v2250 = vsel %vm2227, %v2202, 0
        %v2253 = vsel %vm2227, %v2203, 0
        %v2256 = vsel %vm2227, %v2204, 0
        %v2259 = vsel %vm2227, %v2205, 0
        %v2262 = vsel %vm2227, %v2206, 0
        %v2265 = vsel %vm2227, %v2207, 0
        %v2268 = vsel %vm2227, %v2208, 0
        %v2271 = vsel %vm2227, %v2209, 0
        %v2274 = vsel %vm2227, %v2210, 0
        %2276 = vmatprep.subr.bf16.mxu0 0
        %2277 = vmatpush1.bf16.msra.mxu0 0
        %2278 = vmatprep.subr.bf16.mxu0 0
        %2279 = vmatpush1.bf16.msra.mxu0 0
        %2280 = vmatprep.subr.bf16.mxu0 0
        %2281 = vmatpush1.bf16.msra.mxu0 0
        %2282 = vmatprep.subr.bf16.mxu0 0
        %2283 = vmatpush1.bf16.msra.mxu0 0
        %2284 = vmatprep.subr.bf16.mxu0 0
        %2285 = vmatpush1.bf16.msra.mxu0 0
        %2286 = vmatprep.subr.bf16.mxu0 0
        %2287 = vmatpush1.bf16.msra.mxu0 0
        %2288 = vmatprep.subr.bf16.mxu0 0
        %2289 = vmatpush1.bf16.msra.mxu0 %v2224
        %2290 = vmatprep.subr.bf16.mxu0 0
        %2291 = vmatpush1.bf16.msra.mxu0 %v2223
        %2292 = vmatprep.subr.bf16.mxu0 0
        %2293 = vmatpush2.bf16.msra.mxu0 0
        %2294 = vmatprep.subr.bf16.mxu0 0
        %2295 = vmatpush2.bf16.msra.mxu0 0
        %2296 = vmatprep.subr.bf16.mxu0 0
        %2297 = vmatpush2.bf16.msra.mxu0 0
        %2298 = vmatprep.subr.bf16.mxu0 0
        %2299 = vmatpush2.bf16.msra.mxu0 0
        %2300 = vmatprep.subr.bf16.mxu0 0
        %2301 = vmatpush2.bf16.msra.mxu0 0
        %2302 = vmatprep.subr.bf16.mxu0 0
        %2303 = vmatpush2.bf16.msra.mxu0 0
        %2304 = vmatprep.subr.bf16.mxu0 0
        %2305 = vmatpush2.bf16.msra.mxu0 0
        %2306 = vmatprep.subr.bf16.mxu0 0
        %2307 = vmatpush2.bf16.msra.mxu0 0
        %2308 = vmatprep.mubr.bf16.mxu0 0
        %2309 = vmatmul.mubr.bf16.gmra.mxu0 %v2229
        %v2310 = vpop.f32.mrf.mxu0
        %v2311 = vadd.f32 0.0, %v2310
        %v2312 = vpop.f32.mrf.mxu0
        %v2313 = vpop.f32.mrf.mxu0
        %v2314 = vadd.f32 0.0, %v2313
        %v2315 = vpop.f32.mrf.mxu0
        %2316 = vmatprep.mubr.bf16.mxu0 0
        %2317 = vmatmul.mubr.bf16.gmra.mxu0 %v2232
        %v2318 = vpop.f32.mrf.mxu0
        %v2319 = vadd.f32 0.0, %v2318
        %v2320 = vpop.f32.mrf.mxu0
        %v2321 = vpop.f32.mrf.mxu0
        %v2322 = vadd.f32 0.0, %v2321
        %v2323 = vpop.f32.mrf.mxu0
        %2324 = vmatprep.mubr.bf16.mxu0 0
        %2325 = vmatmul.mubr.bf16.gmra.mxu0 %v2235
        %v2326 = vpop.f32.mrf.mxu0
        %v2327 = vadd.f32 0.0, %v2326
        %v2328 = vpop.f32.mrf.mxu0
        %v2329 = vpop.f32.mrf.mxu0
        %v2330 = vadd.f32 0.0, %v2329
        %v2331 = vpop.f32.mrf.mxu0
        %2332 = vmatprep.mubr.bf16.mxu0 0
        %2333 = vmatmul.mubr.bf16.gmra.mxu0 %v2238
        %v2334 = vpop.f32.mrf.mxu0
        %v2335 = vadd.f32 0.0, %v2334
        %v2336 = vpop.f32.mrf.mxu0
        %v2337 = vpop.f32.mrf.mxu0
        %v2338 = vadd.f32 0.0, %v2337
        %v2339 = vpop.f32.mrf.mxu0
        %2340 = vmatprep.mubr.bf16.mxu0 0
        %2341 = vmatmul.mubr.bf16.gmra.mxu0 %v2241
        %v2342 = vpop.f32.mrf.mxu0
        %v2343 = vadd.f32 0.0, %v2342
        %v2344 = vpop.f32.mrf.mxu0
        %v2345 = vpop.f32.mrf.mxu0
        %v2346 = vadd.f32 0.0, %v2345
        %v2347 = vpop.f32.mrf.mxu0
        %2348 = vmatprep.mubr.bf16.mxu0 0
        %2349 = vmatmul.mubr.bf16.gmra.mxu0 %v2244
        %v2350 = vpop.f32.mrf.mxu0
        %v2351 = vadd.f32 0.0, %v2350
        %v2352 = vpop.f32.mrf.mxu0
        %v2353 = vpop.f32.mrf.mxu0
        %v2354 = vadd.f32 0.0, %v2353
        %v2355 = vpop.f32.mrf.mxu0
        %2356 = vmatprep.mubr.bf16.mxu0 0
        %2357 = vmatmul.mubr.bf16.gmra.mxu0 %v2247
        %v2358 = vpop.f32.mrf.mxu0
        %v2359 = vadd.f32 0.0, %v2358
        %v2360 = vpop.f32.mrf.mxu0
        %v2361 = vpop.f32.mrf.mxu0
        %v2362 = vadd.f32 0.0, %v2361
        %v2363 = vpop.f32.mrf.mxu0
        %2364 = vmatprep.mubr.bf16.mxu0 0
        %2365 = vmatmul.mubr.bf16.gmra.mxu0 %v2250
        %v2366 = vpop.f32.mrf.mxu0
        %v2367 = vadd.f32 0.0, %v2366
        %v2368 = vpop.f32.mrf.mxu0
        %v2369 = vpop.f32.mrf.mxu0
        %v2370 = vadd.f32 0.0, %v2369
        %v2371 = vpop.f32.mrf.mxu0
        %2372 = vmatprep.mubr.bf16.mxu0 0
        %2373 = vmatmul.mubr.bf16.gmra.mxu0 %v2253
        %v2374 = vpop.f32.mrf.mxu0
        %v2375 = vadd.f32 0.0, %v2374
        %v2376 = vpop.f32.mrf.mxu0
        %v2377 = vpop.f32.mrf.mxu0
        %v2378 = vadd.f32 0.0, %v2377
        %v2379 = vpop.f32.mrf.mxu0
        %2380 = vmatprep.mubr.bf16.mxu0 0
        %2381 = vmatmul.mubr.bf16.gmra.mxu0 %v2256
        %v2382 = vpop.f32.mrf.mxu0
        %v2383 = vadd.f32 0.0, %v2382
        %v2384 = vpop.f32.mrf.mxu0
        %v2385 = vpop.f32.mrf.mxu0
        %v2386 = vadd.f32 0.0, %v2385
        %v2387 = vpop.f32.mrf.mxu0
        %2388 = vmatprep.mubr.bf16.mxu0 0
        %2389 = vmatmul.mubr.bf16.gmra.mxu0 %v2259
        %v2390 = vpop.f32.mrf.mxu0
        %v2391 = vadd.f32 0.0, %v2390
        %v2392 = vpop.f32.mrf.mxu0
        %v2393 = vpop.f32.mrf.mxu0
        %v2394 = vadd.f32 0.0, %v2393
        %v2395 = vpop.f32.mrf.mxu0
        %2396 = vmatprep.mubr.bf16.mxu0 0
        %2397 = vmatmul.mubr.bf16.gmra.mxu0 %v2262
        %v2398 = vpop.f32.mrf.mxu0
        %v2399 = vadd.f32 0.0, %v2398
        %v2400 = vpop.f32.mrf.mxu0
        %v2401 = vpop.f32.mrf.mxu0
        %v2402 = vadd.f32 0.0, %v2401
        %v2403 = vpop.f32.mrf.mxu0
        %2404 = vmatprep.mubr.bf16.mxu0 0
        %2405 = vmatmul.mubr.bf16.gmra.mxu0 %v2265
        %v2406 = vpop.f32.mrf.mxu0
        %v2407 = vadd.f32 0.0, %v2406
        %v2408 = vpop.f32.mrf.mxu0
        %v2409 = vpop.f32.mrf.mxu0
        %v2410 = vadd.f32 0.0, %v2409
        %v2411 = vpop.f32.mrf.mxu0
        %2412 = vmatprep.mubr.bf16.mxu0 0
        %2413 = vmatmul.mubr.bf16.gmra.mxu0 %v2268
        %v2414 = vpop.f32.mrf.mxu0
        %v2415 = vadd.f32 0.0, %v2414
        %v2416 = vpop.f32.mrf.mxu0
        %v2417 = vpop.f32.mrf.mxu0
        %v2418 = vadd.f32 0.0, %v2417
        %v2419 = vpop.f32.mrf.mxu0
        %2420 = vmatprep.mubr.bf16.mxu0 0
        %2421 = vmatmul.mubr.bf16.gmra.mxu0 %v2271
        %v2422 = vpop.f32.mrf.mxu0
        %v2423 = vadd.f32 0.0, %v2422
        %v2424 = vpop.f32.mrf.mxu0
        %v2425 = vpop.f32.mrf.mxu0
        %v2426 = vadd.f32 0.0, %v2425
        %v2427 = vpop.f32.mrf.mxu0
        %2428 = vmatprep.mubr.bf16.mxu0 0
        %2429 = vmatmul.mubr.bf16.gmra.mxu0 %v2274
        %v2430 = vpop.f32.mrf.mxu0
        %v2431 = vadd.f32 0.0, %v2430
        %v2432 = vpop.f32.mrf.mxu0
        %v2433 = vpop.f32.mrf.mxu0
        %v2434 = vadd.f32 0.0, %v2433
        %v2435 = vpop.f32.mrf.mxu0
        %2436 = vdwg.mxu0
        %v2437 = vlaneseq
        %v2438 = vshrl.u32 %v2437, 7
        %v2439 = vadd.s32 %v2438, 8
        %v2440 = vadd.s32 %v2438, 16
        %v2441 = vadd.s32 %v2438, 24
        %v2442 = vadd.s32 %v2438, 32
        %v2443 = vadd.s32 %v2438, 40
        %v2444 = vadd.s32 %v2438, 48
        %v2445 = vadd.s32 %v2438, 56
        %v2446 = vadd.s32 %v2438, 64
        %v2447 = vadd.s32 %v2438, 72
        %v2448 = vadd.s32 %v2438, 80
        %v2449 = vadd.s32 %v2438, 88
        %v2450 = vadd.s32 %v2438, 96
        %v2451 = vadd.s32 %v2438, 104
        %v2452 = vadd.s32 %v2438, 112
        %v2453 = vadd.s32 %v2438, 120
        %v2454 = vadd.s32 %v2438, 128
        %v2455 = vadd.s32 %v2438, 136
        %v2456 = vadd.s32 %v2438, 144
        %v2457 = vadd.s32 %v2438, 152
        %v2458 = vadd.s32 %v2438, 160
        %v2459 = vadd.s32 %v2438, 168
        %v2460 = vadd.s32 %v2438, 176
        %v2461 = vadd.s32 %v2438, 184
        %v2462 = vadd.s32 %v2438, 192
        %v2463 = vadd.s32 %v2438, 200
        %v2464 = vadd.s32 %v2438, 208
        %v2465 = vadd.s32 %v2438, 216
        %v2466 = vadd.s32 %v2438, 224
        %v2467 = vadd.s32 %v2438, 232
        %v2468 = vadd.s32 %v2438, 240
        %v2469 = vadd.s32 %v2438, 248
        %vm2470 = vcmp.lt.s32.totalorder %v2438, 0
        %v2471 = vsub.s32 0, %v2438
        %v2472 = vsel %vm2470, %v2471, %v2438
        %v2473 = vshrl.u32 %v2472, 5
        %v2474 = vand.u32 %v2472, 31
        %v2475 = vsub.s32 0, %v2474
        %v2476 = vsel %vm2470, %v2475, %v2474
        %vm2477 = vcmp.lt.s32.totalorder %v2439, 0
        %v2478 = vsub.s32 0, %v2439
        %v2479 = vsel %vm2477, %v2478, %v2439
        %v2480 = vshrl.u32 %v2479, 5
        %v2481 = vand.u32 %v2479, 31
        %v2482 = vsub.s32 0, %v2481
        %v2483 = vsel %vm2477, %v2482, %v2481
        %vm2484 = vcmp.lt.s32.totalorder %v2440, 0
        %v2485 = vsub.s32 0, %v2440
        %v2486 = vsel %vm2484, %v2485, %v2440
        %v2487 = vshrl.u32 %v2486, 5
        %v2488 = vand.u32 %v2486, 31
        %v2489 = vsub.s32 0, %v2488
        %v2490 = vsel %vm2484, %v2489, %v2488
        %vm2491 = vcmp.lt.s32.totalorder %v2441, 0
        %v2492 = vsub.s32 0, %v2441
        %v2493 = vsel %vm2491, %v2492, %v2441
        %v2494 = vshrl.u32 %v2493, 5
        %v2495 = vand.u32 %v2493, 31
        %v2496 = vsub.s32 0, %v2495
        %v2497 = vsel %vm2491, %v2496, %v2495
        %vm2498 = vcmp.lt.s32.totalorder %v2442, 0
        %v2499 = vsub.s32 0, %v2442
        %v2500 = vsel %vm2498, %v2499, %v2442
        %v2501 = vshrl.u32 %v2500, 5
        %v2502 = vand.u32 %v2500, 31
        %v2503 = vsub.s32 0, %v2502
        %v2504 = vsel %vm2498, %v2503, %v2502
        %vm2505 = vcmp.lt.s32.totalorder %v2443, 0
        %v2506 = vsub.s32 0, %v2443
        %v2507 = vsel %vm2505, %v2506, %v2443
        %v2508 = vshrl.u32 %v2507, 5
        %v2509 = vand.u32 %v2507, 31
        %v2510 = vsub.s32 0, %v2509
        %v2511 = vsel %vm2505, %v2510, %v2509
        %vm2512 = vcmp.lt.s32.totalorder %v2444, 0
        %v2513 = vsub.s32 0, %v2444
        %v2514 = vsel %vm2512, %v2513, %v2444
        %v2515 = vshrl.u32 %v2514, 5
        %v2516 = vand.u32 %v2514, 31
        %v2517 = vsub.s32 0, %v2516
        %v2518 = vsel %vm2512, %v2517, %v2516
        %vm2519 = vcmp.lt.s32.totalorder %v2445, 0
        %v2520 = vsub.s32 0, %v2445
        %v2521 = vsel %vm2519, %v2520, %v2445
        %v2522 = vshrl.u32 %v2521, 5
        %v2523 = vand.u32 %v2521, 31
        %v2524 = vsub.s32 0, %v2523
        %v2525 = vsel %vm2519, %v2524, %v2523
        %vm2526 = vcmp.lt.s32.totalorder %v2446, 0
        %v2527 = vsub.s32 0, %v2446
        %v2528 = vsel %vm2526, %v2527, %v2446
        %v2529 = vshrl.u32 %v2528, 5
        %v2530 = vand.u32 %v2528, 31
        %v2531 = vsub.s32 0, %v2530
        %v2532 = vsel %vm2526, %v2531, %v2530
        %vm2533 = vcmp.lt.s32.totalorder %v2447, 0
        %v2534 = vsub.s32 0, %v2447
        %v2535 = vsel %vm2533, %v2534, %v2447
        %v2536 = vshrl.u32 %v2535, 5
        %v2537 = vand.u32 %v2535, 31
        %v2538 = vsub.s32 0, %v2537
        %v2539 = vsel %vm2533, %v2538, %v2537
        %vm2540 = vcmp.lt.s32.totalorder %v2448, 0
        %v2541 = vsub.s32 0, %v2448
        %v2542 = vsel %vm2540, %v2541, %v2448
        %v2543 = vshrl.u32 %v2542, 5
        %v2544 = vand.u32 %v2542, 31
        %v2545 = vsub.s32 0, %v2544
        %v2546 = vsel %vm2540, %v2545, %v2544
        %vm2547 = vcmp.lt.s32.totalorder %v2449, 0
        %v2548 = vsub.s32 0, %v2449
        %v2549 = vsel %vm2547, %v2548, %v2449
        %v2550 = vshrl.u32 %v2549, 5
        %v2551 = vand.u32 %v2549, 31
        %v2552 = vsub.s32 0, %v2551
        %v2553 = vsel %vm2547, %v2552, %v2551
        %vm2554 = vcmp.lt.s32.totalorder %v2450, 0
        %v2555 = vsub.s32 0, %v2450
        %v2556 = vsel %vm2554, %v2555, %v2450
        %v2557 = vshrl.u32 %v2556, 5
        %v2558 = vand.u32 %v2556, 31
        %v2559 = vsub.s32 0, %v2558
        %v2560 = vsel %vm2554, %v2559, %v2558
        %vm2561 = vcmp.lt.s32.totalorder %v2451, 0
        %v2562 = vsub.s32 0, %v2451
        %v2563 = vsel %vm2561, %v2562, %v2451
        %v2564 = vshrl.u32 %v2563, 5
        %v2565 = vand.u32 %v2563, 31
        %v2566 = vsub.s32 0, %v2565
        %v2567 = vsel %vm2561, %v2566, %v2565
        %vm2568 = vcmp.lt.s32.totalorder %v2452, 0
        %v2569 = vsub.s32 0, %v2452
        %v2570 = vsel %vm2568, %v2569, %v2452
        %v2571 = vshrl.u32 %v2570, 5
        %v2572 = vand.u32 %v2570, 31
        %v2573 = vsub.s32 0, %v2572
        %v2574 = vsel %vm2568, %v2573, %v2572
        %vm2575 = vcmp.lt.s32.totalorder %v2453, 0
        %v2576 = vsub.s32 0, %v2453
        %v2577 = vsel %vm2575, %v2576, %v2453
        %v2578 = vshrl.u32 %v2577, 5
        %v2579 = vand.u32 %v2577, 31
        %v2580 = vsub.s32 0, %v2579
        %v2581 = vsel %vm2575, %v2580, %v2579
        %vm2582 = vcmp.lt.s32.totalorder %v2454, 0
        %v2583 = vsub.s32 0, %v2454
        %v2584 = vsel %vm2582, %v2583, %v2454
        %v2585 = vshrl.u32 %v2584, 5
        %v2586 = vand.u32 %v2584, 31
        %v2587 = vsub.s32 0, %v2586
        %v2588 = vsel %vm2582, %v2587, %v2586
        %vm2589 = vcmp.lt.s32.totalorder %v2455, 0
        %v2590 = vsub.s32 0, %v2455
        %v2591 = vsel %vm2589, %v2590, %v2455
        %v2592 = vshrl.u32 %v2591, 5
        %v2593 = vand.u32 %v2591, 31
        %v2594 = vsub.s32 0, %v2593
        %v2595 = vsel %vm2589, %v2594, %v2593
        %vm2596 = vcmp.lt.s32.totalorder %v2456, 0
        %v2597 = vsub.s32 0, %v2456
        %v2598 = vsel %vm2596, %v2597, %v2456
        %v2599 = vshrl.u32 %v2598, 5
        %v2600 = vand.u32 %v2598, 31
        %v2601 = vsub.s32 0, %v2600
        %v2602 = vsel %vm2596, %v2601, %v2600
        %vm2603 = vcmp.lt.s32.totalorder %v2457, 0
        %v2604 = vsub.s32 0, %v2457
        %v2605 = vsel %vm2603, %v2604, %v2457
        %v2606 = vshrl.u32 %v2605, 5
        %v2607 = vand.u32 %v2605, 31
        %v2608 = vsub.s32 0, %v2607
        %v2609 = vsel %vm2603, %v2608, %v2607
        %vm2610 = vcmp.lt.s32.totalorder %v2458, 0
        %v2611 = vsub.s32 0, %v2458
        %v2612 = vsel %vm2610, %v2611, %v2458
        %v2613 = vshrl.u32 %v2612, 5
        %v2614 = vand.u32 %v2612, 31
        %v2615 = vsub.s32 0, %v2614
        %v2616 = vsel %vm2610, %v2615, %v2614
        %vm2617 = vcmp.lt.s32.totalorder %v2459, 0
        %v2618 = vsub.s32 0, %v2459
        %v2619 = vsel %vm2617, %v2618, %v2459
        %v2620 = vshrl.u32 %v2619, 5
        %v2621 = vand.u32 %v2619, 31
        %v2622 = vsub.s32 0, %v2621
        %v2623 = vsel %vm2617, %v2622, %v2621
        %vm2624 = vcmp.lt.s32.totalorder %v2460, 0
        %v2625 = vsub.s32 0, %v2460
        %v2626 = vsel %vm2624, %v2625, %v2460
        %v2627 = vshrl.u32 %v2626, 5
        %v2628 = vand.u32 %v2626, 31
        %v2629 = vsub.s32 0, %v2628
        %v2630 = vsel %vm2624, %v2629, %v2628
        %vm2631 = vcmp.lt.s32.totalorder %v2461, 0
        %v2632 = vsub.s32 0, %v2461
        %v2633 = vsel %vm2631, %v2632, %v2461
        %v2634 = vshrl.u32 %v2633, 5
        %v2635 = vand.u32 %v2633, 31
        %v2636 = vsub.s32 0, %v2635
        %v2637 = vsel %vm2631, %v2636, %v2635
        %vm2638 = vcmp.lt.s32.totalorder %v2462, 0
        %v2639 = vsub.s32 0, %v2462
        %v2640 = vsel %vm2638, %v2639, %v2462
        %v2641 = vshrl.u32 %v2640, 5
        %v2642 = vand.u32 %v2640, 31
        %v2643 = vsub.s32 0, %v2642
        %v2644 = vsel %vm2638, %v2643, %v2642
        %vm2645 = vcmp.lt.s32.totalorder %v2463, 0
        %v2646 = vsub.s32 0, %v2463
        %v2647 = vsel %vm2645, %v2646, %v2463
        %v2648 = vshrl.u32 %v2647, 5
        %v2649 = vand.u32 %v2647, 31
        %v2650 = vsub.s32 0, %v2649
        %v2651 = vsel %vm2645, %v2650, %v2649
        %vm2652 = vcmp.lt.s32.totalorder %v2464, 0
        %v2653 = vsub.s32 0, %v2464
        %v2654 = vsel %vm2652, %v2653, %v2464
        %v2655 = vshrl.u32 %v2654, 5
        %v2656 = vand.u32 %v2654, 31
        %v2657 = vsub.s32 0, %v2656
        %v2658 = vsel %vm2652, %v2657, %v2656
        %vm2659 = vcmp.lt.s32.totalorder %v2465, 0
        %v2660 = vsub.s32 0, %v2465
        %v2661 = vsel %vm2659, %v2660, %v2465
        %v2662 = vshrl.u32 %v2661, 5
        %v2663 = vand.u32 %v2661, 31
        %v2664 = vsub.s32 0, %v2663
        %v2665 = vsel %vm2659, %v2664, %v2663
        %vm2666 = vcmp.lt.s32.totalorder %v2466, 0
        %v2667 = vsub.s32 0, %v2466
        %v2668 = vsel %vm2666, %v2667, %v2466
        %v2669 = vshrl.u32 %v2668, 5
        %v2670 = vand.u32 %v2668, 31
        %v2671 = vsub.s32 0, %v2670
        %v2672 = vsel %vm2666, %v2671, %v2670
        %vm2673 = vcmp.lt.s32.totalorder %v2467, 0
        %v2674 = vsub.s32 0, %v2467
        %v2675 = vsel %vm2673, %v2674, %v2467
        %v2676 = vshrl.u32 %v2675, 5
        %v2677 = vand.u32 %v2675, 31
        %v2678 = vsub.s32 0, %v2677
        %v2679 = vsel %vm2673, %v2678, %v2677
        %vm2680 = vcmp.lt.s32.totalorder %v2468, 0
        %v2681 = vsub.s32 0, %v2468
        %v2682 = vsel %vm2680, %v2681, %v2468
        %v2683 = vshrl.u32 %v2682, 5
        %v2684 = vand.u32 %v2682, 31
        %v2685 = vsub.s32 0, %v2684
        %v2686 = vsel %vm2680, %v2685, %v2684
        %vm2687 = vcmp.lt.s32.totalorder %v2469, 0
        %v2688 = vsub.s32 0, %v2469
        %v2689 = vsel %vm2687, %v2688, %v2469
        %v2690 = vshrl.u32 %v2689, 5
        %v2691 = vand.u32 %v2689, 31
        %v2692 = vsub.s32 0, %v2691
        %v2693 = vsel %vm2687, %v2692, %v2691
        %vm2694 = vcmp.ne.s32.totalorder %v2476, 0
        %vm2695 = vcmp.ne.s32.totalorder %v2483, 0
        %vm2696 = vcmp.ne.s32.totalorder %v2490, 0
        %vm2697 = vcmp.ne.s32.totalorder %v2497, 0
        %vm2698 = vcmp.ne.s32.totalorder %v2504, 0
        %vm2699 = vcmp.ne.s32.totalorder %v2511, 0
        %vm2700 = vcmp.ne.s32.totalorder %v2518, 0
        %vm2701 = vcmp.ne.s32.totalorder %v2525, 0
        %vm2702 = vcmp.ne.s32.totalorder %v2532, 0
        %vm2703 = vcmp.ne.s32.totalorder %v2539, 0
        %vm2704 = vcmp.ne.s32.totalorder %v2546, 0
        %vm2705 = vcmp.ne.s32.totalorder %v2553, 0
        %vm2706 = vcmp.ne.s32.totalorder %v2560, 0
        %vm2707 = vcmp.ne.s32.totalorder %v2567, 0
        %vm2708 = vcmp.ne.s32.totalorder %v2574, 0
        %vm2709 = vcmp.ne.s32.totalorder %v2581, 0
        %vm2710 = vcmp.ne.s32.totalorder %v2588, 0
        %vm2711 = vcmp.ne.s32.totalorder %v2595, 0
        %vm2712 = vcmp.ne.s32.totalorder %v2602, 0
        %vm2713 = vcmp.ne.s32.totalorder %v2609, 0
        %vm2714 = vcmp.ne.s32.totalorder %v2616, 0
        %vm2715 = vcmp.ne.s32.totalorder %v2623, 0
        %vm2716 = vcmp.ne.s32.totalorder %v2630, 0
        %vm2717 = vcmp.ne.s32.totalorder %v2637, 0
        %vm2718 = vcmp.ne.s32.totalorder %v2644, 0
        %vm2719 = vcmp.ne.s32.totalorder %v2651, 0
        %vm2720 = vcmp.ne.s32.totalorder %v2658, 0
        %vm2721 = vcmp.ne.s32.totalorder %v2665, 0
        %vm2722 = vcmp.ne.s32.totalorder %v2672, 0
        %vm2723 = vcmp.ne.s32.totalorder %v2679, 0
        %vm2724 = vcmp.ne.s32.totalorder %v2686, 0
        %vm2725 = vcmp.ne.s32.totalorder %v2693, 0
        %vm2726 = vcmp.lt.s32.totalorder %v2476, 0
        %vm2727 = vcmp.lt.s32.totalorder %v2483, 0
        %vm2728 = vcmp.lt.s32.totalorder %v2490, 0
        %vm2729 = vcmp.lt.s32.totalorder %v2497, 0
        %vm2730 = vcmp.lt.s32.totalorder %v2504, 0
        %vm2731 = vcmp.lt.s32.totalorder %v2511, 0
        %vm2732 = vcmp.lt.s32.totalorder %v2518, 0
        %vm2733 = vcmp.lt.s32.totalorder %v2525, 0
        %vm2734 = vcmp.lt.s32.totalorder %v2532, 0
        %vm2735 = vcmp.lt.s32.totalorder %v2539, 0
        %vm2736 = vcmp.lt.s32.totalorder %v2546, 0
        %vm2737 = vcmp.lt.s32.totalorder %v2553, 0
        %vm2738 = vcmp.lt.s32.totalorder %v2560, 0
        %vm2739 = vcmp.lt.s32.totalorder %v2567, 0
        %vm2740 = vcmp.lt.s32.totalorder %v2574, 0
        %vm2741 = vcmp.lt.s32.totalorder %v2581, 0
        %vm2742 = vcmp.lt.s32.totalorder %v2588, 0
        %vm2743 = vcmp.lt.s32.totalorder %v2595, 0
        %vm2744 = vcmp.lt.s32.totalorder %v2602, 0
        %vm2745 = vcmp.lt.s32.totalorder %v2609, 0
        %vm2746 = vcmp.lt.s32.totalorder %v2616, 0
        %vm2747 = vcmp.lt.s32.totalorder %v2623, 0
        %vm2748 = vcmp.lt.s32.totalorder %v2630, 0
        %vm2749 = vcmp.lt.s32.totalorder %v2637, 0
        %vm2750 = vcmp.lt.s32.totalorder %v2644, 0
        %vm2751 = vcmp.lt.s32.totalorder %v2651, 0
        %vm2752 = vcmp.lt.s32.totalorder %v2658, 0
        %vm2753 = vcmp.lt.s32.totalorder %v2665, 0
        %vm2754 = vcmp.lt.s32.totalorder %v2672, 0
        %vm2755 = vcmp.lt.s32.totalorder %v2679, 0
        %vm2756 = vcmp.lt.s32.totalorder %v2686, 0
        %vm2757 = vcmp.lt.s32.totalorder %v2693, 0
        %vm2758 = vmand %vm2726, %vm2694
        %vm2759 = vmand %vm2727, %vm2695
        %vm2760 = vmand %vm2728, %vm2696
        %vm2761 = vmand %vm2729, %vm2697
        %vm2762 = vmand %vm2730, %vm2698
        %vm2763 = vmand %vm2731, %vm2699
        %vm2764 = vmand %vm2732, %vm2700
        %vm2765 = vmand %vm2733, %vm2701
        %vm2766 = vmand %vm2734, %vm2702
        %vm2767 = vmand %vm2735, %vm2703
        %vm2768 = vmand %vm2736, %vm2704
        %vm2769 = vmand %vm2737, %vm2705
        %vm2770 = vmand %vm2738, %vm2706
        %vm2771 = vmand %vm2739, %vm2707
        %vm2772 = vmand %vm2740, %vm2708
        %vm2773 = vmand %vm2741, %vm2709
        %vm2774 = vmand %vm2742, %vm2710
        %vm2775 = vmand %vm2743, %vm2711
        %vm2776 = vmand %vm2744, %vm2712
        %vm2777 = vmand %vm2745, %vm2713
        %vm2778 = vmand %vm2746, %vm2714
        %vm2779 = vmand %vm2747, %vm2715
        %vm2780 = vmand %vm2748, %vm2716
        %vm2781 = vmand %vm2749, %vm2717
        %vm2782 = vmand %vm2750, %vm2718
        %vm2783 = vmand %vm2751, %vm2719
        %vm2784 = vmand %vm2752, %vm2720
        %vm2785 = vmand %vm2753, %vm2721
        %vm2786 = vmand %vm2754, %vm2722
        %vm2787 = vmand %vm2755, %vm2723
        %vm2788 = vmand %vm2756, %vm2724
        %vm2789 = vmand %vm2757, %vm2725
        %v2790 = vadd.s32 %v2476, 32
        %v2791 = vadd.s32 %v2483, 32
        %v2792 = vadd.s32 %v2490, 32
        %v2793 = vadd.s32 %v2497, 32
        %v2794 = vadd.s32 %v2504, 32
        %v2795 = vadd.s32 %v2511, 32
        %v2796 = vadd.s32 %v2518, 32
        %v2797 = vadd.s32 %v2525, 32
        %v2798 = vadd.s32 %v2532, 32
        %v2799 = vadd.s32 %v2539, 32
        %v2800 = vadd.s32 %v2546, 32
        %v2801 = vadd.s32 %v2553, 32
        %v2802 = vadd.s32 %v2560, 32
        %v2803 = vadd.s32 %v2567, 32
        %v2804 = vadd.s32 %v2574, 32
        %v2805 = vadd.s32 %v2581, 32
        %v2806 = vadd.s32 %v2588, 32
        %v2807 = vadd.s32 %v2595, 32
        %v2808 = vadd.s32 %v2602, 32
        %v2809 = vadd.s32 %v2609, 32
        %v2810 = vadd.s32 %v2616, 32
        %v2811 = vadd.s32 %v2623, 32
        %v2812 = vadd.s32 %v2630, 32
        %v2813 = vadd.s32 %v2637, 32
        %v2814 = vadd.s32 %v2644, 32
        %v2815 = vadd.s32 %v2651, 32
        %v2816 = vadd.s32 %v2658, 32
        %v2817 = vadd.s32 %v2665, 32
        %v2818 = vadd.s32 %v2672, 32
        %v2819 = vadd.s32 %v2679, 32
        %v2820 = vadd.s32 %v2686, 32
        %v2821 = vadd.s32 %v2693, 32
        %v2822 = vsel %vm2758, %v2790, %v2476
        %v2823 = vsel %vm2759, %v2791, %v2483
        %v2824 = vsel %vm2760, %v2792, %v2490
        %v2825 = vsel %vm2761, %v2793, %v2497
        %v2826 = vsel %vm2762, %v2794, %v2504
        %v2827 = vsel %vm2763, %v2795, %v2511
        %v2828 = vsel %vm2764, %v2796, %v2518
        %v2829 = vsel %vm2765, %v2797, %v2525
        %v2830 = vsel %vm2766, %v2798, %v2532
        %v2831 = vsel %vm2767, %v2799, %v2539
        %v2832 = vsel %vm2768, %v2800, %v2546
        %v2833 = vsel %vm2769, %v2801, %v2553
        %v2834 = vsel %vm2770, %v2802, %v2560
        %v2835 = vsel %vm2771, %v2803, %v2567
        %v2836 = vsel %vm2772, %v2804, %v2574
        %v2837 = vsel %vm2773, %v2805, %v2581
        %v2838 = vsel %vm2774, %v2806, %v2588
        %v2839 = vsel %vm2775, %v2807, %v2595
        %v2840 = vsel %vm2776, %v2808, %v2602
        %v2841 = vsel %vm2777, %v2809, %v2609
        %v2842 = vsel %vm2778, %v2810, %v2616
        %v2843 = vsel %vm2779, %v2811, %v2623
        %v2844 = vsel %vm2780, %v2812, %v2630
        %v2845 = vsel %vm2781, %v2813, %v2637
        %v2846 = vsel %vm2782, %v2814, %v2644
        %v2847 = vsel %vm2783, %v2815, %v2651
        %v2848 = vsel %vm2784, %v2816, %v2658
        %v2849 = vsel %vm2785, %v2817, %v2665
        %v2850 = vsel %vm2786, %v2818, %v2672
        %v2851 = vsel %vm2787, %v2819, %v2679
        %v2852 = vsel %vm2788, %v2820, %v2686
        %v2853 = vsel %vm2789, %v2821, %v2693
        %vm2854 = vcmp.eq.s32.totalorder %v2822, 0
        %vm2855 = vcmp.eq.s32.totalorder %v2823, 0
        %vm2856 = vcmp.eq.s32.totalorder %v2824, 0
        %vm2857 = vcmp.eq.s32.totalorder %v2825, 0
        %vm2858 = vcmp.eq.s32.totalorder %v2826, 0
        %vm2859 = vcmp.eq.s32.totalorder %v2827, 0
        %vm2860 = vcmp.eq.s32.totalorder %v2828, 0
        %vm2861 = vcmp.eq.s32.totalorder %v2829, 0
        %vm2862 = vcmp.eq.s32.totalorder %v2830, 0
        %vm2863 = vcmp.eq.s32.totalorder %v2831, 0
        %vm2864 = vcmp.eq.s32.totalorder %v2832, 0
        %vm2865 = vcmp.eq.s32.totalorder %v2833, 0
        %vm2866 = vcmp.eq.s32.totalorder %v2834, 0
        %vm2867 = vcmp.eq.s32.totalorder %v2835, 0
        %vm2868 = vcmp.eq.s32.totalorder %v2836, 0
        %vm2869 = vcmp.eq.s32.totalorder %v2837, 0
        %vm2870 = vcmp.eq.s32.totalorder %v2838, 0
        %vm2871 = vcmp.eq.s32.totalorder %v2839, 0
        %vm2872 = vcmp.eq.s32.totalorder %v2840, 0
        %vm2873 = vcmp.eq.s32.totalorder %v2841, 0
        %vm2874 = vcmp.eq.s32.totalorder %v2842, 0
        %vm2875 = vcmp.eq.s32.totalorder %v2843, 0
        %vm2876 = vcmp.eq.s32.totalorder %v2844, 0
        %vm2877 = vcmp.eq.s32.totalorder %v2845, 0
        %vm2878 = vcmp.eq.s32.totalorder %v2846, 0
        %vm2879 = vcmp.eq.s32.totalorder %v2847, 0
        %vm2880 = vcmp.eq.s32.totalorder %v2848, 0
        %vm2881 = vcmp.eq.s32.totalorder %v2849, 0
        %vm2882 = vcmp.eq.s32.totalorder %v2850, 0
        %vm2883 = vcmp.eq.s32.totalorder %v2851, 0
        %vm2884 = vcmp.eq.s32.totalorder %v2852, 0
        %vm2885 = vcmp.eq.s32.totalorder %v2853, 0
        %vm2886 = vcmp.eq.s32.totalorder %v2822, 31
        %vm2887 = vcmp.eq.s32.totalorder %v2823, 31
        %vm2888 = vcmp.eq.s32.totalorder %v2824, 31
        %vm2889 = vcmp.eq.s32.totalorder %v2825, 31
        %vm2890 = vcmp.eq.s32.totalorder %v2826, 31
        %vm2891 = vcmp.eq.s32.totalorder %v2827, 31
        %vm2892 = vcmp.eq.s32.totalorder %v2828, 31
        %vm2893 = vcmp.eq.s32.totalorder %v2829, 31
        %vm2894 = vcmp.eq.s32.totalorder %v2830, 31
        %vm2895 = vcmp.eq.s32.totalorder %v2831, 31
        %vm2896 = vcmp.eq.s32.totalorder %v2832, 31
        %vm2897 = vcmp.eq.s32.totalorder %v2833, 31
        %vm2898 = vcmp.eq.s32.totalorder %v2834, 31
        %vm2899 = vcmp.eq.s32.totalorder %v2835, 31
        %vm2900 = vcmp.eq.s32.totalorder %v2836, 31
        %vm2901 = vcmp.eq.s32.totalorder %v2837, 31
        %vm2902 = vcmp.eq.s32.totalorder %v2838, 31
        %vm2903 = vcmp.eq.s32.totalorder %v2839, 31
        %vm2904 = vcmp.eq.s32.totalorder %v2840, 31
        %vm2905 = vcmp.eq.s32.totalorder %v2841, 31
        %vm2906 = vcmp.eq.s32.totalorder %v2842, 31
        %vm2907 = vcmp.eq.s32.totalorder %v2843, 31
        %vm2908 = vcmp.eq.s32.totalorder %v2844, 31
        %vm2909 = vcmp.eq.s32.totalorder %v2845, 31
        %vm2910 = vcmp.eq.s32.totalorder %v2846, 31
        %vm2911 = vcmp.eq.s32.totalorder %v2847, 31
        %vm2912 = vcmp.eq.s32.totalorder %v2848, 31
        %vm2913 = vcmp.eq.s32.totalorder %v2849, 31
        %vm2914 = vcmp.eq.s32.totalorder %v2850, 31
        %vm2915 = vcmp.eq.s32.totalorder %v2851, 31
        %vm2916 = vcmp.eq.s32.totalorder %v2852, 31
        %vm2917 = vcmp.eq.s32.totalorder %v2853, 31
        %v2918 = vrot.slane %v2311, 1
        %v2919 = vrot.slane %v2314, 1
        %v2920 = vrot.slane %v2319, 1
        %v2921 = vrot.slane %v2322, 1
        %v2922 = vrot.slane %v2327, 1
        %v2923 = vrot.slane %v2330, 1
        %v2924 = vrot.slane %v2335, 1
        %v2925 = vrot.slane %v2338, 1
        %v2926 = vrot.slane %v2343, 1
        %v2927 = vrot.slane %v2346, 1
        %v2928 = vrot.slane %v2351, 1
        %v2929 = vrot.slane %v2354, 1
        %v2930 = vrot.slane %v2359, 1
        %v2931 = vrot.slane %v2362, 1
        %v2932 = vrot.slane %v2367, 1
        %v2933 = vrot.slane %v2370, 1
        %v2934 = vrot.slane %v2375, 1
        %v2935 = vrot.slane %v2378, 1
        %v2936 = vrot.slane %v2383, 1
        %v2937 = vrot.slane %v2386, 1
        %v2938 = vrot.slane %v2391, 1
        %v2939 = vrot.slane %v2394, 1
        %v2940 = vrot.slane %v2399, 1
        %v2941 = vrot.slane %v2402, 1
        %v2942 = vrot.slane %v2407, 1
        %v2943 = vrot.slane %v2410, 1
        %v2944 = vrot.slane %v2415, 1
        %v2945 = vrot.slane %v2418, 1
        %v2946 = vrot.slane %v2423, 1
        %v2947 = vrot.slane %v2426, 1
        %v2948 = vrot.slane %v2431, 1
        %v2949 = vrot.slane %v2434, 1
        %vm2950 = vcmp.lt.s32.totalorder %v2438, 7
        %v2951 = vsel %vm2950, %v2948, %v2949
        %v2952 = vsel %vm2950, %v2947, %v2948
        %v2953 = vsel %vm2950, %v2946, %v2947
        %v2954 = vsel %vm2950, %v2945, %v2946
        %v2955 = vsel %vm2950, %v2944, %v2945
        %v2956 = vsel %vm2950, %v2943, %v2944
        %v2957 = vsel %vm2950, %v2942, %v2943
        %v2958 = vsel %vm2950, %v2941, %v2942
        %v2959 = vsel %vm2950, %v2940, %v2941
        %v2960 = vsel %vm2950, %v2939, %v2940
        %v2961 = vsel %vm2950, %v2938, %v2939
        %v2962 = vsel %vm2950, %v2937, %v2938
        %v2963 = vsel %vm2950, %v2936, %v2937
        %v2964 = vsel %vm2950, %v2935, %v2936
        %v2965 = vsel %vm2950, %v2934, %v2935
        %v2966 = vsel %vm2950, %v2933, %v2934
        %v2967 = vsel %vm2950, %v2932, %v2933
        %v2968 = vsel %vm2950, %v2931, %v2932
        %v2969 = vsel %vm2950, %v2930, %v2931
        %v2970 = vsel %vm2950, %v2929, %v2930
        %v2971 = vsel %vm2950, %v2928, %v2929
        %v2972 = vsel %vm2950, %v2927, %v2928
        %v2973 = vsel %vm2950, %v2926, %v2927
        %v2974 = vsel %vm2950, %v2925, %v2926
        %v2975 = vsel %vm2950, %v2924, %v2925
        %v2976 = vsel %vm2950, %v2923, %v2924
        %v2977 = vsel %vm2950, %v2922, %v2923
        %v2978 = vsel %vm2950, %v2921, %v2922
        %v2979 = vsel %vm2950, %v2920, %v2921
        %v2980 = vsel %vm2950, %v2919, %v2920
        %v2981 = vsel %vm2950, %v2918, %v2919
        %v2982 = vsel %vm2950, %v2949, %v2918
        %v2983 = vsel %vm2886, -inf, %v2981
        %v2984 = vsel %vm2887, -inf, %v2980
        %v2985 = vsel %vm2888, -inf, %v2979
        %v2986 = vsel %vm2889, -inf, %v2978
        %v2987 = vsel %vm2890, -inf, %v2977
        %v2988 = vsel %vm2891, -inf, %v2976
        %v2989 = vsel %vm2892, -inf, %v2975
        %v2990 = vsel %vm2893, -inf, %v2974
        %v2991 = vsel %vm2894, -inf, %v2973
        %v2992 = vsel %vm2895, -inf, %v2972
        %v2993 = vsel %vm2896, -inf, %v2971
        %v2994 = vsel %vm2897, -inf, %v2970
        %v2995 = vsel %vm2898, -inf, %v2969
        %v2996 = vsel %vm2899, -inf, %v2968
        %v2997 = vsel %vm2900, -inf, %v2967
        %v2998 = vsel %vm2901, -inf, %v2966
        %v2999 = vsel %vm2902, -inf, %v2965
        %v3000 = vsel %vm2903, -inf, %v2964
        %v3001 = vsel %vm2904, -inf, %v2963
        %v3002 = vsel %vm2905, -inf, %v2962
        %v3003 = vsel %vm2906, -inf, %v2961
        %v3004 = vsel %vm2907, -inf, %v2960
        %v3005 = vsel %vm2908, -inf, %v2959
        %v3006 = vsel %vm2909, -inf, %v2958
        %v3007 = vsel %vm2910, -inf, %v2957
        %v3008 = vsel %vm2911, -inf, %v2956
        %v3009 = vsel %vm2912, -inf, %v2955
        %v3010 = vsel %vm2913, -inf, %v2954
        %v3011 = vsel %vm2914, -inf, %v2953
        %v3012 = vsel %vm2915, -inf, %v2952
        %v3013 = vsel %vm2916, -inf, %v2951
        %v3014 = vsel %vm2917, -inf, %v2982
        %v3015 = vrot.slane %v2311, 7
        %v3016 = vrot.slane %v2314, 7
        %v3017 = vrot.slane %v2319, 7
        %v3018 = vrot.slane %v2322, 7
        %v3019 = vrot.slane %v2327, 7
        %v3020 = vrot.slane %v2330, 7
        %v3021 = vrot.slane %v2335, 7
        %v3022 = vrot.slane %v2338, 7
        %v3023 = vrot.slane %v2343, 7
        %v3024 = vrot.slane %v2346, 7
        %v3025 = vrot.slane %v2351, 7
        %v3026 = vrot.slane %v2354, 7
        %v3027 = vrot.slane %v2359, 7
        %v3028 = vrot.slane %v2362, 7
        %v3029 = vrot.slane %v2367, 7
        %v3030 = vrot.slane %v2370, 7
        %v3031 = vrot.slane %v2375, 7
        %v3032 = vrot.slane %v2378, 7
        %v3033 = vrot.slane %v2383, 7
        %v3034 = vrot.slane %v2386, 7
        %v3035 = vrot.slane %v2391, 7
        %v3036 = vrot.slane %v2394, 7
        %v3037 = vrot.slane %v2399, 7
        %v3038 = vrot.slane %v2402, 7
        %v3039 = vrot.slane %v2407, 7
        %v3040 = vrot.slane %v2410, 7
        %v3041 = vrot.slane %v2415, 7
        %v3042 = vrot.slane %v2418, 7
        %v3043 = vrot.slane %v2423, 7
        %v3044 = vrot.slane %v2426, 7
        %v3045 = vrot.slane %v2431, 7
        %v3046 = vrot.slane %v2434, 7
        %vm3047 = vcmp.lt.s32.totalorder %v2438, 1
        %v3048 = vsel %vm3047, %v3045, %v3046
        %v3049 = vsel %vm3047, %v3044, %v3045
        %v3050 = vsel %vm3047, %v3043, %v3044
        %v3051 = vsel %vm3047, %v3042, %v3043
        %v3052 = vsel %vm3047, %v3041, %v3042
        %v3053 = vsel %vm3047, %v3040, %v3041
        %v3054 = vsel %vm3047, %v3039, %v3040
        %v3055 = vsel %vm3047, %v3038, %v3039
        %v3056 = vsel %vm3047, %v3037, %v3038
        %v3057 = vsel %vm3047, %v3036, %v3037
        %v3058 = vsel %vm3047, %v3035, %v3036
        %v3059 = vsel %vm3047, %v3034, %v3035
        %v3060 = vsel %vm3047, %v3033, %v3034
        %v3061 = vsel %vm3047, %v3032, %v3033
        %v3062 = vsel %vm3047, %v3031, %v3032
        %v3063 = vsel %vm3047, %v3030, %v3031
        %v3064 = vsel %vm3047, %v3029, %v3030
        %v3065 = vsel %vm3047, %v3028, %v3029
        %v3066 = vsel %vm3047, %v3027, %v3028
        %v3067 = vsel %vm3047, %v3026, %v3027
        %v3068 = vsel %vm3047, %v3025, %v3026
        %v3069 = vsel %vm3047, %v3024, %v3025
        %v3070 = vsel %vm3047, %v3023, %v3024
        %v3071 = vsel %vm3047, %v3022, %v3023
        %v3072 = vsel %vm3047, %v3021, %v3022
        %v3073 = vsel %vm3047, %v3020, %v3021
        %v3074 = vsel %vm3047, %v3019, %v3020
        %v3075 = vsel %vm3047, %v3018, %v3019
        %v3076 = vsel %vm3047, %v3017, %v3018
        %v3077 = vsel %vm3047, %v3016, %v3017
        %v3078 = vsel %vm3047, %v3015, %v3016
        %v3079 = vsel %vm3047, %v3046, %v3015
        %v3080 = vsel %vm2854, -inf, %v3079
        %v3081 = vsel %vm2855, -inf, %v3078
        %v3082 = vsel %vm2856, -inf, %v3077
        %v3083 = vsel %vm2857, -inf, %v3076
        %v3084 = vsel %vm2858, -inf, %v3075
        %v3085 = vsel %vm2859, -inf, %v3074
        %v3086 = vsel %vm2860, -inf, %v3073
        %v3087 = vsel %vm2861, -inf, %v3072
        %v3088 = vsel %vm2862, -inf, %v3071
        %v3089 = vsel %vm2863, -inf, %v3070
        %v3090 = vsel %vm2864, -inf, %v3069
        %v3091 = vsel %vm2865, -inf, %v3068
        %v3092 = vsel %vm2866, -inf, %v3067
        %v3093 = vsel %vm2867, -inf, %v3066
        %v3094 = vsel %vm2868, -inf, %v3065
        %v3095 = vsel %vm2869, -inf, %v3064
        %v3096 = vsel %vm2870, -inf, %v3063
        %v3097 = vsel %vm2871, -inf, %v3062
        %v3098 = vsel %vm2872, -inf, %v3061
        %v3099 = vsel %vm2873, -inf, %v3060
        %v3100 = vsel %vm2874, -inf, %v3059
        %v3101 = vsel %vm2875, -inf, %v3058
        %v3102 = vsel %vm2876, -inf, %v3057
        %v3103 = vsel %vm2877, -inf, %v3056
        %v3104 = vsel %vm2878, -inf, %v3055
        %v3105 = vsel %vm2879, -inf, %v3054
        %v3106 = vsel %vm2880, -inf, %v3053
        %v3107 = vsel %vm2881, -inf, %v3052
        %v3108 = vsel %vm2882, -inf, %v3051
        %v3109 = vsel %vm2883, -inf, %v3050
        %v3110 = vsel %vm2884, -inf, %v3049
        %v3111 = vsel %vm2885, -inf, %v3048
        %v3112 = vmax.f32 %v2983, %v2311
        %v3113 = vmax.f32 %v2984, %v2314
        %v3114 = vmax.f32 %v2985, %v2319
        %v3115 = vmax.f32 %v2986, %v2322
        %v3116 = vmax.f32 %v2987, %v2327
        %v3117 = vmax.f32 %v2988, %v2330
        %v3118 = vmax.f32 %v2989, %v2335
        %v3119 = vmax.f32 %v2990, %v2338
        %v3120 = vmax.f32 %v2991, %v2343
        %v3121 = vmax.f32 %v2992, %v2346
        %v3122 = vmax.f32 %v2993, %v2351
        %v3123 = vmax.f32 %v2994, %v2354
        %v3124 = vmax.f32 %v2995, %v2359
        %v3125 = vmax.f32 %v2996, %v2362
        %v3126 = vmax.f32 %v2997, %v2367
        %v3127 = vmax.f32 %v2998, %v2370
        %v3128 = vmax.f32 %v2999, %v2375
        %v3129 = vmax.f32 %v3000, %v2378
        %v3130 = vmax.f32 %v3001, %v2383
        %v3131 = vmax.f32 %v3002, %v2386
        %v3132 = vmax.f32 %v3003, %v2391
        %v3133 = vmax.f32 %v3004, %v2394
        %v3134 = vmax.f32 %v3005, %v2399
        %v3135 = vmax.f32 %v3006, %v2402
        %v3136 = vmax.f32 %v3007, %v2407
        %v3137 = vmax.f32 %v3008, %v2410
        %v3138 = vmax.f32 %v3009, %v2415
        %v3139 = vmax.f32 %v3010, %v2418
        %v3140 = vmax.f32 %v3011, %v2423
        %v3141 = vmax.f32 %v3012, %v2426
        %v3142 = vmax.f32 %v3013, %v2431
        %v3143 = vmax.f32 %v3014, %v2434
        %v3144 = vmax.f32 %v3112, %v3080
        %v3145 = vmax.f32 %v3113, %v3081
        %v3146 = vmax.f32 %v3114, %v3082
        %v3147 = vmax.f32 %v3115, %v3083
        %v3148 = vmax.f32 %v3116, %v3084
        %v3149 = vmax.f32 %v3117, %v3085
        %v3150 = vmax.f32 %v3118, %v3086
        %v3151 = vmax.f32 %v3119, %v3087
        %v3152 = vmax.f32 %v3120, %v3088
        %v3153 = vmax.f32 %v3121, %v3089
        %v3154 = vmax.f32 %v3122, %v3090
        %v3155 = vmax.f32 %v3123, %v3091
        %v3156 = vmax.f32 %v3124, %v3092
        %v3157 = vmax.f32 %v3125, %v3093
        %v3158 = vmax.f32 %v3126, %v3094
        %v3159 = vmax.f32 %v3127, %v3095
        %v3160 = vmax.f32 %v3128, %v3096
        %v3161 = vmax.f32 %v3129, %v3097
        %v3162 = vmax.f32 %v3130, %v3098
        %v3163 = vmax.f32 %v3131, %v3099
        %v3164 = vmax.f32 %v3132, %v3100
        %v3165 = vmax.f32 %v3133, %v3101
        %v3166 = vmax.f32 %v3134, %v3102
        %v3167 = vmax.f32 %v3135, %v3103
        %v3168 = vmax.f32 %v3136, %v3104
        %v3169 = vmax.f32 %v3137, %v3105
        %v3170 = vmax.f32 %v3138, %v3106
        %v3171 = vmax.f32 %v3139, %v3107
        %v3172 = vmax.f32 %v3140, %v3108
        %v3173 = vmax.f32 %v3141, %v3109
        %v3174 = vmax.f32 %v3142, %v3110
        %v3175 = vmax.f32 %v3143, %v3111
        %v3176 = vrot.slane %v3144, 1
        %v3177 = vrot.slane %v3145, 1
        %v3178 = vrot.slane %v3146, 1
        %v3179 = vrot.slane %v3147, 1
        %v3180 = vrot.slane %v3148, 1
        %v3181 = vrot.slane %v3149, 1
        %v3182 = vrot.slane %v3150, 1
        %v3183 = vrot.slane %v3151, 1
        %v3184 = vrot.slane %v3152, 1
        %v3185 = vrot.slane %v3153, 1
        %v3186 = vrot.slane %v3154, 1
        %v3187 = vrot.slane %v3155, 1
        %v3188 = vrot.slane %v3156, 1
        %v3189 = vrot.slane %v3157, 1
        %v3190 = vrot.slane %v3158, 1
        %v3191 = vrot.slane %v3159, 1
        %v3192 = vrot.slane %v3160, 1
        %v3193 = vrot.slane %v3161, 1
        %v3194 = vrot.slane %v3162, 1
        %v3195 = vrot.slane %v3163, 1
        %v3196 = vrot.slane %v3164, 1
        %v3197 = vrot.slane %v3165, 1
        %v3198 = vrot.slane %v3166, 1
        %v3199 = vrot.slane %v3167, 1
        %v3200 = vrot.slane %v3168, 1
        %v3201 = vrot.slane %v3169, 1
        %v3202 = vrot.slane %v3170, 1
        %v3203 = vrot.slane %v3171, 1
        %v3204 = vrot.slane %v3172, 1
        %v3205 = vrot.slane %v3173, 1
        %v3206 = vrot.slane %v3174, 1
        %v3207 = vrot.slane %v3175, 1
        %v3208 = vsel %vm2950, %v3206, %v3207
        %v3209 = vsel %vm2950, %v3205, %v3206
        %v3210 = vsel %vm2950, %v3204, %v3205
        %v3211 = vsel %vm2950, %v3203, %v3204
        %v3212 = vsel %vm2950, %v3202, %v3203
        %v3213 = vsel %vm2950, %v3201, %v3202
        %v3214 = vsel %vm2950, %v3200, %v3201
        %v3215 = vsel %vm2950, %v3199, %v3200
        %v3216 = vsel %vm2950, %v3198, %v3199
        %v3217 = vsel %vm2950, %v3197, %v3198
        %v3218 = vsel %vm2950, %v3196, %v3197
        %v3219 = vsel %vm2950, %v3195, %v3196
        %v3220 = vsel %vm2950, %v3194, %v3195
        %v3221 = vsel %vm2950, %v3193, %v3194
        %v3222 = vsel %vm2950, %v3192, %v3193
        %v3223 = vsel %vm2950, %v3191, %v3192
        %v3224 = vsel %vm2950, %v3190, %v3191
        %v3225 = vsel %vm2950, %v3189, %v3190
        %v3226 = vsel %vm2950, %v3188, %v3189
        %v3227 = vsel %vm2950, %v3187, %v3188
        %v3228 = vsel %vm2950, %v3186, %v3187
        %v3229 = vsel %vm2950, %v3185, %v3186
        %v3230 = vsel %vm2950, %v3184, %v3185
        %v3231 = vsel %vm2950, %v3183, %v3184
        %v3232 = vsel %vm2950, %v3182, %v3183
        %v3233 = vsel %vm2950, %v3181, %v3182
        %v3234 = vsel %vm2950, %v3180, %v3181
        %v3235 = vsel %vm2950, %v3179, %v3180
        %v3236 = vsel %vm2950, %v3178, %v3179
        %v3237 = vsel %vm2950, %v3177, %v3178
        %v3238 = vsel %vm2950, %v3176, %v3177
        %v3239 = vsel %vm2950, %v3207, %v3176
        %v3240 = vsel %vm2886, -inf, %v3238
        %v3241 = vsel %vm2887, -inf, %v3237
        %v3242 = vsel %vm2888, -inf, %v3236
        %v3243 = vsel %vm2889, -inf, %v3235
        %v3244 = vsel %vm2890, -inf, %v3234
        %v3245 = vsel %vm2891, -inf, %v3233
        %v3246 = vsel %vm2892, -inf, %v3232
        %v3247 = vsel %vm2893, -inf, %v3231
        %v3248 = vsel %vm2894, -inf, %v3230
        %v3249 = vsel %vm2895, -inf, %v3229
        %v3250 = vsel %vm2896, -inf, %v3228
        %v3251 = vsel %vm2897, -inf, %v3227
        %v3252 = vsel %vm2898, -inf, %v3226
        %v3253 = vsel %vm2899, -inf, %v3225
        %v3254 = vsel %vm2900, -inf, %v3224
        %v3255 = vsel %vm2901, -inf, %v3223
        %v3256 = vsel %vm2902, -inf, %v3222
        %v3257 = vsel %vm2903, -inf, %v3221
        %v3258 = vsel %vm2904, -inf, %v3220
        %v3259 = vsel %vm2905, -inf, %v3219
        %v3260 = vsel %vm2906, -inf, %v3218
        %v3261 = vsel %vm2907, -inf, %v3217
        %v3262 = vsel %vm2908, -inf, %v3216
        %v3263 = vsel %vm2909, -inf, %v3215
        %v3264 = vsel %vm2910, -inf, %v3214
        %v3265 = vsel %vm2911, -inf, %v3213
        %v3266 = vsel %vm2912, -inf, %v3212
        %v3267 = vsel %vm2913, -inf, %v3211
        %v3268 = vsel %vm2914, -inf, %v3210
        %v3269 = vsel %vm2915, -inf, %v3209
        %v3270 = vsel %vm2916, -inf, %v3208
        %v3271 = vsel %vm2917, -inf, %v3239
        %v3272 = vrot.slane %v3144, 7
        %v3273 = vrot.slane %v3145, 7
        %v3274 = vrot.slane %v3146, 7
        %v3275 = vrot.slane %v3147, 7
        %v3276 = vrot.slane %v3148, 7
        %v3277 = vrot.slane %v3149, 7
        %v3278 = vrot.slane %v3150, 7
        %v3279 = vrot.slane %v3151, 7
        %v3280 = vrot.slane %v3152, 7
        %v3281 = vrot.slane %v3153, 7
        %v3282 = vrot.slane %v3154, 7
        %v3283 = vrot.slane %v3155, 7
        %v3284 = vrot.slane %v3156, 7
        %v3285 = vrot.slane %v3157, 7
        %v3286 = vrot.slane %v3158, 7
        %v3287 = vrot.slane %v3159, 7
        %v3288 = vrot.slane %v3160, 7
        %v3289 = vrot.slane %v3161, 7
        %v3290 = vrot.slane %v3162, 7
        %v3291 = vrot.slane %v3163, 7
        %v3292 = vrot.slane %v3164, 7
        %v3293 = vrot.slane %v3165, 7
        %v3294 = vrot.slane %v3166, 7
        %v3295 = vrot.slane %v3167, 7
        %v3296 = vrot.slane %v3168, 7
        %v3297 = vrot.slane %v3169, 7
        %v3298 = vrot.slane %v3170, 7
        %v3299 = vrot.slane %v3171, 7
        %v3300 = vrot.slane %v3172, 7
        %v3301 = vrot.slane %v3173, 7
        %v3302 = vrot.slane %v3174, 7
        %v3303 = vrot.slane %v3175, 7
        %v3304 = vsel %vm3047, %v3302, %v3303
        %v3305 = vsel %vm3047, %v3301, %v3302
        %v3306 = vsel %vm3047, %v3300, %v3301
        %v3307 = vsel %vm3047, %v3299, %v3300
        %v3308 = vsel %vm3047, %v3298, %v3299
        %v3309 = vsel %vm3047, %v3297, %v3298
        %v3310 = vsel %vm3047, %v3296, %v3297
        %v3311 = vsel %vm3047, %v3295, %v3296
        %v3312 = vsel %vm3047, %v3294, %v3295
        %v3313 = vsel %vm3047, %v3293, %v3294
        %v3314 = vsel %vm3047, %v3292, %v3293
        %v3315 = vsel %vm3047, %v3291, %v3292
        %v3316 = vsel %vm3047, %v3290, %v3291
        %v3317 = vsel %vm3047, %v3289, %v3290
        %v3318 = vsel %vm3047, %v3288, %v3289
        %v3319 = vsel %vm3047, %v3287, %v3288
        %v3320 = vsel %vm3047, %v3286, %v3287
        %v3321 = vsel %vm3047, %v3285, %v3286
        %v3322 = vsel %vm3047, %v3284, %v3285
        %v3323 = vsel %vm3047, %v3283, %v3284
        %v3324 = vsel %vm3047, %v3282, %v3283
        %v3325 = vsel %vm3047, %v3281, %v3282
        %v3326 = vsel %vm3047, %v3280, %v3281
        %v3327 = vsel %vm3047, %v3279, %v3280
        %v3328 = vsel %vm3047, %v3278, %v3279
        %v3329 = vsel %vm3047, %v3277, %v3278
        %v3330 = vsel %vm3047, %v3276, %v3277
        %v3331 = vsel %vm3047, %v3275, %v3276
        %v3332 = vsel %vm3047, %v3274, %v3275
        %v3333 = vsel %vm3047, %v3273, %v3274
        %v3334 = vsel %vm3047, %v3272, %v3273
        %v3335 = vsel %vm3047, %v3303, %v3272
        %v3336 = vsel %vm2854, -inf, %v3335
        %v3337 = vsel %vm2855, -inf, %v3334
        %v3338 = vsel %vm2856, -inf, %v3333
        %v3339 = vsel %vm2857, -inf, %v3332
        %v3340 = vsel %vm2858, -inf, %v3331
        %v3341 = vsel %vm2859, -inf, %v3330
        %v3342 = vsel %vm2860, -inf, %v3329
        %v3343 = vsel %vm2861, -inf, %v3328
        %v3344 = vsel %vm2862, -inf, %v3327
        %v3345 = vsel %vm2863, -inf, %v3326
        %v3346 = vsel %vm2864, -inf, %v3325
        %v3347 = vsel %vm2865, -inf, %v3324
        %v3348 = vsel %vm2866, -inf, %v3323
        %v3349 = vsel %vm2867, -inf, %v3322
        %v3350 = vsel %vm2868, -inf, %v3321
        %v3351 = vsel %vm2869, -inf, %v3320
        %v3352 = vsel %vm2870, -inf, %v3319
        %v3353 = vsel %vm2871, -inf, %v3318
        %v3354 = vsel %vm2872, -inf, %v3317
        %v3355 = vsel %vm2873, -inf, %v3316
        %v3356 = vsel %vm2874, -inf, %v3315
        %v3357 = vsel %vm2875, -inf, %v3314
        %v3358 = vsel %vm2876, -inf, %v3313
        %v3359 = vsel %vm2877, -inf, %v3312
        %v3360 = vsel %vm2878, -inf, %v3311
        %v3361 = vsel %vm2879, -inf, %v3310
        %v3362 = vsel %vm2880, -inf, %v3309
        %v3363 = vsel %vm2881, -inf, %v3308
        %v3364 = vsel %vm2882, -inf, %v3307
        %v3365 = vsel %vm2883, -inf, %v3306
        %v3366 = vsel %vm2884, -inf, %v3305
        %v3367 = vsel %vm2885, -inf, %v3304
        %v3368 = vmax.f32 %v3240, %v3144
        %v3369 = vmax.f32 %v3241, %v3145
        %v3370 = vmax.f32 %v3242, %v3146
        %v3371 = vmax.f32 %v3243, %v3147
        %v3372 = vmax.f32 %v3244, %v3148
        %v3373 = vmax.f32 %v3245, %v3149
        %v3374 = vmax.f32 %v3246, %v3150
        %v3375 = vmax.f32 %v3247, %v3151
        %v3376 = vmax.f32 %v3248, %v3152
        %v3377 = vmax.f32 %v3249, %v3153
        %v3378 = vmax.f32 %v3250, %v3154
        %v3379 = vmax.f32 %v3251, %v3155
        %v3380 = vmax.f32 %v3252, %v3156
        %v3381 = vmax.f32 %v3253, %v3157
        %v3382 = vmax.f32 %v3254, %v3158
        %v3383 = vmax.f32 %v3255, %v3159
        %v3384 = vmax.f32 %v3256, %v3160
        %v3385 = vmax.f32 %v3257, %v3161
        %v3386 = vmax.f32 %v3258, %v3162
        %v3387 = vmax.f32 %v3259, %v3163
        %v3388 = vmax.f32 %v3260, %v3164
        %v3389 = vmax.f32 %v3261, %v3165
        %v3390 = vmax.f32 %v3262, %v3166
        %v3391 = vmax.f32 %v3263, %v3167
        %v3392 = vmax.f32 %v3264, %v3168
        %v3393 = vmax.f32 %v3265, %v3169
        %v3394 = vmax.f32 %v3266, %v3170
        %v3395 = vmax.f32 %v3267, %v3171
        %v3396 = vmax.f32 %v3268, %v3172
        %v3397 = vmax.f32 %v3269, %v3173
        %v3398 = vmax.f32 %v3270, %v3174
        %v3399 = vmax.f32 %v3271, %v3175
        %v3400 = vmax.f32 %v3368, %v3336
        %v3401 = vmax.f32 %v3369, %v3337
        %v3402 = vmax.f32 %v3370, %v3338
        %v3403 = vmax.f32 %v3371, %v3339
        %v3404 = vmax.f32 %v3372, %v3340
        %v3405 = vmax.f32 %v3373, %v3341
        %v3406 = vmax.f32 %v3374, %v3342
        %v3407 = vmax.f32 %v3375, %v3343
        %v3408 = vmax.f32 %v3376, %v3344
        %v3409 = vmax.f32 %v3377, %v3345
        %v3410 = vmax.f32 %v3378, %v3346
        %v3411 = vmax.f32 %v3379, %v3347
        %v3412 = vmax.f32 %v3380, %v3348
        %v3413 = vmax.f32 %v3381, %v3349
        %v3414 = vmax.f32 %v3382, %v3350
        %v3415 = vmax.f32 %v3383, %v3351
        %v3416 = vmax.f32 %v3384, %v3352
        %v3417 = vmax.f32 %v3385, %v3353
        %v3418 = vmax.f32 %v3386, %v3354
        %v3419 = vmax.f32 %v3387, %v3355
        %v3420 = vmax.f32 %v3388, %v3356
        %v3421 = vmax.f32 %v3389, %v3357
        %v3422 = vmax.f32 %v3390, %v3358
        %v3423 = vmax.f32 %v3391, %v3359
        %v3424 = vmax.f32 %v3392, %v3360
        %v3425 = vmax.f32 %v3393, %v3361
        %v3426 = vmax.f32 %v3394, %v3362
        %v3427 = vmax.f32 %v3395, %v3363
        %v3428 = vmax.f32 %v3396, %v3364
        %v3429 = vmax.f32 %v3397, %v3365
        %v3430 = vmax.f32 %v3398, %v3366
        %v3431 = vmax.f32 %v3399, %v3367
        %v3432 = vrot.slane %v3400, 1
        %v3433 = vrot.slane %v3401, 1
        %v3434 = vrot.slane %v3402, 1
        %v3435 = vrot.slane %v3403, 1
        %v3436 = vrot.slane %v3404, 1
        %v3437 = vrot.slane %v3405, 1
        %v3438 = vrot.slane %v3406, 1
        %v3439 = vrot.slane %v3407, 1
        %v3440 = vrot.slane %v3408, 1
        %v3441 = vrot.slane %v3409, 1
        %v3442 = vrot.slane %v3410, 1
        %v3443 = vrot.slane %v3411, 1
        %v3444 = vrot.slane %v3412, 1
        %v3445 = vrot.slane %v3413, 1
        %v3446 = vrot.slane %v3414, 1
        %v3447 = vrot.slane %v3415, 1
        %v3448 = vrot.slane %v3416, 1
        %v3449 = vrot.slane %v3417, 1
        %v3450 = vrot.slane %v3418, 1
        %v3451 = vrot.slane %v3419, 1
        %v3452 = vrot.slane %v3420, 1
        %v3453 = vrot.slane %v3421, 1
        %v3454 = vrot.slane %v3422, 1
        %v3455 = vrot.slane %v3423, 1
        %v3456 = vrot.slane %v3424, 1
        %v3457 = vrot.slane %v3425, 1
        %v3458 = vrot.slane %v3426, 1
        %v3459 = vrot.slane %v3427, 1
        %v3460 = vrot.slane %v3428, 1
        %v3461 = vrot.slane %v3429, 1
        %v3462 = vrot.slane %v3430, 1
        %v3463 = vrot.slane %v3431, 1
        %v3464 = vsel %vm2950, %v3462, %v3463
        %v3465 = vsel %vm2950, %v3461, %v3462
        %v3466 = vsel %vm2950, %v3460, %v3461
        %v3467 = vsel %vm2950, %v3459, %v3460
        %v3468 = vsel %vm2950, %v3458, %v3459
        %v3469 = vsel %vm2950, %v3457, %v3458
        %v3470 = vsel %vm2950, %v3456, %v3457
        %v3471 = vsel %vm2950, %v3455, %v3456
        %v3472 = vsel %vm2950, %v3454, %v3455
        %v3473 = vsel %vm2950, %v3453, %v3454
        %v3474 = vsel %vm2950, %v3452, %v3453
        %v3475 = vsel %vm2950, %v3451, %v3452
        %v3476 = vsel %vm2950, %v3450, %v3451
        %v3477 = vsel %vm2950, %v3449, %v3450
        %v3478 = vsel %vm2950, %v3448, %v3449
        %v3479 = vsel %vm2950, %v3447, %v3448
        %v3480 = vsel %vm2950, %v3446, %v3447
        %v3481 = vsel %vm2950, %v3445, %v3446
        %v3482 = vsel %vm2950, %v3444, %v3445
        %v3483 = vsel %vm2950, %v3443, %v3444
        %v3484 = vsel %vm2950, %v3442, %v3443
        %v3485 = vsel %vm2950, %v3441, %v3442
        %v3486 = vsel %vm2950, %v3440, %v3441
        %v3487 = vsel %vm2950, %v3439, %v3440
        %v3488 = vsel %vm2950, %v3438, %v3439
        %v3489 = vsel %vm2950, %v3437, %v3438
        %v3490 = vsel %vm2950, %v3436, %v3437
        %v3491 = vsel %vm2950, %v3435, %v3436
        %v3492 = vsel %vm2950, %v3434, %v3435
        %v3493 = vsel %vm2950, %v3433, %v3434
        %v3494 = vsel %vm2950, %v3432, %v3433
        %v3495 = vsel %vm2950, %v3463, %v3432
        %v3496 = vsel %vm2886, -inf, %v3494
        %v3497 = vsel %vm2887, -inf, %v3493
        %v3498 = vsel %vm2888, -inf, %v3492
        %v3499 = vsel %vm2889, -inf, %v3491
        %v3500 = vsel %vm2890, -inf, %v3490
        %v3501 = vsel %vm2891, -inf, %v3489
        %v3502 = vsel %vm2892, -inf, %v3488
        %v3503 = vsel %vm2893, -inf, %v3487
        %v3504 = vsel %vm2894, -inf, %v3486
        %v3505 = vsel %vm2895, -inf, %v3485
        %v3506 = vsel %vm2896, -inf, %v3484
        %v3507 = vsel %vm2897, -inf, %v3483
        %v3508 = vsel %vm2898, -inf, %v3482
        %v3509 = vsel %vm2899, -inf, %v3481
        %v3510 = vsel %vm2900, -inf, %v3480
        %v3511 = vsel %vm2901, -inf, %v3479
        %v3512 = vsel %vm2902, -inf, %v3478
        %v3513 = vsel %vm2903, -inf, %v3477
        %v3514 = vsel %vm2904, -inf, %v3476
        %v3515 = vsel %vm2905, -inf, %v3475
        %v3516 = vsel %vm2906, -inf, %v3474
        %v3517 = vsel %vm2907, -inf, %v3473
        %v3518 = vsel %vm2908, -inf, %v3472
        %v3519 = vsel %vm2909, -inf, %v3471
        %v3520 = vsel %vm2910, -inf, %v3470
        %v3521 = vsel %vm2911, -inf, %v3469
        %v3522 = vsel %vm2912, -inf, %v3468
        %v3523 = vsel %vm2913, -inf, %v3467
        %v3524 = vsel %vm2914, -inf, %v3466
        %v3525 = vsel %vm2915, -inf, %v3465
        %v3526 = vsel %vm2916, -inf, %v3464
        %v3527 = vsel %vm2917, -inf, %v3495
        %v3528 = vrot.slane %v3400, 7
        %v3529 = vrot.slane %v3401, 7
        %v3530 = vrot.slane %v3402, 7
        %v3531 = vrot.slane %v3403, 7
        %v3532 = vrot.slane %v3404, 7
        %v3533 = vrot.slane %v3405, 7
        %v3534 = vrot.slane %v3406, 7
        %v3535 = vrot.slane %v3407, 7
        %v3536 = vrot.slane %v3408, 7
        %v3537 = vrot.slane %v3409, 7
        %v3538 = vrot.slane %v3410, 7
        %v3539 = vrot.slane %v3411, 7
        %v3540 = vrot.slane %v3412, 7
        %v3541 = vrot.slane %v3413, 7
        %v3542 = vrot.slane %v3414, 7
        %v3543 = vrot.slane %v3415, 7
        %v3544 = vrot.slane %v3416, 7
        %v3545 = vrot.slane %v3417, 7
        %v3546 = vrot.slane %v3418, 7
        %v3547 = vrot.slane %v3419, 7
        %v3548 = vrot.slane %v3420, 7
        %v3549 = vrot.slane %v3421, 7
        %v3550 = vrot.slane %v3422, 7
        %v3551 = vrot.slane %v3423, 7
        %v3552 = vrot.slane %v3424, 7
        %v3553 = vrot.slane %v3425, 7
        %v3554 = vrot.slane %v3426, 7
        %v3555 = vrot.slane %v3427, 7
        %v3556 = vrot.slane %v3428, 7
        %v3557 = vrot.slane %v3429, 7
        %v3558 = vrot.slane %v3430, 7
        %v3559 = vrot.slane %v3431, 7
        %v3560 = vsel %vm3047, %v3558, %v3559
        %v3561 = vsel %vm3047, %v3557, %v3558
        %v3562 = vsel %vm3047, %v3556, %v3557
        %v3563 = vsel %vm3047, %v3555, %v3556
        %v3564 = vsel %vm3047, %v3554, %v3555
        %v3565 = vsel %vm3047, %v3553, %v3554
        %v3566 = vsel %vm3047, %v3552, %v3553
        %v3567 = vsel %vm3047, %v3551, %v3552
        %v3568 = vsel %vm3047, %v3550, %v3551
        %v3569 = vsel %vm3047, %v3549, %v3550
        %v3570 = vsel %vm3047, %v3548, %v3549
        %v3571 = vsel %vm3047, %v3547, %v3548
        %v3572 = vsel %vm3047, %v3546, %v3547
        %v3573 = vsel %vm3047, %v3545, %v3546
        %v3574 = vsel %vm3047, %v3544, %v3545
        %v3575 = vsel %vm3047, %v3543, %v3544
        %v3576 = vsel %vm3047, %v3542, %v3543
        %v3577 = vsel %vm3047, %v3541, %v3542
        %v3578 = vsel %vm3047, %v3540, %v3541
        %v3579 = vsel %vm3047, %v3539, %v3540
        %v3580 = vsel %vm3047, %v3538, %v3539
        %v3581 = vsel %vm3047, %v3537, %v3538
        %v3582 = vsel %vm3047, %v3536, %v3537
        %v3583 = vsel %vm3047, %v3535, %v3536
        %v3584 = vsel %vm3047, %v3534, %v3535
        %v3585 = vsel %vm3047, %v3533, %v3534
        %v3586 = vsel %vm3047, %v3532, %v3533
        %v3587 = vsel %vm3047, %v3531, %v3532
        %v3588 = vsel %vm3047, %v3530, %v3531
        %v3589 = vsel %vm3047, %v3529, %v3530
        %v3590 = vsel %vm3047, %v3528, %v3529
        %v3591 = vsel %vm3047, %v3559, %v3528
        %v3592 = vsel %vm2854, -inf, %v3591
        %v3593 = vsel %vm2855, -inf, %v3590
        %v3594 = vsel %vm2856, -inf, %v3589
        %v3595 = vsel %vm2857, -inf, %v3588
        %v3596 = vsel %vm2858, -inf, %v3587
        %v3597 = vsel %vm2859, -inf, %v3586
        %v3598 = vsel %vm2860, -inf, %v3585
        %v3599 = vsel %vm2861, -inf, %v3584
        %v3600 = vsel %vm2862, -inf, %v3583
        %v3601 = vsel %vm2863, -inf, %v3582
        %v3602 = vsel %vm2864, -inf, %v3581
        %v3603 = vsel %vm2865, -inf, %v3580
        %v3604 = vsel %vm2866, -inf, %v3579
        %v3605 = vsel %vm2867, -inf, %v3578
        %v3606 = vsel %vm2868, -inf, %v3577
        %v3607 = vsel %vm2869, -inf, %v3576
        %v3608 = vsel %vm2870, -inf, %v3575
        %v3609 = vsel %vm2871, -inf, %v3574
        %v3610 = vsel %vm2872, -inf, %v3573
        %v3611 = vsel %vm2873, -inf, %v3572
        %v3612 = vsel %vm2874, -inf, %v3571
        %v3613 = vsel %vm2875, -inf, %v3570
        %v3614 = vsel %vm2876, -inf, %v3569
        %v3615 = vsel %vm2877, -inf, %v3568
        %v3616 = vsel %vm2878, -inf, %v3567
        %v3617 = vsel %vm2879, -inf, %v3566
        %v3618 = vsel %vm2880, -inf, %v3565
        %v3619 = vsel %vm2881, -inf, %v3564
        %v3620 = vsel %vm2882, -inf, %v3563
        %v3621 = vsel %vm2883, -inf, %v3562
        %v3622 = vsel %vm2884, -inf, %v3561
        %v3623 = vsel %vm2885, -inf, %v3560
        %v3624 = vmax.f32 %v3496, %v3400
        %v3625 = vmax.f32 %v3497, %v3401
        %v3626 = vmax.f32 %v3498, %v3402
        %v3627 = vmax.f32 %v3499, %v3403
        %v3628 = vmax.f32 %v3500, %v3404
        %v3629 = vmax.f32 %v3501, %v3405
        %v3630 = vmax.f32 %v3502, %v3406
        %v3631 = vmax.f32 %v3503, %v3407
        %v3632 = vmax.f32 %v3504, %v3408
        %v3633 = vmax.f32 %v3505, %v3409
        %v3634 = vmax.f32 %v3506, %v3410
        %v3635 = vmax.f32 %v3507, %v3411
        %v3636 = vmax.f32 %v3508, %v3412
        %v3637 = vmax.f32 %v3509, %v3413
        %v3638 = vmax.f32 %v3510, %v3414
        %v3639 = vmax.f32 %v3511, %v3415
        %v3640 = vmax.f32 %v3512, %v3416
        %v3641 = vmax.f32 %v3513, %v3417
        %v3642 = vmax.f32 %v3514, %v3418
        %v3643 = vmax.f32 %v3515, %v3419
        %v3644 = vmax.f32 %v3516, %v3420
        %v3645 = vmax.f32 %v3517, %v3421
        %v3646 = vmax.f32 %v3518, %v3422
        %v3647 = vmax.f32 %v3519, %v3423
        %v3648 = vmax.f32 %v3520, %v3424
        %v3649 = vmax.f32 %v3521, %v3425
        %v3650 = vmax.f32 %v3522, %v3426
        %v3651 = vmax.f32 %v3523, %v3427
        %v3652 = vmax.f32 %v3524, %v3428
        %v3653 = vmax.f32 %v3525, %v3429
        %v3654 = vmax.f32 %v3526, %v3430
        %v3655 = vmax.f32 %v3527, %v3431
        %v3656 = vmax.f32 %v3624, %v3592
        %v3657 = vmax.f32 %v3625, %v3593
        %v3658 = vmax.f32 %v3626, %v3594
        %v3659 = vmax.f32 %v3627, %v3595
        %v3660 = vmax.f32 %v3628, %v3596
        %v3661 = vmax.f32 %v3629, %v3597
        %v3662 = vmax.f32 %v3630, %v3598
        %v3663 = vmax.f32 %v3631, %v3599
        %v3664 = vmax.f32 %v3632, %v3600
        %v3665 = vmax.f32 %v3633, %v3601
        %v3666 = vmax.f32 %v3634, %v3602
        %v3667 = vmax.f32 %v3635, %v3603
        %v3668 = vmax.f32 %v3636, %v3604
        %v3669 = vmax.f32 %v3637, %v3605
        %v3670 = vmax.f32 %v3638, %v3606
        %v3671 = vmax.f32 %v3639, %v3607
        %v3672 = vmax.f32 %v3640, %v3608
        %v3673 = vmax.f32 %v3641, %v3609
        %v3674 = vmax.f32 %v3642, %v3610
        %v3675 = vmax.f32 %v3643, %v3611
        %v3676 = vmax.f32 %v3644, %v3612
        %v3677 = vmax.f32 %v3645, %v3613
        %v3678 = vmax.f32 %v3646, %v3614
        %v3679 = vmax.f32 %v3647, %v3615
        %v3680 = vmax.f32 %v3648, %v3616
        %v3681 = vmax.f32 %v3649, %v3617
        %v3682 = vmax.f32 %v3650, %v3618
        %v3683 = vmax.f32 %v3651, %v3619
        %v3684 = vmax.f32 %v3652, %v3620
        %v3685 = vmax.f32 %v3653, %v3621
        %v3686 = vmax.f32 %v3654, %v3622
        %v3687 = vmax.f32 %v3655, %v3623
        %v3688 = vpack.c.bf16 %v3656, %v3656
        %v3689 = vpack.c.bf16 %v3660, %v3660
        %v3690 = vpack.c.bf16 %v3664, %v3664
        %v3691 = vpack.c.bf16 %v3668, %v3668
        %v3692 = vpack.c.bf16 %v3672, %v3672
        %v3693 = vpack.c.bf16 %v3676, %v3676
        %v3694 = vpack.c.bf16 %v3680, %v3680
        %v3695 = vpack.c.bf16 %v3684, %v3684
        %v3704 = vunpack.c.l.b16 %v3688
        %v3705 = vunpack.c.l.b16 %v3689
        %v3706 = vunpack.c.l.b16 %v3690
        %v3707 = vunpack.c.l.b16 %v3691
        %v3708 = vunpack.c.l.b16 %v3692
        %v3709 = vunpack.c.l.b16 %v3693
        %v3710 = vunpack.c.l.b16 %v3694
        %v3711 = vunpack.c.l.b16 %v3695
        %v3712 = vpack.c.b16 %v3704, %v3704
        %v3713 = vpack.c.b16 %v3705, %v3705
        %v3714 = vpack.c.b16 %v3706, %v3706
        %v3715 = vpack.c.b16 %v3707, %v3707
        %v3716 = vpack.c.b16 %v3708, %v3708
        %v3717 = vpack.c.b16 %v3709, %v3709
        %v3718 = vpack.c.b16 %v3710, %v3710
        %v3719 = vpack.c.b16 %v3711, %v3711
        %v3720 = vunpack.c.l.b16 %v3712
        %v3721 = vunpack.c.l.b16 %v3713
        %v3722 = vunpack.c.l.b16 %v3714
        %v3723 = vunpack.c.l.b16 %v3715
        %v3724 = vunpack.c.l.b16 %v3716
        %v3725 = vunpack.c.l.b16 %v3717
        %v3726 = vunpack.c.l.b16 %v3718
        %v3727 = vunpack.c.l.b16 %v3719
        %v3728 = vrot.slane %v3721, 7
        %vm3729 = vcmask 1041409
        %v3730 = vsel %vm3729, %v3728, %v3720
        %v3731 = vrot.slane %v3722, 6
        %vm3732 = vcmask 1042434
        %v3733 = vsel %vm3732, %v3731, %v3730
        %v3734 = vrot.slane %v3723, 5
        %vm3735 = vcmask 1043459
        %v3736 = vsel %vm3735, %v3734, %v3733
        %v3737 = vrot.slane %v3724, 4
        %vm3738 = vcmask 1044484
        %v3739 = vsel %vm3738, %v3737, %v3736
        %v3740 = vrot.slane %v3725, 3
        %vm3741 = vcmask 1045509
        %v3742 = vsel %vm3741, %v3740, %v3739
        %v3743 = vrot.slane %v3726, 2
        %vm3744 = vcmask 1046534
        %v3745 = vsel %vm3744, %v3743, %v3742
        %v3746 = vrot.slane %v3727, 1
        %vm3747 = vcmask 1047559
        %v3748 = vsel %vm3747, %v3746, %v3745
        %v3749 = vpack.c.b16 %v3748, %v3748
        %vm3751 = vcmask 60416
        %3752 = vst.msk [vmem:[#allocation2] sm:$0xf] %vm3751, %v3749
        %v3753 = vrot.slane %v3720, 4
        %v3754 = vrot.slane %v3721, 3
        %v3755 = vsel %vm3729, %v3754, %v3753
        %v3756 = vrot.slane %v3722, 2
        %v3757 = vsel %vm3732, %v3756, %v3755
        %v3758 = vrot.slane %v3723, 1
        %v3759 = vsel %vm3735, %v3758, %v3757
        %v3760 = vsel %vm3738, %v3724, %v3759
        %v3761 = vrot.slane %v3725, 7
        %v3762 = vsel %vm3741, %v3761, %v3760
        %v3763 = vrot.slane %v3726, 6
        %v3764 = vsel %vm3744, %v3763, %v3762
        %v3765 = vrot.slane %v3727, 5
        %v3766 = vsel %vm3747, %v3765, %v3764
        %v3767 = vpack.c.b16 %v3766, %v3766
        %3768 = vrot.lane.b32.xlu0 %v3767, 8
        %v3769 = vpop.permute.xlu0 %3768
        %vm3771 = vcmask 126016
        %3772 = vst.msk [vmem:[#allocation2] sm:$0xf] %vm3771, %v3769
        %v3773 = vpack.c.bf16 %v3657, %v3657
        %v3774 = vpack.c.bf16 %v3661, %v3661
        %v3775 = vpack.c.bf16 %v3665, %v3665
        %v3776 = vpack.c.bf16 %v3669, %v3669
        %v3777 = vpack.c.bf16 %v3673, %v3673
        %v3778 = vpack.c.bf16 %v3677, %v3677
        %v3779 = vpack.c.bf16 %v3681, %v3681
        %v3780 = vpack.c.bf16 %v3685, %v3685
        %v3789 = vunpack.c.l.b16 %v3773
        %v3790 = vunpack.c.l.b16 %v3774
        %v3791 = vunpack.c.l.b16 %v3775
        %v3792 = vunpack.c.l.b16 %v3776
        %v3793 = vunpack.c.l.b16 %v3777
        %v3794 = vunpack.c.l.b16 %v3778
        %v3795 = vunpack.c.l.b16 %v3779
        %v3796 = vunpack.c.l.b16 %v3780
        %v3797 = vpack.c.b16 %v3789, %v3789
        %v3798 = vpack.c.b16 %v3790, %v3790
        %v3799 = vpack.c.b16 %v3791, %v3791
        %v3800 = vpack.c.b16 %v3792, %v3792
        %v3801 = vpack.c.b16 %v3793, %v3793
        %v3802 = vpack.c.b16 %v3794, %v3794
        %v3803 = vpack.c.b16 %v3795, %v3795
        %v3804 = vpack.c.b16 %v3796, %v3796
        %v3805 = vunpack.c.l.b16 %v3797
        %v3806 = vunpack.c.l.b16 %v3798
        %v3807 = vunpack.c.l.b16 %v3799
        %v3808 = vunpack.c.l.b16 %v3800
        %v3809 = vunpack.c.l.b16 %v3801
        %v3810 = vunpack.c.l.b16 %v3802
        %v3811 = vunpack.c.l.b16 %v3803
        %v3812 = vunpack.c.l.b16 %v3804
        %v3813 = vrot.slane %v3806, 7
        %v3814 = vsel %vm3729, %v3813, %v3805
        %v3815 = vrot.slane %v3807, 6
        %v3816 = vsel %vm3732, %v3815, %v3814
        %v3817 = vrot.slane %v3808, 5
        %v3818 = vsel %vm3735, %v3817, %v3816
        %v3819 = vrot.slane %v3809, 4
        %v3820 = vsel %vm3738, %v3819, %v3818
        %v3821 = vrot.slane %v3810, 3
        %v3822 = vsel %vm3741, %v3821, %v3820
        %v3823 = vrot.slane %v3811, 2
        %v3824 = vsel %vm3744, %v3823, %v3822
        %v3825 = vrot.slane %v3812, 1
        %v3826 = vsel %vm3747, %v3825, %v3824
        %v3827 = vpack.c.b16 %v3826, %v3826
        %3828 = vrot.lane.b32.xlu0 %v3827, 16
        %v3829 = vpop.permute.xlu0 %3828
        %vm3831 = vcmask 191616
        %3832 = vst.msk [vmem:[#allocation2] sm:$0xf] %vm3831, %v3829
        %v3833 = vrot.slane %v3805, 4
        %v3834 = vrot.slane %v3806, 3
        %v3835 = vsel %vm3729, %v3834, %v3833
        %v3836 = vrot.slane %v3807, 2
        %v3837 = vsel %vm3732, %v3836, %v3835
        %v3838 = vrot.slane %v3808, 1
        %v3839 = vsel %vm3735, %v3838, %v3837
        %v3840 = vsel %vm3738, %v3809, %v3839
        %v3841 = vrot.slane %v3810, 7
        %v3842 = vsel %vm3741, %v3841, %v3840
        %v3843 = vrot.slane %v3811, 6
        %v3844 = vsel %vm3744, %v3843, %v3842
        %v3845 = vrot.slane %v3812, 5
        %v3846 = vsel %vm3747, %v3845, %v3844
        %v3847 = vpack.c.b16 %v3846, %v3846
        %3848 = vrot.lane.b32.xlu0 %v3847, 24
        %v3849 = vpop.permute.xlu0 %3848
        %vm3851 = vcmask 257216
        %3852 = vst.msk [vmem:[#allocation2] sm:$0xf] %vm3851, %v3849
        %v3853 = vpack.c.bf16 %v3658, %v3658
        %v3854 = vpack.c.bf16 %v3662, %v3662
        %v3855 = vpack.c.bf16 %v3666, %v3666
        %v3856 = vpack.c.bf16 %v3670, %v3670
        %v3857 = vpack.c.bf16 %v3674, %v3674
        %v3858 = vpack.c.bf16 %v3678, %v3678
        %v3859 = vpack.c.bf16 %v3682, %v3682
        %v3860 = vpack.c.bf16 %v3686, %v3686
        %v3869 = vunpack.c.l.b16 %v3853
        %v3870 = vunpack.c.l.b16 %v3854
        %v3871 = vunpack.c.l.b16 %v3855
        %v3872 = vunpack.c.l.b16 %v3856
        %v3873 = vunpack.c.l.b16 %v3857
        %v3874 = vunpack.c.l.b16 %v3858
        %v3875 = vunpack.c.l.b16 %v3859
        %v3876 = vunpack.c.l.b16 %v3860
        %v3877 = vpack.c.b16 %v3869, %v3869
        %v3878 = vpack.c.b16 %v3870, %v3870
        %v3879 = vpack.c.b16 %v3871, %v3871
        %v3880 = vpack.c.b16 %v3872, %v3872
        %v3881 = vpack.c.b16 %v3873, %v3873
        %v3882 = vpack.c.b16 %v3874, %v3874
        %v3883 = vpack.c.b16 %v3875, %v3875
        %v3884 = vpack.c.b16 %v3876, %v3876
        %v3885 = vunpack.c.l.b16 %v3877
        %v3886 = vunpack.c.l.b16 %v3878
        %v3887 = vunpack.c.l.b16 %v3879
        %v3888 = vunpack.c.l.b16 %v3880
        %v3889 = vunpack.c.l.b16 %v3881
        %v3890 = vunpack.c.l.b16 %v3882
        %v3891 = vunpack.c.l.b16 %v3883
        %v3892 = vunpack.c.l.b16 %v3884
        %v3893 = vrot.slane %v3886, 7
        %v3894 = vsel %vm3729, %v3893, %v3885
        %v3895 = vrot.slane %v3887, 6
        %v3896 = vsel %vm3732, %v3895, %v3894
        %v3897 = vrot.slane %v3888, 5
        %v3898 = vsel %vm3735, %v3897, %v3896
        %v3899 = vrot.slane %v3889, 4
        %v3900 = vsel %vm3738, %v3899, %v3898
        %v3901 = vrot.slane %v3890, 3
        %v3902 = vsel %vm3741, %v3901, %v3900
        %v3903 = vrot.slane %v3891, 2
        %v3904 = vsel %vm3744, %v3903, %v3902
        %v3905 = vrot.slane %v3892, 1
        %v3906 = vsel %vm3747, %v3905, %v3904
        %v3907 = vpack.c.b16 %v3906, %v3906
        %3908 = vrot.lane.b32.xlu0 %v3907, 32
        %v3909 = vpop.permute.xlu0 %3908
        %vm3911 = vcmask 322816
        %3912 = vst.msk [vmem:[#allocation2] sm:$0xf] %vm3911, %v3909
        %v3913 = vrot.slane %v3885, 4
        %v3914 = vrot.slane %v3886, 3
        %v3915 = vsel %vm3729, %v3914, %v3913
        %v3916 = vrot.slane %v3887, 2
        %v3917 = vsel %vm3732, %v3916, %v3915
        %v3918 = vrot.slane %v3888, 1
        %v3919 = vsel %vm3735, %v3918, %v3917
        %v3920 = vsel %vm3738, %v3889, %v3919
        %v3921 = vrot.slane %v3890, 7
        %v3922 = vsel %vm3741, %v3921, %v3920
        %v3923 = vrot.slane %v3891, 6
        %v3924 = vsel %vm3744, %v3923, %v3922
        %v3925 = vrot.slane %v3892, 5
        %v3926 = vsel %vm3747, %v3925, %v3924
        %v3927 = vpack.c.b16 %v3926, %v3926
        %3928 = vrot.lane.b32.xlu0 %v3927, 40
        %v3929 = vpop.permute.xlu0 %3928
        %vm3931 = vcmask 388416
        %3932 = vst.msk [vmem:[#allocation2] sm:$0xf] %vm3931, %v3929
        %v3933 = vpack.c.bf16 %v3659, %v3659
        %v3934 = vpack.c.bf16 %v3663, %v3663
        %v3935 = vpack.c.bf16 %v3667, %v3667
        %v3936 = vpack.c.bf16 %v3671, %v3671
        %v3937 = vpack.c.bf16 %v3675, %v3675
        %v3938 = vpack.c.bf16 %v3679, %v3679
        %v3939 = vpack.c.bf16 %v3683, %v3683
        %v3940 = vpack.c.bf16 %v3687, %v3687
        %v3949 = vunpack.c.l.b16 %v3933
        %v3950 = vunpack.c.l.b16 %v3934
        %v3951 = vunpack.c.l.b16 %v3935
        %v3952 = vunpack.c.l.b16 %v3936
        %v3953 = vunpack.c.l.b16 %v3937
        %v3954 = vunpack.c.l.b16 %v3938
        %v3955 = vunpack.c.l.b16 %v3939
        %v3956 = vunpack.c.l.b16 %v3940
        %v3957 = vpack.c.b16 %v3949, %v3949
        %v3958 = vpack.c.b16 %v3950, %v3950
        %v3959 = vpack.c.b16 %v3951, %v3951
        %v3960 = vpack.c.b16 %v3952, %v3952
        %v3961 = vpack.c.b16 %v3953, %v3953
        %v3962 = vpack.c.b16 %v3954, %v3954
        %v3963 = vpack.c.b16 %v3955, %v3955
        %v3964 = vpack.c.b16 %v3956, %v3956
        %v3965 = vunpack.c.l.b16 %v3957
        %v3966 = vunpack.c.l.b16 %v3958
        %v3967 = vunpack.c.l.b16 %v3959
        %v3968 = vunpack.c.l.b16 %v3960
        %v3969 = vunpack.c.l.b16 %v3961
        %v3970 = vunpack.c.l.b16 %v3962
        %v3971 = vunpack.c.l.b16 %v3963
        %v3972 = vunpack.c.l.b16 %v3964
        %v3973 = vrot.slane %v3966, 7
        %v3974 = vsel %vm3729, %v3973, %v3965
        %v3975 = vrot.slane %v3967, 6
        %v3976 = vsel %vm3732, %v3975, %v3974
        %v3977 = vrot.slane %v3968, 5
        %v3978 = vsel %vm3735, %v3977, %v3976
        %v3979 = vrot.slane %v3969, 4
        %v3980 = vsel %vm3738, %v3979, %v3978
        %v3981 = vrot.slane %v3970, 3
        %v3982 = vsel %vm3741, %v3981, %v3980
        %v3983 = vrot.slane %v3971, 2
        %v3984 = vsel %vm3744, %v3983, %v3982
        %v3985 = vrot.slane %v3972, 1
        %v3986 = vsel %vm3747, %v3985, %v3984
        %v3987 = vpack.c.b16 %v3986, %v3986
        %3988 = vrot.lane.b32.xlu0 %v3987, 48
        %v3989 = vpop.permute.xlu0 %3988
        %vm3991 = vcmask 454016
        %3992 = vst.msk [vmem:[#allocation2] sm:$0xf] %vm3991, %v3989
        %v3993 = vrot.slane %v3965, 4
        %v3994 = vrot.slane %v3966, 3
        %v3995 = vsel %vm3729, %v3994, %v3993
        %v3996 = vrot.slane %v3967, 2
        %v3997 = vsel %vm3732, %v3996, %v3995
        %v3998 = vrot.slane %v3968, 1
        %v3999 = vsel %vm3735, %v3998, %v3997
        %v4000 = vsel %vm3738, %v3969, %v3999
        %v4001 = vrot.slane %v3970, 7
        %v4002 = vsel %vm3741, %v4001, %v4000
        %v4003 = vrot.slane %v3971, 6
        %v4004 = vsel %vm3744, %v4003, %v4002
        %v4005 = vrot.slane %v3972, 5
        %v4006 = vsel %vm3747, %v4005, %v4004
        %v4007 = vpack.c.b16 %v4006, %v4006
        %4008 = vrot.lane.b32.xlu0 %v4007, 56
        %v4009 = vpop.permute.xlu0 %4008
        %vm4011 = vcmask 519616
        %4012 = vst.msk [vmem:[#allocation2] sm:$0xf] %vm4011, %v4009
        %v4013 = vld [vmem:[%s485] sm:$0xf]
        %v4014 = vld [vmem:[%s485 + $0x4] sm:$0xf]
        %v4015 = vld [vmem:[%s485 + $0x8] sm:$0xf]
        %v4016 = vld [vmem:[%s485 + $0xc] sm:$0xf]
        %v4017 = vld [vmem:[%s485 + $0x10] sm:$0xf]
        %v4018 = vld [vmem:[%s485 + $0x14] sm:$0xf]
        %v4019 = vld [vmem:[%s485 + $0x18] sm:$0xf]
        %v4020 = vld [vmem:[%s485 + $0x1c] sm:$0xf]
        %v4021 = vld [vmem:[%s485 + $0x20] sm:$0xf]
        %v4022 = vld [vmem:[%s485 + $0x24] sm:$0xf]
        %v4023 = vld [vmem:[%s485 + $0x28] sm:$0xf]
        %v4024 = vld [vmem:[%s485 + $0x2c] sm:$0xf]
        %v4025 = vld [vmem:[%s485 + $0x30] sm:$0xf]
        %v4026 = vld [vmem:[%s485 + $0x34] sm:$0xf]
        %v4027 = vld [vmem:[%s485 + $0x38] sm:$0xf]
        %v4028 = vld [vmem:[%s485 + $0x3c] sm:$0xf]
        %v4029 = vld [vmem:[%s485 + $0x40] sm:$0xf]
        %v4030 = vld [vmem:[%s485 + $0x44] sm:$0xf]
        %v4031 = vld [vmem:[%s485 + $0x48] sm:$0xf]
        %v4032 = vld [vmem:[%s485 + $0x4c] sm:$0xf]
        %v4033 = vld [vmem:[%s485 + $0x50] sm:$0xf]
        %v4034 = vld [vmem:[%s485 + $0x54] sm:$0xf]
        %v4035 = vld [vmem:[%s485 + $0x58] sm:$0xf]
        %v4036 = vld [vmem:[%s485 + $0x5c] sm:$0xf]
        %v4037 = vld [vmem:[%s485 + $0x60] sm:$0xf]
        %v4038 = vld [vmem:[%s485 + $0x64] sm:$0xf]
        %v4039 = vld [vmem:[%s485 + $0x68] sm:$0xf]
        %v4040 = vld [vmem:[%s485 + $0x6c] sm:$0xf]
        %v4041 = vld [vmem:[%s485 + $0x70] sm:$0xf]
        %v4042 = vld [vmem:[%s485 + $0x74] sm:$0xf]
        %v4043 = vld [vmem:[%s485 + $0x78] sm:$0xf]
        %v4044 = vld [vmem:[%s485 + $0x7c] sm:$0xf]
        %v4045 = vld [vmem:[%s485 + $0x80] sm:$0xf]
        %v4046 = vld [vmem:[%s485 + $0x84] sm:$0xf]
        %v4047 = vld [vmem:[%s485 + $0x88] sm:$0xf]
        %v4048 = vld [vmem:[%s485 + $0x8c] sm:$0xf]
        %v4049 = vld [vmem:[%s485 + $0x90] sm:$0xf]
        %v4050 = vld [vmem:[%s485 + $0x94] sm:$0xf]
        %v4051 = vld [vmem:[%s485 + $0x98] sm:$0xf]
        %v4052 = vld [vmem:[%s485 + $0x9c] sm:$0xf]
        %v4053 = vld [vmem:[%s485 + $0xa0] sm:$0xf]
        %v4054 = vld [vmem:[%s485 + $0xa4] sm:$0xf]
        %v4055 = vld [vmem:[%s485 + $0xa8] sm:$0xf]
        %v4056 = vld [vmem:[%s485 + $0xac] sm:$0xf]
        %v4057 = vld [vmem:[%s485 + $0xb0] sm:$0xf]
        %v4058 = vld [vmem:[%s485 + $0xb4] sm:$0xf]
        %v4059 = vld [vmem:[%s485 + $0xb8] sm:$0xf]
        %v4060 = vld [vmem:[%s485 + $0xbc] sm:$0xf]
        %v4061 = vld [vmem:[%s485 + $0xc0] sm:$0xf]
        %v4062 = vld [vmem:[%s485 + $0xc4] sm:$0xf]
        %v4063 = vld [vmem:[%s485 + $0xc8] sm:$0xf]
        %v4064 = vld [vmem:[%s485 + $0xcc] sm:$0xf]
        %v4065 = vld [vmem:[%s485 + $0xd0] sm:$0xf]
        %v4066 = vld [vmem:[%s485 + $0xd4] sm:$0xf]
        %v4067 = vld [vmem:[%s485 + $0xd8] sm:$0xf]
        %v4068 = vld [vmem:[%s485 + $0xdc] sm:$0xf]
        %v4069 = vld [vmem:[%s485 + $0xe0] sm:$0xf]
        %v4070 = vld [vmem:[%s485 + $0xe4] sm:$0xf]
        %v4071 = vld [vmem:[%s485 + $0xe8] sm:$0xf]
        %v4072 = vld [vmem:[%s485 + $0xec] sm:$0xf]
        %v4073 = vld [vmem:[%s485 + $0xf0] sm:$0xf]
        %v4074 = vld [vmem:[%s485 + $0xf4] sm:$0xf]
        %v4075 = vld [vmem:[%s485 + $0xf8] sm:$0xf]
        %v4076 = vld [vmem:[%s485 + $0xfc] sm:$0xf]
        %v4077 = vunpack.c.l.bf16 %v4013
        %v4078 = vunpack.c.l.bf16 %v4014
        %v4079 = vunpack.c.l.bf16 %v4015
        %v4080 = vunpack.c.l.bf16 %v4016
        %v4081 = vunpack.c.l.bf16 %v4017
        %v4082 = vunpack.c.l.bf16 %v4018
        %v4083 = vunpack.c.l.bf16 %v4019
        %v4084 = vunpack.c.l.bf16 %v4020
        %v4085 = vunpack.c.l.bf16 %v4021
        %v4086 = vunpack.c.l.bf16 %v4022
        %v4087 = vunpack.c.l.bf16 %v4023
        %v4088 = vunpack.c.l.bf16 %v4024
        %v4089 = vunpack.c.l.bf16 %v4025
        %v4090 = vunpack.c.l.bf16 %v4026
        %v4091 = vunpack.c.l.bf16 %v4027
        %v4092 = vunpack.c.l.bf16 %v4028
        %v4093 = vunpack.c.l.bf16 %v4029
        %v4094 = vunpack.c.l.bf16 %v4030
        %v4095 = vunpack.c.l.bf16 %v4031
        %v4096 = vunpack.c.l.bf16 %v4032
        %v4097 = vunpack.c.l.bf16 %v4033
        %v4098 = vunpack.c.l.bf16 %v4034
        %v4099 = vunpack.c.l.bf16 %v4035
        %v4100 = vunpack.c.l.bf16 %v4036
        %v4101 = vunpack.c.l.bf16 %v4037
        %v4102 = vunpack.c.l.bf16 %v4038
        %v4103 = vunpack.c.l.bf16 %v4039
        %v4104 = vunpack.c.l.bf16 %v4040
        %v4105 = vunpack.c.l.bf16 %v4041
        %v4106 = vunpack.c.l.bf16 %v4042
        %v4107 = vunpack.c.l.bf16 %v4043
        %v4108 = vunpack.c.l.bf16 %v4044
        %v4109 = vunpack.c.l.bf16 %v4045
        %v4110 = vunpack.c.l.bf16 %v4046
        %v4111 = vunpack.c.l.bf16 %v4047
        %v4112 = vunpack.c.l.bf16 %v4048
        %v4113 = vunpack.c.l.bf16 %v4049
        %v4114 = vunpack.c.l.bf16 %v4050
        %v4115 = vunpack.c.l.bf16 %v4051
        %v4116 = vunpack.c.l.bf16 %v4052
        %v4117 = vunpack.c.l.bf16 %v4053
        %v4118 = vunpack.c.l.bf16 %v4054
        %v4119 = vunpack.c.l.bf16 %v4055
        %v4120 = vunpack.c.l.bf16 %v4056
        %v4121 = vunpack.c.l.bf16 %v4057
        %v4122 = vunpack.c.l.bf16 %v4058
        %v4123 = vunpack.c.l.bf16 %v4059
        %v4124 = vunpack.c.l.bf16 %v4060
        %v4125 = vunpack.c.l.bf16 %v4061
        %v4126 = vunpack.c.l.bf16 %v4062
        %v4127 = vunpack.c.l.bf16 %v4063
        %v4128 = vunpack.c.l.bf16 %v4064
        %v4129 = vunpack.c.l.bf16 %v4065
        %v4130 = vunpack.c.l.bf16 %v4066
        %v4131 = vunpack.c.l.bf16 %v4067
        %v4132 = vunpack.c.l.bf16 %v4068
        %v4133 = vunpack.c.l.bf16 %v4069
        %v4134 = vunpack.c.l.bf16 %v4070
        %v4135 = vunpack.c.l.bf16 %v4071
        %v4136 = vunpack.c.l.bf16 %v4072
        %v4137 = vunpack.c.l.bf16 %v4073
        %v4138 = vunpack.c.l.bf16 %v4074
        %v4139 = vunpack.c.l.bf16 %v4075
        %v4140 = vunpack.c.l.bf16 %v4076
        %v4141 = vsel %vm2227, %v4077, 0.0
        %v4142 = vsel %vm2227, %v4078, 0.0
        %v4143 = vadd.f32 %v4141, %v4142
        %v4144 = vsel %vm2227, %v4079, 0.0
        %v4145 = vadd.f32 %v4143, %v4144
        %v4146 = vsel %vm2227, %v4080, 0.0
        %v4147 = vadd.f32 %v4145, %v4146
        %v4148 = vsel %vm2227, %v4081, 0.0
        %v4149 = vadd.f32 %v4147, %v4148
        %v4150 = vsel %vm2227, %v4082, 0.0
        %v4151 = vadd.f32 %v4149, %v4150
        %v4152 = vsel %vm2227, %v4083, 0.0
        %v4153 = vadd.f32 %v4151, %v4152
        %v4154 = vsel %vm2227, %v4084, 0.0
        %v4155 = vadd.f32 %v4153, %v4154
        %v4156 = vrot.slane %v4155, 4
        %v4157 = vadd.f32 %v4155, %v4156
        %v4158 = vrot.slane %v4157, 2
        %v4159 = vadd.f32 %v4157, %v4158
        %v4160 = vrot.slane %v4159, 1
        %v4161 = vadd.f32 %v4159, %v4160
        %v4162 = vsel %vm2227, %v4085, 0.0
        %v4163 = vsel %vm2227, %v4086, 0.0
        %v4164 = vadd.f32 %v4162, %v4163
        %v4165 = vsel %vm2227, %v4087, 0.0
        %v4166 = vadd.f32 %v4164, %v4165
        %v4167 = vsel %vm2227, %v4088, 0.0
        %v4168 = vadd.f32 %v4166, %v4167
        %v4169 = vsel %vm2227, %v4089, 0.0
        %v4170 = vadd.f32 %v4168, %v4169
        %v4171 = vsel %vm2227, %v4090, 0.0
        %v4172 = vadd.f32 %v4170, %v4171
        %v4173 = vsel %vm2227, %v4091, 0.0
        %v4174 = vadd.f32 %v4172, %v4173
        %v4175 = vsel %vm2227, %v4092, 0.0
        %v4176 = vadd.f32 %v4174, %v4175
        %v4177 = vrot.slane %v4176, 4
        %v4178 = vadd.f32 %v4176, %v4177
        %v4179 = vrot.slane %v4178, 2
        %v4180 = vadd.f32 %v4178, %v4179
        %v4181 = vrot.slane %v4180, 1
        %v4182 = vadd.f32 %v4180, %v4181
        %v4183 = vsel %vm2227, %v4093, 0.0
        %v4184 = vsel %vm2227, %v4094, 0.0
        %v4185 = vadd.f32 %v4183, %v4184
        %v4186 = vsel %vm2227, %v4095, 0.0
        %v4187 = vadd.f32 %v4185, %v4186
        %v4188 = vsel %vm2227, %v4096, 0.0
        %v4189 = vadd.f32 %v4187, %v4188
        %v4190 = vsel %vm2227, %v4097, 0.0
        %v4191 = vadd.f32 %v4189, %v4190
        %v4192 = vsel %vm2227, %v4098, 0.0
        %v4193 = vadd.f32 %v4191, %v4192
        %v4194 = vsel %vm2227, %v4099, 0.0
        %v4195 = vadd.f32 %v4193, %v4194
        %v4196 = vsel %vm2227, %v4100, 0.0
        %v4197 = vadd.f32 %v4195, %v4196
        %v4198 = vrot.slane %v4197, 4
        %v4199 = vadd.f32 %v4197, %v4198
        %v4200 = vrot.slane %v4199, 2
        %v4201 = vadd.f32 %v4199, %v4200
        %v4202 = vrot.slane %v4201, 1
        %v4203 = vadd.f32 %v4201, %v4202
        %v4204 = vsel %vm2227, %v4101, 0.0
        %v4205 = vsel %vm2227, %v4102, 0.0
        %v4206 = vadd.f32 %v4204, %v4205
        %v4207 = vsel %vm2227, %v4103, 0.0
        %v4208 = vadd.f32 %v4206, %v4207
        %v4209 = vsel %vm2227, %v4104, 0.0
        %v4210 = vadd.f32 %v4208, %v4209
        %v4211 = vsel %vm2227, %v4105, 0.0
        %v4212 = vadd.f32 %v4210, %v4211
        %v4213 = vsel %vm2227, %v4106, 0.0
        %v4214 = vadd.f32 %v4212, %v4213
        %v4215 = vsel %vm2227, %v4107, 0.0
        %v4216 = vadd.f32 %v4214, %v4215
        %v4217 = vsel %vm2227, %v4108, 0.0
        %v4218 = vadd.f32 %v4216, %v4217
        %v4219 = vrot.slane %v4218, 4
        %v4220 = vadd.f32 %v4218, %v4219
        %v4221 = vrot.slane %v4220, 2
        %v4222 = vadd.f32 %v4220, %v4221
        %v4223 = vrot.slane %v4222, 1
        %v4224 = vadd.f32 %v4222, %v4223
        %v4225 = vsel %vm2227, %v4109, 0.0
        %v4226 = vsel %vm2227, %v4110, 0.0
        %v4227 = vadd.f32 %v4225, %v4226
        %v4228 = vsel %vm2227, %v4111, 0.0
        %v4229 = vadd.f32 %v4227, %v4228
        %v4230 = vsel %vm2227, %v4112, 0.0
        %v4231 = vadd.f32 %v4229, %v4230
        %v4232 = vsel %vm2227, %v4113, 0.0
        %v4233 = vadd.f32 %v4231, %v4232
        %v4234 = vsel %vm2227, %v4114, 0.0
        %v4235 = vadd.f32 %v4233, %v4234
        %v4236 = vsel %vm2227, %v4115, 0.0
        %v4237 = vadd.f32 %v4235, %v4236
        %v4238 = vsel %vm2227, %v4116, 0.0
        %v4239 = vadd.f32 %v4237, %v4238
        %v4240 = vrot.slane %v4239, 4
        %v4241 = vadd.f32 %v4239, %v4240
        %v4242 = vrot.slane %v4241, 2
        %v4243 = vadd.f32 %v4241, %v4242
        %v4244 = vrot.slane %v4243, 1
        %v4245 = vadd.f32 %v4243, %v4244
        %v4246 = vsel %vm2227, %v4117, 0.0
        %v4247 = vsel %vm2227, %v4118, 0.0
        %v4248 = vadd.f32 %v4246, %v4247
        %v4249 = vsel %vm2227, %v4119, 0.0
        %v4250 = vadd.f32 %v4248, %v4249
        %v4251 = vsel %vm2227, %v4120, 0.0
        %v4252 = vadd.f32 %v4250, %v4251
        %v4253 = vsel %vm2227, %v4121, 0.0
        %v4254 = vadd.f32 %v4252, %v4253
        %v4255 = vsel %vm2227, %v4122, 0.0
        %v4256 = vadd.f32 %v4254, %v4255
        %v4257 = vsel %vm2227, %v4123, 0.0
        %v4258 = vadd.f32 %v4256, %v4257
        %v4259 = vsel %vm2227, %v4124, 0.0
        %v4260 = vadd.f32 %v4258, %v4259
        %v4261 = vrot.slane %v4260, 4
        %v4262 = vadd.f32 %v4260, %v4261
        %v4263 = vrot.slane %v4262, 2
        %v4264 = vadd.f32 %v4262, %v4263
        %v4265 = vrot.slane %v4264, 1
        %v4266 = vadd.f32 %v4264, %v4265
        %v4267 = vsel %vm2227, %v4125, 0.0
        %v4268 = vsel %vm2227, %v4126, 0.0
        %v4269 = vadd.f32 %v4267, %v4268
        %v4270 = vsel %vm2227, %v4127, 0.0
        %v4271 = vadd.f32 %v4269, %v4270
        %v4272 = vsel %vm2227, %v4128, 0.0
        %v4273 = vadd.f32 %v4271, %v4272
        %v4274 = vsel %vm2227, %v4129, 0.0
        %v4275 = vadd.f32 %v4273, %v4274
        %v4276 = vsel %vm2227, %v4130, 0.0
        %v4277 = vadd.f32 %v4275, %v4276
        %v4278 = vsel %vm2227, %v4131, 0.0
        %v4279 = vadd.f32 %v4277, %v4278
        %v4280 = vsel %vm2227, %v4132, 0.0
        %v4281 = vadd.f32 %v4279, %v4280
        %v4282 = vrot.slane %v4281, 4
        %v4283 = vadd.f32 %v4281, %v4282
        %v4284 = vrot.slane %v4283, 2
        %v4285 = vadd.f32 %v4283, %v4284
        %v4286 = vrot.slane %v4285, 1
        %v4287 = vadd.f32 %v4285, %v4286
        %v4288 = vsel %vm2227, %v4133, 0.0
        %v4289 = vsel %vm2227, %v4134, 0.0
        %v4290 = vadd.f32 %v4288, %v4289
        %v4291 = vsel %vm2227, %v4135, 0.0
        %v4292 = vadd.f32 %v4290, %v4291
        %v4293 = vsel %vm2227, %v4136, 0.0
        %v4294 = vadd.f32 %v4292, %v4293
        %v4295 = vsel %vm2227, %v4137, 0.0
        %v4296 = vadd.f32 %v4294, %v4295
        %v4297 = vsel %vm2227, %v4138, 0.0
        %v4298 = vadd.f32 %v4296, %v4297
        %v4299 = vsel %vm2227, %v4139, 0.0
        %v4300 = vadd.f32 %v4298, %v4299
        %v4301 = vsel %vm2227, %v4140, 0.0
        %v4302 = vadd.f32 %v4300, %v4301
        %v4303 = vrot.slane %v4302, 4
        %v4304 = vadd.f32 %v4302, %v4303
        %v4305 = vrot.slane %v4304, 2
        %v4306 = vadd.f32 %v4304, %v4305
        %v4307 = vrot.slane %v4306, 1
        %v4308 = vadd.f32 %v4306, %v4307
        %v4309 = vrcp.pop 64.0
        %v4310 = vmul.f32 %v4161, %v4309
        %v4311 = vmul.f32 %v4182, %v4309
        %v4312 = vmul.f32 %v4203, %v4309
        %v4313 = vmul.f32 %v4224, %v4309
        %v4314 = vmul.f32 %v4245, %v4309
        %v4315 = vmul.f32 %v4266, %v4309
        %v4316 = vmul.f32 %v4287, %v4309
        %v4317 = vmul.f32 %v4308, %v4309
        %v4318 = vld [vmem:[%s3] sm:$0xf]
        %v4319 = vld [vmem:[%s3 + $0x4] sm:$0xf]
        %v4320 = vld [vmem:[%s3 + $0x8] sm:$0xf]
        %v4321 = vld [vmem:[%s3 + $0xc] sm:$0xf]
        %v4322 = vpack.c.bf16 %v4310, %v4310
        %v4323 = vpack.c.bf16 %v4311, %v4311
        %v4324 = vpack.c.bf16 %v4312, %v4312
        %v4325 = vpack.c.bf16 %v4313, %v4313
        %v4326 = vpack.c.bf16 %v4314, %v4314
        %v4327 = vpack.c.bf16 %v4315, %v4315
        %v4328 = vpack.c.bf16 %v4316, %v4316
        %v4329 = vpack.c.bf16 %v4317, %v4317
        %v4330 = vld [vmem:[#allocation2] sm:$0xf]
        %v4331 = vld [vmem:[%s4] sm:$0xf]
        %v4332 = vld [vmem:[%s4 + $0x4] sm:$0xf]
        %v4333 = vld [vmem:[%s4 + $0x8] sm:$0xf]
        %v4334 = vld [vmem:[%s4 + $0xc] sm:$0xf]
        %v4335 = vld [vmem:[%s4 + $0x10] sm:$0xf]
        %v4336 = vld [vmem:[%s4 + $0x14] sm:$0xf]
        %v4337 = vld [vmem:[%s4 + $0x18] sm:$0xf]
        %v4338 = vld [vmem:[%s4 + $0x1c] sm:$0xf]
        %v4347 = vunpack.c.l.b16 %v4331
        %v4348 = vunpack.c.l.b16 %v4332
        %v4349 = vunpack.c.l.b16 %v4333
        %v4350 = vunpack.c.l.b16 %v4334
        %v4351 = vunpack.c.l.b16 %v4335
        %v4352 = vunpack.c.l.b16 %v4336
        %v4353 = vunpack.c.l.b16 %v4337
        %v4354 = vunpack.c.l.b16 %v4338
        %v4355 = vpack.c.b16 %v4348, %v4347
        %v4356 = vpack.c.b16 %v4350, %v4349
        %v4357 = vpack.c.b16 %v4352, %v4351
        %v4358 = vpack.c.b16 %v4354, %v4353
        %vm4363 = vcmask 523264
        %v4365 = vsel %vm4363, %v4330, 0
        %4367 = vmatprep.subr.bf16.mxu0 0
        %4368 = vmatpush1.bf16.msra.mxu0 0
        %4369 = vmatprep.subr.bf16.mxu0 0
        %4370 = vmatpush1.bf16.msra.mxu0 0
        %4371 = vmatprep.subr.bf16.mxu0 0
        %4372 = vmatpush1.bf16.msra.mxu0 0
        %4373 = vmatprep.subr.bf16.mxu0 0
        %4374 = vmatpush1.bf16.msra.mxu0 0
        %4375 = vmatprep.subr.bf16.mxu0 0
        %4376 = vmatpush1.bf16.msra.mxu0 %v4358
        %4377 = vmatprep.subr.bf16.mxu0 0
        %4378 = vmatpush1.bf16.msra.mxu0 %v4357
        %4379 = vmatprep.subr.bf16.mxu0 0
        %4380 = vmatpush1.bf16.msra.mxu0 %v4356
        %4381 = vmatprep.subr.bf16.mxu0 0
        %4382 = vmatpush1.bf16.msra.mxu0 %v4355
        %4383 = vmatprep.subr.bf16.mxu0 0
        %4384 = vmatpush2.bf16.msra.mxu0 0
        %4385 = vmatprep.subr.bf16.mxu0 0
        %4386 = vmatpush2.bf16.msra.mxu0 0
        %4387 = vmatprep.subr.bf16.mxu0 0
        %4388 = vmatpush2.bf16.msra.mxu0 0
        %4389 = vmatprep.subr.bf16.mxu0 0
        %4390 = vmatpush2.bf16.msra.mxu0 0
        %4391 = vmatprep.subr.bf16.mxu0 0
        %4392 = vmatpush2.bf16.msra.mxu0 0
        %4393 = vmatprep.subr.bf16.mxu0 0
        %4394 = vmatpush2.bf16.msra.mxu0 0
        %4395 = vmatprep.subr.bf16.mxu0 0
        %4396 = vmatpush2.bf16.msra.mxu0 0
        %4397 = vmatprep.subr.bf16.mxu0 0
        %4398 = vmatpush2.bf16.msra.mxu0 0
        %4399 = vmatprep.mubr.bf16.mxu0 0
        %4400 = vmatmul.mubr.bf16.gmra.mxu0 %v4365
        %v4401 = vpop.f32.mrf.mxu0
        %v4402 = vadd.f32 0.0, %v4401
        %v4403 = vpop.f32.mrf.mxu0
        %v4404 = vpop.f32.mrf.mxu0
        %v4405 = vpop.f32.mrf.mxu0
        %4406 = vdwg.mxu0
        %v4415 = vunpack.c.l.b16 %v4322
        %v4416 = vunpack.c.l.b16 %v4323
        %v4417 = vunpack.c.l.b16 %v4324
        %v4418 = vunpack.c.l.b16 %v4325
        %v4419 = vunpack.c.l.b16 %v4326
        %v4420 = vunpack.c.l.b16 %v4327
        %v4421 = vunpack.c.l.b16 %v4328
        %v4422 = vunpack.c.l.b16 %v4329
        %v4423 = vsel %vm3729, %v4416, %v4415
        %v4424 = vsel %vm3732, %v4417, %v4423
        %v4425 = vsel %vm3735, %v4418, %v4424
        %v4426 = vsel %vm3738, %v4419, %v4425
        %v4427 = vsel %vm3741, %v4420, %v4426
        %v4428 = vsel %vm3744, %v4421, %v4427
        %v4429 = vsel %vm3747, %v4422, %v4428
        %v4430 = vpack.c.b16 %v4429, %v4429
        %v4435 = vunpack.c.l.b16 %v4318
        %v4436 = vunpack.c.l.b16 %v4319
        %v4437 = vunpack.c.l.b16 %v4320
        %v4438 = vunpack.c.l.b16 %v4321
        %v4439 = vpack.c.b16 %v4436, %v4435
        %v4440 = vpack.c.b16 %v4438, %v4437
        %v4444 = vsel %vm2227, %v4430, 0
        %4446 = vmatprep.subr.bf16.mxu0 0
        %4447 = vmatpush1.bf16.msra.mxu0 0
        %4448 = vmatprep.subr.bf16.mxu0 0
        %4449 = vmatpush1.bf16.msra.mxu0 0
        %4450 = vmatprep.subr.bf16.mxu0 0
        %4451 = vmatpush1.bf16.msra.mxu0 0
        %4452 = vmatprep.subr.bf16.mxu0 0
        %4453 = vmatpush1.bf16.msra.mxu0 0
        %4454 = vmatprep.subr.bf16.mxu0 0
        %4455 = vmatpush1.bf16.msra.mxu0 0
        %4456 = vmatprep.subr.bf16.mxu0 0
        %4457 = vmatpush1.bf16.msra.mxu0 0
        %4458 = vmatprep.subr.bf16.mxu0 0
        %4459 = vmatpush1.bf16.msra.mxu0 %v4440
        %4460 = vmatprep.subr.bf16.mxu0 0
        %4461 = vmatpush1.bf16.msra.mxu0 %v4439
        %4462 = vmatprep.subr.bf16.mxu0 0
        %4463 = vmatpush2.bf16.msra.mxu0 0
        %4464 = vmatprep.subr.bf16.mxu0 0
        %4465 = vmatpush2.bf16.msra.mxu0 0
        %4466 = vmatprep.subr.bf16.mxu0 0
        %4467 = vmatpush2.bf16.msra.mxu0 0
        %4468 = vmatprep.subr.bf16.mxu0 0
        %4469 = vmatpush2.bf16.msra.mxu0 0
        %4470 = vmatprep.subr.bf16.mxu0 0
        %4471 = vmatpush2.bf16.msra.mxu0 0
        %4472 = vmatprep.subr.bf16.mxu0 0
        %4473 = vmatpush2.bf16.msra.mxu0 0
        %4474 = vmatprep.subr.bf16.mxu0 0
        %4475 = vmatpush2.bf16.msra.mxu0 0
        %4476 = vmatprep.subr.bf16.mxu0 0
        %4477 = vmatpush2.bf16.msra.mxu0 0
        %4478 = vmatprep.mubr.bf16.mxu0 0
        %4479 = vmatmul.mubr.bf16.gmra.mxu0 %v4444
        %v4480 = vpop.f32.mrf.mxu0
        %v4481 = vadd.f32 %v4402, %v4480
        %v4482 = vpop.f32.mrf.mxu0
        %v4483 = vpop.f32.mrf.mxu0
        %v4484 = vpop.f32.mrf.mxu0
        %4485 = vdwg.mxu0
        %v4486 = vld [vmem:[%s5] sm:$0xf]
        %v4487 = vld [vmem:[%s5 + $0x4] sm:$0xf]
        %v4488 = vld [vmem:[%s5 + $0x8] sm:$0xf]
        %v4489 = vld [vmem:[%s5 + $0xc] sm:$0xf]
        %v4490 = vld [vmem:[%s5 + $0x10] sm:$0xf]
        %v4491 = vld [vmem:[%s5 + $0x14] sm:$0xf]
        %v4492 = vpack.c.bf16 %v4481, %v4481
        %v4499 = vunpack.c.l.b16 %v4486
        %v4500 = vunpack.c.l.b16 %v4487
        %v4501 = vunpack.c.l.b16 %v4488
        %v4502 = vunpack.c.l.b16 %v4489
        %v4503 = vunpack.c.l.b16 %v4490
        %v4504 = vunpack.c.l.b16 %v4491
        %v4505 = vpack.c.b16 %v4500, %v4499
        %v4506 = vpack.c.b16 %v4502, %v4501
        %v4507 = vpack.c.b16 %v4504, %v4503
        %vm4511 = vcmask 392192
        %v4513 = vsel %vm4511, %v4492, 0
        %4515 = vmatprep.subr.bf16.mxu0 0
        %4516 = vmatpush1.bf16.msra.mxu0 0
        %4517 = vmatprep.subr.bf16.mxu0 0
        %4518 = vmatpush1.bf16.msra.mxu0 0
        %4519 = vmatprep.subr.bf16.mxu0 0
        %4520 = vmatpush1.bf16.msra.mxu0 0
        %4521 = vmatprep.subr.bf16.mxu0 0
        %4522 = vmatpush1.bf16.msra.mxu0 0
        %4523 = vmatprep.subr.bf16.mxu0 0
        %4524 = vmatpush1.bf16.msra.mxu0 0
        %4525 = vmatprep.subr.bf16.mxu0 0
        %4526 = vmatpush1.bf16.msra.mxu0 %v4507
        %4527 = vmatprep.subr.bf16.mxu0 0
        %4528 = vmatpush1.bf16.msra.mxu0 %v4506
        %4529 = vmatprep.subr.bf16.mxu0 0
        %4530 = vmatpush1.bf16.msra.mxu0 %v4505
        %4531 = vmatprep.subr.bf16.mxu0 0
        %4532 = vmatpush2.bf16.msra.mxu0 0
        %4533 = vmatprep.subr.bf16.mxu0 0
        %4534 = vmatpush2.bf16.msra.mxu0 0
        %4535 = vmatprep.subr.bf16.mxu0 0
        %4536 = vmatpush2.bf16.msra.mxu0 0
        %4537 = vmatprep.subr.bf16.mxu0 0
        %4538 = vmatpush2.bf16.msra.mxu0 0
        %4539 = vmatprep.subr.bf16.mxu0 0
        %4540 = vmatpush2.bf16.msra.mxu0 0
        %4541 = vmatprep.subr.bf16.mxu0 0
        %4542 = vmatpush2.bf16.msra.mxu0 0
        %4543 = vmatprep.subr.bf16.mxu0 0
        %4544 = vmatpush2.bf16.msra.mxu0 0
        %4545 = vmatprep.subr.bf16.mxu0 0
        %4546 = vmatpush2.bf16.msra.mxu0 0
        %4547 = vmatprep.mubr.bf16.mxu0 0
        %4548 = vmatmul.mubr.bf16.gmra.mxu0 %v4513
        %v4549 = vpop.f32.mrf.mxu0
        %v4550 = vadd.f32 0.0, %v4549
        %v4551 = vpop.f32.mrf.mxu0
        %v4552 = vpop.f32.mrf.mxu0
        %v4553 = vpop.f32.mrf.mxu0
        %4554 = vdwg.mxu0
        %v4555 = vmax.f32 %v4550, 0.0
        %v4556 = vld [vmem:[%s6] sm:$0xf]
        %v4557 = vld [vmem:[%s6 + $0x4] sm:$0xf]
        %v4558 = vld [vmem:[%s6 + $0x8] sm:$0xf]
        %v4559 = vld [vmem:[%s6 + $0xc] sm:$0xf]
        %v4560 = vld [vmem:[%s6 + $0x10] sm:$0xf]
        %v4561 = vld [vmem:[%s6 + $0x14] sm:$0xf]
        %v4568 = vunpack.c.l.b16 %v4556
        %v4569 = vunpack.c.l.b16 %v4557
        %v4570 = vunpack.c.l.b16 %v4558
        %v4571 = vunpack.c.l.b16 %v4559
        %v4572 = vunpack.c.l.b16 %v4560
        %v4573 = vunpack.c.l.b16 %v4561
        %v4574 = vpack.c.b16 %v4569, %v4568
        %v4575 = vpack.c.b16 %v4571, %v4570
        %v4576 = vpack.c.b16 %v4573, %v4572
        %4580 = vmatprep.subr.bf16.mxu0 0
        %4581 = vmatpush1.bf16.msra.mxu0 0
        %4582 = vmatprep.subr.bf16.mxu0 0
        %4583 = vmatpush1.bf16.msra.mxu0 0
        %4584 = vmatprep.subr.bf16.mxu0 0
        %4585 = vmatpush1.bf16.msra.mxu0 0
        %4586 = vmatprep.subr.bf16.mxu0 0
        %4587 = vmatpush1.bf16.msra.mxu0 0
        %4588 = vmatprep.subr.bf16.mxu0 0
        %4589 = vmatpush1.bf16.msra.mxu0 0
        %4590 = vmatprep.subr.bf16.mxu0 0
        %4591 = vmatpush1.bf16.msra.mxu0 %v4576
        %4592 = vmatprep.subr.bf16.mxu0 0
        %4593 = vmatpush1.bf16.msra.mxu0 %v4575
        %4594 = vmatprep.subr.bf16.mxu0 0
        %4595 = vmatpush1.bf16.msra.mxu0 %v4574
        %4596 = vmatprep.subr.bf16.mxu0 0
        %4597 = vmatpush2.bf16.msra.mxu0 0
        %4598 = vmatprep.subr.bf16.mxu0 0
        %4599 = vmatpush2.bf16.msra.mxu0 0
        %4600 = vmatprep.subr.bf16.mxu0 0
        %4601 = vmatpush2.bf16.msra.mxu0 0
        %4602 = vmatprep.subr.bf16.mxu0 0
        %4603 = vmatpush2.bf16.msra.mxu0 0
        %4604 = vmatprep.subr.bf16.mxu0 0
        %4605 = vmatpush2.bf16.msra.mxu0 0
        %4606 = vmatprep.subr.bf16.mxu0 0
        %4607 = vmatpush2.bf16.msra.mxu0 0
        %4608 = vmatprep.subr.bf16.mxu0 0
        %4609 = vmatpush2.bf16.msra.mxu0 0
        %4610 = vmatprep.subr.bf16.mxu0 0
        %4611 = vmatpush2.bf16.msra.mxu0 0
        %4612 = vmatprep.mubr.bf16.mxu0 0
        %4613 = vmatmul.mubr.bf16.gmra.mxu0 %v4513
        %v4614 = vpop.f32.mrf.mxu0
        %v4615 = vadd.f32 0.0, %v4614
        %v4616 = vpop.f32.mrf.mxu0
        %v4617 = vpop.f32.mrf.mxu0
        %v4618 = vpop.f32.mrf.mxu0
        %4619 = vdwg.mxu0
        %v4620 = vmax.f32 %v4615, 0.0
        %v4621 = vld [vmem:[%s7] sm:$0xf]
        %v4622 = vld [vmem:[%s7 + $0x4] sm:$0xf]
        %v4623 = vld [vmem:[%s7 + $0x8] sm:$0xf]
        %v4624 = vpack.c.bf16 %v4555, %v4555
        %v4628 = vunpack.c.l.b16 %v4621
        %v4629 = vunpack.c.l.b16 %v4622
        %v4630 = vunpack.c.l.b16 %v4623
        %v4631 = vpack.c.b16 %v4629, %v4628
        %v4632 = vpack.c.b16 %v4630, %v4630
        %vm4634 = vcmask 195584
        %v4636 = vsel %vm4634, %v4624, 0
        %vm4638 = vcmask 1043456
        %v4640 = vsel %vm4638, %v4632, 0
        %4642 = vmatprep.subr.bf16.mxu0 0
        %4643 = vmatpush1.bf16.msra.mxu0 0
        %4644 = vmatprep.subr.bf16.mxu0 0
        %4645 = vmatpush1.bf16.msra.mxu0 0
        %4646 = vmatprep.subr.bf16.mxu0 0
        %4647 = vmatpush1.bf16.msra.mxu0 0
        %4648 = vmatprep.subr.bf16.mxu0 0
        %4649 = vmatpush1.bf16.msra.mxu0 0
        %4650 = vmatprep.subr.bf16.mxu0 0
        %4651 = vmatpush1.bf16.msra.mxu0 0
        %4652 = vmatprep.subr.bf16.mxu0 0
        %4653 = vmatpush1.bf16.msra.mxu0 0
        %4654 = vmatprep.subr.bf16.mxu0 0
        %4655 = vmatpush1.bf16.msra.mxu0 %v4640
        %4656 = vmatprep.subr.bf16.mxu0 0
        %4657 = vmatpush1.bf16.msra.mxu0 %v4631
        %4658 = vmatprep.subr.bf16.mxu0 0
        %4659 = vmatpush2.bf16.msra.mxu0 0
        %4660 = vmatprep.subr.bf16.mxu0 0
        %4661 = vmatpush2.bf16.msra.mxu0 0
        %4662 = vmatprep.subr.bf16.mxu0 0
        %4663 = vmatpush2.bf16.msra.mxu0 0
        %4664 = vmatprep.subr.bf16.mxu0 0
        %4665 = vmatpush2.bf16.msra.mxu0 0
        %4666 = vmatprep.subr.bf16.mxu0 0
        %4667 = vmatpush2.bf16.msra.mxu0 0
        %4668 = vmatprep.subr.bf16.mxu0 0
        %4669 = vmatpush2.bf16.msra.mxu0 0
        %4670 = vmatprep.subr.bf16.mxu0 0
        %4671 = vmatpush2.bf16.msra.mxu0 0
        %4672 = vmatprep.subr.bf16.mxu0 0
        %4673 = vmatpush2.bf16.msra.mxu0 0
        %4674 = vmatprep.mubr.bf16.mxu0 0
        %4675 = vmatmul.mubr.bf16.gmra.mxu0 %v4636
        %v4676 = vpop.f32.mrf.mxu0
        %v4677 = vadd.f32 0.0, %v4676
        %v4678 = vpop.f32.mrf.mxu0
        %v4679 = vpop.f32.mrf.mxu0
        %v4680 = vpop.f32.mrf.mxu0
        %4681 = vdwg.mxu0
        %v4682 = vld [vmem:[%s8] sm:$0xf]
        %v4683 = vld [vmem:[%s8 + $0x4] sm:$0xf]
        %v4684 = vld [vmem:[%s8 + $0x8] sm:$0xf]
        %v4685 = vld [vmem:[%s9] sm:$0xf]
        %v4686 = vld [vmem:[%s9 + $0x4] sm:$0xf]
        %v4687 = vld [vmem:[%s9 + $0x8] sm:$0xf]
        %v4688 = vpack.c.bf16 %v4620, %v4620
        %v4692 = vunpack.c.l.b16 %v4685
        %v4693 = vunpack.c.l.b16 %v4686
        %v4694 = vunpack.c.l.b16 %v4687
        %v4695 = vpack.c.b16 %v4693, %v4692
        %v4696 = vpack.c.b16 %v4694, %v4694
        %v4699 = vsel %vm4634, %v4688, 0
        %v4702 = vsel %vm4638, %v4696, 0
        %4704 = vmatprep.subr.bf16.mxu0 0
        %4705 = vmatpush1.bf16.msra.mxu0 0
        %4706 = vmatprep.subr.bf16.mxu0 0
        %4707 = vmatpush1.bf16.msra.mxu0 0
        %4708 = vmatprep.subr.bf16.mxu0 0
        %4709 = vmatpush1.bf16.msra.mxu0 0
        %4710 = vmatprep.subr.bf16.mxu0 0
        %4711 = vmatpush1.bf16.msra.mxu0 0
        %4712 = vmatprep.subr.bf16.mxu0 0
        %4713 = vmatpush1.bf16.msra.mxu0 0
        %4714 = vmatprep.subr.bf16.mxu0 0
        %4715 = vmatpush1.bf16.msra.mxu0 0
        %4716 = vmatprep.subr.bf16.mxu0 0
        %4717 = vmatpush1.bf16.msra.mxu0 %v4702
        %4718 = vmatprep.subr.bf16.mxu0 0
        %4719 = vmatpush1.bf16.msra.mxu0 %v4695
        %4720 = vmatprep.subr.bf16.mxu0 0
        %4721 = vmatpush2.bf16.msra.mxu0 0
        %4722 = vmatprep.subr.bf16.mxu0 0
        %4723 = vmatpush2.bf16.msra.mxu0 0
        %4724 = vmatprep.subr.bf16.mxu0 0
        %4725 = vmatpush2.bf16.msra.mxu0 0
        %4726 = vmatprep.subr.bf16.mxu0 0
        %4727 = vmatpush2.bf16.msra.mxu0 0
        %4728 = vmatprep.subr.bf16.mxu0 0
        %4729 = vmatpush2.bf16.msra.mxu0 0
        %4730 = vmatprep.subr.bf16.mxu0 0
        %4731 = vmatpush2.bf16.msra.mxu0 0
        %4732 = vmatprep.subr.bf16.mxu0 0
        %4733 = vmatpush2.bf16.msra.mxu0 0
        %4734 = vmatprep.subr.bf16.mxu0 0
        %4735 = vmatpush2.bf16.msra.mxu0 0
        %4736 = vmatprep.mubr.bf16.mxu0 0
        %4737 = vmatmul.mubr.bf16.gmra.mxu0 %v4699
        %v4738 = vpop.f32.mrf.mxu0
        %v4739 = vadd.f32 0.0, %v4738
        %v4740 = vpop.f32.mrf.mxu0
        %v4741 = vpop.f32.mrf.mxu0
        %v4742 = vpop.f32.mrf.mxu0
        %4743 = vdwg.mxu0
        %v4747 = vunpack.c.l.b16 %v4682
        %v4748 = vunpack.c.l.b16 %v4683
        %v4749 = vunpack.c.l.b16 %v4684
        %v4750 = vpack.c.b16 %v4748, %v4747
        %v4751 = vpack.c.b16 %v4749, %v4749
        %v4754 = vsel %vm4638, %v4751, 0
        %4756 = vmatprep.subr.bf16.mxu0 0
        %4757 = vmatpush1.bf16.msra.mxu0 0
        %4758 = vmatprep.subr.bf16.mxu0 0
        %4759 = vmatpush1.bf16.msra.mxu0 0
        %4760 = vmatprep.subr.bf16.mxu0 0
        %4761 = vmatpush1.bf16.msra.mxu0 0
        %4762 = vmatprep.subr.bf16.mxu0 0
        %4763 = vmatpush1.bf16.msra.mxu0 0
        %4764 = vmatprep.subr.bf16.mxu0 0
        %4765 = vmatpush1.bf16.msra.mxu0 0
        %4766 = vmatprep.subr.bf16.mxu0 0
        %4767 = vmatpush1.bf16.msra.mxu0 0
        %4768 = vmatprep.subr.bf16.mxu0 0
        %4769 = vmatpush1.bf16.msra.mxu0 %v4754
        %4770 = vmatprep.subr.bf16.mxu0 0
        %4771 = vmatpush1.bf16.msra.mxu0 %v4750
        %4772 = vmatprep.subr.bf16.mxu0 0
        %4773 = vmatpush2.bf16.msra.mxu0 0
        %4774 = vmatprep.subr.bf16.mxu0 0
        %4775 = vmatpush2.bf16.msra.mxu0 0
        %4776 = vmatprep.subr.bf16.mxu0 0
        %4777 = vmatpush2.bf16.msra.mxu0 0
        %4778 = vmatprep.subr.bf16.mxu0 0
        %4779 = vmatpush2.bf16.msra.mxu0 0
        %4780 = vmatprep.subr.bf16.mxu0 0
        %4781 = vmatpush2.bf16.msra.mxu0 0
        %4782 = vmatprep.subr.bf16.mxu0 0
        %4783 = vmatpush2.bf16.msra.mxu0 0
        %4784 = vmatprep.subr.bf16.mxu0 0
        %4785 = vmatpush2.bf16.msra.mxu0 0
        %4786 = vmatprep.subr.bf16.mxu0 0
        %4787 = vmatpush2.bf16.msra.mxu0 0
        %4788 = vmatprep.mubr.bf16.mxu0 0
        %4789 = vmatmul.mubr.bf16.gmra.mxu0 %v4636
        %v4790 = vpop.f32.mrf.mxu0
        %v4791 = vadd.f32 %v4739, %v4790
        %v4792 = vpop.f32.mrf.mxu0
        %v4793 = vpop.f32.mrf.mxu0
        %v4794 = vpop.f32.mrf.mxu0
        %4795 = vdwg.mxu0
        %v4796 = vsub.f32 0.0, %v4791
        %v4797 = vmul.f32 %v4796, 1.442695
        %v4798 = vpow.pop %v4797
        %v4799 = vadd.f32 %v4798, 1.0
        %v4800 = vrcp.pop %v4799
        %v4801 = vmul.f32 1.0, %v4800
        %4803 = vset.pattern.permute.xlu0 0
        %4804 = vperm.xlu0 %4803, %v4801
        %v4805 = vpop.permute.xlu0 %4804
        %v4807 = vmul.f32 %v4805, %v4555
        %4808 = vset.pattern.permute.xlu0 1
        %4809 = vperm.xlu0 %4808, %v4801
        %v4810 = vpop.permute.xlu0 %4809
        %v4812 = vmul.f32 %v4810, %v4620
        %v4813 = vld [vmem:[%s10] sm:$0xf]
        %v4814 = vld [vmem:[%s10 + $0x4] sm:$0xf]
        %v4815 = vld [vmem:[%s10 + $0x8] sm:$0xf]
        %v4816 = vpack.c.bf16 %v4807, %v4807
        %v4817 = vld [vmem:[%s11] sm:$0xf]
        %v4818 = vld [vmem:[%s11 + $0x4] sm:$0xf]
        %v4819 = vld [vmem:[%s11 + $0x8] sm:$0xf]
        %v4820 = vpack.c.bf16 %v4812, %v4812
        %v4824 = vunpack.c.l.b16 %v4817
        %v4825 = vunpack.c.l.b16 %v4818
        %v4826 = vunpack.c.l.b16 %v4819
        %v4827 = vpack.c.b16 %v4825, %v4824
        %v4828 = vpack.c.b16 %v4826, %v4826
        %v4831 = vsel %vm4634, %v4820, 0
        %v4834 = vsel %vm4638, %v4828, 0
        %4836 = vmatprep.subr.bf16.mxu0 0
        %4837 = vmatpush1.bf16.msra.mxu0 0
        %4838 = vmatprep.subr.bf16.mxu0 0
        %4839 = vmatpush1.bf16.msra.mxu0 0
        %4840 = vmatprep.subr.bf16.mxu0 0
        %4841 = vmatpush1.bf16.msra.mxu0 0
        %4842 = vmatprep.subr.bf16.mxu0 0
        %4843 = vmatpush1.bf16.msra.mxu0 0
        %4844 = vmatprep.subr.bf16.mxu0 0
        %4845 = vmatpush1.bf16.msra.mxu0 0
        %4846 = vmatprep.subr.bf16.mxu0 0
        %4847 = vmatpush1.bf16.msra.mxu0 0
        %4848 = vmatprep.subr.bf16.mxu0 0
        %4849 = vmatpush1.bf16.msra.mxu0 %v4834
        %4850 = vmatprep.subr.bf16.mxu0 0
        %4851 = vmatpush1.bf16.msra.mxu0 %v4827
        %4852 = vmatprep.subr.bf16.mxu0 0
        %4853 = vmatpush2.bf16.msra.mxu0 0
        %4854 = vmatprep.subr.bf16.mxu0 0
        %4855 = vmatpush2.bf16.msra.mxu0 0
        %4856 = vmatprep.subr.bf16.mxu0 0
        %4857 = vmatpush2.bf16.msra.mxu0 0
        %4858 = vmatprep.subr.bf16.mxu0 0
        %4859 = vmatpush2.bf16.msra.mxu0 0
        %4860 = vmatprep.subr.bf16.mxu0 0
        %4861 = vmatpush2.bf16.msra.mxu0 0
        %4862 = vmatprep.subr.bf16.mxu0 0
        %4863 = vmatpush2.bf16.msra.mxu0 0
        %4864 = vmatprep.subr.bf16.mxu0 0
        %4865 = vmatpush2.bf16.msra.mxu0 0
        %4866 = vmatprep.subr.bf16.mxu0 0
        %4867 = vmatpush2.bf16.msra.mxu0 0
        %4868 = vmatprep.mubr.bf16.mxu0 0
        %4869 = vmatmul.mubr.bf16.gmra.mxu0 %v4831
        %v4870 = vpop.f32.mrf.mxu0
        %v4871 = vadd.f32 0.0, %v4870
        %v4872 = vpop.f32.mrf.mxu0
        %v4873 = vpop.f32.mrf.mxu0
        %v4874 = vpop.f32.mrf.mxu0
        %4875 = vdwg.mxu0
        %v4879 = vunpack.c.l.b16 %v4813
        %v4880 = vunpack.c.l.b16 %v4814
        %v4881 = vunpack.c.l.b16 %v4815
        %v4882 = vpack.c.b16 %v4880, %v4879
        %v4883 = vpack.c.b16 %v4881, %v4881
        %v4886 = vsel %vm4634, %v4816, 0
        %v4889 = vsel %vm4638, %v4883, 0
        %4891 = vmatprep.subr.bf16.mxu0 0
        %4892 = vmatpush1.bf16.msra.mxu0 0
        %4893 = vmatprep.subr.bf16.mxu0 0
        %4894 = vmatpush1.bf16.msra.mxu0 0
        %4895 = vmatprep.subr.bf16.mxu0 0
        %4896 = vmatpush1.bf16.msra.mxu0 0
        %4897 = vmatprep.subr.bf16.mxu0 0
        %4898 = vmatpush1.bf16.msra.mxu0 0
        %4899 = vmatprep.subr.bf16.mxu0 0
        %4900 = vmatpush1.bf16.msra.mxu0 0
        %4901 = vmatprep.subr.bf16.mxu0 0
        %4902 = vmatpush1.bf16.msra.mxu0 0
        %4903 = vmatprep.subr.bf16.mxu0 0
        %4904 = vmatpush1.bf16.msra.mxu0 %v4889
        %4905 = vmatprep.subr.bf16.mxu0 0
        %4906 = vmatpush1.bf16.msra.mxu0 %v4882
        %4907 = vmatprep.subr.bf16.mxu0 0
        %4908 = vmatpush2.bf16.msra.mxu0 0
        %4909 = vmatprep.subr.bf16.mxu0 0
        %4910 = vmatpush2.bf16.msra.mxu0 0
        %4911 = vmatprep.subr.bf16.mxu0 0
        %4912 = vmatpush2.bf16.msra.mxu0 0
        %4913 = vmatprep.subr.bf16.mxu0 0
        %4914 = vmatpush2.bf16.msra.mxu0 0
        %4915 = vmatprep.subr.bf16.mxu0 0
        %4916 = vmatpush2.bf16.msra.mxu0 0
        %4917 = vmatprep.subr.bf16.mxu0 0
        %4918 = vmatpush2.bf16.msra.mxu0 0
        %4919 = vmatprep.subr.bf16.mxu0 0
        %4920 = vmatpush2.bf16.msra.mxu0 0
        %4921 = vmatprep.subr.bf16.mxu0 0
        %4922 = vmatpush2.bf16.msra.mxu0 0
        %4923 = vmatprep.mubr.bf16.mxu0 0
        %4924 = vmatmul.mubr.bf16.gmra.mxu0 %v4886
        %v4925 = vpop.f32.mrf.mxu0
        %v4926 = vadd.f32 %v4871, %v4925
        %v4927 = vpop.f32.mrf.mxu0
        %v4928 = vpop.f32.mrf.mxu0
        %v4929 = vpop.f32.mrf.mxu0
        %4930 = vdwg.mxu0
        %v4931 = vmax.f32 %v4926, 0.0
        %v4932 = vld [vmem:[%s12] sm:$0xf]
        %v4933 = vld [vmem:[%s12 + $0x4] sm:$0xf]
        %v4934 = vld [vmem:[%s12 + $0x8] sm:$0xf]
        %v4935 = vld [vmem:[%s12 + $0xc] sm:$0xf]
        %v4936 = vld [vmem:[%s12 + $0x10] sm:$0xf]
        %v4937 = vld [vmem:[%s12 + $0x14] sm:$0xf]
        %v4938 = vpack.c.bf16 %v4931, %v4931
        %v4945 = vunpack.c.l.b16 %v4932
        %v4946 = vunpack.c.l.b16 %v4933
        %v4947 = vunpack.c.l.b16 %v4934
        %v4948 = vunpack.c.l.b16 %v4935
        %v4949 = vunpack.c.l.b16 %v4936
        %v4950 = vunpack.c.l.b16 %v4937
        %v4951 = vpack.c.b16 %v4946, %v4945
        %v4952 = vpack.c.b16 %v4948, %v4947
        %v4953 = vpack.c.b16 %v4950, %v4949
        %v4958 = vsel %vm4511, %v4938, 0
        %4960 = vmatprep.subr.bf16.mxu0 0
        %4961 = vmatpush1.bf16.msra.mxu0 0
        %4962 = vmatprep.subr.bf16.mxu0 0
        %4963 = vmatpush1.bf16.msra.mxu0 0
        %4964 = vmatprep.subr.bf16.mxu0 0
        %4965 = vmatpush1.bf16.msra.mxu0 0
        %4966 = vmatprep.subr.bf16.mxu0 0
        %4967 = vmatpush1.bf16.msra.mxu0 0
        %4968 = vmatprep.subr.bf16.mxu0 0
        %4969 = vmatpush1.bf16.msra.mxu0 0
        %4970 = vmatprep.subr.bf16.mxu0 0
        %4971 = vmatpush1.bf16.msra.mxu0 %v4953
        %4972 = vmatprep.subr.bf16.mxu0 0
        %4973 = vmatpush1.bf16.msra.mxu0 %v4952
        %4974 = vmatprep.subr.bf16.mxu0 0
        %4975 = vmatpush1.bf16.msra.mxu0 %v4951
        %4976 = vmatprep.subr.bf16.mxu0 0
        %4977 = vmatpush2.bf16.msra.mxu0 0
        %4978 = vmatprep.subr.bf16.mxu0 0
        %4979 = vmatpush2.bf16.msra.mxu0 0
        %4980 = vmatprep.subr.bf16.mxu0 0
        %4981 = vmatpush2.bf16.msra.mxu0 0
        %4982 = vmatprep.subr.bf16.mxu0 0
        %4983 = vmatpush2.bf16.msra.mxu0 0
        %4984 = vmatprep.subr.bf16.mxu0 0
        %4985 = vmatpush2.bf16.msra.mxu0 0
        %4986 = vmatprep.subr.bf16.mxu0 0
        %4987 = vmatpush2.bf16.msra.mxu0 0
        %4988 = vmatprep.subr.bf16.mxu0 0
        %4989 = vmatpush2.bf16.msra.mxu0 0
        %4990 = vmatprep.subr.bf16.mxu0 0
        %4991 = vmatpush2.bf16.msra.mxu0 0
        %4992 = vmatprep.mubr.bf16.mxu0 0
        %4993 = vmatmul.mubr.bf16.gmra.mxu0 %v4958
        %v4994 = vpop.f32.mrf.mxu0
        %v4995 = vadd.f32 0.0, %v4994
        %v4996 = vpop.f32.mrf.mxu0
        %v4997 = vpop.f32.mrf.mxu0
        %v4998 = vpop.f32.mrf.mxu0
        %4999 = vdwg.mxu0
        %v5000 = vmax.f32 %v4995, 0.0
        %v5001 = vld [vmem:[%s13] sm:$0xf]
        %v5002 = vld [vmem:[%s13 + $0x4] sm:$0xf]
        %v5003 = vld [vmem:[%s13 + $0x8] sm:$0xf]
        %v5004 = vld [vmem:[%s13 + $0xc] sm:$0xf]
        %v5005 = vpack.c.bf16 %v5000, %v5000
        %v5010 = vunpack.c.l.b16 %v5001
        %v5011 = vunpack.c.l.b16 %v5002
        %v5012 = vunpack.c.l.b16 %v5003
        %v5013 = vunpack.c.l.b16 %v5004
        %v5014 = vpack.c.b16 %v5011, %v5010
        %v5015 = vpack.c.b16 %v5013, %v5012
        %v5019 = vsel %vm2227, %v5005, 0
        %5021 = vmatprep.subr.bf16.mxu0 0
        %5022 = vmatpush1.bf16.msra.mxu0 0
        %5023 = vmatprep.subr.bf16.mxu0 0
        %5024 = vmatpush1.bf16.msra.mxu0 0
        %5025 = vmatprep.subr.bf16.mxu0 0
        %5026 = vmatpush1.bf16.msra.mxu0 0
        %5027 = vmatprep.subr.bf16.mxu0 0
        %5028 = vmatpush1.bf16.msra.mxu0 0
        %5029 = vmatprep.subr.bf16.mxu0 0
        %5030 = vmatpush1.bf16.msra.mxu0 0
        %5031 = vmatprep.subr.bf16.mxu0 0
        %5032 = vmatpush1.bf16.msra.mxu0 0
        %5033 = vmatprep.subr.bf16.mxu0 0
        %5034 = vmatpush1.bf16.msra.mxu0 %v5015
        %5035 = vmatprep.subr.bf16.mxu0 0
        %5036 = vmatpush1.bf16.msra.mxu0 %v5014
        %5037 = vmatprep.subr.bf16.mxu0 0
        %5038 = vmatpush2.bf16.msra.mxu0 0
        %5039 = vmatprep.subr.bf16.mxu0 0
        %5040 = vmatpush2.bf16.msra.mxu0 0
        %5041 = vmatprep.subr.bf16.mxu0 0
        %5042 = vmatpush2.bf16.msra.mxu0 0
        %5043 = vmatprep.subr.bf16.mxu0 0
        %5044 = vmatpush2.bf16.msra.mxu0 0
        %5045 = vmatprep.subr.bf16.mxu0 0
        %5046 = vmatpush2.bf16.msra.mxu0 0
        %5047 = vmatprep.subr.bf16.mxu0 0
        %5048 = vmatpush2.bf16.msra.mxu0 0
        %5049 = vmatprep.subr.bf16.mxu0 0
        %5050 = vmatpush2.bf16.msra.mxu0 0
        %5051 = vmatprep.subr.bf16.mxu0 0
        %5052 = vmatpush2.bf16.msra.mxu0 0
        %5053 = vmatprep.mubr.bf16.mxu0 0
        %5054 = vmatmul.mubr.bf16.gmra.mxu0 %v5019
        %v5055 = vpop.f32.mrf.mxu0
        %v5056 = vadd.f32 0.0, %v5055
        %v5057 = vpop.f32.mrf.mxu0
        %v5058 = vpop.f32.mrf.mxu0
        %v5059 = vpop.f32.mrf.mxu0
        %5060 = vdwg.mxu0
        %vm5061 = vcmask 39936
        %v5062 = vsel %vm5061, %v5056, -inf
        %5063 = vmax.xlane.f32.xlu0 %v5062
        %v5064 = vpop.xlane.xlu0 %5063
        %v5065 = vsub.f32 %v5056, %v5064
        %v5066 = vmul.f32 %v5065, 1.442695
        %v5067 = vpow.pop %v5066
        %v5068 = vsel %vm5061, %v5067, 0.0
        %5069 = vadd.xlane.f32.xlu0 %v5068
        %v5070 = vpop.xlane.xlu0 %5069
        %v5071 = vrcp.pop %v5070
        %v5072 = vmul.f32 %v5067, %v5071
        %vm5073 = vcmask 31744
        %5074 = vst.msk [vmem:[%s479] sm:$0xff] %vm5073, %v4677
        %5076 = vrot.lane.b32.xlu0 %v5072, 4
        %v5077 = vpop.permute.xlu0 %5076
        %vm5079 = vcmask 72736
        %5080 = vst.msk [vmem:[%s479] sm:$0xff] %vm5079, %v5077
        %s5081 = sand.u32 %s340, 1
        %s5082 = scalar_lea.sflag [#allocation4], %s5081
        %s5083 = sand.u32 %s340, 1
        %s5084 = smul.addr %s5083, 8
        %s5085 = scalar_lea.vmem [#allocation3], %s5084
        // Predicated region
        $region77: #{tpu_custom_call.1} parent=75 // pred_check
          %p5086 = pneg %p350
        $region78: #{tpu_custom_call.1} parent=75 // pred_check_branch
          %5088 = sbr.rel (%p5086) target = $region80
        $region79: #{tpu_custom_call.1} parent=75 // pred_region
          %s5090 = ssub.s32 128, 128
          %5091 = vsyncadd %s5082, %s5090
          %s5092 = smul.addr %s28, 128
          %s5093 = scalar_lea.hbm %s14, %s5092
          %s5095 = sshll.u32 %s5085, 4
          %s5096 = int_to_ptr.vmem [resolvable:$true] %s5095
          %5098 = dma.vmem_to_hbm [thread:$0]  %s5096, 128, %s5093, %s5082
        $region80: #{tpu_custom_call.1} parent=75 // pred_fallthru
          _
      $region76: #{tpu_custom_call.1} parent=5 // pred_fallthru
        _
      %p5099 = scmp.le.s32.totalorder 2, %s23
      // Predicated region
      $region81: #{tpu_custom_call.1} parent=5 // pred_check
        %p5100 = pneg %p5099
      $region82: #{tpu_custom_call.1} parent=5 // pred_check_branch
        %5102 = sbr.rel (%p5100) target = $region84
      $region83: #{tpu_custom_call.1} parent=5 // pred_region
        %s5103 = ssub.s32 %s23, 2
        // Predicated region
        $region85: #{tpu_custom_call.1} parent=83 // pred_check
          %p5104 = pneg %p356
        $region86: #{tpu_custom_call.1} parent=83 // pred_check_branch
          %5106 = sbr.rel (%p5104) target = $region88
        $region87: #{tpu_custom_call.1} parent=83 // pred_region
          %s5107 = sand.u32 %s341, 1
          %s5108 = scalar_lea.sflag [#allocation4], %s5107
          %s5109 = sand.u32 %s341, 1
          %s5110 = smul.addr %s5109, 8
          %s5111 = scalar_lea.vmem [#allocation3], %s5110
          %5112 = dma.done %s5108, 128
        $region88: #{tpu_custom_call.1} parent=83 // pred_fallthru
          _
      $region84: #{tpu_custom_call.1} parent=5 // pred_fallthru
        _
    $region6: #{tpu_custom_call.1} parent=1 // loop_footer
      %s27 = sadd.s32 1, %s23
    $region7: #{tpu_custom_call.1} parent=1 // loop_footer_branch
      %22 = sbr.rel target = $region3
    $region8: #{tpu_custom_call.1} parent=1 // loop_exit
      _
    %5113 = vsyncpa [#allocation4], 1
    %s5114 = scalar_lea.sflag [#allocation4], 1
    %5115 = vsyncpa %s5114, 1

</llo_original>
